<compile_context>
chip_gen: v6e
topology: v6e:2x2x1
jax: 0.10.0
libtpu: 0.0.40
codegen_flags: <defaults>
</compile_context>

<pallas_src>
import jax
import jax.numpy as jnp
from jax.experimental import pallas as pl
from jax.experimental.pallas import tpu as pltpu

PAD = 4  # conv1: padding=4, padding_mode='circular'


# ----------------------------------------------------------------------------
# Weight preprocessing (wrapper side, plain JAX): expand each HWIO conv weight
# into a block-Toeplitz matrix so a conv over lane-dense rows becomes a single
# matmul.  T[(i, j', ci), (w, c)] = W[i, j'-w, ci, c] for 0 <= j'-w < KW.
# ----------------------------------------------------------------------------
def _toeplitz_weight(w_hwio, win, wout, dtype=jnp.bfloat16):
    kh, kw, cin, cout = w_hwio.shape
    assert win == wout + kw - 1
    blocks_i = []
    for i in range(kh):
        w_i = w_hwio[i].reshape(kw * cin, cout)           # rows = (j, ci)
        cols = [jnp.pad(w_i, ((p * cin, (wout - 1 - p) * cin), (0, 0)))
                for p in range(wout)]                      # place at row p*cin
        blocks_i.append(jnp.concatenate(cols, axis=1))     # (win*cin, wout*cout)
    return jnp.concatenate(blocks_i, axis=0).astype(dtype)


def _prepare_params(params, H, W):
    (w1, b1), (w2, b2), (w3, b3) = params
    t1 = _toeplitz_weight(w1, W + 2 * PAD, W + 4)   # (5*(W+8)*Cin, (W+4)*ch)
    t2 = _toeplitz_weight(w2, W + 4, W + 2)         # (3*(W+4)*ch, (W+2)*ch)
    t3 = _toeplitz_weight(w3, W + 2, W)             # (3*(W+2)*ch,  W*Cin)
    b1r = jnp.tile(b1.astype(jnp.float32), (1, W + 4))
    b2r = jnp.tile(b2.astype(jnp.float32), (1, W + 2))
    b3r = jnp.tile(b3.astype(jnp.float32), (1, W))
    return t1, b1r, t2, b2r, t3, b3r


# ----------------------------------------------------------------------------
# Kernel
# ----------------------------------------------------------------------------
def _make_kernel(nb, H, W, cin):
    def conv_block(x3d, t_ref, brow_ref, kh):
        # x3d: (nb, hin, win*cin_l) bf16 ; t_ref: (kh*win*cin_l, wout*cout) bf16
        hout = x3d.shape[1] - kh + 1
        # im2col over the kernel-row axis only -> one wide-K matmul.
        xcat = jnp.concatenate([x3d[:, i:i + hout, :] for i in range(kh)],
                               axis=-1)                    # (nb, hout, K)
        x2d = xcat.reshape(nb * hout, xcat.shape[-1])
        y = jnp.dot(x2d, t_ref[...], preferred_element_type=jnp.float32)
        y = jnp.maximum(y + brow_ref[...], 0.0)            # bias + ReLU in f32
        return y.reshape(nb, hout, -1)                     # lane-dense rows

    def kernel(x_ref, t1_ref, b1_ref, t2_ref, b2_ref, t3_ref, b3_ref, o_ref):
        x = x_ref[...]                                     # (nb, H, W*cin) bf16
        # circular ('wrap') halo of PAD rows / cols, built in VMEM.
        xh = jnp.concatenate([x[:, H - PAD:, :], x, x[:, :PAD, :]], axis=1)
        xp = jnp.concatenate(
            [xh[:, :, (W - PAD) * cin:], xh, xh[:, :, :PAD * cin]], axis=2)
        # (nb, H+8, (W+8)*cin)
        h1 = conv_block(xp, t1_ref, b1_ref, 5).astype(jnp.bfloat16)  # (nb,H+4,(W+4)*ch)
        h2 = conv_block(h1, t2_ref, b2_ref, 3).astype(jnp.bfloat16)  # (nb,H+2,(W+2)*ch)
        y3 = conv_block(h2, t3_ref, b3_ref, 3)                       # (nb,H,  W*cin) f32
        o_ref[...] = y3

    return kernel


# ----------------------------------------------------------------------------
# Wrapper (matches the PyTorch module forward, NCHW in / NCHW out)
# ----------------------------------------------------------------------------
@jax.jit
def one_iteration_reverse_net(x_nchw, params):
    N, cin, H, W = x_nchw.shape
    assert H > PAD and W > PAD  # circular pad (4) must not exceed spatial size
    t1, b1r, t2, b2r, t3, b3r = _prepare_params(params, H, W)

    # NCHW -> lane-dense (N, H, W*cin) rows, bf16 for the MXU.
    x_rows = jnp.transpose(x_nchw, (0, 2, 3, 1)).reshape(N, H, W * cin)
    x_rows = x_rows.astype(jnp.bfloat16)

    # Fold `nb` images into the matmul M dim per grid step, but keep >= 2
    # parallel grid steps so both TensorCores are used on v7x.
    num_steps = 2 if (N > 1 and N % 2 == 0) else N
    nb = N // num_steps

    kernel = _make_kernel(nb, H, W, cin)
    out_rows = pl.pallas_call(
        kernel,
        out_shape=jax.ShapeDtypeStruct((N, H, W * cin), jnp.float32),
        grid_spec=pltpu.PrefetchScalarGridSpec(
            num_scalar_prefetch=0,
            grid=(num_steps,),
            in_specs=[
                pl.BlockSpec((nb, H, W * cin), lambda b: (b, 0, 0)),
                pl.BlockSpec(t1.shape, lambda b: (0, 0)),
                pl.BlockSpec(b1r.shape, lambda b: (0, 0)),
                pl.BlockSpec(t2.shape, lambda b: (0, 0)),
                pl.BlockSpec(b2r.shape, lambda b: (0, 0)),
                pl.BlockSpec(t3.shape, lambda b: (0, 0)),
                pl.BlockSpec(b3r.shape, lambda b: (0, 0)),
            ],
            out_specs=pl.BlockSpec((nb, H, W * cin), lambda b: (b, 0, 0)),
        ),
        compiler_params=pltpu.CompilerParams(
            dimension_semantics=("parallel",)),
    )(x_rows, t1, b1r, t2, b2r, t3, b3r)

    # lane-dense slab -> NCHW
    return jnp.transpose(out_rows.reshape(N, H, W, cin), (0, 3, 1, 2))


# ----------------------------------------------------------------------------
# Params / reference
# ----------------------------------------------------------------------------
def init_params(key, info_ch, ch):
    """Deterministic Conv2d-style init (uniform +/- 1/sqrt(fan_in)), HWIO."""
    def conv_init(k, cin, cout, ksz):
        kw, kb = jax.random.split(k)
        fan_in = cin * ksz * ksz
        bound = 1.0 / (fan_in ** 0.5)
        w = jax.random.uniform(kw, (ksz, ksz, cin, cout), jnp.float32,
                               -bound, bound)
        b = jax.random.uniform(kb, (1, cout), jnp.float32, -bound, bound)
        return w, b

    k1, k2, k3 = jax.random.split(key, 3)
    return (conv_init(k1, info_ch, ch, 5),
            conv_init(k2, ch, ch, 3),
            conv_init(k3, ch, info_ch, 3))


def _ref_forward(x_nchw, params):
    """Pure-JAX reference (lax.conv) for numerical sanity checking."""
    (w1, b1), (w2, b2), (w3, b3) = params

    def conv_relu(x, w, b, circ_pad=None):
        if circ_pad is not None:
            x = jnp.pad(x, ((0, 0), (circ_pad, circ_pad),
                            (circ_pad, circ_pad), (0, 0)), mode="wrap")
        y = jax.lax.conv_general_dilated(
            x, w, (1, 1), "VALID",
            dimension_numbers=("NHWC", "HWIO", "NHWC"))
        return jax.nn.relu(y + b[0][None, None, None, :])

    x = jnp.transpose(x_nchw, (0, 2, 3, 1)).astype(jnp.float32)
    x = conv_relu(x, w1, b1, circ_pad=4)
    x = conv_relu(x, w2, b2)
    x = conv_relu(x, w3, b3)
    return jnp.transpose(x, (0, 3, 1, 2))


if __name__ == "__main__":
    key = jax.random.PRNGKey(0)
    kx, kp = jax.random.split(key)

    info_ch, ch = 4, 32
    N, H, W = 2, 16, 16

    x = jax.random.normal(kx, (N, info_ch, H, W), jnp.float32)
    params = init_params(kp, info_ch, ch)

    out = one_iteration_reverse_net(x, params)
    out = jax.block_until_ready(out)

    assert out.shape == (N, info_ch, H, W), out.shape

    ref = _ref_forward(x, params)
    max_err = float(jnp.max(jnp.abs(out - ref)))
    assert max_err < 5e-2, f"max abs err vs reference: {max_err}"

    print("KERNEL_OK")
</pallas_src>

<mosaic_0001>
module attributes {stable_mosaic.version = 11 : i64} {
  func.func @kernel(%arg0: i32, %arg1: memref<1x16x64xbf16, #tpu.memory_space<vmem>>, %arg2: memref<480x640xbf16, #tpu.memory_space<vmem>>, %arg3: memref<1x640xf32, #tpu.memory_space<vmem>>, %arg4: memref<1920x576xbf16, #tpu.memory_space<vmem>>, %arg5: memref<1x576xf32, #tpu.memory_space<vmem>>, %arg6: memref<1728x64xbf16, #tpu.memory_space<vmem>>, %arg7: memref<1x64xf32, #tpu.memory_space<vmem>>, %arg8: memref<1x16x64xf32, #tpu.memory_space<vmem>>) attributes {dimension_semantics = [#tpu.dimension_semantics<parallel>], iteration_bounds = array<i64: 2>, scalar_prefetch = 0 : i64, scratch_operands = 0 : i64, tpu.core_type = #tpu.core_type<tc>, window_params = [{transform_indices = @transform_0, window_bounds = array<i64: 1, 16, 64>}, {pipeline_mode = #tpu.pipeline_mode<synchronous>, transform_indices = @transform_1, window_bounds = array<i64: 480, 640>}, {pipeline_mode = #tpu.pipeline_mode<synchronous>, transform_indices = @transform_2, window_bounds = array<i64: 1, 640>}, {pipeline_mode = #tpu.pipeline_mode<synchronous>, transform_indices = @transform_3, window_bounds = array<i64: 1920, 576>}, {pipeline_mode = #tpu.pipeline_mode<synchronous>, transform_indices = @transform_4, window_bounds = array<i64: 1, 576>}, {pipeline_mode = #tpu.pipeline_mode<synchronous>, transform_indices = @transform_5, window_bounds = array<i64: 1728, 64>}, {pipeline_mode = #tpu.pipeline_mode<synchronous>, transform_indices = @transform_6, window_bounds = array<i64: 1, 64>}, {transform_indices = @transform_7, window_bounds = array<i64: 1, 16, 64>}]} {
    %c0 = arith.constant 0 : index
    %c0_0 = arith.constant 0 : index
    %c0_1 = arith.constant 0 : index
    %0 = vector.load %arg1[%c0, %c0_0, %c0_1] : memref<1x16x64xbf16, #tpu.memory_space<vmem>>, vector<1x16x64xbf16>
    %1 = vector.extract_strided_slice %0 {offsets = [0, 12, 0], sizes = [1, 4, 64], strides = [1, 1, 1]} : vector<1x16x64xbf16> to vector<1x4x64xbf16>
    %2 = vector.extract_strided_slice %0 {offsets = [0, 0, 0], sizes = [1, 4, 64], strides = [1, 1, 1]} : vector<1x16x64xbf16> to vector<1x4x64xbf16>
    %3 = tpu.concatenate %1, %0, %2 in 1 : vector<1x4x64xbf16>, vector<1x16x64xbf16>, vector<1x4x64xbf16> -> vector<1x24x64xbf16>
    %4 = vector.extract_strided_slice %3 {offsets = [0, 0, 48], sizes = [1, 24, 16], strides = [1, 1, 1]} : vector<1x24x64xbf16> to vector<1x24x16xbf16>
    %5 = vector.extract_strided_slice %3 {offsets = [0, 0, 0], sizes = [1, 24, 16], strides = [1, 1, 1]} : vector<1x24x64xbf16> to vector<1x24x16xbf16>
    %6 = tpu.concatenate %4, %3, %5 in 2 : vector<1x24x16xbf16>, vector<1x24x64xbf16>, vector<1x24x16xbf16> -> vector<1x24x96xbf16>
    %7 = vector.extract_strided_slice %6 {offsets = [0, 0, 0], sizes = [1, 20, 96], strides = [1, 1, 1]} : vector<1x24x96xbf16> to vector<1x20x96xbf16>
    %8 = vector.extract_strided_slice %6 {offsets = [0, 1, 0], sizes = [1, 20, 96], strides = [1, 1, 1]} : vector<1x24x96xbf16> to vector<1x20x96xbf16>
    %9 = vector.extract_strided_slice %6 {offsets = [0, 2, 0], sizes = [1, 20, 96], strides = [1, 1, 1]} : vector<1x24x96xbf16> to vector<1x20x96xbf16>
    %10 = vector.extract_strided_slice %6 {offsets = [0, 3, 0], sizes = [1, 20, 96], strides = [1, 1, 1]} : vector<1x24x96xbf16> to vector<1x20x96xbf16>
    %11 = vector.extract_strided_slice %6 {offsets = [0, 4, 0], sizes = [1, 20, 96], strides = [1, 1, 1]} : vector<1x24x96xbf16> to vector<1x20x96xbf16>
    %12 = tpu.concatenate %7, %8, %9, %10, %11 in 2 : vector<1x20x96xbf16>, vector<1x20x96xbf16>, vector<1x20x96xbf16>, vector<1x20x96xbf16>, vector<1x20x96xbf16> -> vector<1x20x480xbf16>
    %13 = vector.shape_cast %12 : vector<1x20x480xbf16> to vector<20x480xbf16>
    %c0_2 = arith.constant 0 : index
    %c0_3 = arith.constant 0 : index
    %14 = vector.load %arg2[%c0_2, %c0_3] : memref<480x640xbf16, #tpu.memory_space<vmem>>, vector<480x640xbf16>
    %cst = arith.constant dense<0.000000e+00> : vector<20x640xf32>
    %15 = tpu.matmul %13, %14, %cst {dimension_numbers = #tpu.dot_dimension_numbers<[1], [0], [0], [1], [0, 0, 1, 1], [], []>} : vector<20x480xbf16>, vector<480x640xbf16>, vector<20x640xf32> -> vector<20x640xf32>
    %c0_4 = arith.constant 0 : index
    %c0_5 = arith.constant 0 : index
    %16 = vector.load %arg3[%c0_4, %c0_5] : memref<1x640xf32, #tpu.memory_space<vmem>>, vector<1x640xf32>
    %17 = vector.broadcast %16 : vector<1x640xf32> to vector<20x640xf32>
    %18 = arith.addf %15, %17 : vector<20x640xf32>
    %cst_6 = arith.constant 0.000000e+00 : f32
    %19 = vector.broadcast %cst_6 : f32 to vector<20x640xf32>
    %20 = arith.maximumf %18, %19 : vector<20x640xf32>
    %21 = vector.shape_cast %20 : vector<20x640xf32> to vector<1x20x640xf32>
    %22 = arith.truncf %21 : vector<1x20x640xf32> to vector<1x20x640xbf16>
    %23 = vector.extract_strided_slice %22 {offsets = [0, 0, 0], sizes = [1, 18, 640], strides = [1, 1, 1]} : vector<1x20x640xbf16> to vector<1x18x640xbf16>
    %24 = vector.extract_strided_slice %22 {offsets = [0, 1, 0], sizes = [1, 18, 640], strides = [1, 1, 1]} : vector<1x20x640xbf16> to vector<1x18x640xbf16>
    %25 = vector.extract_strided_slice %22 {offsets = [0, 2, 0], sizes = [1, 18, 640], strides = [1, 1, 1]} : vector<1x20x640xbf16> to vector<1x18x640xbf16>
    %26 = tpu.concatenate %23, %24, %25 in 2 : vector<1x18x640xbf16>, vector<1x18x640xbf16>, vector<1x18x640xbf16> -> vector<1x18x1920xbf16>
    %27 = vector.shape_cast %26 : vector<1x18x1920xbf16> to vector<18x1920xbf16>
    %c0_7 = arith.constant 0 : index
    %c0_8 = arith.constant 0 : index
    %28 = vector.load %arg4[%c0_7, %c0_8] : memref<1920x576xbf16, #tpu.memory_space<vmem>>, vector<1920x576xbf16>
    %cst_9 = arith.constant dense<0.000000e+00> : vector<18x576xf32>
    %29 = tpu.matmul %27, %28, %cst_9 {dimension_numbers = #tpu.dot_dimension_numbers<[1], [0], [0], [1], [0, 0, 1, 1], [], []>} : vector<18x1920xbf16>, vector<1920x576xbf16>, vector<18x576xf32> -> vector<18x576xf32>
    %c0_10 = arith.constant 0 : index
    %c0_11 = arith.constant 0 : index
    %30 = vector.load %arg5[%c0_10, %c0_11] : memref<1x576xf32, #tpu.memory_space<vmem>>, vector<1x576xf32>
    %31 = vector.broadcast %30 : vector<1x576xf32> to vector<18x576xf32>
    %32 = arith.addf %29, %31 : vector<18x576xf32>
    %cst_12 = arith.constant 0.000000e+00 : f32
    %33 = vector.broadcast %cst_12 : f32 to vector<18x576xf32>
    %34 = arith.maximumf %32, %33 : vector<18x576xf32>
    %35 = vector.shape_cast %34 : vector<18x576xf32> to vector<1x18x576xf32>
    %36 = arith.truncf %35 : vector<1x18x576xf32> to vector<1x18x576xbf16>
    %37 = vector.extract_strided_slice %36 {offsets = [0, 0, 0], sizes = [1, 16, 576], strides = [1, 1, 1]} : vector<1x18x576xbf16> to vector<1x16x576xbf16>
    %38 = vector.extract_strided_slice %36 {offsets = [0, 1, 0], sizes = [1, 16, 576], strides = [1, 1, 1]} : vector<1x18x576xbf16> to vector<1x16x576xbf16>
    %39 = vector.extract_strided_slice %36 {offsets = [0, 2, 0], sizes = [1, 16, 576], strides = [1, 1, 1]} : vector<1x18x576xbf16> to vector<1x16x576xbf16>
    %40 = tpu.concatenate %37, %38, %39 in 2 : vector<1x16x576xbf16>, vector<1x16x576xbf16>, vector<1x16x576xbf16> -> vector<1x16x1728xbf16>
    %41 = vector.shape_cast %40 : vector<1x16x1728xbf16> to vector<16x1728xbf16>
    %c0_13 = arith.constant 0 : index
    %c0_14 = arith.constant 0 : index
    %42 = vector.load %arg6[%c0_13, %c0_14] : memref<1728x64xbf16, #tpu.memory_space<vmem>>, vector<1728x64xbf16>
    %cst_15 = arith.constant dense<0.000000e+00> : vector<16x64xf32>
    %43 = tpu.matmul %41, %42, %cst_15 {dimension_numbers = #tpu.dot_dimension_numbers<[1], [0], [0], [1], [0, 0, 1, 1], [], []>} : vector<16x1728xbf16>, vector<1728x64xbf16>, vector<16x64xf32> -> vector<16x64xf32>
    %c0_16 = arith.constant 0 : index
    %c0_17 = arith.constant 0 : index
    %44 = vector.load %arg7[%c0_16, %c0_17] : memref<1x64xf32, #tpu.memory_space<vmem>>, vector<1x64xf32>
    %45 = vector.broadcast %44 : vector<1x64xf32> to vector<16x64xf32>
    %46 = arith.addf %43, %45 : vector<16x64xf32>
    %cst_18 = arith.constant 0.000000e+00 : f32
    %47 = vector.broadcast %cst_18 : f32 to vector<16x64xf32>
    %48 = arith.maximumf %46, %47 : vector<16x64xf32>
    %49 = vector.shape_cast %48 : vector<16x64xf32> to vector<1x16x64xf32>
    %c0_19 = arith.constant 0 : index
    %c0_20 = arith.constant 0 : index
    %c0_21 = arith.constant 0 : index
    %50 = vector.load %arg8[%c0_19, %c0_20, %c0_21] : memref<1x16x64xf32, #tpu.memory_space<vmem>>, vector<1x16x64xf32>
    tpu.vector_store %arg8[%c0_19, %c0_20, %c0_21], %49 {strides = array<i32>} : memref<1x16x64xf32, #tpu.memory_space<vmem>>, vector<1x16x64xf32>,
    return
  }
  func.func @transform_0(%arg0: i32) -> (i32, i32, i32) {
    %c0_i32 = arith.constant 0 : i32
    %c0_i32_0 = arith.constant 0 : i32
    %c0_i32_1 = arith.constant 0 : i32
    return %arg0, %c0_i32, %c0_i32_0 : i32, i32, i32
  }
  func.func @transform_1(%arg0: i32) -> (i32, i32) {
    %c0_i32 = arith.constant 0 : i32
    %c0_i32_0 = arith.constant 0 : i32
    %c0_i32_1 = arith.constant 0 : i32
    return %c0_i32, %c0_i32_0 : i32, i32
  }
  func.func @transform_2(%arg0: i32) -> (i32, i32) {
    %c0_i32 = arith.constant 0 : i32
    %c0_i32_0 = arith.constant 0 : i32
    %c0_i32_1 = arith.constant 0 : i32
    return %c0_i32, %c0_i32_0 : i32, i32
  }
  func.func @transform_3(%arg0: i32) -> (i32, i32) {
    %c0_i32 = arith.constant 0 : i32
    %c0_i32_0 = arith.constant 0 : i32
    %c0_i32_1 = arith.constant 0 : i32
    return %c0_i32, %c0_i32_0 : i32, i32
  }
  func.func @transform_4(%arg0: i32) -> (i32, i32) {
    %c0_i32 = arith.constant 0 : i32
    %c0_i32_0 = arith.constant 0 : i32
    %c0_i32_1 = arith.constant 0 : i32
    return %c0_i32, %c0_i32_0 : i32, i32
  }
  func.func @transform_5(%arg0: i32) -> (i32, i32) {
    %c0_i32 = arith.constant 0 : i32
    %c0_i32_0 = arith.constant 0 : i32
    %c0_i32_1 = arith.constant 0 : i32
    return %c0_i32, %c0_i32_0 : i32, i32
  }
  func.func @transform_6(%arg0: i32) -> (i32, i32) {
    %c0_i32 = arith.constant 0 : i32
    %c0_i32_0 = arith.constant 0 : i32
    %c0_i32_1 = arith.constant 0 : i32
    return %c0_i32, %c0_i32_0 : i32, i32
  }
  func.func @transform_7(%arg0: i32) -> (i32, i32, i32) {
    %c0_i32 = arith.constant 0 : i32
    %c0_i32_0 = arith.constant 0 : i32
    %c0_i32_1 = arith.constant 0 : i32
    return %arg0, %c0_i32, %c0_i32_0 : i32, i32, i32
  }
}

</mosaic_0001>

<llo_original>
// kernel: one_iteration_reverse_net.1
$region0: #{one_iteration_reverse_net.1}
  #allocation0 [shape = 'u32[]', space=smem, size = 0x4, offset = 0x4, fixed_abs, tag = 'smem constant byte address 0x4 - core index']
  #allocation1 [shape = 'u32[144,128]{1,0:T(1,128)}', space=vmem, size = 0x12000, scoped, tag = 'internal scratch']
  %s0 = inlined_call_operand.vmem [shape: bf16[2,16,64], index: 0, kind: input, shape index: {}]
  %s1 = inlined_call_operand.vmem [shape: bf16[480,640], index: 1, kind: input, shape index: {}]
  %s2 = inlined_call_operand.vmem [shape: f32[1,640], index: 2, kind: input, shape index: {}]
  %s3 = inlined_call_operand.vmem [shape: bf16[1920,576], index: 3, kind: input, shape index: {}]
  %s4 = inlined_call_operand.vmem [shape: f32[1,576], index: 4, kind: input, shape index: {}]
  %s5 = inlined_call_operand.vmem [shape: bf16[1728,64], index: 5, kind: input, shape index: {}]
  %s6 = inlined_call_operand.vmem [shape: f32[1,64], index: 6, kind: input, shape index: {}]
  %s7 = inlined_call_operand.vmem [shape: f32[2,16,64], index: 7, kind: output, shape index: {}]
  %s8 = sld [smem:[#allocation0]]
  $region61: #{one_iteration_reverse_net.1} parent=0
    _
  %s10 = ssub.s32 1, %s8
  %s11 = scalar_select 0, %s10, %s8
  loop: start=0, step=1, limit=4
  $region2: #{one_iteration_reverse_net.1} parent=0 // loop_pre_header
    _
  $region3: #{one_iteration_reverse_net.1} parent=0 // loop_header
    %s13 = sphi 0, %s17
    %p14 = scmp.ge.s32.totalorder %s13, 4
    %s23 = sphi 0, %s25
    %s26 = sphi 0, %s23
    %s27 = sphi 0, %s26
    %s43 = sphi 0, %s27
    %s47 = sphi 0, %s47
    %s49 = sphi 0, %s47
    %s50 = sphi 0, %s49
    %s64 = sphi 0, %s50
    %s68 = sphi 0, %s68
    %s70 = sphi 0, %s68
    %s71 = sphi 0, %s70
    %s85 = sphi 0, %s71
    %s89 = sphi 0, %s89
    %s91 = sphi 0, %s89
    %s92 = sphi 0, %s91
    %s106 = sphi 0, %s92
    %s110 = sphi 0, %s110
    %s112 = sphi 0, %s110
    %s113 = sphi 0, %s112
    %s127 = sphi 0, %s113
    %s131 = sphi 0, %s131
    %s133 = sphi 0, %s131
    %s134 = sphi 0, %s133
    %s148 = sphi 0, %s134
    %s152 = sphi 0, %s152
    %s154 = sphi 0, %s152
    %s155 = sphi 0, %s154
    %s169 = sphi 0, %s155
    %s175 = sphi 0, %s177
    %s178 = sphi 0, %s175
    %s179 = sphi 0, %s178
    %s195 = sphi 0, %s179
  $region4: #{one_iteration_reverse_net.1} parent=0 // loop_header_branch
    %16 = sbr.rel (%p14) target = $region8
  $region5: #{one_iteration_reverse_net.1} parent=0 // loop_body
    %s18 = ssub.s32 %s13, 1
    %s19 = ssub.s32 %s13, 2
    %s20 = sadd.s32 %s13, 1
    %s21 = ssub.s32 %s13, %s20
    %p22 = scmp.eq.s32.totalorder %s21, 0
    %s24 = sadd.s32 %s23, 1
    %s25 = scalar_select %p22, %s23, %s24
    %p28 = pneg %p22
    %p29 = scmp.eq.s32.totalorder %s13, 1
    %p30 = por %p28, %p29
    %p31 = scmp.ne.s32.totalorder %s23, %s26
    %p32 = scmp.eq.s32.totalorder %s13, 0
    %p33 = por %p31, %p32
    %p34 = scmp.ne.s32.totalorder %s23, %s26
    %p35 = scmp.eq.s32.totalorder %s18, 1
    %p36 = por %p34, %p35
    %p37 = scmp.ne.s32.totalorder %s26, %s27
    %p38 = scmp.eq.s32.totalorder %s18, 0
    %p39 = por %p37, %p38
    %p40 = scmp.ne.s32.totalorder %s26, %s27
    %p41 = scmp.eq.s32.totalorder %s19, 1
    %p42 = por %p40, %p41
    %p44 = scmp.ne.s32.totalorder %s27, %s43
    %p45 = scmp.eq.s32.totalorder %s19, 0
    %p46 = por %p44, %p45
    %s48 = sadd.s32 %s47, 1
    %p51 = scmp.eq.s32.totalorder %s13, 1
    %p52 = scmp.ne.s32.totalorder %s47, %s49
    %p53 = scmp.eq.s32.totalorder %s13, 0
    %p54 = por %p52, %p53
    %p55 = scmp.ne.s32.totalorder %s47, %s49
    %p56 = scmp.eq.s32.totalorder %s18, 1
    %p57 = por %p55, %p56
    %p58 = scmp.ne.s32.totalorder %s49, %s50
    %p59 = scmp.eq.s32.totalorder %s18, 0
    %p60 = por %p58, %p59
    %p61 = scmp.ne.s32.totalorder %s49, %s50
    %p62 = scmp.eq.s32.totalorder %s19, 1
    %p63 = por %p61, %p62
    %p65 = scmp.ne.s32.totalorder %s50, %s64
    %p66 = scmp.eq.s32.totalorder %s19, 0
    %p67 = por %p65, %p66
    %s69 = sadd.s32 %s68, 1
    %p72 = scmp.eq.s32.totalorder %s13, 1
    %p73 = scmp.ne.s32.totalorder %s68, %s70
    %p74 = scmp.eq.s32.totalorder %s13, 0
    %p75 = por %p73, %p74
    %p76 = scmp.ne.s32.totalorder %s68, %s70
    %p77 = scmp.eq.s32.totalorder %s18, 1
    %p78 = por %p76, %p77
    %p79 = scmp.ne.s32.totalorder %s70, %s71
    %p80 = scmp.eq.s32.totalorder %s18, 0
    %p81 = por %p79, %p80
    %p82 = scmp.ne.s32.totalorder %s70, %s71
    %p83 = scmp.eq.s32.totalorder %s19, 1
    %p84 = por %p82, %p83
    %p86 = scmp.ne.s32.totalorder %s71, %s85
    %p87 = scmp.eq.s32.totalorder %s19, 0
    %p88 = por %p86, %p87
    %s90 = sadd.s32 %s89, 1
    %p93 = scmp.eq.s32.totalorder %s13, 1
    %p94 = scmp.ne.s32.totalorder %s89, %s91
    %p95 = scmp.eq.s32.totalorder %s13, 0
    %p96 = por %p94, %p95
    %p97 = scmp.ne.s32.totalorder %s89, %s91
    %p98 = scmp.eq.s32.totalorder %s18, 1
    %p99 = por %p97, %p98
    %p100 = scmp.ne.s32.totalorder %s91, %s92
    %p101 = scmp.eq.s32.totalorder %s18, 0
    %p102 = por %p100, %p101
    %p103 = scmp.ne.s32.totalorder %s91, %s92
    %p104 = scmp.eq.s32.totalorder %s19, 1
    %p105 = por %p103, %p104
    %p107 = scmp.ne.s32.totalorder %s92, %s106
    %p108 = scmp.eq.s32.totalorder %s19, 0
    %p109 = por %p107, %p108
    %s111 = sadd.s32 %s110, 1
    %p114 = scmp.eq.s32.totalorder %s13, 1
    %p115 = scmp.ne.s32.totalorder %s110, %s112
    %p116 = scmp.eq.s32.totalorder %s13, 0
    %p117 = por %p115, %p116
    %p118 = scmp.ne.s32.totalorder %s110, %s112
    %p119 = scmp.eq.s32.totalorder %s18, 1
    %p120 = por %p118, %p119
    %p121 = scmp.ne.s32.totalorder %s112, %s113
    %p122 = scmp.eq.s32.totalorder %s18, 0
    %p123 = por %p121, %p122
    %p124 = scmp.ne.s32.totalorder %s112, %s113
    %p125 = scmp.eq.s32.totalorder %s19, 1
    %p126 = por %p124, %p125
    %p128 = scmp.ne.s32.totalorder %s113, %s127
    %p129 = scmp.eq.s32.totalorder %s19, 0
    %p130 = por %p128, %p129
    %s132 = sadd.s32 %s131, 1
    %p135 = scmp.eq.s32.totalorder %s13, 1
    %p136 = scmp.ne.s32.totalorder %s131, %s133
    %p137 = scmp.eq.s32.totalorder %s13, 0
    %p138 = por %p136, %p137
    %p139 = scmp.ne.s32.totalorder %s131, %s133
    %p140 = scmp.eq.s32.totalorder %s18, 1
    %p141 = por %p139, %p140
    %p142 = scmp.ne.s32.totalorder %s133, %s134
    %p143 = scmp.eq.s32.totalorder %s18, 0
    %p144 = por %p142, %p143
    %p145 = scmp.ne.s32.totalorder %s133, %s134
    %p146 = scmp.eq.s32.totalorder %s19, 1
    %p147 = por %p145, %p146
    %p149 = scmp.ne.s32.totalorder %s134, %s148
    %p150 = scmp.eq.s32.totalorder %s19, 0
    %p151 = por %p149, %p150
    %s153 = sadd.s32 %s152, 1
    %p156 = scmp.eq.s32.totalorder %s13, 1
    %p157 = scmp.ne.s32.totalorder %s152, %s154
    %p158 = scmp.eq.s32.totalorder %s13, 0
    %p159 = por %p157, %p158
    %p160 = scmp.ne.s32.totalorder %s152, %s154
    %p161 = scmp.eq.s32.totalorder %s18, 1
    %p162 = por %p160, %p161
    %p163 = scmp.ne.s32.totalorder %s154, %s155
    %p164 = scmp.eq.s32.totalorder %s18, 0
    %p165 = por %p163, %p164
    %p166 = scmp.ne.s32.totalorder %s154, %s155
    %p167 = scmp.eq.s32.totalorder %s19, 1
    %p168 = por %p166, %p167
    %p170 = scmp.ne.s32.totalorder %s155, %s169
    %p171 = scmp.eq.s32.totalorder %s19, 0
    %p172 = por %p170, %p171
    %s173 = ssub.s32 %s13, %s20
    %p174 = scmp.eq.s32.totalorder %s173, 0
    %s176 = sadd.s32 %s175, 1
    %s177 = scalar_select %p174, %s175, %s176
    %p180 = pneg %p174
    %p181 = scmp.eq.s32.totalorder %s13, 1
    %p182 = por %p180, %p181
    %p183 = scmp.ne.s32.totalorder %s175, %s178
    %p184 = scmp.eq.s32.totalorder %s13, 0
    %p185 = por %p183, %p184
    %p186 = scmp.ne.s32.totalorder %s175, %s178
    %p187 = scmp.eq.s32.totalorder %s18, 1
    %p188 = por %p186, %p187
    %p189 = scmp.ne.s32.totalorder %s178, %s179
    %p190 = scmp.eq.s32.totalorder %s18, 0
    %p191 = por %p189, %p190
    %p192 = scmp.ne.s32.totalorder %s178, %s179
    %p193 = scmp.eq.s32.totalorder %s19, 1
    %p194 = por %p192, %p193
    %p196 = scmp.ne.s32.totalorder %s179, %s195
    %p197 = scmp.eq.s32.totalorder %s19, 0
    %p198 = por %p196, %p197
    %p199 = scmp.le.s32.totalorder 1, %s13
    %p200 = scmp.lt.s32.totalorder %s13, 3
    %p201 = pnand %p199, %p200
    %p202 = pneg %p201
    // Predicated region
    $region9: #{one_iteration_reverse_net.1} parent=5 // pred_check
      _
    $region10: #{one_iteration_reverse_net.1} parent=5 // pred_check_branch
      %204 = sbr.rel (%p201) target = $region12
    $region11: #{one_iteration_reverse_net.1} parent=5 // pred_region
      %s205 = ssub.s32 %s13, 1
      // Predicated region
      $region13: #{one_iteration_reverse_net.1} parent=11 // pred_check
        %p206 = pneg %p60
      $region14: #{one_iteration_reverse_net.1} parent=11 // pred_check_branch
        %208 = sbr.rel (%p206) target = $region16
      $region15: #{one_iteration_reverse_net.1} parent=11 // pred_region
        _
      $region16: #{one_iteration_reverse_net.1} parent=11 // pred_fallthru
        _
      // Predicated region
      $region17: #{one_iteration_reverse_net.1} parent=11 // pred_check
        %p209 = pneg %p81
      $region18: #{one_iteration_reverse_net.1} parent=11 // pred_check_branch
        %211 = sbr.rel (%p209) target = $region20
      $region19: #{one_iteration_reverse_net.1} parent=11 // pred_region
        _
      $region20: #{one_iteration_reverse_net.1} parent=11 // pred_fallthru
        _
      // Predicated region
      $region21: #{one_iteration_reverse_net.1} parent=11 // pred_check
        %p212 = pneg %p102
      $region22: #{one_iteration_reverse_net.1} parent=11 // pred_check_branch
        %214 = sbr.rel (%p212) target = $region24
      $region23: #{one_iteration_reverse_net.1} parent=11 // pred_region
        _
      $region24: #{one_iteration_reverse_net.1} parent=11 // pred_fallthru
        _
      // Predicated region
      $region25: #{one_iteration_reverse_net.1} parent=11 // pred_check
        %p215 = pneg %p123
      $region26: #{one_iteration_reverse_net.1} parent=11 // pred_check_branch
        %217 = sbr.rel (%p215) target = $region28
      $region27: #{one_iteration_reverse_net.1} parent=11 // pred_region
        _
      $region28: #{one_iteration_reverse_net.1} parent=11 // pred_fallthru
        _
      // Predicated region
      $region29: #{one_iteration_reverse_net.1} parent=11 // pred_check
        %p218 = pneg %p144
      $region30: #{one_iteration_reverse_net.1} parent=11 // pred_check_branch
        %220 = sbr.rel (%p218) target = $region32
      $region31: #{one_iteration_reverse_net.1} parent=11 // pred_region
        _
      $region32: #{one_iteration_reverse_net.1} parent=11 // pred_fallthru
        _
      // Predicated region
      $region33: #{one_iteration_reverse_net.1} parent=11 // pred_check
        %p221 = pneg %p165
      $region34: #{one_iteration_reverse_net.1} parent=11 // pred_check_branch
        %223 = sbr.rel (%p221) target = $region36
      $region35: #{one_iteration_reverse_net.1} parent=11 // pred_region
        _
      $region36: #{one_iteration_reverse_net.1} parent=11 // pred_fallthru
        _
    $region12: #{one_iteration_reverse_net.1} parent=5 // pred_fallthru
      _
    %p224 = scmp.lt.s32.totalorder %s13, 2
    // Predicated region
    $region37: #{one_iteration_reverse_net.1} parent=5 // pred_check
      %p225 = pneg %p224
    $region38: #{one_iteration_reverse_net.1} parent=5 // pred_check_branch
      %227 = sbr.rel (%p225) target = $region40
    $region39: #{one_iteration_reverse_net.1} parent=5 // pred_region
      // Predicated region
      $region41: #{one_iteration_reverse_net.1} parent=39 // pred_check
        %p228 = pneg %p33
      $region42: #{one_iteration_reverse_net.1} parent=39 // pred_check_branch
        %230 = sbr.rel (%p228) target = $region44
      $region43: #{one_iteration_reverse_net.1} parent=39 // pred_region
        %p231 = scmp.lt.s32.totalorder %s13, 1
        %s232 = scalar_select %p231, %s13, 1
        %s233 = smul.addr %s232, 2
        %s234 = smul.addr %s233, 4
        %s235 = scalar_lea.vmem %s0, %s234
      $region44: #{one_iteration_reverse_net.1} parent=39 // pred_fallthru
        _
    $region40: #{one_iteration_reverse_net.1} parent=5 // pred_fallthru
      _
    %p236 = scmp.le.s32.totalorder 1, %s13
    %p237 = scmp.lt.s32.totalorder %s13, 3
    %p238 = pnand %p236, %p237
    %p239 = pneg %p238
    // Predicated region
    $region45: #{one_iteration_reverse_net.1} parent=5 // pred_check
      _
    $region46: #{one_iteration_reverse_net.1} parent=5 // pred_check_branch
      %241 = sbr.rel (%p238) target = $region48
    $region47: #{one_iteration_reverse_net.1} parent=5 // pred_region
      %s242 = ssub.s32 %s13, 1
      %p243 = scmp.lt.s32.totalorder %s18, 1
      %s244 = scalar_select %p243, %s18, 1
      %s245 = smul.addr %s244, 2
      %s246 = smul.addr %s245, 4
      %s247 = scalar_lea.vmem %s0, %s246
      %p248 = pneg %p39
      %p249 = pneg %p36
      %p250 = pneg %p60
      %p251 = pneg %p57
      %p252 = pneg %p81
      %p253 = pneg %p78
      %p254 = pneg %p102
      %p255 = pneg %p99
      %p256 = pneg %p123
      %p257 = pneg %p120
      %p258 = pneg %p144
      %p259 = pneg %p141
      %p260 = pneg %p165
      %p261 = pneg %p162
      %p262 = pneg %p191
      %p263 = pneg %p188
      %p264 = scmp.lt.s32.totalorder %s18, 1
      %s265 = scalar_select %p264, %s18, 1
      %s266 = smul.addr %s265, 2
      %s267 = smul.addr %s266, 8
      %s268 = scalar_lea.vmem %s7, %s267
      %p269 = scmp.lt.s32.totalorder %s18, 1
      %s270 = scalar_select %p269, %s18, 1
      %s271 = smul.addr %s270, 2
      %s272 = smul.addr %s271, 4
      %s273 = scalar_lea.vmem %s0, %s272
      %p274 = scmp.lt.s32.totalorder %s18, 1
      %s275 = scalar_select %p274, %s18, 1
      %s276 = smul.addr %s275, 2
      %s277 = smul.addr %s276, 8
      %s278 = scalar_lea.vmem %s7, %s277
      %v280 = vld [vmem:[%s273] sm:$0xf]
      %v281 = vld [vmem:[%s273 + $0x4] sm:$0xf]
      %v283 = vunpack.c.l.b16 %v281
      %v284 = vpack.c.b16 %v283, %v283
      %v285 = vrot.slane %v284, 2
      %v287 = vunpack.c.l.b16 %v280
      %v288 = vpack.c.b16 %v283, %v287
      %v289 = vrot.slane %v288, 6
      %v290 = vpack.c.b16 %v287, %v287
      %v291 = vrot.slane %v290, 6
      %vm292 = vcmask 1041408
      %v295 = vsel %vm292, %v285, %v289
      %v297 = vsel %vm292, %v289, %v291
      %300 = vrot.lane.b32.xlu0 %v295, 80
      %v301 = vpop.permute.xlu0 %300
      %302 = vrot.lane.b32.xlu0 %v297, 80
      %v303 = vpop.permute.xlu0 %302
      %304 = vrot.lane.b32.xlu0 %v295, 16
      %v305 = vpop.permute.xlu0 %304
      %306 = vrot.lane.b32.xlu0 %v297, 16
      %v307 = vpop.permute.xlu0 %306
      %vm308 = vcmask 130048
      %v311 = vsel %vm308, %v301, %v305
      %v314 = vsel %vm308, %v303, %v307
      %vm315 = vcmask 654336
      %v316 = vsel %vm315, %v311, %v301
      %v317 = vsel %vm315, %v314, %v303
      %vm318 = vsmask.f32 7424
      %v319 = vshrl.u32 %v316, 16
      %v321 = vshll.u32 %v316, 16
      %v323 = vrot.slane %v321, 1
      %v324 = vor.u32 %v319, %v323
      %v325 = vshll.u32 %v317, 16
      %v327 = vrot.slane %v325, 1
      %v328 = vsel %vm318, %v324, %v327
      %v329 = vshrl.u32 %v317, 16
      %v331 = vor.u32 %v329, %v327
      %332 = vrot.lane.b32.xlu0 %v328, 96
      %v333 = vpop.permute.xlu0 %332
      %334 = vrot.lane.b32.xlu0 %v331, 96
      %v335 = vpop.permute.xlu0 %334
      %vm338 = vcmask 1046528
      %v339 = vrot.slane %v316, 1
      %v340 = vrot.slane %v317, 1
      %v341 = vsel %vm338, %v339, %v340
      %342 = vrot.lane.b32.xlu0 %v341, 64
      %v343 = vpop.permute.xlu0 %342
      %344 = vrot.lane.b32.xlu0 %v340, 64
      %v345 = vpop.permute.xlu0 %344
      %vm346 = vsmask.f32 6400
      %v347 = vrot.slane %v319, 1
      %v348 = vrot.slane %v321, 2
      %v349 = vor.u32 %v347, %v348
      %v350 = vrot.slane %v329, 1
      %v351 = vrot.slane %v325, 2
      %v352 = vor.u32 %v350, %v351
      %v353 = vsel %vm346, %v349, %v352
      %354 = vrot.lane.b32.xlu0 %v353, 32
      %v355 = vpop.permute.xlu0 %354
      %356 = vrot.lane.b32.xlu0 %v352, 32
      %v357 = vpop.permute.xlu0 %356
      %vm358 = vcmask 1045504
      %v359 = vrot.slane %v316, 2
      %v360 = vrot.slane %v317, 2
      %v361 = vsel %vm358, %v359, %v360
      %vm362 = vcmask 785408
      %v364 = vsel %vm362, %v316, %v333
      %v367 = vsel %vm362, %v317, %v335
      %vm369 = vcmask 523264
      %v371 = vsel %vm369, %v333, %v343
      %v374 = vsel %vm369, %v335, %v345
      %vm376 = vcmask 261120
      %v378 = vsel %vm376, %v343, %v355
      %v381 = vsel %vm376, %v345, %v357
      %v383 = vld [vmem:[%s1] sm:$0xff]
      %v384 = vld [vmem:[%s1 + $0x8] sm:$0xff]
      %v385 = vld [vmem:[%s1 + $0x10] sm:$0xf]
      %v386 = vld [vmem:[%s1 + $0x14] sm:$0xff]
      %v387 = vld [vmem:[%s1 + $0x1c] sm:$0xff]
      %v388 = vld [vmem:[%s1 + $0x24] sm:$0xf]
      %v389 = vld [vmem:[%s1 + $0x28] sm:$0xff]
      %v390 = vld [vmem:[%s1 + $0x30] sm:$0xff]
      %v391 = vld [vmem:[%s1 + $0x38] sm:$0xf]
      %v392 = vld [vmem:[%s1 + $0x3c] sm:$0xff]
      %v393 = vld [vmem:[%s1 + $0x44] sm:$0xff]
      %v394 = vld [vmem:[%s1 + $0x4c] sm:$0xf]
      %v395 = vld [vmem:[%s1 + $0x50] sm:$0xff]
      %v396 = vld [vmem:[%s1 + $0x58] sm:$0xff]
      %v397 = vld [vmem:[%s1 + $0x60] sm:$0xf]
      %v398 = vld [vmem:[%s1 + $0x64] sm:$0xff]
      %v399 = vld [vmem:[%s1 + $0x6c] sm:$0xff]
      %v400 = vld [vmem:[%s1 + $0x74] sm:$0xf]
      %v401 = vld [vmem:[%s1 + $0x78] sm:$0xff]
      %v402 = vld [vmem:[%s1 + $0x80] sm:$0xff]
      %v403 = vld [vmem:[%s1 + $0x88] sm:$0xf]
      %v404 = vld [vmem:[%s1 + $0x8c] sm:$0xff]
      %v405 = vld [vmem:[%s1 + $0x94] sm:$0xff]
      %v406 = vld [vmem:[%s1 + $0x9c] sm:$0xf]
      %v407 = vld [vmem:[%s1 + $0xa0] sm:$0xff]
      %v408 = vld [vmem:[%s1 + $0xa8] sm:$0xff]
      %v409 = vld [vmem:[%s1 + $0xb0] sm:$0xf]
      %v410 = vld [vmem:[%s1 + $0xb4] sm:$0xff]
      %v411 = vld [vmem:[%s1 + $0xbc] sm:$0xff]
      %v412 = vld [vmem:[%s1 + $0xc4] sm:$0xf]
      %v413 = vld [vmem:[%s1 + $0xc8] sm:$0xff]
      %v414 = vld [vmem:[%s1 + $0xd0] sm:$0xff]
      %v415 = vld [vmem:[%s1 + $0xd8] sm:$0xf]
      %v416 = vld [vmem:[%s1 + $0xdc] sm:$0xff]
      %v417 = vld [vmem:[%s1 + $0xe4] sm:$0xff]
      %v418 = vld [vmem:[%s1 + $0xec] sm:$0xf]
      %v419 = vld [vmem:[%s1 + $0xf0] sm:$0xff]
      %v420 = vld [vmem:[%s1 + $0xf8] sm:$0xff]
      %v421 = vld [vmem:[%s1 + $0x100] sm:$0xf]
      %v422 = vld [vmem:[%s1 + $0x104] sm:$0xff]
      %v423 = vld [vmem:[%s1 + $0x10c] sm:$0xff]
      %v424 = vld [vmem:[%s1 + $0x114] sm:$0xf]
      %v425 = vld [vmem:[%s1 + $0x118] sm:$0xff]
      %v426 = vld [vmem:[%s1 + $0x120] sm:$0xff]
      %v427 = vld [vmem:[%s1 + $0x128] sm:$0xf]
      %v428 = vld [vmem:[%s1 + $0x12c] sm:$0xff]
      %v429 = vld [vmem:[%s1 + $0x134] sm:$0xff]
      %v430 = vld [vmem:[%s1 + $0x13c] sm:$0xf]
      %v431 = vld [vmem:[%s1 + $0x140] sm:$0xff]
      %v432 = vld [vmem:[%s1 + $0x148] sm:$0xff]
      %v433 = vld [vmem:[%s1 + $0x150] sm:$0xf]
      %v434 = vld [vmem:[%s1 + $0x154] sm:$0xff]
      %v435 = vld [vmem:[%s1 + $0x15c] sm:$0xff]
      %v436 = vld [vmem:[%s1 + $0x164] sm:$0xf]
      %v437 = vld [vmem:[%s1 + $0x168] sm:$0xff]
      %v438 = vld [vmem:[%s1 + $0x170] sm:$0xff]
      %v439 = vld [vmem:[%s1 + $0x178] sm:$0xf]
      %v440 = vld [vmem:[%s1 + $0x17c] sm:$0xff]
      %v441 = vld [vmem:[%s1 + $0x184] sm:$0xff]
      %v442 = vld [vmem:[%s1 + $0x18c] sm:$0xf]
      %v443 = vld [vmem:[%s1 + $0x190] sm:$0xff]
      %v444 = vld [vmem:[%s1 + $0x198] sm:$0xff]
      %v445 = vld [vmem:[%s1 + $0x1a0] sm:$0xf]
      %v446 = vld [vmem:[%s1 + $0x1a4] sm:$0xff]
      %v447 = vld [vmem:[%s1 + $0x1ac] sm:$0xff]
      %v448 = vld [vmem:[%s1 + $0x1b4] sm:$0xf]
      %v449 = vld [vmem:[%s1 + $0x1b8] sm:$0xff]
      %v450 = vld [vmem:[%s1 + $0x1c0] sm:$0xff]
      %v451 = vld [vmem:[%s1 + $0x1c8] sm:$0xf]
      %v452 = vld [vmem:[%s1 + $0x1cc] sm:$0xff]
      %v453 = vld [vmem:[%s1 + $0x1d4] sm:$0xff]
      %v454 = vld [vmem:[%s1 + $0x1dc] sm:$0xf]
      %v455 = vld [vmem:[%s1 + $0x1e0] sm:$0xff]
      %v456 = vld [vmem:[%s1 + $0x1e8] sm:$0xff]
      %v457 = vld [vmem:[%s1 + $0x1f0] sm:$0xf]
      %v458 = vld [vmem:[%s1 + $0x1f4] sm:$0xff]
      %v459 = vld [vmem:[%s1 + $0x1fc] sm:$0xff]
      %v460 = vld [vmem:[%s1 + $0x204] sm:$0xf]
      %v461 = vld [vmem:[%s1 + $0x208] sm:$0xff]
      %v462 = vld [vmem:[%s1 + $0x210] sm:$0xff]
      %v463 = vld [vmem:[%s1 + $0x218] sm:$0xf]
      %v464 = vld [vmem:[%s1 + $0x21c] sm:$0xff]
      %v465 = vld [vmem:[%s1 + $0x224] sm:$0xff]
      %v466 = vld [vmem:[%s1 + $0x22c] sm:$0xf]
      %v467 = vld [vmem:[%s1 + $0x230] sm:$0xff]
      %v468 = vld [vmem:[%s1 + $0x238] sm:$0xff]
      %v469 = vld [vmem:[%s1 + $0x240] sm:$0xf]
      %v470 = vld [vmem:[%s1 + $0x244] sm:$0xff]
      %v471 = vld [vmem:[%s1 + $0x24c] sm:$0xff]
      %v472 = vld [vmem:[%s1 + $0x254] sm:$0xf]
      %v473 = vld [vmem:[%s1 + $0x258] sm:$0xff]
      %v474 = vld [vmem:[%s1 + $0x260] sm:$0xff]
      %v475 = vld [vmem:[%s1 + $0x268] sm:$0xf]
      %v476 = vld [vmem:[%s1 + $0x26c] sm:$0xff]
      %v477 = vld [vmem:[%s1 + $0x274] sm:$0xff]
      %v478 = vld [vmem:[%s1 + $0x27c] sm:$0xf]
      %v479 = vld [vmem:[%s1 + $0x280] sm:$0xff]
      %v480 = vld [vmem:[%s1 + $0x288] sm:$0xff]
      %v481 = vld [vmem:[%s1 + $0x290] sm:$0xf]
      %v482 = vld [vmem:[%s1 + $0x294] sm:$0xff]
      %v483 = vld [vmem:[%s1 + $0x29c] sm:$0xff]
      %v484 = vld [vmem:[%s1 + $0x2a4] sm:$0xf]
      %v485 = vld [vmem:[%s1 + $0x2a8] sm:$0xff]
      %v486 = vld [vmem:[%s1 + $0x2b0] sm:$0xff]
      %v487 = vld [vmem:[%s1 + $0x2b8] sm:$0xf]
      %v488 = vld [vmem:[%s1 + $0x2bc] sm:$0xff]
      %v489 = vld [vmem:[%s1 + $0x2c4] sm:$0xff]
      %v490 = vld [vmem:[%s1 + $0x2cc] sm:$0xf]
      %v491 = vld [vmem:[%s1 + $0x2d0] sm:$0xff]
      %v492 = vld [vmem:[%s1 + $0x2d8] sm:$0xff]
      %v493 = vld [vmem:[%s1 + $0x2e0] sm:$0xf]
      %v494 = vld [vmem:[%s1 + $0x2e4] sm:$0xff]
      %v495 = vld [vmem:[%s1 + $0x2ec] sm:$0xff]
      %v496 = vld [vmem:[%s1 + $0x2f4] sm:$0xf]
      %v497 = vld [vmem:[%s1 + $0x2f8] sm:$0xff]
      %v498 = vld [vmem:[%s1 + $0x300] sm:$0xff]
      %v499 = vld [vmem:[%s1 + $0x308] sm:$0xf]
      %v500 = vld [vmem:[%s1 + $0x30c] sm:$0xff]
      %v501 = vld [vmem:[%s1 + $0x314] sm:$0xff]
      %v502 = vld [vmem:[%s1 + $0x31c] sm:$0xf]
      %v503 = vld [vmem:[%s1 + $0x320] sm:$0xff]
      %v504 = vld [vmem:[%s1 + $0x328] sm:$0xff]
      %v505 = vld [vmem:[%s1 + $0x330] sm:$0xf]
      %v506 = vld [vmem:[%s1 + $0x334] sm:$0xff]
      %v507 = vld [vmem:[%s1 + $0x33c] sm:$0xff]
      %v508 = vld [vmem:[%s1 + $0x344] sm:$0xf]
      %v509 = vld [vmem:[%s1 + $0x348] sm:$0xff]
      %v510 = vld [vmem:[%s1 + $0x350] sm:$0xff]
      %v511 = vld [vmem:[%s1 + $0x358] sm:$0xf]
      %v512 = vld [vmem:[%s1 + $0x35c] sm:$0xff]
      %v513 = vld [vmem:[%s1 + $0x364] sm:$0xff]
      %v514 = vld [vmem:[%s1 + $0x36c] sm:$0xf]
      %v515 = vld [vmem:[%s1 + $0x370] sm:$0xff]
      %v516 = vld [vmem:[%s1 + $0x378] sm:$0xff]
      %v517 = vld [vmem:[%s1 + $0x380] sm:$0xf]
      %v518 = vld [vmem:[%s1 + $0x384] sm:$0xff]
      %v519 = vld [vmem:[%s1 + $0x38c] sm:$0xff]
      %v520 = vld [vmem:[%s1 + $0x394] sm:$0xf]
      %v521 = vld [vmem:[%s1 + $0x398] sm:$0xff]
      %v522 = vld [vmem:[%s1 + $0x3a0] sm:$0xff]
      %v523 = vld [vmem:[%s1 + $0x3a8] sm:$0xf]
      %v524 = vld [vmem:[%s1 + $0x3ac] sm:$0xff]
      %v525 = vld [vmem:[%s1 + $0x3b4] sm:$0xff]
      %v526 = vld [vmem:[%s1 + $0x3bc] sm:$0xf]
      %v527 = vld [vmem:[%s1 + $0x3c0] sm:$0xff]
      %v528 = vld [vmem:[%s1 + $0x3c8] sm:$0xff]
      %v529 = vld [vmem:[%s1 + $0x3d0] sm:$0xf]
      %v530 = vld [vmem:[%s1 + $0x3d4] sm:$0xff]
      %v531 = vld [vmem:[%s1 + $0x3dc] sm:$0xff]
      %v532 = vld [vmem:[%s1 + $0x3e4] sm:$0xf]
      %v533 = vld [vmem:[%s1 + $0x3e8] sm:$0xff]
      %v534 = vld [vmem:[%s1 + $0x3f0] sm:$0xff]
      %v535 = vld [vmem:[%s1 + $0x3f8] sm:$0xf]
      %v536 = vld [vmem:[%s1 + $0x3fc] sm:$0xff]
      %v537 = vld [vmem:[%s1 + $0x404] sm:$0xff]
      %v538 = vld [vmem:[%s1 + $0x40c] sm:$0xf]
      %v539 = vld [vmem:[%s1 + $0x410] sm:$0xff]
      %v540 = vld [vmem:[%s1 + $0x418] sm:$0xff]
      %v541 = vld [vmem:[%s1 + $0x420] sm:$0xf]
      %v542 = vld [vmem:[%s1 + $0x424] sm:$0xff]
      %v543 = vld [vmem:[%s1 + $0x42c] sm:$0xff]
      %v544 = vld [vmem:[%s1 + $0x434] sm:$0xf]
      %v545 = vld [vmem:[%s1 + $0x438] sm:$0xff]
      %v546 = vld [vmem:[%s1 + $0x440] sm:$0xff]
      %v547 = vld [vmem:[%s1 + $0x448] sm:$0xf]
      %v548 = vld [vmem:[%s1 + $0x44c] sm:$0xff]
      %v549 = vld [vmem:[%s1 + $0x454] sm:$0xff]
      %v550 = vld [vmem:[%s1 + $0x45c] sm:$0xf]
      %v551 = vld [vmem:[%s1 + $0x460] sm:$0xff]
      %v552 = vld [vmem:[%s1 + $0x468] sm:$0xff]
      %v553 = vld [vmem:[%s1 + $0x470] sm:$0xf]
      %v554 = vld [vmem:[%s1 + $0x474] sm:$0xff]
      %v555 = vld [vmem:[%s1 + $0x47c] sm:$0xff]
      %v556 = vld [vmem:[%s1 + $0x484] sm:$0xf]
      %v557 = vld [vmem:[%s1 + $0x488] sm:$0xff]
      %v558 = vld [vmem:[%s1 + $0x490] sm:$0xff]
      %v559 = vld [vmem:[%s1 + $0x498] sm:$0xf]
      %v560 = vld [vmem:[%s1 + $0x49c] sm:$0xff]
      %v561 = vld [vmem:[%s1 + $0x4a4] sm:$0xff]
      %v562 = vld [vmem:[%s1 + $0x4ac] sm:$0xf]
      %v563 = vld [vmem:[%s2] sm:$0x1f]
      %v565 = vlaneseq
      %v566 = vshrl.u32 %v565, 7
      %v567 = vsub.s32 0, %v566
      %v568 = vrot.slane %v563, %v567
      %v569 = vlaneseq
      %v570 = vshrl.u32 %v569, 7
      %v571 = vsub.s32 1, %v570
      %v572 = vrot.slane %v563, %v571
      %v573 = vlaneseq
      %v574 = vshrl.u32 %v573, 7
      %v575 = vsub.s32 2, %v574
      %v576 = vrot.slane %v563, %v575
      %v577 = vlaneseq
      %v578 = vshrl.u32 %v577, 7
      %v579 = vsub.s32 3, %v578
      %v580 = vrot.slane %v563, %v579
      %v581 = vlaneseq
      %v582 = vshrl.u32 %v581, 7
      %v583 = vsub.s32 4, %v582
      %v584 = vrot.slane %v563, %v583
      %v770 = vunpack.c.l.b16 %v383
      %v771 = vunpack.c.h.b16 %v383
      %v772 = vunpack.c.l.b16 %v384
      %v773 = vunpack.c.h.b16 %v384
      %v774 = vunpack.c.l.b16 %v385
      %v775 = vunpack.c.l.b16 %v386
      %v776 = vunpack.c.h.b16 %v386
      %v777 = vunpack.c.l.b16 %v387
      %v778 = vunpack.c.h.b16 %v387
      %v779 = vunpack.c.l.b16 %v388
      %v780 = vunpack.c.l.b16 %v389
      %v781 = vunpack.c.h.b16 %v389
      %v782 = vunpack.c.l.b16 %v390
      %v783 = vunpack.c.h.b16 %v390
      %v784 = vunpack.c.l.b16 %v391
      %v785 = vunpack.c.l.b16 %v392
      %v786 = vunpack.c.h.b16 %v392
      %v787 = vunpack.c.l.b16 %v393
      %v788 = vunpack.c.h.b16 %v393
      %v789 = vunpack.c.l.b16 %v394
      %v790 = vunpack.c.l.b16 %v395
      %v791 = vunpack.c.h.b16 %v395
      %v792 = vunpack.c.l.b16 %v396
      %v793 = vunpack.c.h.b16 %v396
      %v794 = vunpack.c.l.b16 %v397
      %v795 = vunpack.c.l.b16 %v398
      %v796 = vunpack.c.h.b16 %v398
      %v797 = vunpack.c.l.b16 %v399
      %v798 = vunpack.c.h.b16 %v399
      %v799 = vunpack.c.l.b16 %v400
      %v800 = vunpack.c.l.b16 %v401
      %v801 = vunpack.c.h.b16 %v401
      %v802 = vunpack.c.l.b16 %v402
      %v803 = vunpack.c.h.b16 %v402
      %v804 = vunpack.c.l.b16 %v403
      %v805 = vunpack.c.l.b16 %v404
      %v806 = vunpack.c.h.b16 %v404
      %v807 = vunpack.c.l.b16 %v405
      %v808 = vunpack.c.h.b16 %v405
      %v809 = vunpack.c.l.b16 %v406
      %v810 = vunpack.c.l.b16 %v407
      %v811 = vunpack.c.h.b16 %v407
      %v812 = vunpack.c.l.b16 %v408
      %v813 = vunpack.c.h.b16 %v408
      %v814 = vunpack.c.l.b16 %v409
      %v815 = vunpack.c.l.b16 %v410
      %v816 = vunpack.c.h.b16 %v410
      %v817 = vunpack.c.l.b16 %v411
      %v818 = vunpack.c.h.b16 %v411
      %v819 = vunpack.c.l.b16 %v412
      %v820 = vunpack.c.l.b16 %v413
      %v821 = vunpack.c.h.b16 %v413
      %v822 = vunpack.c.l.b16 %v414
      %v823 = vunpack.c.h.b16 %v414
      %v824 = vunpack.c.l.b16 %v415
      %v825 = vunpack.c.l.b16 %v416
      %v826 = vunpack.c.h.b16 %v416
      %v827 = vunpack.c.l.b16 %v417
      %v828 = vunpack.c.h.b16 %v417
      %v829 = vunpack.c.l.b16 %v418
      %v830 = vunpack.c.l.b16 %v419
      %v831 = vunpack.c.h.b16 %v419
      %v832 = vunpack.c.l.b16 %v420
      %v833 = vunpack.c.h.b16 %v420
      %v834 = vunpack.c.l.b16 %v421
      %v835 = vunpack.c.l.b16 %v422
      %v836 = vunpack.c.h.b16 %v422
      %v837 = vunpack.c.l.b16 %v423
      %v838 = vunpack.c.h.b16 %v423
      %v839 = vunpack.c.l.b16 %v424
      %v840 = vunpack.c.l.b16 %v425
      %v841 = vunpack.c.h.b16 %v425
      %v842 = vunpack.c.l.b16 %v426
      %v843 = vunpack.c.h.b16 %v426
      %v844 = vunpack.c.l.b16 %v427
      %v845 = vunpack.c.l.b16 %v428
      %v846 = vunpack.c.h.b16 %v428
      %v847 = vunpack.c.l.b16 %v429
      %v848 = vunpack.c.h.b16 %v429
      %v849 = vunpack.c.l.b16 %v430
      %v850 = vunpack.c.l.b16 %v431
      %v851 = vunpack.c.h.b16 %v431
      %v852 = vunpack.c.l.b16 %v432
      %v853 = vunpack.c.h.b16 %v432
      %v854 = vunpack.c.l.b16 %v433
      %v855 = vunpack.c.l.b16 %v434
      %v856 = vunpack.c.h.b16 %v434
      %v857 = vunpack.c.l.b16 %v435
      %v858 = vunpack.c.h.b16 %v435
      %v859 = vunpack.c.l.b16 %v436
      %v860 = vunpack.c.l.b16 %v437
      %v861 = vunpack.c.h.b16 %v437
      %v862 = vunpack.c.l.b16 %v438
      %v863 = vunpack.c.h.b16 %v438
      %v864 = vunpack.c.l.b16 %v439
      %v865 = vunpack.c.l.b16 %v440
      %v866 = vunpack.c.h.b16 %v440
      %v867 = vunpack.c.l.b16 %v441
      %v868 = vunpack.c.h.b16 %v441
      %v869 = vunpack.c.l.b16 %v442
      %v870 = vunpack.c.l.b16 %v443
      %v871 = vunpack.c.h.b16 %v443
      %v872 = vunpack.c.l.b16 %v444
      %v873 = vunpack.c.h.b16 %v444
      %v874 = vunpack.c.l.b16 %v445
      %v875 = vunpack.c.l.b16 %v446
      %v876 = vunpack.c.h.b16 %v446
      %v877 = vunpack.c.l.b16 %v447
      %v878 = vunpack.c.h.b16 %v447
      %v879 = vunpack.c.l.b16 %v448
      %v880 = vunpack.c.l.b16 %v449
      %v881 = vunpack.c.h.b16 %v449
      %v882 = vunpack.c.l.b16 %v450
      %v883 = vunpack.c.h.b16 %v450
      %v884 = vunpack.c.l.b16 %v451
      %v885 = vunpack.c.l.b16 %v452
      %v886 = vunpack.c.h.b16 %v452
      %v887 = vunpack.c.l.b16 %v453
      %v888 = vunpack.c.h.b16 %v453
      %v889 = vunpack.c.l.b16 %v454
      %v890 = vunpack.c.l.b16 %v455
      %v891 = vunpack.c.h.b16 %v455
      %v892 = vunpack.c.l.b16 %v456
      %v893 = vunpack.c.h.b16 %v456
      %v894 = vunpack.c.l.b16 %v457
      %v895 = vunpack.c.l.b16 %v458
      %v896 = vunpack.c.h.b16 %v458
      %v897 = vunpack.c.l.b16 %v459
      %v898 = vunpack.c.h.b16 %v459
      %v899 = vunpack.c.l.b16 %v460
      %v900 = vunpack.c.l.b16 %v461
      %v901 = vunpack.c.h.b16 %v461
      %v902 = vunpack.c.l.b16 %v462
      %v903 = vunpack.c.h.b16 %v462
      %v904 = vunpack.c.l.b16 %v463
      %v905 = vunpack.c.l.b16 %v464
      %v906 = vunpack.c.h.b16 %v464
      %v907 = vunpack.c.l.b16 %v465
      %v908 = vunpack.c.h.b16 %v465
      %v909 = vunpack.c.l.b16 %v466
      %v910 = vunpack.c.l.b16 %v467
      %v911 = vunpack.c.h.b16 %v467
      %v912 = vunpack.c.l.b16 %v468
      %v913 = vunpack.c.h.b16 %v468
      %v914 = vunpack.c.l.b16 %v469
      %v915 = vunpack.c.l.b16 %v470
      %v916 = vunpack.c.h.b16 %v470
      %v917 = vunpack.c.l.b16 %v471
      %v918 = vunpack.c.h.b16 %v471
      %v919 = vunpack.c.l.b16 %v472
      %v920 = vunpack.c.l.b16 %v473
      %v921 = vunpack.c.h.b16 %v473
      %v922 = vunpack.c.l.b16 %v474
      %v923 = vunpack.c.h.b16 %v474
      %v924 = vunpack.c.l.b16 %v475
      %v925 = vunpack.c.l.b16 %v476
      %v926 = vunpack.c.h.b16 %v476
      %v927 = vunpack.c.l.b16 %v477
      %v928 = vunpack.c.h.b16 %v477
      %v929 = vunpack.c.l.b16 %v478
      %v930 = vunpack.c.l.b16 %v479
      %v931 = vunpack.c.h.b16 %v479
      %v932 = vunpack.c.l.b16 %v480
      %v933 = vunpack.c.h.b16 %v480
      %v934 = vunpack.c.l.b16 %v481
      %v935 = vunpack.c.l.b16 %v482
      %v936 = vunpack.c.h.b16 %v482
      %v937 = vunpack.c.l.b16 %v483
      %v938 = vunpack.c.h.b16 %v483
      %v939 = vunpack.c.l.b16 %v484
      %v940 = vunpack.c.l.b16 %v485
      %v941 = vunpack.c.h.b16 %v485
      %v942 = vunpack.c.l.b16 %v486
      %v943 = vunpack.c.h.b16 %v486
      %v944 = vunpack.c.l.b16 %v487
      %v945 = vunpack.c.l.b16 %v488
      %v946 = vunpack.c.h.b16 %v488
      %v947 = vunpack.c.l.b16 %v489
      %v948 = vunpack.c.h.b16 %v489
      %v949 = vunpack.c.l.b16 %v490
      %v950 = vunpack.c.l.b16 %v491
      %v951 = vunpack.c.h.b16 %v491
      %v952 = vunpack.c.l.b16 %v492
      %v953 = vunpack.c.h.b16 %v492
      %v954 = vunpack.c.l.b16 %v493
      %v955 = vunpack.c.l.b16 %v494
      %v956 = vunpack.c.h.b16 %v494
      %v957 = vunpack.c.l.b16 %v495
      %v958 = vunpack.c.h.b16 %v495
      %v959 = vunpack.c.l.b16 %v496
      %v960 = vunpack.c.l.b16 %v497
      %v961 = vunpack.c.h.b16 %v497
      %v962 = vunpack.c.l.b16 %v498
      %v963 = vunpack.c.h.b16 %v498
      %v964 = vunpack.c.l.b16 %v499
      %v965 = vunpack.c.l.b16 %v500
      %v966 = vunpack.c.h.b16 %v500
      %v967 = vunpack.c.l.b16 %v501
      %v968 = vunpack.c.h.b16 %v501
      %v969 = vunpack.c.l.b16 %v502
      %v970 = vunpack.c.l.b16 %v503
      %v971 = vunpack.c.h.b16 %v503
      %v972 = vunpack.c.l.b16 %v504
      %v973 = vunpack.c.h.b16 %v504
      %v974 = vunpack.c.l.b16 %v505
      %v975 = vunpack.c.l.b16 %v506
      %v976 = vunpack.c.h.b16 %v506
      %v977 = vunpack.c.l.b16 %v507
      %v978 = vunpack.c.h.b16 %v507
      %v979 = vunpack.c.l.b16 %v508
      %v980 = vunpack.c.l.b16 %v509
      %v981 = vunpack.c.h.b16 %v509
      %v982 = vunpack.c.l.b16 %v510
      %v983 = vunpack.c.h.b16 %v510
      %v984 = vunpack.c.l.b16 %v511
      %v985 = vunpack.c.l.b16 %v512
      %v986 = vunpack.c.h.b16 %v512
      %v987 = vunpack.c.l.b16 %v513
      %v988 = vunpack.c.h.b16 %v513
      %v989 = vunpack.c.l.b16 %v514
      %v990 = vunpack.c.l.b16 %v515
      %v991 = vunpack.c.h.b16 %v515
      %v992 = vunpack.c.l.b16 %v516
      %v993 = vunpack.c.h.b16 %v516
      %v994 = vunpack.c.l.b16 %v517
      %v995 = vunpack.c.l.b16 %v518
      %v996 = vunpack.c.h.b16 %v518
      %v997 = vunpack.c.l.b16 %v519
      %v998 = vunpack.c.h.b16 %v519
      %v999 = vunpack.c.l.b16 %v520
      %v1000 = vunpack.c.l.b16 %v521
      %v1001 = vunpack.c.h.b16 %v521
      %v1002 = vunpack.c.l.b16 %v522
      %v1003 = vunpack.c.h.b16 %v522
      %v1004 = vunpack.c.l.b16 %v523
      %v1005 = vunpack.c.l.b16 %v524
      %v1006 = vunpack.c.h.b16 %v524
      %v1007 = vunpack.c.l.b16 %v525
      %v1008 = vunpack.c.h.b16 %v525
      %v1009 = vunpack.c.l.b16 %v526
      %v1010 = vunpack.c.l.b16 %v527
      %v1011 = vunpack.c.h.b16 %v527
      %v1012 = vunpack.c.l.b16 %v528
      %v1013 = vunpack.c.h.b16 %v528
      %v1014 = vunpack.c.l.b16 %v529
      %v1015 = vunpack.c.l.b16 %v530
      %v1016 = vunpack.c.h.b16 %v530
      %v1017 = vunpack.c.l.b16 %v531
      %v1018 = vunpack.c.h.b16 %v531
      %v1019 = vunpack.c.l.b16 %v532
      %v1020 = vunpack.c.l.b16 %v533
      %v1021 = vunpack.c.h.b16 %v533
      %v1022 = vunpack.c.l.b16 %v534
      %v1023 = vunpack.c.h.b16 %v534
      %v1024 = vunpack.c.l.b16 %v535
      %v1025 = vunpack.c.l.b16 %v536
      %v1026 = vunpack.c.h.b16 %v536
      %v1027 = vunpack.c.l.b16 %v537
      %v1028 = vunpack.c.h.b16 %v537
      %v1029 = vunpack.c.l.b16 %v538
      %v1030 = vunpack.c.l.b16 %v539
      %v1031 = vunpack.c.h.b16 %v539
      %v1032 = vunpack.c.l.b16 %v540
      %v1033 = vunpack.c.h.b16 %v540
      %v1034 = vunpack.c.l.b16 %v541
      %v1035 = vunpack.c.l.b16 %v542
      %v1036 = vunpack.c.h.b16 %v542
      %v1037 = vunpack.c.l.b16 %v543
      %v1038 = vunpack.c.h.b16 %v543
      %v1039 = vunpack.c.l.b16 %v544
      %v1040 = vunpack.c.l.b16 %v545
      %v1041 = vunpack.c.h.b16 %v545
      %v1042 = vunpack.c.l.b16 %v546
      %v1043 = vunpack.c.h.b16 %v546
      %v1044 = vunpack.c.l.b16 %v547
      %v1045 = vunpack.c.l.b16 %v548
      %v1046 = vunpack.c.h.b16 %v548
      %v1047 = vunpack.c.l.b16 %v549
      %v1048 = vunpack.c.h.b16 %v549
      %v1049 = vunpack.c.l.b16 %v550
      %v1050 = vunpack.c.l.b16 %v551
      %v1051 = vunpack.c.h.b16 %v551
      %v1052 = vunpack.c.l.b16 %v552
      %v1053 = vunpack.c.h.b16 %v552
      %v1054 = vunpack.c.l.b16 %v553
      %v1055 = vunpack.c.l.b16 %v554
      %v1056 = vunpack.c.h.b16 %v554
      %v1057 = vunpack.c.l.b16 %v555
      %v1058 = vunpack.c.h.b16 %v555
      %v1059 = vunpack.c.l.b16 %v556
      %v1060 = vunpack.c.l.b16 %v557
      %v1061 = vunpack.c.h.b16 %v557
      %v1062 = vunpack.c.l.b16 %v558
      %v1063 = vunpack.c.h.b16 %v558
      %v1064 = vunpack.c.l.b16 %v559
      %v1065 = vunpack.c.l.b16 %v560
      %v1066 = vunpack.c.h.b16 %v560
      %v1067 = vunpack.c.l.b16 %v561
      %v1068 = vunpack.c.h.b16 %v561
      %v1069 = vunpack.c.l.b16 %v562
      %v1070 = vpack.c.b16 %v775, %v770
      %v1071 = vpack.c.b16 %v776, %v771
      %v1072 = vpack.c.b16 %v777, %v772
      %v1073 = vpack.c.b16 %v778, %v773
      %v1074 = vpack.c.b16 %v779, %v774
      %v1075 = vpack.c.b16 %v785, %v780
      %v1076 = vpack.c.b16 %v786, %v781
      %v1077 = vpack.c.b16 %v787, %v782
      %v1078 = vpack.c.b16 %v788, %v783
      %v1079 = vpack.c.b16 %v789, %v784
      %v1080 = vpack.c.b16 %v795, %v790
      %v1081 = vpack.c.b16 %v796, %v791
      %v1082 = vpack.c.b16 %v797, %v792
      %v1083 = vpack.c.b16 %v798, %v793
      %v1084 = vpack.c.b16 %v799, %v794
      %v1085 = vpack.c.b16 %v805, %v800
      %v1086 = vpack.c.b16 %v806, %v801
      %v1087 = vpack.c.b16 %v807, %v802
      %v1088 = vpack.c.b16 %v808, %v803
      %v1089 = vpack.c.b16 %v809, %v804
      %v1090 = vpack.c.b16 %v815, %v810
      %v1091 = vpack.c.b16 %v816, %v811
      %v1092 = vpack.c.b16 %v817, %v812
      %v1093 = vpack.c.b16 %v818, %v813
      %v1094 = vpack.c.b16 %v819, %v814
      %v1095 = vpack.c.b16 %v825, %v820
      %v1096 = vpack.c.b16 %v826, %v821
      %v1097 = vpack.c.b16 %v827, %v822
      %v1098 = vpack.c.b16 %v828, %v823
      %v1099 = vpack.c.b16 %v829, %v824
      %v1100 = vpack.c.b16 %v835, %v830
      %v1101 = vpack.c.b16 %v836, %v831
      %v1102 = vpack.c.b16 %v837, %v832
      %v1103 = vpack.c.b16 %v838, %v833
      %v1104 = vpack.c.b16 %v839, %v834
      %v1105 = vpack.c.b16 %v845, %v840
      %v1106 = vpack.c.b16 %v846, %v841
      %v1107 = vpack.c.b16 %v847, %v842
      %v1108 = vpack.c.b16 %v848, %v843
      %v1109 = vpack.c.b16 %v849, %v844
      %v1110 = vpack.c.b16 %v855, %v850
      %v1111 = vpack.c.b16 %v856, %v851
      %v1112 = vpack.c.b16 %v857, %v852
      %v1113 = vpack.c.b16 %v858, %v853
      %v1114 = vpack.c.b16 %v859, %v854
      %v1115 = vpack.c.b16 %v865, %v860
      %v1116 = vpack.c.b16 %v866, %v861
      %v1117 = vpack.c.b16 %v867, %v862
      %v1118 = vpack.c.b16 %v868, %v863
      %v1119 = vpack.c.b16 %v869, %v864
      %v1120 = vpack.c.b16 %v875, %v870
      %v1121 = vpack.c.b16 %v876, %v871
      %v1122 = vpack.c.b16 %v877, %v872
      %v1123 = vpack.c.b16 %v878, %v873
      %v1124 = vpack.c.b16 %v879, %v874
      %v1125 = vpack.c.b16 %v885, %v880
      %v1126 = vpack.c.b16 %v886, %v881
      %v1127 = vpack.c.b16 %v887, %v882
      %v1128 = vpack.c.b16 %v888, %v883
      %v1129 = vpack.c.b16 %v889, %v884
      %v1130 = vpack.c.b16 %v895, %v890
      %v1131 = vpack.c.b16 %v896, %v891
      %v1132 = vpack.c.b16 %v897, %v892
      %v1133 = vpack.c.b16 %v898, %v893
      %v1134 = vpack.c.b16 %v899, %v894
      %v1135 = vpack.c.b16 %v905, %v900
      %v1136 = vpack.c.b16 %v906, %v901
      %v1137 = vpack.c.b16 %v907, %v902
      %v1138 = vpack.c.b16 %v908, %v903
      %v1139 = vpack.c.b16 %v909, %v904
      %v1140 = vpack.c.b16 %v915, %v910
      %v1141 = vpack.c.b16 %v916, %v911
      %v1142 = vpack.c.b16 %v917, %v912
      %v1143 = vpack.c.b16 %v918, %v913
      %v1144 = vpack.c.b16 %v919, %v914
      %v1145 = vpack.c.b16 %v925, %v920
      %v1146 = vpack.c.b16 %v926, %v921
      %v1147 = vpack.c.b16 %v927, %v922
      %v1148 = vpack.c.b16 %v928, %v923
      %v1149 = vpack.c.b16 %v929, %v924
      %v1150 = vpack.c.b16 %v935, %v930
      %v1151 = vpack.c.b16 %v936, %v931
      %v1152 = vpack.c.b16 %v937, %v932
      %v1153 = vpack.c.b16 %v938, %v933
      %v1154 = vpack.c.b16 %v939, %v934
      %v1155 = vpack.c.b16 %v945, %v940
      %v1156 = vpack.c.b16 %v946, %v941
      %v1157 = vpack.c.b16 %v947, %v942
      %v1158 = vpack.c.b16 %v948, %v943
      %v1159 = vpack.c.b16 %v949, %v944
      %v1160 = vpack.c.b16 %v955, %v950
      %v1161 = vpack.c.b16 %v956, %v951
      %v1162 = vpack.c.b16 %v957, %v952
      %v1163 = vpack.c.b16 %v958, %v953
      %v1164 = vpack.c.b16 %v959, %v954
      %v1165 = vpack.c.b16 %v965, %v960
      %v1166 = vpack.c.b16 %v966, %v961
      %v1167 = vpack.c.b16 %v967, %v962
      %v1168 = vpack.c.b16 %v968, %v963
      %v1169 = vpack.c.b16 %v969, %v964
      %v1170 = vpack.c.b16 %v975, %v970
      %v1171 = vpack.c.b16 %v976, %v971
      %v1172 = vpack.c.b16 %v977, %v972
      %v1173 = vpack.c.b16 %v978, %v973
      %v1174 = vpack.c.b16 %v979, %v974
      %v1175 = vpack.c.b16 %v985, %v980
      %v1176 = vpack.c.b16 %v986, %v981
      %v1177 = vpack.c.b16 %v987, %v982
      %v1178 = vpack.c.b16 %v988, %v983
      %v1179 = vpack.c.b16 %v989, %v984
      %v1180 = vpack.c.b16 %v995, %v990
      %v1181 = vpack.c.b16 %v996, %v991
      %v1182 = vpack.c.b16 %v997, %v992
      %v1183 = vpack.c.b16 %v998, %v993
      %v1184 = vpack.c.b16 %v999, %v994
      %v1185 = vpack.c.b16 %v1005, %v1000
      %v1186 = vpack.c.b16 %v1006, %v1001
      %v1187 = vpack.c.b16 %v1007, %v1002
      %v1188 = vpack.c.b16 %v1008, %v1003
      %v1189 = vpack.c.b16 %v1009, %v1004
      %v1190 = vpack.c.b16 %v1015, %v1010
      %v1191 = vpack.c.b16 %v1016, %v1011
      %v1192 = vpack.c.b16 %v1017, %v1012
      %v1193 = vpack.c.b16 %v1018, %v1013
      %v1194 = vpack.c.b16 %v1019, %v1014
      %v1195 = vpack.c.b16 %v1025, %v1020
      %v1196 = vpack.c.b16 %v1026, %v1021
      %v1197 = vpack.c.b16 %v1027, %v1022
      %v1198 = vpack.c.b16 %v1028, %v1023
      %v1199 = vpack.c.b16 %v1029, %v1024
      %v1200 = vpack.c.b16 %v1035, %v1030
      %v1201 = vpack.c.b16 %v1036, %v1031
      %v1202 = vpack.c.b16 %v1037, %v1032
      %v1203 = vpack.c.b16 %v1038, %v1033
      %v1204 = vpack.c.b16 %v1039, %v1034
      %v1205 = vpack.c.b16 %v1045, %v1040
      %v1206 = vpack.c.b16 %v1046, %v1041
      %v1207 = vpack.c.b16 %v1047, %v1042
      %v1208 = vpack.c.b16 %v1048, %v1043
      %v1209 = vpack.c.b16 %v1049, %v1044
      %v1210 = vpack.c.b16 %v1055, %v1050
      %v1211 = vpack.c.b16 %v1056, %v1051
      %v1212 = vpack.c.b16 %v1057, %v1052
      %v1213 = vpack.c.b16 %v1058, %v1053
      %v1214 = vpack.c.b16 %v1059, %v1054
      %v1215 = vpack.c.b16 %v1065, %v1060
      %v1216 = vpack.c.b16 %v1066, %v1061
      %v1217 = vpack.c.b16 %v1067, %v1062
      %v1218 = vpack.c.b16 %v1068, %v1063
      %v1219 = vpack.c.b16 %v1069, %v1064
      %v1371 = vsel %vm362, %v361, 0
      %v1374 = vsel %vm362, %v360, 0
      %1376 = vmatprep.subr.bf16.mxu0 %v1106
      %1377 = vmatpush1.bf16.msra.mxu0 %v1105
      %1378 = vmatprep.subr.bf16.mxu0 %v1101
      %1379 = vmatpush1.bf16.msra.mxu0 %v1100
      %1380 = vmatprep.subr.bf16.mxu0 %v1096
      %1381 = vmatpush1.bf16.msra.mxu0 %v1095
      %1382 = vmatprep.subr.bf16.mxu0 %v1091
      %1383 = vmatpush1.bf16.msra.mxu0 %v1090
      %1384 = vmatprep.subr.bf16.mxu0 %v1086
      %1385 = vmatpush1.bf16.msra.mxu0 %v1085
      %1386 = vmatprep.subr.bf16.mxu0 %v1081
      %1387 = vmatpush1.bf16.msra.mxu0 %v1080
      %1388 = vmatprep.subr.bf16.mxu0 %v1076
      %1389 = vmatpush1.bf16.msra.mxu0 %v1075
      %1390 = vmatprep.subr.bf16.mxu0 %v1071
      %1391 = vmatpush1.bf16.msra.mxu0 %v1070
      %1392 = vmatprep.subr.bf16.mxu0 %v1146
      %1393 = vmatpush2.bf16.msra.mxu0 %v1145
      %1394 = vmatprep.subr.bf16.mxu0 %v1141
      %1395 = vmatpush2.bf16.msra.mxu0 %v1140
      %1396 = vmatprep.subr.bf16.mxu0 %v1136
      %1397 = vmatpush2.bf16.msra.mxu0 %v1135
      %1398 = vmatprep.subr.bf16.mxu0 %v1131
      %1399 = vmatpush2.bf16.msra.mxu0 %v1130
      %1400 = vmatprep.subr.bf16.mxu0 %v1126
      %1401 = vmatpush2.bf16.msra.mxu0 %v1125
      %1402 = vmatprep.subr.bf16.mxu0 %v1121
      %1403 = vmatpush2.bf16.msra.mxu0 %v1120
      %1404 = vmatprep.subr.bf16.mxu0 %v1116
      %1405 = vmatpush2.bf16.msra.mxu0 %v1115
      %1406 = vmatprep.subr.bf16.mxu0 %v1111
      %1407 = vmatpush2.bf16.msra.mxu0 %v1110
      %1408 = vmatprep.mubr.bf16.mxu0 %v371
      %1409 = vmatmul.mubr.bf16.gmra.mxu0 %v364
      %v1410 = vpop.f32.mrf.mxu0
      %v1411 = vadd.f32 %v568, %v1410
      %v1412 = vpop.f32.mrf.mxu0
      %v1413 = vadd.f32 %v572, %v1412
      %v1414 = vpop.f32.mrf.mxu0
      %v1415 = vadd.f32 %v568, %v1414
      %v1416 = vpop.f32.mrf.mxu0
      %v1417 = vadd.f32 %v572, %v1416
      %1418 = vmatprep.mubr.bf16.mxu0 %v374
      %1419 = vmatmul.mubr.bf16.gmra.mxu0 %v367
      %v1420 = vpop.f32.mrf.mxu0
      %v1421 = vadd.f32 %v568, %v1420
      %v1422 = vpop.f32.mrf.mxu0
      %v1423 = vadd.f32 %v572, %v1422
      %v1424 = vpop.f32.mrf.mxu0
      %v1425 = vpop.f32.mrf.mxu0
      %1426 = vdwg.mxu0
      %1427 = vmatprep.subr.bf16.mxu0 %v1186
      %1428 = vmatpush1.bf16.msra.mxu0 %v1185
      %1429 = vmatprep.subr.bf16.mxu0 %v1181
      %1430 = vmatpush1.bf16.msra.mxu0 %v1180
      %1431 = vmatprep.subr.bf16.mxu0 %v1176
      %1432 = vmatpush1.bf16.msra.mxu0 %v1175
      %1433 = vmatprep.subr.bf16.mxu0 %v1171
      %1434 = vmatpush1.bf16.msra.mxu0 %v1170
      %1435 = vmatprep.subr.bf16.mxu0 %v1166
      %1436 = vmatpush1.bf16.msra.mxu0 %v1165
      %1437 = vmatprep.subr.bf16.mxu0 %v1161
      %1438 = vmatpush1.bf16.msra.mxu0 %v1160
      %1439 = vmatprep.subr.bf16.mxu0 %v1156
      %1440 = vmatpush1.bf16.msra.mxu0 %v1155
      %1441 = vmatprep.subr.bf16.mxu0 %v1151
      %1442 = vmatpush1.bf16.msra.mxu0 %v1150
      %1443 = vmatprep.subr.bf16.mxu0 0
      %1444 = vmatpush2.bf16.msra.mxu0 0
      %1445 = vmatprep.subr.bf16.mxu0 0
      %1446 = vmatpush2.bf16.msra.mxu0 0
      %1447 = vmatprep.subr.bf16.mxu0 %v1216
      %1448 = vmatpush2.bf16.msra.mxu0 %v1215
      %1449 = vmatprep.subr.bf16.mxu0 %v1211
      %1450 = vmatpush2.bf16.msra.mxu0 %v1210
      %1451 = vmatprep.subr.bf16.mxu0 %v1206
      %1452 = vmatpush2.bf16.msra.mxu0 %v1205
      %1453 = vmatprep.subr.bf16.mxu0 %v1201
      %1454 = vmatpush2.bf16.msra.mxu0 %v1200
      %1455 = vmatprep.subr.bf16.mxu0 %v1196
      %1456 = vmatpush2.bf16.msra.mxu0 %v1195
      %1457 = vmatprep.subr.bf16.mxu0 %v1191
      %1458 = vmatpush2.bf16.msra.mxu0 %v1190
      %1459 = vmatprep.mubr.bf16.mxu0 %v1371
      %1460 = vmatmul.mubr.bf16.gmra.mxu0 %v378
      %v1461 = vpop.f32.mrf.mxu0
      %v1462 = vadd.f32 %v1411, %v1461
      %v1463 = vpop.f32.mrf.mxu0
      %v1464 = vadd.f32 %v1413, %v1463
      %v1465 = vpop.f32.mrf.mxu0
      %v1466 = vadd.f32 %v1415, %v1465
      %v1467 = vpop.f32.mrf.mxu0
      %v1468 = vadd.f32 %v1417, %v1467
      %1469 = vmatprep.mubr.bf16.mxu0 %v1374
      %1470 = vmatmul.mubr.bf16.gmra.mxu0 %v381
      %v1471 = vpop.f32.mrf.mxu0
      %v1472 = vadd.f32 %v1421, %v1471
      %v1473 = vpop.f32.mrf.mxu0
      %v1474 = vadd.f32 %v1423, %v1473
      %v1475 = vpop.f32.mrf.mxu0
      %v1476 = vpop.f32.mrf.mxu0
      %1477 = vdwg.mxu0
      %1478 = vmatprep.subr.bf16.mxu0 %v1108
      %1479 = vmatpush1.bf16.msra.mxu0 %v1107
      %1480 = vmatprep.subr.bf16.mxu0 %v1103
      %1481 = vmatpush1.bf16.msra.mxu0 %v1102
      %1482 = vmatprep.subr.bf16.mxu0 %v1098
      %1483 = vmatpush1.bf16.msra.mxu0 %v1097
      %1484 = vmatprep.subr.bf16.mxu0 %v1093
      %1485 = vmatpush1.bf16.msra.mxu0 %v1092
      %1486 = vmatprep.subr.bf16.mxu0 %v1088
      %1487 = vmatpush1.bf16.msra.mxu0 %v1087
      %1488 = vmatprep.subr.bf16.mxu0 %v1083
      %1489 = vmatpush1.bf16.msra.mxu0 %v1082
      %1490 = vmatprep.subr.bf16.mxu0 %v1078
      %1491 = vmatpush1.bf16.msra.mxu0 %v1077
      %1492 = vmatprep.subr.bf16.mxu0 %v1073
      %1493 = vmatpush1.bf16.msra.mxu0 %v1072
      %1494 = vmatprep.subr.bf16.mxu0 %v1148
      %1495 = vmatpush2.bf16.msra.mxu0 %v1147
      %1496 = vmatprep.subr.bf16.mxu0 %v1143
      %1497 = vmatpush2.bf16.msra.mxu0 %v1142
      %1498 = vmatprep.subr.bf16.mxu0 %v1138
      %1499 = vmatpush2.bf16.msra.mxu0 %v1137
      %1500 = vmatprep.subr.bf16.mxu0 %v1133
      %1501 = vmatpush2.bf16.msra.mxu0 %v1132
      %1502 = vmatprep.subr.bf16.mxu0 %v1128
      %1503 = vmatpush2.bf16.msra.mxu0 %v1127
      %1504 = vmatprep.subr.bf16.mxu0 %v1123
      %1505 = vmatpush2.bf16.msra.mxu0 %v1122
      %1506 = vmatprep.subr.bf16.mxu0 %v1118
      %1507 = vmatpush2.bf16.msra.mxu0 %v1117
      %1508 = vmatprep.subr.bf16.mxu0 %v1113
      %1509 = vmatpush2.bf16.msra.mxu0 %v1112
      %1510 = vmatprep.mubr.bf16.mxu0 %v371
      %1511 = vmatmul.mubr.bf16.gmra.mxu0 %v364
      %v1512 = vpop.f32.mrf.mxu0
      %v1513 = vadd.f32 %v576, %v1512
      %v1514 = vpop.f32.mrf.mxu0
      %v1515 = vadd.f32 %v580, %v1514
      %v1516 = vpop.f32.mrf.mxu0
      %v1517 = vadd.f32 %v576, %v1516
      %v1518 = vpop.f32.mrf.mxu0
      %v1519 = vadd.f32 %v580, %v1518
      %1520 = vmatprep.mubr.bf16.mxu0 %v374
      %1521 = vmatmul.mubr.bf16.gmra.mxu0 %v367
      %v1522 = vpop.f32.mrf.mxu0
      %v1523 = vadd.f32 %v576, %v1522
      %v1524 = vpop.f32.mrf.mxu0
      %v1525 = vadd.f32 %v580, %v1524
      %v1526 = vpop.f32.mrf.mxu0
      %v1527 = vpop.f32.mrf.mxu0
      %1528 = vdwg.mxu0
      %1529 = vmatprep.subr.bf16.mxu0 %v1188
      %1530 = vmatpush1.bf16.msra.mxu0 %v1187
      %1531 = vmatprep.subr.bf16.mxu0 %v1183
      %1532 = vmatpush1.bf16.msra.mxu0 %v1182
      %1533 = vmatprep.subr.bf16.mxu0 %v1178
      %1534 = vmatpush1.bf16.msra.mxu0 %v1177
      %1535 = vmatprep.subr.bf16.mxu0 %v1173
      %1536 = vmatpush1.bf16.msra.mxu0 %v1172
      %1537 = vmatprep.subr.bf16.mxu0 %v1168
      %1538 = vmatpush1.bf16.msra.mxu0 %v1167
      %1539 = vmatprep.subr.bf16.mxu0 %v1163
      %1540 = vmatpush1.bf16.msra.mxu0 %v1162
      %1541 = vmatprep.subr.bf16.mxu0 %v1158
      %1542 = vmatpush1.bf16.msra.mxu0 %v1157
      %1543 = vmatprep.subr.bf16.mxu0 %v1153
      %1544 = vmatpush1.bf16.msra.mxu0 %v1152
      %1545 = vmatprep.subr.bf16.mxu0 0
      %1546 = vmatpush2.bf16.msra.mxu0 0
      %1547 = vmatprep.subr.bf16.mxu0 0
      %1548 = vmatpush2.bf16.msra.mxu0 0
      %1549 = vmatprep.subr.bf16.mxu0 %v1218
      %1550 = vmatpush2.bf16.msra.mxu0 %v1217
      %1551 = vmatprep.subr.bf16.mxu0 %v1213
      %1552 = vmatpush2.bf16.msra.mxu0 %v1212
      %1553 = vmatprep.subr.bf16.mxu0 %v1208
      %1554 = vmatpush2.bf16.msra.mxu0 %v1207
      %1555 = vmatprep.subr.bf16.mxu0 %v1203
      %1556 = vmatpush2.bf16.msra.mxu0 %v1202
      %1557 = vmatprep.subr.bf16.mxu0 %v1198
      %1558 = vmatpush2.bf16.msra.mxu0 %v1197
      %1559 = vmatprep.subr.bf16.mxu0 %v1193
      %1560 = vmatpush2.bf16.msra.mxu0 %v1192
      %1561 = vmatprep.mubr.bf16.mxu0 %v1371
      %1562 = vmatmul.mubr.bf16.gmra.mxu0 %v378
      %v1563 = vpop.f32.mrf.mxu0
      %v1564 = vadd.f32 %v1513, %v1563
      %v1565 = vpop.f32.mrf.mxu0
      %v1566 = vadd.f32 %v1515, %v1565
      %v1567 = vpop.f32.mrf.mxu0
      %v1568 = vadd.f32 %v1517, %v1567
      %v1569 = vpop.f32.mrf.mxu0
      %v1570 = vadd.f32 %v1519, %v1569
      %1571 = vmatprep.mubr.bf16.mxu0 %v1374
      %1572 = vmatmul.mubr.bf16.gmra.mxu0 %v381
      %v1573 = vpop.f32.mrf.mxu0
      %v1574 = vadd.f32 %v1523, %v1573
      %v1575 = vpop.f32.mrf.mxu0
      %v1576 = vadd.f32 %v1525, %v1575
      %v1577 = vpop.f32.mrf.mxu0
      %v1578 = vpop.f32.mrf.mxu0
      %1579 = vdwg.mxu0
      %1580 = vmatprep.subr.bf16.mxu0 0
      %1581 = vmatpush1.bf16.msra.mxu0 %v1109
      %1582 = vmatprep.subr.bf16.mxu0 0
      %1583 = vmatpush1.bf16.msra.mxu0 %v1104
      %1584 = vmatprep.subr.bf16.mxu0 0
      %1585 = vmatpush1.bf16.msra.mxu0 %v1099
      %1586 = vmatprep.subr.bf16.mxu0 0
      %1587 = vmatpush1.bf16.msra.mxu0 %v1094
      %1588 = vmatprep.subr.bf16.mxu0 0
      %1589 = vmatpush1.bf16.msra.mxu0 %v1089
      %1590 = vmatprep.subr.bf16.mxu0 0
      %1591 = vmatpush1.bf16.msra.mxu0 %v1084
      %1592 = vmatprep.subr.bf16.mxu0 0
      %1593 = vmatpush1.bf16.msra.mxu0 %v1079
      %1594 = vmatprep.subr.bf16.mxu0 0
      %1595 = vmatpush1.bf16.msra.mxu0 %v1074
      %1596 = vmatprep.subr.bf16.mxu0 0
      %1597 = vmatpush2.bf16.msra.mxu0 %v1149
      %1598 = vmatprep.subr.bf16.mxu0 0
      %1599 = vmatpush2.bf16.msra.mxu0 %v1144
      %1600 = vmatprep.subr.bf16.mxu0 0
      %1601 = vmatpush2.bf16.msra.mxu0 %v1139
      %1602 = vmatprep.subr.bf16.mxu0 0
      %1603 = vmatpush2.bf16.msra.mxu0 %v1134
      %1604 = vmatprep.subr.bf16.mxu0 0
      %1605 = vmatpush2.bf16.msra.mxu0 %v1129
      %1606 = vmatprep.subr.bf16.mxu0 0
      %1607 = vmatpush2.bf16.msra.mxu0 %v1124
      %1608 = vmatprep.subr.bf16.mxu0 0
      %1609 = vmatpush2.bf16.msra.mxu0 %v1119
      %1610 = vmatprep.subr.bf16.mxu0 0
      %1611 = vmatpush2.bf16.msra.mxu0 %v1114
      %1612 = vmatprep.mubr.bf16.mxu0 %v371
      %1613 = vmatmul.mubr.bf16.gmra.mxu0 %v364
      %v1614 = vpop.f32.mrf.mxu0
      %v1615 = vadd.f32 %v584, %v1614
      %v1616 = vpop.f32.mrf.mxu0
      %v1617 = vpop.f32.mrf.mxu0
      %v1618 = vadd.f32 %v584, %v1617
      %v1619 = vpop.f32.mrf.mxu0
      %1620 = vmatprep.mubr.bf16.mxu0 %v374
      %1621 = vmatmul.mubr.bf16.gmra.mxu0 %v367
      %v1622 = vpop.f32.mrf.mxu0
      %v1623 = vadd.f32 %v584, %v1622
      %v1624 = vpop.f32.mrf.mxu0
      %v1625 = vpop.f32.mrf.mxu0
      %v1626 = vpop.f32.mrf.mxu0
      %1627 = vdwg.mxu0
      %1628 = vmatprep.subr.bf16.mxu0 0
      %1629 = vmatpush1.bf16.msra.mxu0 %v1189
      %1630 = vmatprep.subr.bf16.mxu0 0
      %1631 = vmatpush1.bf16.msra.mxu0 %v1184
      %1632 = vmatprep.subr.bf16.mxu0 0
      %1633 = vmatpush1.bf16.msra.mxu0 %v1179
      %1634 = vmatprep.subr.bf16.mxu0 0
      %1635 = vmatpush1.bf16.msra.mxu0 %v1174
      %1636 = vmatprep.subr.bf16.mxu0 0
      %1637 = vmatpush1.bf16.msra.mxu0 %v1169
      %1638 = vmatprep.subr.bf16.mxu0 0
      %1639 = vmatpush1.bf16.msra.mxu0 %v1164
      %1640 = vmatprep.subr.bf16.mxu0 0
      %1641 = vmatpush1.bf16.msra.mxu0 %v1159
      %1642 = vmatprep.subr.bf16.mxu0 0
      %1643 = vmatpush1.bf16.msra.mxu0 %v1154
      %1644 = vmatprep.subr.bf16.mxu0 0
      %1645 = vmatpush2.bf16.msra.mxu0 0
      %1646 = vmatprep.subr.bf16.mxu0 0
      %1647 = vmatpush2.bf16.msra.mxu0 0
      %1648 = vmatprep.subr.bf16.mxu0 0
      %1649 = vmatpush2.bf16.msra.mxu0 %v1219
      %1650 = vmatprep.subr.bf16.mxu0 0
      %1651 = vmatpush2.bf16.msra.mxu0 %v1214
      %1652 = vmatprep.subr.bf16.mxu0 0
      %1653 = vmatpush2.bf16.msra.mxu0 %v1209
      %1654 = vmatprep.subr.bf16.mxu0 0
      %1655 = vmatpush2.bf16.msra.mxu0 %v1204
      %1656 = vmatprep.subr.bf16.mxu0 0
      %1657 = vmatpush2.bf16.msra.mxu0 %v1199
      %1658 = vmatprep.subr.bf16.mxu0 0
      %1659 = vmatpush2.bf16.msra.mxu0 %v1194
      %1660 = vmatprep.mubr.bf16.mxu0 %v1371
      %1661 = vmatmul.mubr.bf16.gmra.mxu0 %v378
      %v1662 = vpop.f32.mrf.mxu0
      %v1663 = vadd.f32 %v1615, %v1662
      %v1664 = vpop.f32.mrf.mxu0
      %v1665 = vpop.f32.mrf.mxu0
      %v1666 = vadd.f32 %v1618, %v1665
      %v1667 = vpop.f32.mrf.mxu0
      %1668 = vmatprep.mubr.bf16.mxu0 %v1374
      %1669 = vmatmul.mubr.bf16.gmra.mxu0 %v381
      %v1670 = vpop.f32.mrf.mxu0
      %v1671 = vadd.f32 %v1623, %v1670
      %v1672 = vpop.f32.mrf.mxu0
      %v1673 = vpop.f32.mrf.mxu0
      %v1674 = vpop.f32.mrf.mxu0
      %1675 = vdwg.mxu0
      %v1676 = vmax.f32 %v1462, 0.0
      %v1677 = vmax.f32 %v1464, 0.0
      %v1678 = vmax.f32 %v1564, 0.0
      %v1679 = vmax.f32 %v1566, 0.0
      %v1680 = vmax.f32 %v1663, 0.0
      %v1681 = vmax.f32 %v1466, 0.0
      %v1682 = vmax.f32 %v1468, 0.0
      %v1683 = vmax.f32 %v1568, 0.0
      %v1684 = vmax.f32 %v1570, 0.0
      %v1685 = vmax.f32 %v1666, 0.0
      %v1686 = vmax.f32 %v1472, 0.0
      %v1687 = vmax.f32 %v1474, 0.0
      %v1688 = vmax.f32 %v1574, 0.0
      %v1689 = vmax.f32 %v1576, 0.0
      %v1690 = vmax.f32 %v1671, 0.0
      %v1691 = vpack.c.bf16 %v1681, %v1676
      %v1692 = vpack.c.bf16 %v1682, %v1677
      %v1693 = vpack.c.bf16 %v1683, %v1678
      %v1694 = vpack.c.bf16 %v1684, %v1679
      %v1695 = vpack.c.bf16 %v1685, %v1680
      %v1696 = vpack.c.bf16 %v1686, %v1686
      %v1697 = vpack.c.bf16 %v1687, %v1687
      %v1698 = vpack.c.bf16 %v1688, %v1688
      %v1699 = vpack.c.bf16 %v1689, %v1689
      %v1700 = vpack.c.bf16 %v1690, %v1690
      %v1702 = vshrl.u32 %v1691, 16
      %v1704 = vshll.u32 %v1691, 16
      %v1706 = vrot.slane %v1704, 1
      %v1707 = vor.u32 %v1702, %v1706
      %v1709 = vshll.u32 %v1696, 16
      %v1711 = vrot.slane %v1709, 1
      %v1712 = vsel %vm318, %v1707, %v1711
      %v1714 = vshrl.u32 %v1692, 16
      %v1716 = vshll.u32 %v1692, 16
      %v1718 = vrot.slane %v1716, 1
      %v1719 = vor.u32 %v1714, %v1718
      %v1721 = vshll.u32 %v1697, 16
      %v1723 = vrot.slane %v1721, 1
      %v1724 = vsel %vm318, %v1719, %v1723
      %v1726 = vshrl.u32 %v1693, 16
      %v1728 = vshll.u32 %v1693, 16
      %v1730 = vrot.slane %v1728, 1
      %v1731 = vor.u32 %v1726, %v1730
      %v1733 = vshll.u32 %v1698, 16
      %v1735 = vrot.slane %v1733, 1
      %v1736 = vsel %vm318, %v1731, %v1735
      %v1738 = vshrl.u32 %v1694, 16
      %v1740 = vshll.u32 %v1694, 16
      %v1742 = vrot.slane %v1740, 1
      %v1743 = vor.u32 %v1738, %v1742
      %v1745 = vshll.u32 %v1699, 16
      %v1747 = vrot.slane %v1745, 1
      %v1748 = vsel %vm318, %v1743, %v1747
      %v1750 = vshrl.u32 %v1695, 16
      %v1752 = vshll.u32 %v1695, 16
      %v1754 = vrot.slane %v1752, 1
      %v1755 = vor.u32 %v1750, %v1754
      %v1757 = vshll.u32 %v1700, 16
      %v1759 = vrot.slane %v1757, 1
      %v1760 = vsel %vm318, %v1755, %v1759
      %v1761 = vshrl.u32 %v1696, 16
      %v1763 = vor.u32 %v1761, %v1711
      %v1764 = vshrl.u32 %v1697, 16
      %v1766 = vor.u32 %v1764, %v1723
      %v1767 = vshrl.u32 %v1698, 16
      %v1769 = vor.u32 %v1767, %v1735
      %v1770 = vshrl.u32 %v1699, 16
      %v1772 = vor.u32 %v1770, %v1747
      %v1773 = vshrl.u32 %v1700, 16
      %v1775 = vor.u32 %v1773, %v1759
      %v1796 = vrot.slane %v1691, 1
      %v1797 = vrot.slane %v1696, 1
      %v1798 = vsel %vm338, %v1796, %v1797
      %v1799 = vrot.slane %v1692, 1
      %v1800 = vrot.slane %v1697, 1
      %v1801 = vsel %vm338, %v1799, %v1800
      %v1802 = vrot.slane %v1693, 1
      %v1803 = vrot.slane %v1698, 1
      %v1804 = vsel %vm338, %v1802, %v1803
      %v1805 = vrot.slane %v1694, 1
      %v1806 = vrot.slane %v1699, 1
      %v1807 = vsel %vm338, %v1805, %v1806
      %v1808 = vrot.slane %v1695, 1
      %v1809 = vrot.slane %v1700, 1
      %v1810 = vsel %vm338, %v1808, %v1809
      %v1821 = vld [vmem:[%s3] sm:$0xff]
      %v1822 = vld [vmem:[%s3 + $0x8] sm:$0xff]
      %v1823 = vld [vmem:[%s3 + $0x10] sm:$0xf]
      %v1824 = vld [vmem:[%s3 + $0x14] sm:$0xff]
      %v1825 = vld [vmem:[%s3 + $0x1c] sm:$0xff]
      %v1826 = vld [vmem:[%s3 + $0x24] sm:$0xf]
      %v1827 = vld [vmem:[%s3 + $0x28] sm:$0xff]
      %v1828 = vld [vmem:[%s3 + $0x30] sm:$0xff]
      %v1829 = vld [vmem:[%s3 + $0x38] sm:$0xf]
      %v1830 = vld [vmem:[%s3 + $0x3c] sm:$0xff]
      %v1831 = vld [vmem:[%s3 + $0x44] sm:$0xff]
      %v1832 = vld [vmem:[%s3 + $0x4c] sm:$0xf]
      %v1833 = vld [vmem:[%s3 + $0x50] sm:$0xff]
      %v1834 = vld [vmem:[%s3 + $0x58] sm:$0xff]
      %v1835 = vld [vmem:[%s3 + $0x60] sm:$0xf]
      %v1836 = vld [vmem:[%s3 + $0x64] sm:$0xff]
      %v1837 = vld [vmem:[%s3 + $0x6c] sm:$0xff]
      %v1838 = vld [vmem:[%s3 + $0x74] sm:$0xf]
      %v1839 = vld [vmem:[%s3 + $0x78] sm:$0xff]
      %v1840 = vld [vmem:[%s3 + $0x80] sm:$0xff]
      %v1841 = vld [vmem:[%s3 + $0x88] sm:$0xf]
      %v1842 = vld [vmem:[%s3 + $0x8c] sm:$0xff]
      %v1843 = vld [vmem:[%s3 + $0x94] sm:$0xff]
      %v1844 = vld [vmem:[%s3 + $0x9c] sm:$0xf]
      %v1845 = vld [vmem:[%s3 + $0xa0] sm:$0xff]
      %v1846 = vld [vmem:[%s3 + $0xa8] sm:$0xff]
      %v1847 = vld [vmem:[%s3 + $0xb0] sm:$0xf]
      %v1848 = vld [vmem:[%s3 + $0xb4] sm:$0xff]
      %v1849 = vld [vmem:[%s3 + $0xbc] sm:$0xff]
      %v1850 = vld [vmem:[%s3 + $0xc4] sm:$0xf]
      %v1851 = vld [vmem:[%s3 + $0xc8] sm:$0xff]
      %v1852 = vld [vmem:[%s3 + $0xd0] sm:$0xff]
      %v1853 = vld [vmem:[%s3 + $0xd8] sm:$0xf]
      %v1854 = vld [vmem:[%s3 + $0xdc] sm:$0xff]
      %v1855 = vld [vmem:[%s3 + $0xe4] sm:$0xff]
      %v1856 = vld [vmem:[%s3 + $0xec] sm:$0xf]
      %v1857 = vld [vmem:[%s3 + $0xf0] sm:$0xff]
      %v1858 = vld [vmem:[%s3 + $0xf8] sm:$0xff]
      %v1859 = vld [vmem:[%s3 + $0x100] sm:$0xf]
      %v1860 = vld [vmem:[%s3 + $0x104] sm:$0xff]
      %v1861 = vld [vmem:[%s3 + $0x10c] sm:$0xff]
      %v1862 = vld [vmem:[%s3 + $0x114] sm:$0xf]
      %v1863 = vld [vmem:[%s3 + $0x118] sm:$0xff]
      %v1864 = vld [vmem:[%s3 + $0x120] sm:$0xff]
      %v1865 = vld [vmem:[%s3 + $0x128] sm:$0xf]
      %v1866 = vld [vmem:[%s3 + $0x12c] sm:$0xff]
      %v1867 = vld [vmem:[%s3 + $0x134] sm:$0xff]
      %v1868 = vld [vmem:[%s3 + $0x13c] sm:$0xf]
      %v1869 = vld [vmem:[%s3 + $0x140] sm:$0xff]
      %v1870 = vld [vmem:[%s3 + $0x148] sm:$0xff]
      %v1871 = vld [vmem:[%s3 + $0x150] sm:$0xf]
      %v1872 = vld [vmem:[%s3 + $0x154] sm:$0xff]
      %v1873 = vld [vmem:[%s3 + $0x15c] sm:$0xff]
      %v1874 = vld [vmem:[%s3 + $0x164] sm:$0xf]
      %v1875 = vld [vmem:[%s3 + $0x168] sm:$0xff]
      %v1876 = vld [vmem:[%s3 + $0x170] sm:$0xff]
      %v1877 = vld [vmem:[%s3 + $0x178] sm:$0xf]
      %v1878 = vld [vmem:[%s3 + $0x17c] sm:$0xff]
      %v1879 = vld [vmem:[%s3 + $0x184] sm:$0xff]
      %v1880 = vld [vmem:[%s3 + $0x18c] sm:$0xf]
      %v1881 = vld [vmem:[%s3 + $0x190] sm:$0xff]
      %v1882 = vld [vmem:[%s3 + $0x198] sm:$0xff]
      %v1883 = vld [vmem:[%s3 + $0x1a0] sm:$0xf]
      %v1884 = vld [vmem:[%s3 + $0x1a4] sm:$0xff]
      %v1885 = vld [vmem:[%s3 + $0x1ac] sm:$0xff]
      %v1886 = vld [vmem:[%s3 + $0x1b4] sm:$0xf]
      %v1887 = vld [vmem:[%s3 + $0x1b8] sm:$0xff]
      %v1888 = vld [vmem:[%s3 + $0x1c0] sm:$0xff]
      %v1889 = vld [vmem:[%s3 + $0x1c8] sm:$0xf]
      %v1890 = vld [vmem:[%s3 + $0x1cc] sm:$0xff]
      %v1891 = vld [vmem:[%s3 + $0x1d4] sm:$0xff]
      %v1892 = vld [vmem:[%s3 + $0x1dc] sm:$0xf]
      %v1893 = vld [vmem:[%s3 + $0x1e0] sm:$0xff]
      %v1894 = vld [vmem:[%s3 + $0x1e8] sm:$0xff]
      %v1895 = vld [vmem:[%s3 + $0x1f0] sm:$0xf]
      %v1896 = vld [vmem:[%s3 + $0x1f4] sm:$0xff]
      %v1897 = vld [vmem:[%s3 + $0x1fc] sm:$0xff]
      %v1898 = vld [vmem:[%s3 + $0x204] sm:$0xf]
      %v1899 = vld [vmem:[%s3 + $0x208] sm:$0xff]
      %v1900 = vld [vmem:[%s3 + $0x210] sm:$0xff]
      %v1901 = vld [vmem:[%s3 + $0x218] sm:$0xf]
      %v1902 = vld [vmem:[%s3 + $0x21c] sm:$0xff]
      %v1903 = vld [vmem:[%s3 + $0x224] sm:$0xff]
      %v1904 = vld [vmem:[%s3 + $0x22c] sm:$0xf]
      %v1905 = vld [vmem:[%s3 + $0x230] sm:$0xff]
      %v1906 = vld [vmem:[%s3 + $0x238] sm:$0xff]
      %v1907 = vld [vmem:[%s3 + $0x240] sm:$0xf]
      %v1908 = vld [vmem:[%s3 + $0x244] sm:$0xff]
      %v1909 = vld [vmem:[%s3 + $0x24c] sm:$0xff]
      %v1910 = vld [vmem:[%s3 + $0x254] sm:$0xf]
      %v1911 = vld [vmem:[%s3 + $0x258] sm:$0xff]
      %v1912 = vld [vmem:[%s3 + $0x260] sm:$0xff]
      %v1913 = vld [vmem:[%s3 + $0x268] sm:$0xf]
      %v1914 = vld [vmem:[%s3 + $0x26c] sm:$0xff]
      %v1915 = vld [vmem:[%s3 + $0x274] sm:$0xff]
      %v1916 = vld [vmem:[%s3 + $0x27c] sm:$0xf]
      %v1917 = vld [vmem:[%s3 + $0x280] sm:$0xff]
      %v1918 = vld [vmem:[%s3 + $0x288] sm:$0xff]
      %v1919 = vld [vmem:[%s3 + $0x290] sm:$0xf]
      %v1920 = vld [vmem:[%s3 + $0x294] sm:$0xff]
      %v1921 = vld [vmem:[%s3 + $0x29c] sm:$0xff]
      %v1922 = vld [vmem:[%s3 + $0x2a4] sm:$0xf]
      %v1923 = vld [vmem:[%s3 + $0x2a8] sm:$0xff]
      %v1924 = vld [vmem:[%s3 + $0x2b0] sm:$0xff]
      %v1925 = vld [vmem:[%s3 + $0x2b8] sm:$0xf]
      %v1926 = vld [vmem:[%s3 + $0x2bc] sm:$0xff]
      %v1927 = vld [vmem:[%s3 + $0x2c4] sm:$0xff]
      %v1928 = vld [vmem:[%s3 + $0x2cc] sm:$0xf]
      %v1929 = vld [vmem:[%s3 + $0x2d0] sm:$0xff]
      %v1930 = vld [vmem:[%s3 + $0x2d8] sm:$0xff]
      %v1931 = vld [vmem:[%s3 + $0x2e0] sm:$0xf]
      %v1932 = vld [vmem:[%s3 + $0x2e4] sm:$0xff]
      %v1933 = vld [vmem:[%s3 + $0x2ec] sm:$0xff]
      %v1934 = vld [vmem:[%s3 + $0x2f4] sm:$0xf]
      %v1935 = vld [vmem:[%s3 + $0x2f8] sm:$0xff]
      %v1936 = vld [vmem:[%s3 + $0x300] sm:$0xff]
      %v1937 = vld [vmem:[%s3 + $0x308] sm:$0xf]
      %v1938 = vld [vmem:[%s3 + $0x30c] sm:$0xff]
      %v1939 = vld [vmem:[%s3 + $0x314] sm:$0xff]
      %v1940 = vld [vmem:[%s3 + $0x31c] sm:$0xf]
      %v1941 = vld [vmem:[%s3 + $0x320] sm:$0xff]
      %v1942 = vld [vmem:[%s3 + $0x328] sm:$0xff]
      %v1943 = vld [vmem:[%s3 + $0x330] sm:$0xf]
      %v1944 = vld [vmem:[%s3 + $0x334] sm:$0xff]
      %v1945 = vld [vmem:[%s3 + $0x33c] sm:$0xff]
      %v1946 = vld [vmem:[%s3 + $0x344] sm:$0xf]
      %v1947 = vld [vmem:[%s3 + $0x348] sm:$0xff]
      %v1948 = vld [vmem:[%s3 + $0x350] sm:$0xff]
      %v1949 = vld [vmem:[%s3 + $0x358] sm:$0xf]
      %v1950 = vld [vmem:[%s3 + $0x35c] sm:$0xff]
      %v1951 = vld [vmem:[%s3 + $0x364] sm:$0xff]
      %v1952 = vld [vmem:[%s3 + $0x36c] sm:$0xf]
      %v1953 = vld [vmem:[%s3 + $0x370] sm:$0xff]
      %v1954 = vld [vmem:[%s3 + $0x378] sm:$0xff]
      %v1955 = vld [vmem:[%s3 + $0x380] sm:$0xf]
      %v1956 = vld [vmem:[%s3 + $0x384] sm:$0xff]
      %v1957 = vld [vmem:[%s3 + $0x38c] sm:$0xff]
      %v1958 = vld [vmem:[%s3 + $0x394] sm:$0xf]
      %v1959 = vld [vmem:[%s3 + $0x398] sm:$0xff]
      %v1960 = vld [vmem:[%s3 + $0x3a0] sm:$0xff]
      %v1961 = vld [vmem:[%s3 + $0x3a8] sm:$0xf]
      %v1962 = vld [vmem:[%s3 + $0x3ac] sm:$0xff]
      %v1963 = vld [vmem:[%s3 + $0x3b4] sm:$0xff]
      %v1964 = vld [vmem:[%s3 + $0x3bc] sm:$0xf]
      %v1965 = vld [vmem:[%s3 + $0x3c0] sm:$0xff]
      %v1966 = vld [vmem:[%s3 + $0x3c8] sm:$0xff]
      %v1967 = vld [vmem:[%s3 + $0x3d0] sm:$0xf]
      %v1968 = vld [vmem:[%s3 + $0x3d4] sm:$0xff]
      %v1969 = vld [vmem:[%s3 + $0x3dc] sm:$0xff]
      %v1970 = vld [vmem:[%s3 + $0x3e4] sm:$0xf]
      %v1971 = vld [vmem:[%s3 + $0x3e8] sm:$0xff]
      %v1972 = vld [vmem:[%s3 + $0x3f0] sm:$0xff]
      %v1973 = vld [vmem:[%s3 + $0x3f8] sm:$0xf]
      %v1974 = vld [vmem:[%s3 + $0x3fc] sm:$0xff]
      %v1975 = vld [vmem:[%s3 + $0x404] sm:$0xff]
      %v1976 = vld [vmem:[%s3 + $0x40c] sm:$0xf]
      %v1977 = vld [vmem:[%s3 + $0x410] sm:$0xff]
      %v1978 = vld [vmem:[%s3 + $0x418] sm:$0xff]
      %v1979 = vld [vmem:[%s3 + $0x420] sm:$0xf]
      %v1980 = vld [vmem:[%s3 + $0x424] sm:$0xff]
      %v1981 = vld [vmem:[%s3 + $0x42c] sm:$0xff]
      %v1982 = vld [vmem:[%s3 + $0x434] sm:$0xf]
      %v1983 = vld [vmem:[%s3 + $0x438] sm:$0xff]
      %v1984 = vld [vmem:[%s3 + $0x440] sm:$0xff]
      %v1985 = vld [vmem:[%s3 + $0x448] sm:$0xf]
      %v1986 = vld [vmem:[%s3 + $0x44c] sm:$0xff]
      %v1987 = vld [vmem:[%s3 + $0x454] sm:$0xff]
      %v1988 = vld [vmem:[%s3 + $0x45c] sm:$0xf]
      %v1989 = vld [vmem:[%s3 + $0x460] sm:$0xff]
      %v1990 = vld [vmem:[%s3 + $0x468] sm:$0xff]
      %v1991 = vld [vmem:[%s3 + $0x470] sm:$0xf]
      %v1992 = vld [vmem:[%s3 + $0x474] sm:$0xff]
      %v1993 = vld [vmem:[%s3 + $0x47c] sm:$0xff]
      %v1994 = vld [vmem:[%s3 + $0x484] sm:$0xf]
      %v1995 = vld [vmem:[%s3 + $0x488] sm:$0xff]
      %v1996 = vld [vmem:[%s3 + $0x490] sm:$0xff]
      %v1997 = vld [vmem:[%s3 + $0x498] sm:$0xf]
      %v1998 = vld [vmem:[%s3 + $0x49c] sm:$0xff]
      %v1999 = vld [vmem:[%s3 + $0x4a4] sm:$0xff]
      %v2000 = vld [vmem:[%s3 + $0x4ac] sm:$0xf]
      %v2001 = vld [vmem:[%s3 + $0x4b0] sm:$0xff]
      %v2002 = vld [vmem:[%s3 + $0x4b8] sm:$0xff]
      %v2003 = vld [vmem:[%s3 + $0x4c0] sm:$0xf]
      %v2004 = vld [vmem:[%s3 + $0x4c4] sm:$0xff]
      %v2005 = vld [vmem:[%s3 + $0x4cc] sm:$0xff]
      %v2006 = vld [vmem:[%s3 + $0x4d4] sm:$0xf]
      %v2007 = vld [vmem:[%s3 + $0x4d8] sm:$0xff]
      %v2008 = vld [vmem:[%s3 + $0x4e0] sm:$0xff]
      %v2009 = vld [vmem:[%s3 + $0x4e8] sm:$0xf]
      %v2010 = vld [vmem:[%s3 + $0x4ec] sm:$0xff]
      %v2011 = vld [vmem:[%s3 + $0x4f4] sm:$0xff]
      %v2012 = vld [vmem:[%s3 + $0x4fc] sm:$0xf]
      %v2013 = vld [vmem:[%s3 + $0x500] sm:$0xff]
      %v2014 = vld [vmem:[%s3 + $0x508] sm:$0xff]
      %v2015 = vld [vmem:[%s3 + $0x510] sm:$0xf]
      %v2016 = vld [vmem:[%s3 + $0x514] sm:$0xff]
      %v2017 = vld [vmem:[%s3 + $0x51c] sm:$0xff]
      %v2018 = vld [vmem:[%s3 + $0x524] sm:$0xf]
      %v2019 = vld [vmem:[%s3 + $0x528] sm:$0xff]
      %v2020 = vld [vmem:[%s3 + $0x530] sm:$0xff]
      %v2021 = vld [vmem:[%s3 + $0x538] sm:$0xf]
      %v2022 = vld [vmem:[%s3 + $0x53c] sm:$0xff]
      %v2023 = vld [vmem:[%s3 + $0x544] sm:$0xff]
      %v2024 = vld [vmem:[%s3 + $0x54c] sm:$0xf]
      %v2025 = vld [vmem:[%s3 + $0x550] sm:$0xff]
      %v2026 = vld [vmem:[%s3 + $0x558] sm:$0xff]
      %v2027 = vld [vmem:[%s3 + $0x560] sm:$0xf]
      %v2028 = vld [vmem:[%s3 + $0x564] sm:$0xff]
      %v2029 = vld [vmem:[%s3 + $0x56c] sm:$0xff]
      %v2030 = vld [vmem:[%s3 + $0x574] sm:$0xf]
      %v2031 = vld [vmem:[%s3 + $0x578] sm:$0xff]
      %v2032 = vld [vmem:[%s3 + $0x580] sm:$0xff]
      %v2033 = vld [vmem:[%s3 + $0x588] sm:$0xf]
      %v2034 = vld [vmem:[%s3 + $0x58c] sm:$0xff]
      %v2035 = vld [vmem:[%s3 + $0x594] sm:$0xff]
      %v2036 = vld [vmem:[%s3 + $0x59c] sm:$0xf]
      %v2037 = vld [vmem:[%s3 + $0x5a0] sm:$0xff]
      %v2038 = vld [vmem:[%s3 + $0x5a8] sm:$0xff]
      %v2039 = vld [vmem:[%s3 + $0x5b0] sm:$0xf]
      %v2040 = vld [vmem:[%s3 + $0x5b4] sm:$0xff]
      %v2041 = vld [vmem:[%s3 + $0x5bc] sm:$0xff]
      %v2042 = vld [vmem:[%s3 + $0x5c4] sm:$0xf]
      %v2043 = vld [vmem:[%s3 + $0x5c8] sm:$0xff]
      %v2044 = vld [vmem:[%s3 + $0x5d0] sm:$0xff]
      %v2045 = vld [vmem:[%s3 + $0x5d8] sm:$0xf]
      %v2046 = vld [vmem:[%s3 + $0x5dc] sm:$0xff]
      %v2047 = vld [vmem:[%s3 + $0x5e4] sm:$0xff]
      %v2048 = vld [vmem:[%s3 + $0x5ec] sm:$0xf]
      %v2049 = vld [vmem:[%s3 + $0x5f0] sm:$0xff]
      %v2050 = vld [vmem:[%s3 + $0x5f8] sm:$0xff]
      %v2051 = vld [vmem:[%s3 + $0x600] sm:$0xf]
      %v2052 = vld [vmem:[%s3 + $0x604] sm:$0xff]
      %v2053 = vld [vmem:[%s3 + $0x60c] sm:$0xff]
      %v2054 = vld [vmem:[%s3 + $0x614] sm:$0xf]
      %v2055 = vld [vmem:[%s3 + $0x618] sm:$0xff]
      %v2056 = vld [vmem:[%s3 + $0x620] sm:$0xff]
      %v2057 = vld [vmem:[%s3 + $0x628] sm:$0xf]
      %v2058 = vld [vmem:[%s3 + $0x62c] sm:$0xff]
      %v2059 = vld [vmem:[%s3 + $0x634] sm:$0xff]
      %v2060 = vld [vmem:[%s3 + $0x63c] sm:$0xf]
      %v2061 = vld [vmem:[%s3 + $0x640] sm:$0xff]
      %v2062 = vld [vmem:[%s3 + $0x648] sm:$0xff]
      %v2063 = vld [vmem:[%s3 + $0x650] sm:$0xf]
      %v2064 = vld [vmem:[%s3 + $0x654] sm:$0xff]
      %v2065 = vld [vmem:[%s3 + $0x65c] sm:$0xff]
      %v2066 = vld [vmem:[%s3 + $0x664] sm:$0xf]
      %v2067 = vld [vmem:[%s3 + $0x668] sm:$0xff]
      %v2068 = vld [vmem:[%s3 + $0x670] sm:$0xff]
      %v2069 = vld [vmem:[%s3 + $0x678] sm:$0xf]
      %v2070 = vld [vmem:[%s3 + $0x67c] sm:$0xff]
      %v2071 = vld [vmem:[%s3 + $0x684] sm:$0xff]
      %v2072 = vld [vmem:[%s3 + $0x68c] sm:$0xf]
      %v2073 = vld [vmem:[%s3 + $0x690] sm:$0xff]
      %v2074 = vld [vmem:[%s3 + $0x698] sm:$0xff]
      %v2075 = vld [vmem:[%s3 + $0x6a0] sm:$0xf]
      %v2076 = vld [vmem:[%s3 + $0x6a4] sm:$0xff]
      %v2077 = vld [vmem:[%s3 + $0x6ac] sm:$0xff]
      %v2078 = vld [vmem:[%s3 + $0x6b4] sm:$0xf]
      %v2079 = vld [vmem:[%s3 + $0x6b8] sm:$0xff]
      %v2080 = vld [vmem:[%s3 + $0x6c0] sm:$0xff]
      %v2081 = vld [vmem:[%s3 + $0x6c8] sm:$0xf]
      %v2082 = vld [vmem:[%s3 + $0x6cc] sm:$0xff]
      %v2083 = vld [vmem:[%s3 + $0x6d4] sm:$0xff]
      %v2084 = vld [vmem:[%s3 + $0x6dc] sm:$0xf]
      %v2085 = vld [vmem:[%s3 + $0x6e0] sm:$0xff]
      %v2086 = vld [vmem:[%s3 + $0x6e8] sm:$0xff]
      %v2087 = vld [vmem:[%s3 + $0x6f0] sm:$0xf]
      %v2088 = vld [vmem:[%s3 + $0x6f4] sm:$0xff]
      %v2089 = vld [vmem:[%s3 + $0x6fc] sm:$0xff]
      %v2090 = vld [vmem:[%s3 + $0x704] sm:$0xf]
      %v2091 = vld [vmem:[%s3 + $0x708] sm:$0xff]
      %v2092 = vld [vmem:[%s3 + $0x710] sm:$0xff]
      %v2093 = vld [vmem:[%s3 + $0x718] sm:$0xf]
      %v2094 = vld [vmem:[%s3 + $0x71c] sm:$0xff]
      %v2095 = vld [vmem:[%s3 + $0x724] sm:$0xff]
      %v2096 = vld [vmem:[%s3 + $0x72c] sm:$0xf]
      %v2097 = vld [vmem:[%s3 + $0x730] sm:$0xff]
      %v2098 = vld [vmem:[%s3 + $0x738] sm:$0xff]
      %v2099 = vld [vmem:[%s3 + $0x740] sm:$0xf]
      %v2100 = vld [vmem:[%s3 + $0x744] sm:$0xff]
      %v2101 = vld [vmem:[%s3 + $0x74c] sm:$0xff]
      %v2102 = vld [vmem:[%s3 + $0x754] sm:$0xf]
      %v2103 = vld [vmem:[%s3 + $0x758] sm:$0xff]
      %v2104 = vld [vmem:[%s3 + $0x760] sm:$0xff]
      %v2105 = vld [vmem:[%s3 + $0x768] sm:$0xf]
      %v2106 = vld [vmem:[%s3 + $0x76c] sm:$0xff]
      %v2107 = vld [vmem:[%s3 + $0x774] sm:$0xff]
      %v2108 = vld [vmem:[%s3 + $0x77c] sm:$0xf]
      %v2109 = vld [vmem:[%s3 + $0x780] sm:$0xff]
      %v2110 = vld [vmem:[%s3 + $0x788] sm:$0xff]
      %v2111 = vld [vmem:[%s3 + $0x790] sm:$0xf]
      %v2112 = vld [vmem:[%s3 + $0x794] sm:$0xff]
      %v2113 = vld [vmem:[%s3 + $0x79c] sm:$0xff]
      %v2114 = vld [vmem:[%s3 + $0x7a4] sm:$0xf]
      %v2115 = vld [vmem:[%s3 + $0x7a8] sm:$0xff]
      %v2116 = vld [vmem:[%s3 + $0x7b0] sm:$0xff]
      %v2117 = vld [vmem:[%s3 + $0x7b8] sm:$0xf]
      %v2118 = vld [vmem:[%s3 + $0x7bc] sm:$0xff]
      %v2119 = vld [vmem:[%s3 + $0x7c4] sm:$0xff]
      %v2120 = vld [vmem:[%s3 + $0x7cc] sm:$0xf]
      %v2121 = vld [vmem:[%s3 + $0x7d0] sm:$0xff]
      %v2122 = vld [vmem:[%s3 + $0x7d8] sm:$0xff]
      %v2123 = vld [vmem:[%s3 + $0x7e0] sm:$0xf]
      %v2124 = vld [vmem:[%s3 + $0x7e4] sm:$0xff]
      %v2125 = vld [vmem:[%s3 + $0x7ec] sm:$0xff]
      %v2126 = vld [vmem:[%s3 + $0x7f4] sm:$0xf]
      %v2127 = vld [vmem:[%s3 + $0x7f8] sm:$0xff]
      %v2128 = vld [vmem:[%s3 + $0x800] sm:$0xff]
      %v2129 = vld [vmem:[%s3 + $0x808] sm:$0xf]
      %v2130 = vld [vmem:[%s3 + $0x80c] sm:$0xff]
      %v2131 = vld [vmem:[%s3 + $0x814] sm:$0xff]
      %v2132 = vld [vmem:[%s3 + $0x81c] sm:$0xf]
      %v2133 = vld [vmem:[%s3 + $0x820] sm:$0xff]
      %v2134 = vld [vmem:[%s3 + $0x828] sm:$0xff]
      %v2135 = vld [vmem:[%s3 + $0x830] sm:$0xf]
      %v2136 = vld [vmem:[%s3 + $0x834] sm:$0xff]
      %v2137 = vld [vmem:[%s3 + $0x83c] sm:$0xff]
      %v2138 = vld [vmem:[%s3 + $0x844] sm:$0xf]
      %v2139 = vld [vmem:[%s3 + $0x848] sm:$0xff]
      %v2140 = vld [vmem:[%s3 + $0x850] sm:$0xff]
      %v2141 = vld [vmem:[%s3 + $0x858] sm:$0xf]
      %v2142 = vld [vmem:[%s3 + $0x85c] sm:$0xff]
      %v2143 = vld [vmem:[%s3 + $0x864] sm:$0xff]
      %v2144 = vld [vmem:[%s3 + $0x86c] sm:$0xf]
      %v2145 = vld [vmem:[%s3 + $0x870] sm:$0xff]
      %v2146 = vld [vmem:[%s3 + $0x878] sm:$0xff]
      %v2147 = vld [vmem:[%s3 + $0x880] sm:$0xf]
      %v2148 = vld [vmem:[%s3 + $0x884] sm:$0xff]
      %v2149 = vld [vmem:[%s3 + $0x88c] sm:$0xff]
      %v2150 = vld [vmem:[%s3 + $0x894] sm:$0xf]
      %v2151 = vld [vmem:[%s3 + $0x898] sm:$0xff]
      %v2152 = vld [vmem:[%s3 + $0x8a0] sm:$0xff]
      %v2153 = vld [vmem:[%s3 + $0x8a8] sm:$0xf]
      %v2154 = vld [vmem:[%s3 + $0x8ac] sm:$0xff]
      %v2155 = vld [vmem:[%s3 + $0x8b4] sm:$0xff]
      %v2156 = vld [vmem:[%s3 + $0x8bc] sm:$0xf]
      %v2157 = vld [vmem:[%s3 + $0x8c0] sm:$0xff]
      %v2158 = vld [vmem:[%s3 + $0x8c8] sm:$0xff]
      %v2159 = vld [vmem:[%s3 + $0x8d0] sm:$0xf]
      %v2160 = vld [vmem:[%s3 + $0x8d4] sm:$0xff]
      %v2161 = vld [vmem:[%s3 + $0x8dc] sm:$0xff]
      %v2162 = vld [vmem:[%s3 + $0x8e4] sm:$0xf]
      %v2163 = vld [vmem:[%s3 + $0x8e8] sm:$0xff]
      %v2164 = vld [vmem:[%s3 + $0x8f0] sm:$0xff]
      %v2165 = vld [vmem:[%s3 + $0x8f8] sm:$0xf]
      %v2166 = vld [vmem:[%s3 + $0x8fc] sm:$0xff]
      %v2167 = vld [vmem:[%s3 + $0x904] sm:$0xff]
      %v2168 = vld [vmem:[%s3 + $0x90c] sm:$0xf]
      %v2169 = vld [vmem:[%s3 + $0x910] sm:$0xff]
      %v2170 = vld [vmem:[%s3 + $0x918] sm:$0xff]
      %v2171 = vld [vmem:[%s3 + $0x920] sm:$0xf]
      %v2172 = vld [vmem:[%s3 + $0x924] sm:$0xff]
      %v2173 = vld [vmem:[%s3 + $0x92c] sm:$0xff]
      %v2174 = vld [vmem:[%s3 + $0x934] sm:$0xf]
      %v2175 = vld [vmem:[%s3 + $0x938] sm:$0xff]
      %v2176 = vld [vmem:[%s3 + $0x940] sm:$0xff]
      %v2177 = vld [vmem:[%s3 + $0x948] sm:$0xf]
      %v2178 = vld [vmem:[%s3 + $0x94c] sm:$0xff]
      %v2179 = vld [vmem:[%s3 + $0x954] sm:$0xff]
      %v2180 = vld [vmem:[%s3 + $0x95c] sm:$0xf]
      %v2181 = vld [vmem:[%s3 + $0x960] sm:$0xff]
      %v2182 = vld [vmem:[%s3 + $0x968] sm:$0xff]
      %v2183 = vld [vmem:[%s3 + $0x970] sm:$0xf]
      %v2184 = vld [vmem:[%s3 + $0x974] sm:$0xff]
      %v2185 = vld [vmem:[%s3 + $0x97c] sm:$0xff]
      %v2186 = vld [vmem:[%s3 + $0x984] sm:$0xf]
      %v2187 = vld [vmem:[%s3 + $0x988] sm:$0xff]
      %v2188 = vld [vmem:[%s3 + $0x990] sm:$0xff]
      %v2189 = vld [vmem:[%s3 + $0x998] sm:$0xf]
      %v2190 = vld [vmem:[%s3 + $0x99c] sm:$0xff]
      %v2191 = vld [vmem:[%s3 + $0x9a4] sm:$0xff]
      %v2192 = vld [vmem:[%s3 + $0x9ac] sm:$0xf]
      %v2193 = vld [vmem:[%s3 + $0x9b0] sm:$0xff]
      %v2194 = vld [vmem:[%s3 + $0x9b8] sm:$0xff]
      %v2195 = vld [vmem:[%s3 + $0x9c0] sm:$0xf]
      %v2196 = vld [vmem:[%s3 + $0x9c4] sm:$0xff]
      %v2197 = vld [vmem:[%s3 + $0x9cc] sm:$0xff]
      %v2198 = vld [vmem:[%s3 + $0x9d4] sm:$0xf]
      %v2199 = vld [vmem:[%s3 + $0x9d8] sm:$0xff]
      %v2200 = vld [vmem:[%s3 + $0x9e0] sm:$0xff]
      %v2201 = vld [vmem:[%s3 + $0x9e8] sm:$0xf]
      %v2202 = vld [vmem:[%s3 + $0x9ec] sm:$0xff]
      %v2203 = vld [vmem:[%s3 + $0x9f4] sm:$0xff]
      %v2204 = vld [vmem:[%s3 + $0x9fc] sm:$0xf]
      %v2205 = vld [vmem:[%s3 + $0xa00] sm:$0xff]
      %v2206 = vld [vmem:[%s3 + $0xa08] sm:$0xff]
      %v2207 = vld [vmem:[%s3 + $0xa10] sm:$0xf]
      %v2208 = vld [vmem:[%s3 + $0xa14] sm:$0xff]
      %v2209 = vld [vmem:[%s3 + $0xa1c] sm:$0xff]
      %v2210 = vld [vmem:[%s3 + $0xa24] sm:$0xf]
      %v2211 = vld [vmem:[%s3 + $0xa28] sm:$0xff]
      %v2212 = vld [vmem:[%s3 + $0xa30] sm:$0xff]
      %v2213 = vld [vmem:[%s3 + $0xa38] sm:$0xf]
      %v2214 = vld [vmem:[%s3 + $0xa3c] sm:$0xff]
      %v2215 = vld [vmem:[%s3 + $0xa44] sm:$0xff]
      %v2216 = vld [vmem:[%s3 + $0xa4c] sm:$0xf]
      %v2217 = vld [vmem:[%s3 + $0xa50] sm:$0xff]
      %v2218 = vld [vmem:[%s3 + $0xa58] sm:$0xff]
      %v2219 = vld [vmem:[%s3 + $0xa60] sm:$0xf]
      %v2220 = vld [vmem:[%s3 + $0xa64] sm:$0xff]
      %v2221 = vld [vmem:[%s3 + $0xa6c] sm:$0xff]
      %v2222 = vld [vmem:[%s3 + $0xa74] sm:$0xf]
      %v2223 = vld [vmem:[%s3 + $0xa78] sm:$0xff]
      %v2224 = vld [vmem:[%s3 + $0xa80] sm:$0xff]
      %v2225 = vld [vmem:[%s3 + $0xa88] sm:$0xf]
      %v2226 = vld [vmem:[%s3 + $0xa8c] sm:$0xff]
      %v2227 = vld [vmem:[%s3 + $0xa94] sm:$0xff]
      %v2228 = vld [vmem:[%s3 + $0xa9c] sm:$0xf]
      %v2229 = vld [vmem:[%s3 + $0xaa0] sm:$0xff]
      %v2230 = vld [vmem:[%s3 + $0xaa8] sm:$0xff]
      %v2231 = vld [vmem:[%s3 + $0xab0] sm:$0xf]
      %v2232 = vld [vmem:[%s3 + $0xab4] sm:$0xff]
      %v2233 = vld [vmem:[%s3 + $0xabc] sm:$0xff]
      %v2234 = vld [vmem:[%s3 + $0xac4] sm:$0xf]
      %v2235 = vld [vmem:[%s3 + $0xac8] sm:$0xff]
      %v2236 = vld [vmem:[%s3 + $0xad0] sm:$0xff]
      %v2237 = vld [vmem:[%s3 + $0xad8] sm:$0xf]
      %v2238 = vld [vmem:[%s3 + $0xadc] sm:$0xff]
      %v2239 = vld [vmem:[%s3 + $0xae4] sm:$0xff]
      %v2240 = vld [vmem:[%s3 + $0xaec] sm:$0xf]
      %v2241 = vld [vmem:[%s3 + $0xaf0] sm:$0xff]
      %v2242 = vld [vmem:[%s3 + $0xaf8] sm:$0xff]
      %v2243 = vld [vmem:[%s3 + $0xb00] sm:$0xf]
      %v2244 = vld [vmem:[%s3 + $0xb04] sm:$0xff]
      %v2245 = vld [vmem:[%s3 + $0xb0c] sm:$0xff]
      %v2246 = vld [vmem:[%s3 + $0xb14] sm:$0xf]
      %v2247 = vld [vmem:[%s3 + $0xb18] sm:$0xff]
      %v2248 = vld [vmem:[%s3 + $0xb20] sm:$0xff]
      %v2249 = vld [vmem:[%s3 + $0xb28] sm:$0xf]
      %v2250 = vld [vmem:[%s3 + $0xb2c] sm:$0xff]
      %v2251 = vld [vmem:[%s3 + $0xb34] sm:$0xff]
      %v2252 = vld [vmem:[%s3 + $0xb3c] sm:$0xf]
      %v2253 = vld [vmem:[%s3 + $0xb40] sm:$0xff]
      %v2254 = vld [vmem:[%s3 + $0xb48] sm:$0xff]
      %v2255 = vld [vmem:[%s3 + $0xb50] sm:$0xf]
      %v2256 = vld [vmem:[%s3 + $0xb54] sm:$0xff]
      %v2257 = vld [vmem:[%s3 + $0xb5c] sm:$0xff]
      %v2258 = vld [vmem:[%s3 + $0xb64] sm:$0xf]
      %v2259 = vld [vmem:[%s3 + $0xb68] sm:$0xff]
      %v2260 = vld [vmem:[%s3 + $0xb70] sm:$0xff]
      %v2261 = vld [vmem:[%s3 + $0xb78] sm:$0xf]
      %v2262 = vld [vmem:[%s3 + $0xb7c] sm:$0xff]
      %v2263 = vld [vmem:[%s3 + $0xb84] sm:$0xff]
      %v2264 = vld [vmem:[%s3 + $0xb8c] sm:$0xf]
      %v2265 = vld [vmem:[%s3 + $0xb90] sm:$0xff]
      %v2266 = vld [vmem:[%s3 + $0xb98] sm:$0xff]
      %v2267 = vld [vmem:[%s3 + $0xba0] sm:$0xf]
      %v2268 = vld [vmem:[%s3 + $0xba4] sm:$0xff]
      %v2269 = vld [vmem:[%s3 + $0xbac] sm:$0xff]
      %v2270 = vld [vmem:[%s3 + $0xbb4] sm:$0xf]
      %v2271 = vld [vmem:[%s3 + $0xbb8] sm:$0xff]
      %v2272 = vld [vmem:[%s3 + $0xbc0] sm:$0xff]
      %v2273 = vld [vmem:[%s3 + $0xbc8] sm:$0xf]
      %v2274 = vld [vmem:[%s3 + $0xbcc] sm:$0xff]
      %v2275 = vld [vmem:[%s3 + $0xbd4] sm:$0xff]
      %v2276 = vld [vmem:[%s3 + $0xbdc] sm:$0xf]
      %v2277 = vld [vmem:[%s3 + $0xbe0] sm:$0xff]
      %v2278 = vld [vmem:[%s3 + $0xbe8] sm:$0xff]
      %v2279 = vld [vmem:[%s3 + $0xbf0] sm:$0xf]
      %v2280 = vld [vmem:[%s3 + $0xbf4] sm:$0xff]
      %v2281 = vld [vmem:[%s3 + $0xbfc] sm:$0xff]
      %v2282 = vld [vmem:[%s3 + $0xc04] sm:$0xf]
      %v2283 = vld [vmem:[%s3 + $0xc08] sm:$0xff]
      %v2284 = vld [vmem:[%s3 + $0xc10] sm:$0xff]
      %v2285 = vld [vmem:[%s3 + $0xc18] sm:$0xf]
      %v2286 = vld [vmem:[%s3 + $0xc1c] sm:$0xff]
      %v2287 = vld [vmem:[%s3 + $0xc24] sm:$0xff]
      %v2288 = vld [vmem:[%s3 + $0xc2c] sm:$0xf]
      %v2289 = vld [vmem:[%s3 + $0xc30] sm:$0xff]
      %v2290 = vld [vmem:[%s3 + $0xc38] sm:$0xff]
      %v2291 = vld [vmem:[%s3 + $0xc40] sm:$0xf]
      %v2292 = vld [vmem:[%s3 + $0xc44] sm:$0xff]
      %v2293 = vld [vmem:[%s3 + $0xc4c] sm:$0xff]
      %v2294 = vld [vmem:[%s3 + $0xc54] sm:$0xf]
      %v2295 = vld [vmem:[%s3 + $0xc58] sm:$0xff]
      %v2296 = vld [vmem:[%s3 + $0xc60] sm:$0xff]
      %v2297 = vld [vmem:[%s3 + $0xc68] sm:$0xf]
      %v2298 = vld [vmem:[%s3 + $0xc6c] sm:$0xff]
      %v2299 = vld [vmem:[%s3 + $0xc74] sm:$0xff]
      %v2300 = vld [vmem:[%s3 + $0xc7c] sm:$0xf]
      %v2301 = vld [vmem:[%s3 + $0xc80] sm:$0xff]
      %v2302 = vld [vmem:[%s3 + $0xc88] sm:$0xff]
      %v2303 = vld [vmem:[%s3 + $0xc90] sm:$0xf]
      %v2304 = vld [vmem:[%s3 + $0xc94] sm:$0xff]
      %v2305 = vld [vmem:[%s3 + $0xc9c] sm:$0xff]
      %v2306 = vld [vmem:[%s3 + $0xca4] sm:$0xf]
      %v2307 = vld [vmem:[%s3 + $0xca8] sm:$0xff]
      %v2308 = vld [vmem:[%s3 + $0xcb0] sm:$0xff]
      %v2309 = vld [vmem:[%s3 + $0xcb8] sm:$0xf]
      %v2310 = vld [vmem:[%s3 + $0xcbc] sm:$0xff]
      %v2311 = vld [vmem:[%s3 + $0xcc4] sm:$0xff]
      %v2312 = vld [vmem:[%s3 + $0xccc] sm:$0xf]
      %v2313 = vld [vmem:[%s3 + $0xcd0] sm:$0xff]
      %v2314 = vld [vmem:[%s3 + $0xcd8] sm:$0xff]
      %v2315 = vld [vmem:[%s3 + $0xce0] sm:$0xf]
      %v2316 = vld [vmem:[%s3 + $0xce4] sm:$0xff]
      %v2317 = vld [vmem:[%s3 + $0xcec] sm:$0xff]
      %v2318 = vld [vmem:[%s3 + $0xcf4] sm:$0xf]
      %v2319 = vld [vmem:[%s3 + $0xcf8] sm:$0xff]
      %v2320 = vld [vmem:[%s3 + $0xd00] sm:$0xff]
      %v2321 = vld [vmem:[%s3 + $0xd08] sm:$0xf]
      %v2322 = vld [vmem:[%s3 + $0xd0c] sm:$0xff]
      %v2323 = vld [vmem:[%s3 + $0xd14] sm:$0xff]
      %v2324 = vld [vmem:[%s3 + $0xd1c] sm:$0xf]
      %v2325 = vld [vmem:[%s3 + $0xd20] sm:$0xff]
      %v2326 = vld [vmem:[%s3 + $0xd28] sm:$0xff]
      %v2327 = vld [vmem:[%s3 + $0xd30] sm:$0xf]
      %v2328 = vld [vmem:[%s3 + $0xd34] sm:$0xff]
      %v2329 = vld [vmem:[%s3 + $0xd3c] sm:$0xff]
      %v2330 = vld [vmem:[%s3 + $0xd44] sm:$0xf]
      %v2331 = vld [vmem:[%s3 + $0xd48] sm:$0xff]
      %v2332 = vld [vmem:[%s3 + $0xd50] sm:$0xff]
      %v2333 = vld [vmem:[%s3 + $0xd58] sm:$0xf]
      %v2334 = vld [vmem:[%s3 + $0xd5c] sm:$0xff]
      %v2335 = vld [vmem:[%s3 + $0xd64] sm:$0xff]
      %v2336 = vld [vmem:[%s3 + $0xd6c] sm:$0xf]
      %v2337 = vld [vmem:[%s3 + $0xd70] sm:$0xff]
      %v2338 = vld [vmem:[%s3 + $0xd78] sm:$0xff]
      %v2339 = vld [vmem:[%s3 + $0xd80] sm:$0xf]
      %v2340 = vld [vmem:[%s3 + $0xd84] sm:$0xff]
      %v2341 = vld [vmem:[%s3 + $0xd8c] sm:$0xff]
      %v2342 = vld [vmem:[%s3 + $0xd94] sm:$0xf]
      %v2343 = vld [vmem:[%s3 + $0xd98] sm:$0xff]
      %v2344 = vld [vmem:[%s3 + $0xda0] sm:$0xff]
      %v2345 = vld [vmem:[%s3 + $0xda8] sm:$0xf]
      %v2346 = vld [vmem:[%s3 + $0xdac] sm:$0xff]
      %v2347 = vld [vmem:[%s3 + $0xdb4] sm:$0xff]
      %v2348 = vld [vmem:[%s3 + $0xdbc] sm:$0xf]
      %v2349 = vld [vmem:[%s3 + $0xdc0] sm:$0xff]
      %v2350 = vld [vmem:[%s3 + $0xdc8] sm:$0xff]
      %v2351 = vld [vmem:[%s3 + $0xdd0] sm:$0xf]
      %v2352 = vld [vmem:[%s3 + $0xdd4] sm:$0xff]
      %v2353 = vld [vmem:[%s3 + $0xddc] sm:$0xff]
      %v2354 = vld [vmem:[%s3 + $0xde4] sm:$0xf]
      %v2355 = vld [vmem:[%s3 + $0xde8] sm:$0xff]
      %v2356 = vld [vmem:[%s3 + $0xdf0] sm:$0xff]
      %v2357 = vld [vmem:[%s3 + $0xdf8] sm:$0xf]
      %v2358 = vld [vmem:[%s3 + $0xdfc] sm:$0xff]
      %v2359 = vld [vmem:[%s3 + $0xe04] sm:$0xff]
      %v2360 = vld [vmem:[%s3 + $0xe0c] sm:$0xf]
      %v2361 = vld [vmem:[%s3 + $0xe10] sm:$0xff]
      %v2362 = vld [vmem:[%s3 + $0xe18] sm:$0xff]
      %v2363 = vld [vmem:[%s3 + $0xe20] sm:$0xf]
      %v2364 = vld [vmem:[%s3 + $0xe24] sm:$0xff]
      %v2365 = vld [vmem:[%s3 + $0xe2c] sm:$0xff]
      %v2366 = vld [vmem:[%s3 + $0xe34] sm:$0xf]
      %v2367 = vld [vmem:[%s3 + $0xe38] sm:$0xff]
      %v2368 = vld [vmem:[%s3 + $0xe40] sm:$0xff]
      %v2369 = vld [vmem:[%s3 + $0xe48] sm:$0xf]
      %v2370 = vld [vmem:[%s3 + $0xe4c] sm:$0xff]
      %v2371 = vld [vmem:[%s3 + $0xe54] sm:$0xff]
      %v2372 = vld [vmem:[%s3 + $0xe5c] sm:$0xf]
      %v2373 = vld [vmem:[%s3 + $0xe60] sm:$0xff]
      %v2374 = vld [vmem:[%s3 + $0xe68] sm:$0xff]
      %v2375 = vld [vmem:[%s3 + $0xe70] sm:$0xf]
      %v2376 = vld [vmem:[%s3 + $0xe74] sm:$0xff]
      %v2377 = vld [vmem:[%s3 + $0xe7c] sm:$0xff]
      %v2378 = vld [vmem:[%s3 + $0xe84] sm:$0xf]
      %v2379 = vld [vmem:[%s3 + $0xe88] sm:$0xff]
      %v2380 = vld [vmem:[%s3 + $0xe90] sm:$0xff]
      %v2381 = vld [vmem:[%s3 + $0xe98] sm:$0xf]
      %v2382 = vld [vmem:[%s3 + $0xe9c] sm:$0xff]
      %v2383 = vld [vmem:[%s3 + $0xea4] sm:$0xff]
      %v2384 = vld [vmem:[%s3 + $0xeac] sm:$0xf]
      %v2385 = vld [vmem:[%s3 + $0xeb0] sm:$0xff]
      %v2386 = vld [vmem:[%s3 + $0xeb8] sm:$0xff]
      %v2387 = vld [vmem:[%s3 + $0xec0] sm:$0xf]
      %v2388 = vld [vmem:[%s3 + $0xec4] sm:$0xff]
      %v2389 = vld [vmem:[%s3 + $0xecc] sm:$0xff]
      %v2390 = vld [vmem:[%s3 + $0xed4] sm:$0xf]
      %v2391 = vld [vmem:[%s3 + $0xed8] sm:$0xff]
      %v2392 = vld [vmem:[%s3 + $0xee0] sm:$0xff]
      %v2393 = vld [vmem:[%s3 + $0xee8] sm:$0xf]
      %v2394 = vld [vmem:[%s3 + $0xeec] sm:$0xff]
      %v2395 = vld [vmem:[%s3 + $0xef4] sm:$0xff]
      %v2396 = vld [vmem:[%s3 + $0xefc] sm:$0xf]
      %v2397 = vld [vmem:[%s3 + $0xf00] sm:$0xff]
      %v2398 = vld [vmem:[%s3 + $0xf08] sm:$0xff]
      %v2399 = vld [vmem:[%s3 + $0xf10] sm:$0xf]
      %v2400 = vld [vmem:[%s3 + $0xf14] sm:$0xff]
      %v2401 = vld [vmem:[%s3 + $0xf1c] sm:$0xff]
      %v2402 = vld [vmem:[%s3 + $0xf24] sm:$0xf]
      %v2403 = vld [vmem:[%s3 + $0xf28] sm:$0xff]
      %v2404 = vld [vmem:[%s3 + $0xf30] sm:$0xff]
      %v2405 = vld [vmem:[%s3 + $0xf38] sm:$0xf]
      %v2406 = vld [vmem:[%s3 + $0xf3c] sm:$0xff]
      %v2407 = vld [vmem:[%s3 + $0xf44] sm:$0xff]
      %v2408 = vld [vmem:[%s3 + $0xf4c] sm:$0xf]
      %v2409 = vld [vmem:[%s3 + $0xf50] sm:$0xff]
      %v2410 = vld [vmem:[%s3 + $0xf58] sm:$0xff]
      %v2411 = vld [vmem:[%s3 + $0xf60] sm:$0xf]
      %v2412 = vld [vmem:[%s3 + $0xf64] sm:$0xff]
      %v2413 = vld [vmem:[%s3 + $0xf6c] sm:$0xff]
      %v2414 = vld [vmem:[%s3 + $0xf74] sm:$0xf]
      %v2415 = vld [vmem:[%s3 + $0xf78] sm:$0xff]
      %v2416 = vld [vmem:[%s3 + $0xf80] sm:$0xff]
      %v2417 = vld [vmem:[%s3 + $0xf88] sm:$0xf]
      %v2418 = vld [vmem:[%s3 + $0xf8c] sm:$0xff]
      %v2419 = vld [vmem:[%s3 + $0xf94] sm:$0xff]
      %v2420 = vld [vmem:[%s3 + $0xf9c] sm:$0xf]
      %v2421 = vld [vmem:[%s3 + $0xfa0] sm:$0xff]
      %v2422 = vld [vmem:[%s3 + $0xfa8] sm:$0xff]
      %v2423 = vld [vmem:[%s3 + $0xfb0] sm:$0xf]
      %v2424 = vld [vmem:[%s3 + $0xfb4] sm:$0xff]
      %v2425 = vld [vmem:[%s3 + $0xfbc] sm:$0xff]
      %v2426 = vld [vmem:[%s3 + $0xfc4] sm:$0xf]
      %v2427 = vld [vmem:[%s3 + $0xfc8] sm:$0xff]
      %v2428 = vld [vmem:[%s3 + $0xfd0] sm:$0xff]
      %v2429 = vld [vmem:[%s3 + $0xfd8] sm:$0xf]
      %v2430 = vld [vmem:[%s3 + $0xfdc] sm:$0xff]
      %v2431 = vld [vmem:[%s3 + $0xfe4] sm:$0xff]
      %v2432 = vld [vmem:[%s3 + $0xfec] sm:$0xf]
      %v2433 = vld [vmem:[%s3 + $0xff0] sm:$0xff]
      %v2434 = vld [vmem:[%s3 + $0xff8] sm:$0xff]
      %v2435 = vld [vmem:[%s3 + $0x1000] sm:$0xf]
      %v2436 = vld [vmem:[%s3 + $0x1004] sm:$0xff]
      %v2437 = vld [vmem:[%s3 + $0x100c] sm:$0xff]
      %v2438 = vld [vmem:[%s3 + $0x1014] sm:$0xf]
      %v2439 = vld [vmem:[%s3 + $0x1018] sm:$0xff]
      %v2440 = vld [vmem:[%s3 + $0x1020] sm:$0xff]
      %v2441 = vld [vmem:[%s3 + $0x1028] sm:$0xf]
      %v2442 = vld [vmem:[%s3 + $0x102c] sm:$0xff]
      %v2443 = vld [vmem:[%s3 + $0x1034] sm:$0xff]
      %v2444 = vld [vmem:[%s3 + $0x103c] sm:$0xf]
      %v2445 = vld [vmem:[%s3 + $0x1040] sm:$0xff]
      %v2446 = vld [vmem:[%s3 + $0x1048] sm:$0xff]
      %v2447 = vld [vmem:[%s3 + $0x1050] sm:$0xf]
      %v2448 = vld [vmem:[%s3 + $0x1054] sm:$0xff]
      %v2449 = vld [vmem:[%s3 + $0x105c] sm:$0xff]
      %v2450 = vld [vmem:[%s3 + $0x1064] sm:$0xf]
      %v2451 = vld [vmem:[%s3 + $0x1068] sm:$0xff]
      %v2452 = vld [vmem:[%s3 + $0x1070] sm:$0xff]
      %v2453 = vld [vmem:[%s3 + $0x1078] sm:$0xf]
      %v2454 = vld [vmem:[%s3 + $0x107c] sm:$0xff]
      %v2455 = vld [vmem:[%s3 + $0x1084] sm:$0xff]
      %v2456 = vld [vmem:[%s3 + $0x108c] sm:$0xf]
      %v2457 = vld [vmem:[%s3 + $0x1090] sm:$0xff]
      %v2458 = vld [vmem:[%s3 + $0x1098] sm:$0xff]
      %v2459 = vld [vmem:[%s3 + $0x10a0] sm:$0xf]
      %v2460 = vld [vmem:[%s3 + $0x10a4] sm:$0xff]
      %v2461 = vld [vmem:[%s3 + $0x10ac] sm:$0xff]
      %v2462 = vld [vmem:[%s3 + $0x10b4] sm:$0xf]
      %v2463 = vld [vmem:[%s3 + $0x10b8] sm:$0xff]
      %v2464 = vld [vmem:[%s3 + $0x10c0] sm:$0xff]
      %v2465 = vld [vmem:[%s3 + $0x10c8] sm:$0xf]
      %v2466 = vld [vmem:[%s3 + $0x10cc] sm:$0xff]
      %v2467 = vld [vmem:[%s3 + $0x10d4] sm:$0xff]
      %v2468 = vld [vmem:[%s3 + $0x10dc] sm:$0xf]
      %v2469 = vld [vmem:[%s3 + $0x10e0] sm:$0xff]
      %v2470 = vld [vmem:[%s3 + $0x10e8] sm:$0xff]
      %v2471 = vld [vmem:[%s3 + $0x10f0] sm:$0xf]
      %v2472 = vld [vmem:[%s3 + $0x10f4] sm:$0xff]
      %v2473 = vld [vmem:[%s3 + $0x10fc] sm:$0xff]
      %v2474 = vld [vmem:[%s3 + $0x1104] sm:$0xf]
      %v2475 = vld [vmem:[%s3 + $0x1108] sm:$0xff]
      %v2476 = vld [vmem:[%s3 + $0x1110] sm:$0xff]
      %v2477 = vld [vmem:[%s3 + $0x1118] sm:$0xf]
      %v2478 = vld [vmem:[%s3 + $0x111c] sm:$0xff]
      %v2479 = vld [vmem:[%s3 + $0x1124] sm:$0xff]
      %v2480 = vld [vmem:[%s3 + $0x112c] sm:$0xf]
      %v2481 = vld [vmem:[%s3 + $0x1130] sm:$0xff]
      %v2482 = vld [vmem:[%s3 + $0x1138] sm:$0xff]
      %v2483 = vld [vmem:[%s3 + $0x1140] sm:$0xf]
      %v2484 = vld [vmem:[%s3 + $0x1144] sm:$0xff]
      %v2485 = vld [vmem:[%s3 + $0x114c] sm:$0xff]
      %v2486 = vld [vmem:[%s3 + $0x1154] sm:$0xf]
      %v2487 = vld [vmem:[%s3 + $0x1158] sm:$0xff]
      %v2488 = vld [vmem:[%s3 + $0x1160] sm:$0xff]
      %v2489 = vld [vmem:[%s3 + $0x1168] sm:$0xf]
      %v2490 = vld [vmem:[%s3 + $0x116c] sm:$0xff]
      %v2491 = vld [vmem:[%s3 + $0x1174] sm:$0xff]
      %v2492 = vld [vmem:[%s3 + $0x117c] sm:$0xf]
      %v2493 = vld [vmem:[%s3 + $0x1180] sm:$0xff]
      %v2494 = vld [vmem:[%s3 + $0x1188] sm:$0xff]
      %v2495 = vld [vmem:[%s3 + $0x1190] sm:$0xf]
      %v2496 = vld [vmem:[%s3 + $0x1194] sm:$0xff]
      %v2497 = vld [vmem:[%s3 + $0x119c] sm:$0xff]
      %v2498 = vld [vmem:[%s3 + $0x11a4] sm:$0xf]
      %v2499 = vld [vmem:[%s3 + $0x11a8] sm:$0xff]
      %v2500 = vld [vmem:[%s3 + $0x11b0] sm:$0xff]
      %v2501 = vld [vmem:[%s3 + $0x11b8] sm:$0xf]
      %v2502 = vld [vmem:[%s3 + $0x11bc] sm:$0xff]
      %v2503 = vld [vmem:[%s3 + $0x11c4] sm:$0xff]
      %v2504 = vld [vmem:[%s3 + $0x11cc] sm:$0xf]
      %v2505 = vld [vmem:[%s3 + $0x11d0] sm:$0xff]
      %v2506 = vld [vmem:[%s3 + $0x11d8] sm:$0xff]
      %v2507 = vld [vmem:[%s3 + $0x11e0] sm:$0xf]
      %v2508 = vld [vmem:[%s3 + $0x11e4] sm:$0xff]
      %v2509 = vld [vmem:[%s3 + $0x11ec] sm:$0xff]
      %v2510 = vld [vmem:[%s3 + $0x11f4] sm:$0xf]
      %v2511 = vld [vmem:[%s3 + $0x11f8] sm:$0xff]
      %v2512 = vld [vmem:[%s3 + $0x1200] sm:$0xff]
      %v2513 = vld [vmem:[%s3 + $0x1208] sm:$0xf]
      %v2514 = vld [vmem:[%s3 + $0x120c] sm:$0xff]
      %v2515 = vld [vmem:[%s3 + $0x1214] sm:$0xff]
      %v2516 = vld [vmem:[%s3 + $0x121c] sm:$0xf]
      %v2517 = vld [vmem:[%s3 + $0x1220] sm:$0xff]
      %v2518 = vld [vmem:[%s3 + $0x1228] sm:$0xff]
      %v2519 = vld [vmem:[%s3 + $0x1230] sm:$0xf]
      %v2520 = vld [vmem:[%s3 + $0x1234] sm:$0xff]
      %v2521 = vld [vmem:[%s3 + $0x123c] sm:$0xff]
      %v2522 = vld [vmem:[%s3 + $0x1244] sm:$0xf]
      %v2523 = vld [vmem:[%s3 + $0x1248] sm:$0xff]
      %v2524 = vld [vmem:[%s3 + $0x1250] sm:$0xff]
      %v2525 = vld [vmem:[%s3 + $0x1258] sm:$0xf]
      %v2526 = vld [vmem:[%s3 + $0x125c] sm:$0xff]
      %v2527 = vld [vmem:[%s3 + $0x1264] sm:$0xff]
      %v2528 = vld [vmem:[%s3 + $0x126c] sm:$0xf]
      %v2529 = vld [vmem:[%s3 + $0x1270] sm:$0xff]
      %v2530 = vld [vmem:[%s3 + $0x1278] sm:$0xff]
      %v2531 = vld [vmem:[%s3 + $0x1280] sm:$0xf]
      %v2532 = vld [vmem:[%s3 + $0x1284] sm:$0xff]
      %v2533 = vld [vmem:[%s3 + $0x128c] sm:$0xff]
      %v2534 = vld [vmem:[%s3 + $0x1294] sm:$0xf]
      %v2535 = vld [vmem:[%s3 + $0x1298] sm:$0xff]
      %v2536 = vld [vmem:[%s3 + $0x12a0] sm:$0xff]
      %v2537 = vld [vmem:[%s3 + $0x12a8] sm:$0xf]
      %v2538 = vld [vmem:[%s3 + $0x12ac] sm:$0xff]
      %v2539 = vld [vmem:[%s3 + $0x12b4] sm:$0xff]
      %v2540 = vld [vmem:[%s3 + $0x12bc] sm:$0xf]
      %v2541 = vld [vmem:[%s4] sm:$0x1f]
      %v2543 = vlaneseq
      %v2544 = vshrl.u32 %v2543, 7
      %v2545 = vsub.s32 0, %v2544
      %v2546 = vrot.slane %v2541, %v2545
      %v2547 = vlaneseq
      %v2548 = vshrl.u32 %v2547, 7
      %v2549 = vsub.s32 1, %v2548
      %v2550 = vrot.slane %v2541, %v2549
      %v2551 = vlaneseq
      %v2552 = vshrl.u32 %v2551, 7
      %v2553 = vsub.s32 2, %v2552
      %v2554 = vrot.slane %v2541, %v2553
      %v2555 = vlaneseq
      %v2556 = vshrl.u32 %v2555, 7
      %v2557 = vsub.s32 3, %v2556
      %v2558 = vrot.slane %v2541, %v2557
      %v2559 = vlaneseq
      %v2560 = vshrl.u32 %v2559, 7
      %v2561 = vsub.s32 4, %v2560
      %v2562 = vrot.slane %v2541, %v2561
      %v3288 = vunpack.c.l.b16 %v1821
      %v3289 = vunpack.c.h.b16 %v1821
      %v3290 = vunpack.c.l.b16 %v1822
      %v3291 = vunpack.c.h.b16 %v1822
      %v3292 = vunpack.c.l.b16 %v1823
      %v3293 = vunpack.c.l.b16 %v1824
      %v3294 = vunpack.c.h.b16 %v1824
      %v3295 = vunpack.c.l.b16 %v1825
      %v3296 = vunpack.c.h.b16 %v1825
      %v3297 = vunpack.c.l.b16 %v1826
      %v3298 = vunpack.c.l.b16 %v1827
      %v3299 = vunpack.c.h.b16 %v1827
      %v3300 = vunpack.c.l.b16 %v1828
      %v3301 = vunpack.c.h.b16 %v1828
      %v3302 = vunpack.c.l.b16 %v1829
      %v3303 = vunpack.c.l.b16 %v1830
      %v3304 = vunpack.c.h.b16 %v1830
      %v3305 = vunpack.c.l.b16 %v1831
      %v3306 = vunpack.c.h.b16 %v1831
      %v3307 = vunpack.c.l.b16 %v1832
      %v3308 = vunpack.c.l.b16 %v1833
      %v3309 = vunpack.c.h.b16 %v1833
      %v3310 = vunpack.c.l.b16 %v1834
      %v3311 = vunpack.c.h.b16 %v1834
      %v3312 = vunpack.c.l.b16 %v1835
      %v3313 = vunpack.c.l.b16 %v1836
      %v3314 = vunpack.c.h.b16 %v1836
      %v3315 = vunpack.c.l.b16 %v1837
      %v3316 = vunpack.c.h.b16 %v1837
      %v3317 = vunpack.c.l.b16 %v1838
      %v3318 = vunpack.c.l.b16 %v1839
      %v3319 = vunpack.c.h.b16 %v1839
      %v3320 = vunpack.c.l.b16 %v1840
      %v3321 = vunpack.c.h.b16 %v1840
      %v3322 = vunpack.c.l.b16 %v1841
      %v3323 = vunpack.c.l.b16 %v1842
      %v3324 = vunpack.c.h.b16 %v1842
      %v3325 = vunpack.c.l.b16 %v1843
      %v3326 = vunpack.c.h.b16 %v1843
      %v3327 = vunpack.c.l.b16 %v1844
      %v3328 = vunpack.c.l.b16 %v1845
      %v3329 = vunpack.c.h.b16 %v1845
      %v3330 = vunpack.c.l.b16 %v1846
      %v3331 = vunpack.c.h.b16 %v1846
      %v3332 = vunpack.c.l.b16 %v1847
      %v3333 = vunpack.c.l.b16 %v1848
      %v3334 = vunpack.c.h.b16 %v1848
      %v3335 = vunpack.c.l.b16 %v1849
      %v3336 = vunpack.c.h.b16 %v1849
      %v3337 = vunpack.c.l.b16 %v1850
      %v3338 = vunpack.c.l.b16 %v1851
      %v3339 = vunpack.c.h.b16 %v1851
      %v3340 = vunpack.c.l.b16 %v1852
      %v3341 = vunpack.c.h.b16 %v1852
      %v3342 = vunpack.c.l.b16 %v1853
      %v3343 = vunpack.c.l.b16 %v1854
      %v3344 = vunpack.c.h.b16 %v1854
      %v3345 = vunpack.c.l.b16 %v1855
      %v3346 = vunpack.c.h.b16 %v1855
      %v3347 = vunpack.c.l.b16 %v1856
      %v3348 = vunpack.c.l.b16 %v1857
      %v3349 = vunpack.c.h.b16 %v1857
      %v3350 = vunpack.c.l.b16 %v1858
      %v3351 = vunpack.c.h.b16 %v1858
      %v3352 = vunpack.c.l.b16 %v1859
      %v3353 = vunpack.c.l.b16 %v1860
      %v3354 = vunpack.c.h.b16 %v1860
      %v3355 = vunpack.c.l.b16 %v1861
      %v3356 = vunpack.c.h.b16 %v1861
      %v3357 = vunpack.c.l.b16 %v1862
      %v3358 = vunpack.c.l.b16 %v1863
      %v3359 = vunpack.c.h.b16 %v1863
      %v3360 = vunpack.c.l.b16 %v1864
      %v3361 = vunpack.c.h.b16 %v1864
      %v3362 = vunpack.c.l.b16 %v1865
      %v3363 = vunpack.c.l.b16 %v1866
      %v3364 = vunpack.c.h.b16 %v1866
      %v3365 = vunpack.c.l.b16 %v1867
      %v3366 = vunpack.c.h.b16 %v1867
      %v3367 = vunpack.c.l.b16 %v1868
      %v3368 = vunpack.c.l.b16 %v1869
      %v3369 = vunpack.c.h.b16 %v1869
      %v3370 = vunpack.c.l.b16 %v1870
      %v3371 = vunpack.c.h.b16 %v1870
      %v3372 = vunpack.c.l.b16 %v1871
      %v3373 = vunpack.c.l.b16 %v1872
      %v3374 = vunpack.c.h.b16 %v1872
      %v3375 = vunpack.c.l.b16 %v1873
      %v3376 = vunpack.c.h.b16 %v1873
      %v3377 = vunpack.c.l.b16 %v1874
      %v3378 = vunpack.c.l.b16 %v1875
      %v3379 = vunpack.c.h.b16 %v1875
      %v3380 = vunpack.c.l.b16 %v1876
      %v3381 = vunpack.c.h.b16 %v1876
      %v3382 = vunpack.c.l.b16 %v1877
      %v3383 = vunpack.c.l.b16 %v1878
      %v3384 = vunpack.c.h.b16 %v1878
      %v3385 = vunpack.c.l.b16 %v1879
      %v3386 = vunpack.c.h.b16 %v1879
      %v3387 = vunpack.c.l.b16 %v1880
      %v3388 = vunpack.c.l.b16 %v1881
      %v3389 = vunpack.c.h.b16 %v1881
      %v3390 = vunpack.c.l.b16 %v1882
      %v3391 = vunpack.c.h.b16 %v1882
      %v3392 = vunpack.c.l.b16 %v1883
      %v3393 = vunpack.c.l.b16 %v1884
      %v3394 = vunpack.c.h.b16 %v1884
      %v3395 = vunpack.c.l.b16 %v1885
      %v3396 = vunpack.c.h.b16 %v1885
      %v3397 = vunpack.c.l.b16 %v1886
      %v3398 = vunpack.c.l.b16 %v1887
      %v3399 = vunpack.c.h.b16 %v1887
      %v3400 = vunpack.c.l.b16 %v1888
      %v3401 = vunpack.c.h.b16 %v1888
      %v3402 = vunpack.c.l.b16 %v1889
      %v3403 = vunpack.c.l.b16 %v1890
      %v3404 = vunpack.c.h.b16 %v1890
      %v3405 = vunpack.c.l.b16 %v1891
      %v3406 = vunpack.c.h.b16 %v1891
      %v3407 = vunpack.c.l.b16 %v1892
      %v3408 = vunpack.c.l.b16 %v1893
      %v3409 = vunpack.c.h.b16 %v1893
      %v3410 = vunpack.c.l.b16 %v1894
      %v3411 = vunpack.c.h.b16 %v1894
      %v3412 = vunpack.c.l.b16 %v1895
      %v3413 = vunpack.c.l.b16 %v1896
      %v3414 = vunpack.c.h.b16 %v1896
      %v3415 = vunpack.c.l.b16 %v1897
      %v3416 = vunpack.c.h.b16 %v1897
      %v3417 = vunpack.c.l.b16 %v1898
      %v3418 = vunpack.c.l.b16 %v1899
      %v3419 = vunpack.c.h.b16 %v1899
      %v3420 = vunpack.c.l.b16 %v1900
      %v3421 = vunpack.c.h.b16 %v1900
      %v3422 = vunpack.c.l.b16 %v1901
      %v3423 = vunpack.c.l.b16 %v1902
      %v3424 = vunpack.c.h.b16 %v1902
      %v3425 = vunpack.c.l.b16 %v1903
      %v3426 = vunpack.c.h.b16 %v1903
      %v3427 = vunpack.c.l.b16 %v1904
      %v3428 = vunpack.c.l.b16 %v1905
      %v3429 = vunpack.c.h.b16 %v1905
      %v3430 = vunpack.c.l.b16 %v1906
      %v3431 = vunpack.c.h.b16 %v1906
      %v3432 = vunpack.c.l.b16 %v1907
      %v3433 = vunpack.c.l.b16 %v1908
      %v3434 = vunpack.c.h.b16 %v1908
      %v3435 = vunpack.c.l.b16 %v1909
      %v3436 = vunpack.c.h.b16 %v1909
      %v3437 = vunpack.c.l.b16 %v1910
      %v3438 = vunpack.c.l.b16 %v1911
      %v3439 = vunpack.c.h.b16 %v1911
      %v3440 = vunpack.c.l.b16 %v1912
      %v3441 = vunpack.c.h.b16 %v1912
      %v3442 = vunpack.c.l.b16 %v1913
      %v3443 = vunpack.c.l.b16 %v1914
      %v3444 = vunpack.c.h.b16 %v1914
      %v3445 = vunpack.c.l.b16 %v1915
      %v3446 = vunpack.c.h.b16 %v1915
      %v3447 = vunpack.c.l.b16 %v1916
      %v3448 = vunpack.c.l.b16 %v1917
      %v3449 = vunpack.c.h.b16 %v1917
      %v3450 = vunpack.c.l.b16 %v1918
      %v3451 = vunpack.c.h.b16 %v1918
      %v3452 = vunpack.c.l.b16 %v1919
      %v3453 = vunpack.c.l.b16 %v1920
      %v3454 = vunpack.c.h.b16 %v1920
      %v3455 = vunpack.c.l.b16 %v1921
      %v3456 = vunpack.c.h.b16 %v1921
      %v3457 = vunpack.c.l.b16 %v1922
      %v3458 = vunpack.c.l.b16 %v1923
      %v3459 = vunpack.c.h.b16 %v1923
      %v3460 = vunpack.c.l.b16 %v1924
      %v3461 = vunpack.c.h.b16 %v1924
      %v3462 = vunpack.c.l.b16 %v1925
      %v3463 = vunpack.c.l.b16 %v1926
      %v3464 = vunpack.c.h.b16 %v1926
      %v3465 = vunpack.c.l.b16 %v1927
      %v3466 = vunpack.c.h.b16 %v1927
      %v3467 = vunpack.c.l.b16 %v1928
      %v3468 = vunpack.c.l.b16 %v1929
      %v3469 = vunpack.c.h.b16 %v1929
      %v3470 = vunpack.c.l.b16 %v1930
      %v3471 = vunpack.c.h.b16 %v1930
      %v3472 = vunpack.c.l.b16 %v1931
      %v3473 = vunpack.c.l.b16 %v1932
      %v3474 = vunpack.c.h.b16 %v1932
      %v3475 = vunpack.c.l.b16 %v1933
      %v3476 = vunpack.c.h.b16 %v1933
      %v3477 = vunpack.c.l.b16 %v1934
      %v3478 = vunpack.c.l.b16 %v1935
      %v3479 = vunpack.c.h.b16 %v1935
      %v3480 = vunpack.c.l.b16 %v1936
      %v3481 = vunpack.c.h.b16 %v1936
      %v3482 = vunpack.c.l.b16 %v1937
      %v3483 = vunpack.c.l.b16 %v1938
      %v3484 = vunpack.c.h.b16 %v1938
      %v3485 = vunpack.c.l.b16 %v1939
      %v3486 = vunpack.c.h.b16 %v1939
      %v3487 = vunpack.c.l.b16 %v1940
      %v3488 = vunpack.c.l.b16 %v1941
      %v3489 = vunpack.c.h.b16 %v1941
      %v3490 = vunpack.c.l.b16 %v1942
      %v3491 = vunpack.c.h.b16 %v1942
      %v3492 = vunpack.c.l.b16 %v1943
      %v3493 = vunpack.c.l.b16 %v1944
      %v3494 = vunpack.c.h.b16 %v1944
      %v3495 = vunpack.c.l.b16 %v1945
      %v3496 = vunpack.c.h.b16 %v1945
      %v3497 = vunpack.c.l.b16 %v1946
      %v3498 = vunpack.c.l.b16 %v1947
      %v3499 = vunpack.c.h.b16 %v1947
      %v3500 = vunpack.c.l.b16 %v1948
      %v3501 = vunpack.c.h.b16 %v1948
      %v3502 = vunpack.c.l.b16 %v1949
      %v3503 = vunpack.c.l.b16 %v1950
      %v3504 = vunpack.c.h.b16 %v1950
      %v3505 = vunpack.c.l.b16 %v1951
      %v3506 = vunpack.c.h.b16 %v1951
      %v3507 = vunpack.c.l.b16 %v1952
      %v3508 = vunpack.c.l.b16 %v1953
      %v3509 = vunpack.c.h.b16 %v1953
      %v3510 = vunpack.c.l.b16 %v1954
      %v3511 = vunpack.c.h.b16 %v1954
      %v3512 = vunpack.c.l.b16 %v1955
      %v3513 = vunpack.c.l.b16 %v1956
      %v3514 = vunpack.c.h.b16 %v1956
      %v3515 = vunpack.c.l.b16 %v1957
      %v3516 = vunpack.c.h.b16 %v1957
      %v3517 = vunpack.c.l.b16 %v1958
      %v3518 = vunpack.c.l.b16 %v1959
      %v3519 = vunpack.c.h.b16 %v1959
      %v3520 = vunpack.c.l.b16 %v1960
      %v3521 = vunpack.c.h.b16 %v1960
      %v3522 = vunpack.c.l.b16 %v1961
      %v3523 = vunpack.c.l.b16 %v1962
      %v3524 = vunpack.c.h.b16 %v1962
      %v3525 = vunpack.c.l.b16 %v1963
      %v3526 = vunpack.c.h.b16 %v1963
      %v3527 = vunpack.c.l.b16 %v1964
      %v3528 = vunpack.c.l.b16 %v1965
      %v3529 = vunpack.c.h.b16 %v1965
      %v3530 = vunpack.c.l.b16 %v1966
      %v3531 = vunpack.c.h.b16 %v1966
      %v3532 = vunpack.c.l.b16 %v1967
      %v3533 = vunpack.c.l.b16 %v1968
      %v3534 = vunpack.c.h.b16 %v1968
      %v3535 = vunpack.c.l.b16 %v1969
      %v3536 = vunpack.c.h.b16 %v1969
      %v3537 = vunpack.c.l.b16 %v1970
      %v3538 = vunpack.c.l.b16 %v1971
      %v3539 = vunpack.c.h.b16 %v1971
      %v3540 = vunpack.c.l.b16 %v1972
      %v3541 = vunpack.c.h.b16 %v1972
      %v3542 = vunpack.c.l.b16 %v1973
      %v3543 = vunpack.c.l.b16 %v1974
      %v3544 = vunpack.c.h.b16 %v1974
      %v3545 = vunpack.c.l.b16 %v1975
      %v3546 = vunpack.c.h.b16 %v1975
      %v3547 = vunpack.c.l.b16 %v1976
      %v3548 = vunpack.c.l.b16 %v1977
      %v3549 = vunpack.c.h.b16 %v1977
      %v3550 = vunpack.c.l.b16 %v1978
      %v3551 = vunpack.c.h.b16 %v1978
      %v3552 = vunpack.c.l.b16 %v1979
      %v3553 = vunpack.c.l.b16 %v1980
      %v3554 = vunpack.c.h.b16 %v1980
      %v3555 = vunpack.c.l.b16 %v1981
      %v3556 = vunpack.c.h.b16 %v1981
      %v3557 = vunpack.c.l.b16 %v1982
      %v3558 = vunpack.c.l.b16 %v1983
      %v3559 = vunpack.c.h.b16 %v1983
      %v3560 = vunpack.c.l.b16 %v1984
      %v3561 = vunpack.c.h.b16 %v1984
      %v3562 = vunpack.c.l.b16 %v1985
      %v3563 = vunpack.c.l.b16 %v1986
      %v3564 = vunpack.c.h.b16 %v1986
      %v3565 = vunpack.c.l.b16 %v1987
      %v3566 = vunpack.c.h.b16 %v1987
      %v3567 = vunpack.c.l.b16 %v1988
      %v3568 = vunpack.c.l.b16 %v1989
      %v3569 = vunpack.c.h.b16 %v1989
      %v3570 = vunpack.c.l.b16 %v1990
      %v3571 = vunpack.c.h.b16 %v1990
      %v3572 = vunpack.c.l.b16 %v1991
      %v3573 = vunpack.c.l.b16 %v1992
      %v3574 = vunpack.c.h.b16 %v1992
      %v3575 = vunpack.c.l.b16 %v1993
      %v3576 = vunpack.c.h.b16 %v1993
      %v3577 = vunpack.c.l.b16 %v1994
      %v3578 = vunpack.c.l.b16 %v1995
      %v3579 = vunpack.c.h.b16 %v1995
      %v3580 = vunpack.c.l.b16 %v1996
      %v3581 = vunpack.c.h.b16 %v1996
      %v3582 = vunpack.c.l.b16 %v1997
      %v3583 = vunpack.c.l.b16 %v1998
      %v3584 = vunpack.c.h.b16 %v1998
      %v3585 = vunpack.c.l.b16 %v1999
      %v3586 = vunpack.c.h.b16 %v1999
      %v3587 = vunpack.c.l.b16 %v2000
      %v3588 = vunpack.c.l.b16 %v2001
      %v3589 = vunpack.c.h.b16 %v2001
      %v3590 = vunpack.c.l.b16 %v2002
      %v3591 = vunpack.c.h.b16 %v2002
      %v3592 = vunpack.c.l.b16 %v2003
      %v3593 = vunpack.c.l.b16 %v2004
      %v3594 = vunpack.c.h.b16 %v2004
      %v3595 = vunpack.c.l.b16 %v2005
      %v3596 = vunpack.c.h.b16 %v2005
      %v3597 = vunpack.c.l.b16 %v2006
      %v3598 = vunpack.c.l.b16 %v2007
      %v3599 = vunpack.c.h.b16 %v2007
      %v3600 = vunpack.c.l.b16 %v2008
      %v3601 = vunpack.c.h.b16 %v2008
      %v3602 = vunpack.c.l.b16 %v2009
      %v3603 = vunpack.c.l.b16 %v2010
      %v3604 = vunpack.c.h.b16 %v2010
      %v3605 = vunpack.c.l.b16 %v2011
      %v3606 = vunpack.c.h.b16 %v2011
      %v3607 = vunpack.c.l.b16 %v2012
      %v3608 = vunpack.c.l.b16 %v2013
      %v3609 = vunpack.c.h.b16 %v2013
      %v3610 = vunpack.c.l.b16 %v2014
      %v3611 = vunpack.c.h.b16 %v2014
      %v3612 = vunpack.c.l.b16 %v2015
      %v3613 = vunpack.c.l.b16 %v2016
      %v3614 = vunpack.c.h.b16 %v2016
      %v3615 = vunpack.c.l.b16 %v2017
      %v3616 = vunpack.c.h.b16 %v2017
      %v3617 = vunpack.c.l.b16 %v2018
      %v3618 = vunpack.c.l.b16 %v2019
      %v3619 = vunpack.c.h.b16 %v2019
      %v3620 = vunpack.c.l.b16 %v2020
      %v3621 = vunpack.c.h.b16 %v2020
      %v3622 = vunpack.c.l.b16 %v2021
      %v3623 = vunpack.c.l.b16 %v2022
      %v3624 = vunpack.c.h.b16 %v2022
      %v3625 = vunpack.c.l.b16 %v2023
      %v3626 = vunpack.c.h.b16 %v2023
      %v3627 = vunpack.c.l.b16 %v2024
      %v3628 = vunpack.c.l.b16 %v2025
      %v3629 = vunpack.c.h.b16 %v2025
      %v3630 = vunpack.c.l.b16 %v2026
      %v3631 = vunpack.c.h.b16 %v2026
      %v3632 = vunpack.c.l.b16 %v2027
      %v3633 = vunpack.c.l.b16 %v2028
      %v3634 = vunpack.c.h.b16 %v2028
      %v3635 = vunpack.c.l.b16 %v2029
      %v3636 = vunpack.c.h.b16 %v2029
      %v3637 = vunpack.c.l.b16 %v2030
      %v3638 = vunpack.c.l.b16 %v2031
      %v3639 = vunpack.c.h.b16 %v2031
      %v3640 = vunpack.c.l.b16 %v2032
      %v3641 = vunpack.c.h.b16 %v2032
      %v3642 = vunpack.c.l.b16 %v2033
      %v3643 = vunpack.c.l.b16 %v2034
      %v3644 = vunpack.c.h.b16 %v2034
      %v3645 = vunpack.c.l.b16 %v2035
      %v3646 = vunpack.c.h.b16 %v2035
      %v3647 = vunpack.c.l.b16 %v2036
      %v3648 = vunpack.c.l.b16 %v2037
      %v3649 = vunpack.c.h.b16 %v2037
      %v3650 = vunpack.c.l.b16 %v2038
      %v3651 = vunpack.c.h.b16 %v2038
      %v3652 = vunpack.c.l.b16 %v2039
      %v3653 = vunpack.c.l.b16 %v2040
      %v3654 = vunpack.c.h.b16 %v2040
      %v3655 = vunpack.c.l.b16 %v2041
      %v3656 = vunpack.c.h.b16 %v2041
      %v3657 = vunpack.c.l.b16 %v2042
      %v3658 = vunpack.c.l.b16 %v2043
      %v3659 = vunpack.c.h.b16 %v2043
      %v3660 = vunpack.c.l.b16 %v2044
      %v3661 = vunpack.c.h.b16 %v2044
      %v3662 = vunpack.c.l.b16 %v2045
      %v3663 = vunpack.c.l.b16 %v2046
      %v3664 = vunpack.c.h.b16 %v2046
      %v3665 = vunpack.c.l.b16 %v2047
      %v3666 = vunpack.c.h.b16 %v2047
      %v3667 = vunpack.c.l.b16 %v2048
      %v3668 = vunpack.c.l.b16 %v2049
      %v3669 = vunpack.c.h.b16 %v2049
      %v3670 = vunpack.c.l.b16 %v2050
      %v3671 = vunpack.c.h.b16 %v2050
      %v3672 = vunpack.c.l.b16 %v2051
      %v3673 = vunpack.c.l.b16 %v2052
      %v3674 = vunpack.c.h.b16 %v2052
      %v3675 = vunpack.c.l.b16 %v2053
      %v3676 = vunpack.c.h.b16 %v2053
      %v3677 = vunpack.c.l.b16 %v2054
      %v3678 = vunpack.c.l.b16 %v2055
      %v3679 = vunpack.c.h.b16 %v2055
      %v3680 = vunpack.c.l.b16 %v2056
      %v3681 = vunpack.c.h.b16 %v2056
      %v3682 = vunpack.c.l.b16 %v2057
      %v3683 = vunpack.c.l.b16 %v2058
      %v3684 = vunpack.c.h.b16 %v2058
      %v3685 = vunpack.c.l.b16 %v2059
      %v3686 = vunpack.c.h.b16 %v2059
      %v3687 = vunpack.c.l.b16 %v2060
      %v3688 = vunpack.c.l.b16 %v2061
      %v3689 = vunpack.c.h.b16 %v2061
      %v3690 = vunpack.c.l.b16 %v2062
      %v3691 = vunpack.c.h.b16 %v2062
      %v3692 = vunpack.c.l.b16 %v2063
      %v3693 = vunpack.c.l.b16 %v2064
      %v3694 = vunpack.c.h.b16 %v2064
      %v3695 = vunpack.c.l.b16 %v2065
      %v3696 = vunpack.c.h.b16 %v2065
      %v3697 = vunpack.c.l.b16 %v2066
      %v3698 = vunpack.c.l.b16 %v2067
      %v3699 = vunpack.c.h.b16 %v2067
      %v3700 = vunpack.c.l.b16 %v2068
      %v3701 = vunpack.c.h.b16 %v2068
      %v3702 = vunpack.c.l.b16 %v2069
      %v3703 = vunpack.c.l.b16 %v2070
      %v3704 = vunpack.c.h.b16 %v2070
      %v3705 = vunpack.c.l.b16 %v2071
      %v3706 = vunpack.c.h.b16 %v2071
      %v3707 = vunpack.c.l.b16 %v2072
      %v3708 = vunpack.c.l.b16 %v2073
      %v3709 = vunpack.c.h.b16 %v2073
      %v3710 = vunpack.c.l.b16 %v2074
      %v3711 = vunpack.c.h.b16 %v2074
      %v3712 = vunpack.c.l.b16 %v2075
      %v3713 = vunpack.c.l.b16 %v2076
      %v3714 = vunpack.c.h.b16 %v2076
      %v3715 = vunpack.c.l.b16 %v2077
      %v3716 = vunpack.c.h.b16 %v2077
      %v3717 = vunpack.c.l.b16 %v2078
      %v3718 = vunpack.c.l.b16 %v2079
      %v3719 = vunpack.c.h.b16 %v2079
      %v3720 = vunpack.c.l.b16 %v2080
      %v3721 = vunpack.c.h.b16 %v2080
      %v3722 = vunpack.c.l.b16 %v2081
      %v3723 = vunpack.c.l.b16 %v2082
      %v3724 = vunpack.c.h.b16 %v2082
      %v3725 = vunpack.c.l.b16 %v2083
      %v3726 = vunpack.c.h.b16 %v2083
      %v3727 = vunpack.c.l.b16 %v2084
      %v3728 = vunpack.c.l.b16 %v2085
      %v3729 = vunpack.c.h.b16 %v2085
      %v3730 = vunpack.c.l.b16 %v2086
      %v3731 = vunpack.c.h.b16 %v2086
      %v3732 = vunpack.c.l.b16 %v2087
      %v3733 = vunpack.c.l.b16 %v2088
      %v3734 = vunpack.c.h.b16 %v2088
      %v3735 = vunpack.c.l.b16 %v2089
      %v3736 = vunpack.c.h.b16 %v2089
      %v3737 = vunpack.c.l.b16 %v2090
      %v3738 = vunpack.c.l.b16 %v2091
      %v3739 = vunpack.c.h.b16 %v2091
      %v3740 = vunpack.c.l.b16 %v2092
      %v3741 = vunpack.c.h.b16 %v2092
      %v3742 = vunpack.c.l.b16 %v2093
      %v3743 = vunpack.c.l.b16 %v2094
      %v3744 = vunpack.c.h.b16 %v2094
      %v3745 = vunpack.c.l.b16 %v2095
      %v3746 = vunpack.c.h.b16 %v2095
      %v3747 = vunpack.c.l.b16 %v2096
      %v3748 = vunpack.c.l.b16 %v2097
      %v3749 = vunpack.c.h.b16 %v2097
      %v3750 = vunpack.c.l.b16 %v2098
      %v3751 = vunpack.c.h.b16 %v2098
      %v3752 = vunpack.c.l.b16 %v2099
      %v3753 = vunpack.c.l.b16 %v2100
      %v3754 = vunpack.c.h.b16 %v2100
      %v3755 = vunpack.c.l.b16 %v2101
      %v3756 = vunpack.c.h.b16 %v2101
      %v3757 = vunpack.c.l.b16 %v2102
      %v3758 = vunpack.c.l.b16 %v2103
      %v3759 = vunpack.c.h.b16 %v2103
      %v3760 = vunpack.c.l.b16 %v2104
      %v3761 = vunpack.c.h.b16 %v2104
      %v3762 = vunpack.c.l.b16 %v2105
      %v3763 = vunpack.c.l.b16 %v2106
      %v3764 = vunpack.c.h.b16 %v2106
      %v3765 = vunpack.c.l.b16 %v2107
      %v3766 = vunpack.c.h.b16 %v2107
      %v3767 = vunpack.c.l.b16 %v2108
      %v3768 = vunpack.c.l.b16 %v2109
      %v3769 = vunpack.c.h.b16 %v2109
      %v3770 = vunpack.c.l.b16 %v2110
      %v3771 = vunpack.c.h.b16 %v2110
      %v3772 = vunpack.c.l.b16 %v2111
      %v3773 = vunpack.c.l.b16 %v2112
      %v3774 = vunpack.c.h.b16 %v2112
      %v3775 = vunpack.c.l.b16 %v2113
      %v3776 = vunpack.c.h.b16 %v2113
      %v3777 = vunpack.c.l.b16 %v2114
      %v3778 = vunpack.c.l.b16 %v2115
      %v3779 = vunpack.c.h.b16 %v2115
      %v3780 = vunpack.c.l.b16 %v2116
      %v3781 = vunpack.c.h.b16 %v2116
      %v3782 = vunpack.c.l.b16 %v2117
      %v3783 = vunpack.c.l.b16 %v2118
      %v3784 = vunpack.c.h.b16 %v2118
      %v3785 = vunpack.c.l.b16 %v2119
      %v3786 = vunpack.c.h.b16 %v2119
      %v3787 = vunpack.c.l.b16 %v2120
      %v3788 = vunpack.c.l.b16 %v2121
      %v3789 = vunpack.c.h.b16 %v2121
      %v3790 = vunpack.c.l.b16 %v2122
      %v3791 = vunpack.c.h.b16 %v2122
      %v3792 = vunpack.c.l.b16 %v2123
      %v3793 = vunpack.c.l.b16 %v2124
      %v3794 = vunpack.c.h.b16 %v2124
      %v3795 = vunpack.c.l.b16 %v2125
      %v3796 = vunpack.c.h.b16 %v2125
      %v3797 = vunpack.c.l.b16 %v2126
      %v3798 = vunpack.c.l.b16 %v2127
      %v3799 = vunpack.c.h.b16 %v2127
      %v3800 = vunpack.c.l.b16 %v2128
      %v3801 = vunpack.c.h.b16 %v2128
      %v3802 = vunpack.c.l.b16 %v2129
      %v3803 = vunpack.c.l.b16 %v2130
      %v3804 = vunpack.c.h.b16 %v2130
      %v3805 = vunpack.c.l.b16 %v2131
      %v3806 = vunpack.c.h.b16 %v2131
      %v3807 = vunpack.c.l.b16 %v2132
      %v3808 = vunpack.c.l.b16 %v2133
      %v3809 = vunpack.c.h.b16 %v2133
      %v3810 = vunpack.c.l.b16 %v2134
      %v3811 = vunpack.c.h.b16 %v2134
      %v3812 = vunpack.c.l.b16 %v2135
      %v3813 = vunpack.c.l.b16 %v2136
      %v3814 = vunpack.c.h.b16 %v2136
      %v3815 = vunpack.c.l.b16 %v2137
      %v3816 = vunpack.c.h.b16 %v2137
      %v3817 = vunpack.c.l.b16 %v2138
      %v3818 = vunpack.c.l.b16 %v2139
      %v3819 = vunpack.c.h.b16 %v2139
      %v3820 = vunpack.c.l.b16 %v2140
      %v3821 = vunpack.c.h.b16 %v2140
      %v3822 = vunpack.c.l.b16 %v2141
      %v3823 = vunpack.c.l.b16 %v2142
      %v3824 = vunpack.c.h.b16 %v2142
      %v3825 = vunpack.c.l.b16 %v2143
      %v3826 = vunpack.c.h.b16 %v2143
      %v3827 = vunpack.c.l.b16 %v2144
      %v3828 = vunpack.c.l.b16 %v2145
      %v3829 = vunpack.c.h.b16 %v2145
      %v3830 = vunpack.c.l.b16 %v2146
      %v3831 = vunpack.c.h.b16 %v2146
      %v3832 = vunpack.c.l.b16 %v2147
      %v3833 = vunpack.c.l.b16 %v2148
      %v3834 = vunpack.c.h.b16 %v2148
      %v3835 = vunpack.c.l.b16 %v2149
      %v3836 = vunpack.c.h.b16 %v2149
      %v3837 = vunpack.c.l.b16 %v2150
      %v3838 = vunpack.c.l.b16 %v2151
      %v3839 = vunpack.c.h.b16 %v2151
      %v3840 = vunpack.c.l.b16 %v2152
      %v3841 = vunpack.c.h.b16 %v2152
      %v3842 = vunpack.c.l.b16 %v2153
      %v3843 = vunpack.c.l.b16 %v2154
      %v3844 = vunpack.c.h.b16 %v2154
      %v3845 = vunpack.c.l.b16 %v2155
      %v3846 = vunpack.c.h.b16 %v2155
      %v3847 = vunpack.c.l.b16 %v2156
      %v3848 = vunpack.c.l.b16 %v2157
      %v3849 = vunpack.c.h.b16 %v2157
      %v3850 = vunpack.c.l.b16 %v2158
      %v3851 = vunpack.c.h.b16 %v2158
      %v3852 = vunpack.c.l.b16 %v2159
      %v3853 = vunpack.c.l.b16 %v2160
      %v3854 = vunpack.c.h.b16 %v2160
      %v3855 = vunpack.c.l.b16 %v2161
      %v3856 = vunpack.c.h.b16 %v2161
      %v3857 = vunpack.c.l.b16 %v2162
      %v3858 = vunpack.c.l.b16 %v2163
      %v3859 = vunpack.c.h.b16 %v2163
      %v3860 = vunpack.c.l.b16 %v2164
      %v3861 = vunpack.c.h.b16 %v2164
      %v3862 = vunpack.c.l.b16 %v2165
      %v3863 = vunpack.c.l.b16 %v2166
      %v3864 = vunpack.c.h.b16 %v2166
      %v3865 = vunpack.c.l.b16 %v2167
      %v3866 = vunpack.c.h.b16 %v2167
      %v3867 = vunpack.c.l.b16 %v2168
      %v3868 = vunpack.c.l.b16 %v2169
      %v3869 = vunpack.c.h.b16 %v2169
      %v3870 = vunpack.c.l.b16 %v2170
      %v3871 = vunpack.c.h.b16 %v2170
      %v3872 = vunpack.c.l.b16 %v2171
      %v3873 = vunpack.c.l.b16 %v2172
      %v3874 = vunpack.c.h.b16 %v2172
      %v3875 = vunpack.c.l.b16 %v2173
      %v3876 = vunpack.c.h.b16 %v2173
      %v3877 = vunpack.c.l.b16 %v2174
      %v3878 = vunpack.c.l.b16 %v2175
      %v3879 = vunpack.c.h.b16 %v2175
      %v3880 = vunpack.c.l.b16 %v2176
      %v3881 = vunpack.c.h.b16 %v2176
      %v3882 = vunpack.c.l.b16 %v2177
      %v3883 = vunpack.c.l.b16 %v2178
      %v3884 = vunpack.c.h.b16 %v2178
      %v3885 = vunpack.c.l.b16 %v2179
      %v3886 = vunpack.c.h.b16 %v2179
      %v3887 = vunpack.c.l.b16 %v2180
      %v3888 = vunpack.c.l.b16 %v2181
      %v3889 = vunpack.c.h.b16 %v2181
      %v3890 = vunpack.c.l.b16 %v2182
      %v3891 = vunpack.c.h.b16 %v2182
      %v3892 = vunpack.c.l.b16 %v2183
      %v3893 = vunpack.c.l.b16 %v2184
      %v3894 = vunpack.c.h.b16 %v2184
      %v3895 = vunpack.c.l.b16 %v2185
      %v3896 = vunpack.c.h.b16 %v2185
      %v3897 = vunpack.c.l.b16 %v2186
      %v3898 = vunpack.c.l.b16 %v2187
      %v3899 = vunpack.c.h.b16 %v2187
      %v3900 = vunpack.c.l.b16 %v2188
      %v3901 = vunpack.c.h.b16 %v2188
      %v3902 = vunpack.c.l.b16 %v2189
      %v3903 = vunpack.c.l.b16 %v2190
      %v3904 = vunpack.c.h.b16 %v2190
      %v3905 = vunpack.c.l.b16 %v2191
      %v3906 = vunpack.c.h.b16 %v2191
      %v3907 = vunpack.c.l.b16 %v2192
      %v3908 = vunpack.c.l.b16 %v2193
      %v3909 = vunpack.c.h.b16 %v2193
      %v3910 = vunpack.c.l.b16 %v2194
      %v3911 = vunpack.c.h.b16 %v2194
      %v3912 = vunpack.c.l.b16 %v2195
      %v3913 = vunpack.c.l.b16 %v2196
      %v3914 = vunpack.c.h.b16 %v2196
      %v3915 = vunpack.c.l.b16 %v2197
      %v3916 = vunpack.c.h.b16 %v2197
      %v3917 = vunpack.c.l.b16 %v2198
      %v3918 = vunpack.c.l.b16 %v2199
      %v3919 = vunpack.c.h.b16 %v2199
      %v3920 = vunpack.c.l.b16 %v2200
      %v3921 = vunpack.c.h.b16 %v2200
      %v3922 = vunpack.c.l.b16 %v2201
      %v3923 = vunpack.c.l.b16 %v2202
      %v3924 = vunpack.c.h.b16 %v2202
      %v3925 = vunpack.c.l.b16 %v2203
      %v3926 = vunpack.c.h.b16 %v2203
      %v3927 = vunpack.c.l.b16 %v2204
      %v3928 = vunpack.c.l.b16 %v2205
      %v3929 = vunpack.c.h.b16 %v2205
      %v3930 = vunpack.c.l.b16 %v2206
      %v3931 = vunpack.c.h.b16 %v2206
      %v3932 = vunpack.c.l.b16 %v2207
      %v3933 = vunpack.c.l.b16 %v2208
      %v3934 = vunpack.c.h.b16 %v2208
      %v3935 = vunpack.c.l.b16 %v2209
      %v3936 = vunpack.c.h.b16 %v2209
      %v3937 = vunpack.c.l.b16 %v2210
      %v3938 = vunpack.c.l.b16 %v2211
      %v3939 = vunpack.c.h.b16 %v2211
      %v3940 = vunpack.c.l.b16 %v2212
      %v3941 = vunpack.c.h.b16 %v2212
      %v3942 = vunpack.c.l.b16 %v2213
      %v3943 = vunpack.c.l.b16 %v2214
      %v3944 = vunpack.c.h.b16 %v2214
      %v3945 = vunpack.c.l.b16 %v2215
      %v3946 = vunpack.c.h.b16 %v2215
      %v3947 = vunpack.c.l.b16 %v2216
      %v3948 = vunpack.c.l.b16 %v2217
      %v3949 = vunpack.c.h.b16 %v2217
      %v3950 = vunpack.c.l.b16 %v2218
      %v3951 = vunpack.c.h.b16 %v2218
      %v3952 = vunpack.c.l.b16 %v2219
      %v3953 = vunpack.c.l.b16 %v2220
      %v3954 = vunpack.c.h.b16 %v2220
      %v3955 = vunpack.c.l.b16 %v2221
      %v3956 = vunpack.c.h.b16 %v2221
      %v3957 = vunpack.c.l.b16 %v2222
      %v3958 = vunpack.c.l.b16 %v2223
      %v3959 = vunpack.c.h.b16 %v2223
      %v3960 = vunpack.c.l.b16 %v2224
      %v3961 = vunpack.c.h.b16 %v2224
      %v3962 = vunpack.c.l.b16 %v2225
      %v3963 = vunpack.c.l.b16 %v2226
      %v3964 = vunpack.c.h.b16 %v2226
      %v3965 = vunpack.c.l.b16 %v2227
      %v3966 = vunpack.c.h.b16 %v2227
      %v3967 = vunpack.c.l.b16 %v2228
      %v3968 = vunpack.c.l.b16 %v2229
      %v3969 = vunpack.c.h.b16 %v2229
      %v3970 = vunpack.c.l.b16 %v2230
      %v3971 = vunpack.c.h.b16 %v2230
      %v3972 = vunpack.c.l.b16 %v2231
      %v3973 = vunpack.c.l.b16 %v2232
      %v3974 = vunpack.c.h.b16 %v2232
      %v3975 = vunpack.c.l.b16 %v2233
      %v3976 = vunpack.c.h.b16 %v2233
      %v3977 = vunpack.c.l.b16 %v2234
      %v3978 = vunpack.c.l.b16 %v2235
      %v3979 = vunpack.c.h.b16 %v2235
      %v3980 = vunpack.c.l.b16 %v2236
      %v3981 = vunpack.c.h.b16 %v2236
      %v3982 = vunpack.c.l.b16 %v2237
      %v3983 = vunpack.c.l.b16 %v2238
      %v3984 = vunpack.c.h.b16 %v2238
      %v3985 = vunpack.c.l.b16 %v2239
      %v3986 = vunpack.c.h.b16 %v2239
      %v3987 = vunpack.c.l.b16 %v2240
      %v3988 = vunpack.c.l.b16 %v2241
      %v3989 = vunpack.c.h.b16 %v2241
      %v3990 = vunpack.c.l.b16 %v2242
      %v3991 = vunpack.c.h.b16 %v2242
      %v3992 = vunpack.c.l.b16 %v2243
      %v3993 = vunpack.c.l.b16 %v2244
      %v3994 = vunpack.c.h.b16 %v2244
      %v3995 = vunpack.c.l.b16 %v2245
      %v3996 = vunpack.c.h.b16 %v2245
      %v3997 = vunpack.c.l.b16 %v2246
      %v3998 = vunpack.c.l.b16 %v2247
      %v3999 = vunpack.c.h.b16 %v2247
      %v4000 = vunpack.c.l.b16 %v2248
      %v4001 = vunpack.c.h.b16 %v2248
      %v4002 = vunpack.c.l.b16 %v2249
      %v4003 = vunpack.c.l.b16 %v2250
      %v4004 = vunpack.c.h.b16 %v2250
      %v4005 = vunpack.c.l.b16 %v2251
      %v4006 = vunpack.c.h.b16 %v2251
      %v4007 = vunpack.c.l.b16 %v2252
      %v4008 = vunpack.c.l.b16 %v2253
      %v4009 = vunpack.c.h.b16 %v2253
      %v4010 = vunpack.c.l.b16 %v2254
      %v4011 = vunpack.c.h.b16 %v2254
      %v4012 = vunpack.c.l.b16 %v2255
      %v4013 = vunpack.c.l.b16 %v2256
      %v4014 = vunpack.c.h.b16 %v2256
      %v4015 = vunpack.c.l.b16 %v2257
      %v4016 = vunpack.c.h.b16 %v2257
      %v4017 = vunpack.c.l.b16 %v2258
      %v4018 = vunpack.c.l.b16 %v2259
      %v4019 = vunpack.c.h.b16 %v2259
      %v4020 = vunpack.c.l.b16 %v2260
      %v4021 = vunpack.c.h.b16 %v2260
      %v4022 = vunpack.c.l.b16 %v2261
      %v4023 = vunpack.c.l.b16 %v2262
      %v4024 = vunpack.c.h.b16 %v2262
      %v4025 = vunpack.c.l.b16 %v2263
      %v4026 = vunpack.c.h.b16 %v2263
      %v4027 = vunpack.c.l.b16 %v2264
      %v4028 = vunpack.c.l.b16 %v2265
      %v4029 = vunpack.c.h.b16 %v2265
      %v4030 = vunpack.c.l.b16 %v2266
      %v4031 = vunpack.c.h.b16 %v2266
      %v4032 = vunpack.c.l.b16 %v2267
      %v4033 = vunpack.c.l.b16 %v2268
      %v4034 = vunpack.c.h.b16 %v2268
      %v4035 = vunpack.c.l.b16 %v2269
      %v4036 = vunpack.c.h.b16 %v2269
      %v4037 = vunpack.c.l.b16 %v2270
      %v4038 = vunpack.c.l.b16 %v2271
      %v4039 = vunpack.c.h.b16 %v2271
      %v4040 = vunpack.c.l.b16 %v2272
      %v4041 = vunpack.c.h.b16 %v2272
      %v4042 = vunpack.c.l.b16 %v2273
      %v4043 = vunpack.c.l.b16 %v2274
      %v4044 = vunpack.c.h.b16 %v2274
      %v4045 = vunpack.c.l.b16 %v2275
      %v4046 = vunpack.c.h.b16 %v2275
      %v4047 = vunpack.c.l.b16 %v2276
      %v4048 = vunpack.c.l.b16 %v2277
      %v4049 = vunpack.c.h.b16 %v2277
      %v4050 = vunpack.c.l.b16 %v2278
      %v4051 = vunpack.c.h.b16 %v2278
      %v4052 = vunpack.c.l.b16 %v2279
      %v4053 = vunpack.c.l.b16 %v2280
      %v4054 = vunpack.c.h.b16 %v2280
      %v4055 = vunpack.c.l.b16 %v2281
      %v4056 = vunpack.c.h.b16 %v2281
      %v4057 = vunpack.c.l.b16 %v2282
      %v4058 = vunpack.c.l.b16 %v2283
      %v4059 = vunpack.c.h.b16 %v2283
      %v4060 = vunpack.c.l.b16 %v2284
      %v4061 = vunpack.c.h.b16 %v2284
      %v4062 = vunpack.c.l.b16 %v2285
      %v4063 = vunpack.c.l.b16 %v2286
      %v4064 = vunpack.c.h.b16 %v2286
      %v4065 = vunpack.c.l.b16 %v2287
      %v4066 = vunpack.c.h.b16 %v2287
      %v4067 = vunpack.c.l.b16 %v2288
      %v4068 = vunpack.c.l.b16 %v2289
      %v4069 = vunpack.c.h.b16 %v2289
      %v4070 = vunpack.c.l.b16 %v2290
      %v4071 = vunpack.c.h.b16 %v2290
      %v4072 = vunpack.c.l.b16 %v2291
      %v4073 = vunpack.c.l.b16 %v2292
      %v4074 = vunpack.c.h.b16 %v2292
      %v4075 = vunpack.c.l.b16 %v2293
      %v4076 = vunpack.c.h.b16 %v2293
      %v4077 = vunpack.c.l.b16 %v2294
      %v4078 = vunpack.c.l.b16 %v2295
      %v4079 = vunpack.c.h.b16 %v2295
      %v4080 = vunpack.c.l.b16 %v2296
      %v4081 = vunpack.c.h.b16 %v2296
      %v4082 = vunpack.c.l.b16 %v2297
      %v4083 = vunpack.c.l.b16 %v2298
      %v4084 = vunpack.c.h.b16 %v2298
      %v4085 = vunpack.c.l.b16 %v2299
      %v4086 = vunpack.c.h.b16 %v2299
      %v4087 = vunpack.c.l.b16 %v2300
      %v4088 = vunpack.c.l.b16 %v2301
      %v4089 = vunpack.c.h.b16 %v2301
      %v4090 = vunpack.c.l.b16 %v2302
      %v4091 = vunpack.c.h.b16 %v2302
      %v4092 = vunpack.c.l.b16 %v2303
      %v4093 = vunpack.c.l.b16 %v2304
      %v4094 = vunpack.c.h.b16 %v2304
      %v4095 = vunpack.c.l.b16 %v2305
      %v4096 = vunpack.c.h.b16 %v2305
      %v4097 = vunpack.c.l.b16 %v2306
      %v4098 = vunpack.c.l.b16 %v2307
      %v4099 = vunpack.c.h.b16 %v2307
      %v4100 = vunpack.c.l.b16 %v2308
      %v4101 = vunpack.c.h.b16 %v2308
      %v4102 = vunpack.c.l.b16 %v2309
      %v4103 = vunpack.c.l.b16 %v2310
      %v4104 = vunpack.c.h.b16 %v2310
      %v4105 = vunpack.c.l.b16 %v2311
      %v4106 = vunpack.c.h.b16 %v2311
      %v4107 = vunpack.c.l.b16 %v2312
      %v4108 = vunpack.c.l.b16 %v2313
      %v4109 = vunpack.c.h.b16 %v2313
      %v4110 = vunpack.c.l.b16 %v2314
      %v4111 = vunpack.c.h.b16 %v2314
      %v4112 = vunpack.c.l.b16 %v2315
      %v4113 = vunpack.c.l.b16 %v2316
      %v4114 = vunpack.c.h.b16 %v2316
      %v4115 = vunpack.c.l.b16 %v2317
      %v4116 = vunpack.c.h.b16 %v2317
      %v4117 = vunpack.c.l.b16 %v2318
      %v4118 = vunpack.c.l.b16 %v2319
      %v4119 = vunpack.c.h.b16 %v2319
      %v4120 = vunpack.c.l.b16 %v2320
      %v4121 = vunpack.c.h.b16 %v2320
      %v4122 = vunpack.c.l.b16 %v2321
      %v4123 = vunpack.c.l.b16 %v2322
      %v4124 = vunpack.c.h.b16 %v2322
      %v4125 = vunpack.c.l.b16 %v2323
      %v4126 = vunpack.c.h.b16 %v2323
      %v4127 = vunpack.c.l.b16 %v2324
      %v4128 = vunpack.c.l.b16 %v2325
      %v4129 = vunpack.c.h.b16 %v2325
      %v4130 = vunpack.c.l.b16 %v2326
      %v4131 = vunpack.c.h.b16 %v2326
      %v4132 = vunpack.c.l.b16 %v2327
      %v4133 = vunpack.c.l.b16 %v2328
      %v4134 = vunpack.c.h.b16 %v2328
      %v4135 = vunpack.c.l.b16 %v2329
      %v4136 = vunpack.c.h.b16 %v2329
      %v4137 = vunpack.c.l.b16 %v2330
      %v4138 = vunpack.c.l.b16 %v2331
      %v4139 = vunpack.c.h.b16 %v2331
      %v4140 = vunpack.c.l.b16 %v2332
      %v4141 = vunpack.c.h.b16 %v2332
      %v4142 = vunpack.c.l.b16 %v2333
      %v4143 = vunpack.c.l.b16 %v2334
      %v4144 = vunpack.c.h.b16 %v2334
      %v4145 = vunpack.c.l.b16 %v2335
      %v4146 = vunpack.c.h.b16 %v2335
      %v4147 = vunpack.c.l.b16 %v2336
      %v4148 = vunpack.c.l.b16 %v2337
      %v4149 = vunpack.c.h.b16 %v2337
      %v4150 = vunpack.c.l.b16 %v2338
      %v4151 = vunpack.c.h.b16 %v2338
      %v4152 = vunpack.c.l.b16 %v2339
      %v4153 = vunpack.c.l.b16 %v2340
      %v4154 = vunpack.c.h.b16 %v2340
      %v4155 = vunpack.c.l.b16 %v2341
      %v4156 = vunpack.c.h.b16 %v2341
      %v4157 = vunpack.c.l.b16 %v2342
      %v4158 = vunpack.c.l.b16 %v2343
      %v4159 = vunpack.c.h.b16 %v2343
      %v4160 = vunpack.c.l.b16 %v2344
      %v4161 = vunpack.c.h.b16 %v2344
      %v4162 = vunpack.c.l.b16 %v2345
      %v4163 = vunpack.c.l.b16 %v2346
      %v4164 = vunpack.c.h.b16 %v2346
      %v4165 = vunpack.c.l.b16 %v2347
      %v4166 = vunpack.c.h.b16 %v2347
      %v4167 = vunpack.c.l.b16 %v2348
      %v4168 = vunpack.c.l.b16 %v2349
      %v4169 = vunpack.c.h.b16 %v2349
      %v4170 = vunpack.c.l.b16 %v2350
      %v4171 = vunpack.c.h.b16 %v2350
      %v4172 = vunpack.c.l.b16 %v2351
      %v4173 = vunpack.c.l.b16 %v2352
      %v4174 = vunpack.c.h.b16 %v2352
      %v4175 = vunpack.c.l.b16 %v2353
      %v4176 = vunpack.c.h.b16 %v2353
      %v4177 = vunpack.c.l.b16 %v2354
      %v4178 = vunpack.c.l.b16 %v2355
      %v4179 = vunpack.c.h.b16 %v2355
      %v4180 = vunpack.c.l.b16 %v2356
      %v4181 = vunpack.c.h.b16 %v2356
      %v4182 = vunpack.c.l.b16 %v2357
      %v4183 = vunpack.c.l.b16 %v2358
      %v4184 = vunpack.c.h.b16 %v2358
      %v4185 = vunpack.c.l.b16 %v2359
      %v4186 = vunpack.c.h.b16 %v2359
      %v4187 = vunpack.c.l.b16 %v2360
      %v4188 = vunpack.c.l.b16 %v2361
      %v4189 = vunpack.c.h.b16 %v2361
      %v4190 = vunpack.c.l.b16 %v2362
      %v4191 = vunpack.c.h.b16 %v2362
      %v4192 = vunpack.c.l.b16 %v2363
      %v4193 = vunpack.c.l.b16 %v2364
      %v4194 = vunpack.c.h.b16 %v2364
      %v4195 = vunpack.c.l.b16 %v2365
      %v4196 = vunpack.c.h.b16 %v2365
      %v4197 = vunpack.c.l.b16 %v2366
      %v4198 = vunpack.c.l.b16 %v2367
      %v4199 = vunpack.c.h.b16 %v2367
      %v4200 = vunpack.c.l.b16 %v2368
      %v4201 = vunpack.c.h.b16 %v2368
      %v4202 = vunpack.c.l.b16 %v2369
      %v4203 = vunpack.c.l.b16 %v2370
      %v4204 = vunpack.c.h.b16 %v2370
      %v4205 = vunpack.c.l.b16 %v2371
      %v4206 = vunpack.c.h.b16 %v2371
      %v4207 = vunpack.c.l.b16 %v2372
      %v4208 = vunpack.c.l.b16 %v2373
      %v4209 = vunpack.c.h.b16 %v2373
      %v4210 = vunpack.c.l.b16 %v2374
      %v4211 = vunpack.c.h.b16 %v2374
      %v4212 = vunpack.c.l.b16 %v2375
      %v4213 = vunpack.c.l.b16 %v2376
      %v4214 = vunpack.c.h.b16 %v2376
      %v4215 = vunpack.c.l.b16 %v2377
      %v4216 = vunpack.c.h.b16 %v2377
      %v4217 = vunpack.c.l.b16 %v2378
      %v4218 = vunpack.c.l.b16 %v2379
      %v4219 = vunpack.c.h.b16 %v2379
      %v4220 = vunpack.c.l.b16 %v2380
      %v4221 = vunpack.c.h.b16 %v2380
      %v4222 = vunpack.c.l.b16 %v2381
      %v4223 = vunpack.c.l.b16 %v2382
      %v4224 = vunpack.c.h.b16 %v2382
      %v4225 = vunpack.c.l.b16 %v2383
      %v4226 = vunpack.c.h.b16 %v2383
      %v4227 = vunpack.c.l.b16 %v2384
      %v4228 = vunpack.c.l.b16 %v2385
      %v4229 = vunpack.c.h.b16 %v2385
      %v4230 = vunpack.c.l.b16 %v2386
      %v4231 = vunpack.c.h.b16 %v2386
      %v4232 = vunpack.c.l.b16 %v2387
      %v4233 = vunpack.c.l.b16 %v2388
      %v4234 = vunpack.c.h.b16 %v2388
      %v4235 = vunpack.c.l.b16 %v2389
      %v4236 = vunpack.c.h.b16 %v2389
      %v4237 = vunpack.c.l.b16 %v2390
      %v4238 = vunpack.c.l.b16 %v2391
      %v4239 = vunpack.c.h.b16 %v2391
      %v4240 = vunpack.c.l.b16 %v2392
      %v4241 = vunpack.c.h.b16 %v2392
      %v4242 = vunpack.c.l.b16 %v2393
      %v4243 = vunpack.c.l.b16 %v2394
      %v4244 = vunpack.c.h.b16 %v2394
      %v4245 = vunpack.c.l.b16 %v2395
      %v4246 = vunpack.c.h.b16 %v2395
      %v4247 = vunpack.c.l.b16 %v2396
      %v4248 = vunpack.c.l.b16 %v2397
      %v4249 = vunpack.c.h.b16 %v2397
      %v4250 = vunpack.c.l.b16 %v2398
      %v4251 = vunpack.c.h.b16 %v2398
      %v4252 = vunpack.c.l.b16 %v2399
      %v4253 = vunpack.c.l.b16 %v2400
      %v4254 = vunpack.c.h.b16 %v2400
      %v4255 = vunpack.c.l.b16 %v2401
      %v4256 = vunpack.c.h.b16 %v2401
      %v4257 = vunpack.c.l.b16 %v2402
      %v4258 = vunpack.c.l.b16 %v2403
      %v4259 = vunpack.c.h.b16 %v2403
      %v4260 = vunpack.c.l.b16 %v2404
      %v4261 = vunpack.c.h.b16 %v2404
      %v4262 = vunpack.c.l.b16 %v2405
      %v4263 = vunpack.c.l.b16 %v2406
      %v4264 = vunpack.c.h.b16 %v2406
      %v4265 = vunpack.c.l.b16 %v2407
      %v4266 = vunpack.c.h.b16 %v2407
      %v4267 = vunpack.c.l.b16 %v2408
      %v4268 = vunpack.c.l.b16 %v2409
      %v4269 = vunpack.c.h.b16 %v2409
      %v4270 = vunpack.c.l.b16 %v2410
      %v4271 = vunpack.c.h.b16 %v2410
      %v4272 = vunpack.c.l.b16 %v2411
      %v4273 = vunpack.c.l.b16 %v2412
      %v4274 = vunpack.c.h.b16 %v2412
      %v4275 = vunpack.c.l.b16 %v2413
      %v4276 = vunpack.c.h.b16 %v2413
      %v4277 = vunpack.c.l.b16 %v2414
      %v4278 = vunpack.c.l.b16 %v2415
      %v4279 = vunpack.c.h.b16 %v2415
      %v4280 = vunpack.c.l.b16 %v2416
      %v4281 = vunpack.c.h.b16 %v2416
      %v4282 = vunpack.c.l.b16 %v2417
      %v4283 = vunpack.c.l.b16 %v2418
      %v4284 = vunpack.c.h.b16 %v2418
      %v4285 = vunpack.c.l.b16 %v2419
      %v4286 = vunpack.c.h.b16 %v2419
      %v4287 = vunpack.c.l.b16 %v2420
      %v4288 = vunpack.c.l.b16 %v2421
      %v4289 = vunpack.c.h.b16 %v2421
      %v4290 = vunpack.c.l.b16 %v2422
      %v4291 = vunpack.c.h.b16 %v2422
      %v4292 = vunpack.c.l.b16 %v2423
      %v4293 = vunpack.c.l.b16 %v2424
      %v4294 = vunpack.c.h.b16 %v2424
      %v4295 = vunpack.c.l.b16 %v2425
      %v4296 = vunpack.c.h.b16 %v2425
      %v4297 = vunpack.c.l.b16 %v2426
      %v4298 = vunpack.c.l.b16 %v2427
      %v4299 = vunpack.c.h.b16 %v2427
      %v4300 = vunpack.c.l.b16 %v2428
      %v4301 = vunpack.c.h.b16 %v2428
      %v4302 = vunpack.c.l.b16 %v2429
      %v4303 = vunpack.c.l.b16 %v2430
      %v4304 = vunpack.c.h.b16 %v2430
      %v4305 = vunpack.c.l.b16 %v2431
      %v4306 = vunpack.c.h.b16 %v2431
      %v4307 = vunpack.c.l.b16 %v2432
      %v4308 = vunpack.c.l.b16 %v2433
      %v4309 = vunpack.c.h.b16 %v2433
      %v4310 = vunpack.c.l.b16 %v2434
      %v4311 = vunpack.c.h.b16 %v2434
      %v4312 = vunpack.c.l.b16 %v2435
      %v4313 = vunpack.c.l.b16 %v2436
      %v4314 = vunpack.c.h.b16 %v2436
      %v4315 = vunpack.c.l.b16 %v2437
      %v4316 = vunpack.c.h.b16 %v2437
      %v4317 = vunpack.c.l.b16 %v2438
      %v4318 = vunpack.c.l.b16 %v2439
      %v4319 = vunpack.c.h.b16 %v2439
      %v4320 = vunpack.c.l.b16 %v2440
      %v4321 = vunpack.c.h.b16 %v2440
      %v4322 = vunpack.c.l.b16 %v2441
      %v4323 = vunpack.c.l.b16 %v2442
      %v4324 = vunpack.c.h.b16 %v2442
      %v4325 = vunpack.c.l.b16 %v2443
      %v4326 = vunpack.c.h.b16 %v2443
      %v4327 = vunpack.c.l.b16 %v2444
      %v4328 = vunpack.c.l.b16 %v2445
      %v4329 = vunpack.c.h.b16 %v2445
      %v4330 = vunpack.c.l.b16 %v2446
      %v4331 = vunpack.c.h.b16 %v2446
      %v4332 = vunpack.c.l.b16 %v2447
      %v4333 = vunpack.c.l.b16 %v2448
      %v4334 = vunpack.c.h.b16 %v2448
      %v4335 = vunpack.c.l.b16 %v2449
      %v4336 = vunpack.c.h.b16 %v2449
      %v4337 = vunpack.c.l.b16 %v2450
      %v4338 = vunpack.c.l.b16 %v2451
      %v4339 = vunpack.c.h.b16 %v2451
      %v4340 = vunpack.c.l.b16 %v2452
      %v4341 = vunpack.c.h.b16 %v2452
      %v4342 = vunpack.c.l.b16 %v2453
      %v4343 = vunpack.c.l.b16 %v2454
      %v4344 = vunpack.c.h.b16 %v2454
      %v4345 = vunpack.c.l.b16 %v2455
      %v4346 = vunpack.c.h.b16 %v2455
      %v4347 = vunpack.c.l.b16 %v2456
      %v4348 = vunpack.c.l.b16 %v2457
      %v4349 = vunpack.c.h.b16 %v2457
      %v4350 = vunpack.c.l.b16 %v2458
      %v4351 = vunpack.c.h.b16 %v2458
      %v4352 = vunpack.c.l.b16 %v2459
      %v4353 = vunpack.c.l.b16 %v2460
      %v4354 = vunpack.c.h.b16 %v2460
      %v4355 = vunpack.c.l.b16 %v2461
      %v4356 = vunpack.c.h.b16 %v2461
      %v4357 = vunpack.c.l.b16 %v2462
      %v4358 = vunpack.c.l.b16 %v2463
      %v4359 = vunpack.c.h.b16 %v2463
      %v4360 = vunpack.c.l.b16 %v2464
      %v4361 = vunpack.c.h.b16 %v2464
      %v4362 = vunpack.c.l.b16 %v2465
      %v4363 = vunpack.c.l.b16 %v2466
      %v4364 = vunpack.c.h.b16 %v2466
      %v4365 = vunpack.c.l.b16 %v2467
      %v4366 = vunpack.c.h.b16 %v2467
      %v4367 = vunpack.c.l.b16 %v2468
      %v4368 = vunpack.c.l.b16 %v2469
      %v4369 = vunpack.c.h.b16 %v2469
      %v4370 = vunpack.c.l.b16 %v2470
      %v4371 = vunpack.c.h.b16 %v2470
      %v4372 = vunpack.c.l.b16 %v2471
      %v4373 = vunpack.c.l.b16 %v2472
      %v4374 = vunpack.c.h.b16 %v2472
      %v4375 = vunpack.c.l.b16 %v2473
      %v4376 = vunpack.c.h.b16 %v2473
      %v4377 = vunpack.c.l.b16 %v2474
      %v4378 = vunpack.c.l.b16 %v2475
      %v4379 = vunpack.c.h.b16 %v2475
      %v4380 = vunpack.c.l.b16 %v2476
      %v4381 = vunpack.c.h.b16 %v2476
      %v4382 = vunpack.c.l.b16 %v2477
      %v4383 = vunpack.c.l.b16 %v2478
      %v4384 = vunpack.c.h.b16 %v2478
      %v4385 = vunpack.c.l.b16 %v2479
      %v4386 = vunpack.c.h.b16 %v2479
      %v4387 = vunpack.c.l.b16 %v2480
      %v4388 = vunpack.c.l.b16 %v2481
      %v4389 = vunpack.c.h.b16 %v2481
      %v4390 = vunpack.c.l.b16 %v2482
      %v4391 = vunpack.c.h.b16 %v2482
      %v4392 = vunpack.c.l.b16 %v2483
      %v4393 = vunpack.c.l.b16 %v2484
      %v4394 = vunpack.c.h.b16 %v2484
      %v4395 = vunpack.c.l.b16 %v2485
      %v4396 = vunpack.c.h.b16 %v2485
      %v4397 = vunpack.c.l.b16 %v2486
      %v4398 = vunpack.c.l.b16 %v2487
      %v4399 = vunpack.c.h.b16 %v2487
      %v4400 = vunpack.c.l.b16 %v2488
      %v4401 = vunpack.c.h.b16 %v2488
      %v4402 = vunpack.c.l.b16 %v2489
      %v4403 = vunpack.c.l.b16 %v2490
      %v4404 = vunpack.c.h.b16 %v2490
      %v4405 = vunpack.c.l.b16 %v2491
      %v4406 = vunpack.c.h.b16 %v2491
      %v4407 = vunpack.c.l.b16 %v2492
      %v4408 = vunpack.c.l.b16 %v2493
      %v4409 = vunpack.c.h.b16 %v2493
      %v4410 = vunpack.c.l.b16 %v2494
      %v4411 = vunpack.c.h.b16 %v2494
      %v4412 = vunpack.c.l.b16 %v2495
      %v4413 = vunpack.c.l.b16 %v2496
      %v4414 = vunpack.c.h.b16 %v2496
      %v4415 = vunpack.c.l.b16 %v2497
      %v4416 = vunpack.c.h.b16 %v2497
      %v4417 = vunpack.c.l.b16 %v2498
      %v4418 = vunpack.c.l.b16 %v2499
      %v4419 = vunpack.c.h.b16 %v2499
      %v4420 = vunpack.c.l.b16 %v2500
      %v4421 = vunpack.c.h.b16 %v2500
      %v4422 = vunpack.c.l.b16 %v2501
      %v4423 = vunpack.c.l.b16 %v2502
      %v4424 = vunpack.c.h.b16 %v2502
      %v4425 = vunpack.c.l.b16 %v2503
      %v4426 = vunpack.c.h.b16 %v2503
      %v4427 = vunpack.c.l.b16 %v2504
      %v4428 = vunpack.c.l.b16 %v2505
      %v4429 = vunpack.c.h.b16 %v2505
      %v4430 = vunpack.c.l.b16 %v2506
      %v4431 = vunpack.c.h.b16 %v2506
      %v4432 = vunpack.c.l.b16 %v2507
      %v4433 = vunpack.c.l.b16 %v2508
      %v4434 = vunpack.c.h.b16 %v2508
      %v4435 = vunpack.c.l.b16 %v2509
      %v4436 = vunpack.c.h.b16 %v2509
      %v4437 = vunpack.c.l.b16 %v2510
      %v4438 = vunpack.c.l.b16 %v2511
      %v4439 = vunpack.c.h.b16 %v2511
      %v4440 = vunpack.c.l.b16 %v2512
      %v4441 = vunpack.c.h.b16 %v2512
      %v4442 = vunpack.c.l.b16 %v2513
      %v4443 = vunpack.c.l.b16 %v2514
      %v4444 = vunpack.c.h.b16 %v2514
      %v4445 = vunpack.c.l.b16 %v2515
      %v4446 = vunpack.c.h.b16 %v2515
      %v4447 = vunpack.c.l.b16 %v2516
      %v4448 = vunpack.c.l.b16 %v2517
      %v4449 = vunpack.c.h.b16 %v2517
      %v4450 = vunpack.c.l.b16 %v2518
      %v4451 = vunpack.c.h.b16 %v2518
      %v4452 = vunpack.c.l.b16 %v2519
      %v4453 = vunpack.c.l.b16 %v2520
      %v4454 = vunpack.c.h.b16 %v2520
      %v4455 = vunpack.c.l.b16 %v2521
      %v4456 = vunpack.c.h.b16 %v2521
      %v4457 = vunpack.c.l.b16 %v2522
      %v4458 = vunpack.c.l.b16 %v2523
      %v4459 = vunpack.c.h.b16 %v2523
      %v4460 = vunpack.c.l.b16 %v2524
      %v4461 = vunpack.c.h.b16 %v2524
      %v4462 = vunpack.c.l.b16 %v2525
      %v4463 = vunpack.c.l.b16 %v2526
      %v4464 = vunpack.c.h.b16 %v2526
      %v4465 = vunpack.c.l.b16 %v2527
      %v4466 = vunpack.c.h.b16 %v2527
      %v4467 = vunpack.c.l.b16 %v2528
      %v4468 = vunpack.c.l.b16 %v2529
      %v4469 = vunpack.c.h.b16 %v2529
      %v4470 = vunpack.c.l.b16 %v2530
      %v4471 = vunpack.c.h.b16 %v2530
      %v4472 = vunpack.c.l.b16 %v2531
      %v4473 = vunpack.c.l.b16 %v2532
      %v4474 = vunpack.c.h.b16 %v2532
      %v4475 = vunpack.c.l.b16 %v2533
      %v4476 = vunpack.c.h.b16 %v2533
      %v4477 = vunpack.c.l.b16 %v2534
      %v4478 = vunpack.c.l.b16 %v2535
      %v4479 = vunpack.c.h.b16 %v2535
      %v4480 = vunpack.c.l.b16 %v2536
      %v4481 = vunpack.c.h.b16 %v2536
      %v4482 = vunpack.c.l.b16 %v2537
      %v4483 = vunpack.c.l.b16 %v2538
      %v4484 = vunpack.c.h.b16 %v2538
      %v4485 = vunpack.c.l.b16 %v2539
      %v4486 = vunpack.c.h.b16 %v2539
      %v4487 = vunpack.c.l.b16 %v2540
      %v4488 = vpack.c.b16 %v3293, %v3288
      %v4489 = vpack.c.b16 %v3294, %v3289
      %v4490 = vpack.c.b16 %v3295, %v3290
      %v4491 = vpack.c.b16 %v3296, %v3291
      %v4492 = vpack.c.b16 %v3297, %v3292
      %v4493 = vpack.c.b16 %v3303, %v3298
      %v4494 = vpack.c.b16 %v3304, %v3299
      %v4495 = vpack.c.b16 %v3305, %v3300
      %v4496 = vpack.c.b16 %v3306, %v3301
      %v4497 = vpack.c.b16 %v3307, %v3302
      %v4498 = vpack.c.b16 %v3313, %v3308
      %v4499 = vpack.c.b16 %v3314, %v3309
      %v4500 = vpack.c.b16 %v3315, %v3310
      %v4501 = vpack.c.b16 %v3316, %v3311
      %v4502 = vpack.c.b16 %v3317, %v3312
      %v4503 = vpack.c.b16 %v3323, %v3318
      %v4504 = vpack.c.b16 %v3324, %v3319
      %v4505 = vpack.c.b16 %v3325, %v3320
      %v4506 = vpack.c.b16 %v3326, %v3321
      %v4507 = vpack.c.b16 %v3327, %v3322
      %v4508 = vpack.c.b16 %v3333, %v3328
      %v4509 = vpack.c.b16 %v3334, %v3329
      %v4510 = vpack.c.b16 %v3335, %v3330
      %v4511 = vpack.c.b16 %v3336, %v3331
      %v4512 = vpack.c.b16 %v3337, %v3332
      %v4513 = vpack.c.b16 %v3343, %v3338
      %v4514 = vpack.c.b16 %v3344, %v3339
      %v4515 = vpack.c.b16 %v3345, %v3340
      %v4516 = vpack.c.b16 %v3346, %v3341
      %v4517 = vpack.c.b16 %v3347, %v3342
      %v4518 = vpack.c.b16 %v3353, %v3348
      %v4519 = vpack.c.b16 %v3354, %v3349
      %v4520 = vpack.c.b16 %v3355, %v3350
      %v4521 = vpack.c.b16 %v3356, %v3351
      %v4522 = vpack.c.b16 %v3357, %v3352
      %v4523 = vpack.c.b16 %v3363, %v3358
      %v4524 = vpack.c.b16 %v3364, %v3359
      %v4525 = vpack.c.b16 %v3365, %v3360
      %v4526 = vpack.c.b16 %v3366, %v3361
      %v4527 = vpack.c.b16 %v3367, %v3362
      %v4528 = vpack.c.b16 %v3373, %v3368
      %v4529 = vpack.c.b16 %v3374, %v3369
      %v4530 = vpack.c.b16 %v3375, %v3370
      %v4531 = vpack.c.b16 %v3376, %v3371
      %v4532 = vpack.c.b16 %v3377, %v3372
      %v4533 = vpack.c.b16 %v3383, %v3378
      %v4534 = vpack.c.b16 %v3384, %v3379
      %v4535 = vpack.c.b16 %v3385, %v3380
      %v4536 = vpack.c.b16 %v3386, %v3381
      %v4537 = vpack.c.b16 %v3387, %v3382
      %v4538 = vpack.c.b16 %v3393, %v3388
      %v4539 = vpack.c.b16 %v3394, %v3389
      %v4540 = vpack.c.b16 %v3395, %v3390
      %v4541 = vpack.c.b16 %v3396, %v3391
      %v4542 = vpack.c.b16 %v3397, %v3392
      %v4543 = vpack.c.b16 %v3403, %v3398
      %v4544 = vpack.c.b16 %v3404, %v3399
      %v4545 = vpack.c.b16 %v3405, %v3400
      %v4546 = vpack.c.b16 %v3406, %v3401
      %v4547 = vpack.c.b16 %v3407, %v3402
      %v4548 = vpack.c.b16 %v3413, %v3408
      %v4549 = vpack.c.b16 %v3414, %v3409
      %v4550 = vpack.c.b16 %v3415, %v3410
      %v4551 = vpack.c.b16 %v3416, %v3411
      %v4552 = vpack.c.b16 %v3417, %v3412
      %v4553 = vpack.c.b16 %v3423, %v3418
      %v4554 = vpack.c.b16 %v3424, %v3419
      %v4555 = vpack.c.b16 %v3425, %v3420
      %v4556 = vpack.c.b16 %v3426, %v3421
      %v4557 = vpack.c.b16 %v3427, %v3422
      %v4558 = vpack.c.b16 %v3433, %v3428
      %v4559 = vpack.c.b16 %v3434, %v3429
      %v4560 = vpack.c.b16 %v3435, %v3430
      %v4561 = vpack.c.b16 %v3436, %v3431
      %v4562 = vpack.c.b16 %v3437, %v3432
      %v4563 = vpack.c.b16 %v3443, %v3438
      %v4564 = vpack.c.b16 %v3444, %v3439
      %v4565 = vpack.c.b16 %v3445, %v3440
      %v4566 = vpack.c.b16 %v3446, %v3441
      %v4567 = vpack.c.b16 %v3447, %v3442
      %v4568 = vpack.c.b16 %v3453, %v3448
      %v4569 = vpack.c.b16 %v3454, %v3449
      %v4570 = vpack.c.b16 %v3455, %v3450
      %v4571 = vpack.c.b16 %v3456, %v3451
      %v4572 = vpack.c.b16 %v3457, %v3452
      %v4573 = vpack.c.b16 %v3463, %v3458
      %v4574 = vpack.c.b16 %v3464, %v3459
      %v4575 = vpack.c.b16 %v3465, %v3460
      %v4576 = vpack.c.b16 %v3466, %v3461
      %v4577 = vpack.c.b16 %v3467, %v3462
      %v4578 = vpack.c.b16 %v3473, %v3468
      %v4579 = vpack.c.b16 %v3474, %v3469
      %v4580 = vpack.c.b16 %v3475, %v3470
      %v4581 = vpack.c.b16 %v3476, %v3471
      %v4582 = vpack.c.b16 %v3477, %v3472
      %v4583 = vpack.c.b16 %v3483, %v3478
      %v4584 = vpack.c.b16 %v3484, %v3479
      %v4585 = vpack.c.b16 %v3485, %v3480
      %v4586 = vpack.c.b16 %v3486, %v3481
      %v4587 = vpack.c.b16 %v3487, %v3482
      %v4588 = vpack.c.b16 %v3493, %v3488
      %v4589 = vpack.c.b16 %v3494, %v3489
      %v4590 = vpack.c.b16 %v3495, %v3490
      %v4591 = vpack.c.b16 %v3496, %v3491
      %v4592 = vpack.c.b16 %v3497, %v3492
      %v4593 = vpack.c.b16 %v3503, %v3498
      %v4594 = vpack.c.b16 %v3504, %v3499
      %v4595 = vpack.c.b16 %v3505, %v3500
      %v4596 = vpack.c.b16 %v3506, %v3501
      %v4597 = vpack.c.b16 %v3507, %v3502
      %v4598 = vpack.c.b16 %v3513, %v3508
      %v4599 = vpack.c.b16 %v3514, %v3509
      %v4600 = vpack.c.b16 %v3515, %v3510
      %v4601 = vpack.c.b16 %v3516, %v3511
      %v4602 = vpack.c.b16 %v3517, %v3512
      %v4603 = vpack.c.b16 %v3523, %v3518
      %v4604 = vpack.c.b16 %v3524, %v3519
      %v4605 = vpack.c.b16 %v3525, %v3520
      %v4606 = vpack.c.b16 %v3526, %v3521
      %v4607 = vpack.c.b16 %v3527, %v3522
      %v4608 = vpack.c.b16 %v3533, %v3528
      %v4609 = vpack.c.b16 %v3534, %v3529
      %v4610 = vpack.c.b16 %v3535, %v3530
      %v4611 = vpack.c.b16 %v3536, %v3531
      %v4612 = vpack.c.b16 %v3537, %v3532
      %v4613 = vpack.c.b16 %v3543, %v3538
      %v4614 = vpack.c.b16 %v3544, %v3539
      %v4615 = vpack.c.b16 %v3545, %v3540
      %v4616 = vpack.c.b16 %v3546, %v3541
      %v4617 = vpack.c.b16 %v3547, %v3542
      %v4618 = vpack.c.b16 %v3553, %v3548
      %v4619 = vpack.c.b16 %v3554, %v3549
      %v4620 = vpack.c.b16 %v3555, %v3550
      %v4621 = vpack.c.b16 %v3556, %v3551
      %v4622 = vpack.c.b16 %v3557, %v3552
      %v4623 = vpack.c.b16 %v3563, %v3558
      %v4624 = vpack.c.b16 %v3564, %v3559
      %v4625 = vpack.c.b16 %v3565, %v3560
      %v4626 = vpack.c.b16 %v3566, %v3561
      %v4627 = vpack.c.b16 %v3567, %v3562
      %v4628 = vpack.c.b16 %v3573, %v3568
      %v4629 = vpack.c.b16 %v3574, %v3569
      %v4630 = vpack.c.b16 %v3575, %v3570
      %v4631 = vpack.c.b16 %v3576, %v3571
      %v4632 = vpack.c.b16 %v3577, %v3572
      %v4633 = vpack.c.b16 %v3583, %v3578
      %v4634 = vpack.c.b16 %v3584, %v3579
      %v4635 = vpack.c.b16 %v3585, %v3580
      %v4636 = vpack.c.b16 %v3586, %v3581
      %v4637 = vpack.c.b16 %v3587, %v3582
      %v4638 = vpack.c.b16 %v3593, %v3588
      %v4639 = vpack.c.b16 %v3594, %v3589
      %v4640 = vpack.c.b16 %v3595, %v3590
      %v4641 = vpack.c.b16 %v3596, %v3591
      %v4642 = vpack.c.b16 %v3597, %v3592
      %v4643 = vpack.c.b16 %v3603, %v3598
      %v4644 = vpack.c.b16 %v3604, %v3599
      %v4645 = vpack.c.b16 %v3605, %v3600
      %v4646 = vpack.c.b16 %v3606, %v3601
      %v4647 = vpack.c.b16 %v3607, %v3602
      %v4648 = vpack.c.b16 %v3613, %v3608
      %v4649 = vpack.c.b16 %v3614, %v3609
      %v4650 = vpack.c.b16 %v3615, %v3610
      %v4651 = vpack.c.b16 %v3616, %v3611
      %v4652 = vpack.c.b16 %v3617, %v3612
      %v4653 = vpack.c.b16 %v3623, %v3618
      %v4654 = vpack.c.b16 %v3624, %v3619
      %v4655 = vpack.c.b16 %v3625, %v3620
      %v4656 = vpack.c.b16 %v3626, %v3621
      %v4657 = vpack.c.b16 %v3627, %v3622
      %v4658 = vpack.c.b16 %v3633, %v3628
      %v4659 = vpack.c.b16 %v3634, %v3629
      %v4660 = vpack.c.b16 %v3635, %v3630
      %v4661 = vpack.c.b16 %v3636, %v3631
      %v4662 = vpack.c.b16 %v3637, %v3632
      %v4663 = vpack.c.b16 %v3643, %v3638
      %v4664 = vpack.c.b16 %v3644, %v3639
      %v4665 = vpack.c.b16 %v3645, %v3640
      %v4666 = vpack.c.b16 %v3646, %v3641
      %v4667 = vpack.c.b16 %v3647, %v3642
      %v4668 = vpack.c.b16 %v3653, %v3648
      %v4669 = vpack.c.b16 %v3654, %v3649
      %v4670 = vpack.c.b16 %v3655, %v3650
      %v4671 = vpack.c.b16 %v3656, %v3651
      %v4672 = vpack.c.b16 %v3657, %v3652
      %v4673 = vpack.c.b16 %v3663, %v3658
      %v4674 = vpack.c.b16 %v3664, %v3659
      %v4675 = vpack.c.b16 %v3665, %v3660
      %v4676 = vpack.c.b16 %v3666, %v3661
      %v4677 = vpack.c.b16 %v3667, %v3662
      %v4678 = vpack.c.b16 %v3673, %v3668
      %v4679 = vpack.c.b16 %v3674, %v3669
      %v4680 = vpack.c.b16 %v3675, %v3670
      %v4681 = vpack.c.b16 %v3676, %v3671
      %v4682 = vpack.c.b16 %v3677, %v3672
      %v4683 = vpack.c.b16 %v3683, %v3678
      %v4684 = vpack.c.b16 %v3684, %v3679
      %v4685 = vpack.c.b16 %v3685, %v3680
      %v4686 = vpack.c.b16 %v3686, %v3681
      %v4687 = vpack.c.b16 %v3687, %v3682
      %v4688 = vpack.c.b16 %v3693, %v3688
      %v4689 = vpack.c.b16 %v3694, %v3689
      %v4690 = vpack.c.b16 %v3695, %v3690
      %v4691 = vpack.c.b16 %v3696, %v3691
      %v4692 = vpack.c.b16 %v3697, %v3692
      %v4693 = vpack.c.b16 %v3703, %v3698
      %v4694 = vpack.c.b16 %v3704, %v3699
      %v4695 = vpack.c.b16 %v3705, %v3700
      %v4696 = vpack.c.b16 %v3706, %v3701
      %v4697 = vpack.c.b16 %v3707, %v3702
      %v4698 = vpack.c.b16 %v3713, %v3708
      %v4699 = vpack.c.b16 %v3714, %v3709
      %v4700 = vpack.c.b16 %v3715, %v3710
      %v4701 = vpack.c.b16 %v3716, %v3711
      %v4702 = vpack.c.b16 %v3717, %v3712
      %v4703 = vpack.c.b16 %v3723, %v3718
      %v4704 = vpack.c.b16 %v3724, %v3719
      %v4705 = vpack.c.b16 %v3725, %v3720
      %v4706 = vpack.c.b16 %v3726, %v3721
      %v4707 = vpack.c.b16 %v3727, %v3722
      %v4708 = vpack.c.b16 %v3733, %v3728
      %v4709 = vpack.c.b16 %v3734, %v3729
      %v4710 = vpack.c.b16 %v3735, %v3730
      %v4711 = vpack.c.b16 %v3736, %v3731
      %v4712 = vpack.c.b16 %v3737, %v3732
      %v4713 = vpack.c.b16 %v3743, %v3738
      %v4714 = vpack.c.b16 %v3744, %v3739
      %v4715 = vpack.c.b16 %v3745, %v3740
      %v4716 = vpack.c.b16 %v3746, %v3741
      %v4717 = vpack.c.b16 %v3747, %v3742
      %v4718 = vpack.c.b16 %v3753, %v3748
      %v4719 = vpack.c.b16 %v3754, %v3749
      %v4720 = vpack.c.b16 %v3755, %v3750
      %v4721 = vpack.c.b16 %v3756, %v3751
      %v4722 = vpack.c.b16 %v3757, %v3752
      %v4723 = vpack.c.b16 %v3763, %v3758
      %v4724 = vpack.c.b16 %v3764, %v3759
      %v4725 = vpack.c.b16 %v3765, %v3760
      %v4726 = vpack.c.b16 %v3766, %v3761
      %v4727 = vpack.c.b16 %v3767, %v3762
      %v4728 = vpack.c.b16 %v3773, %v3768
      %v4729 = vpack.c.b16 %v3774, %v3769
      %v4730 = vpack.c.b16 %v3775, %v3770
      %v4731 = vpack.c.b16 %v3776, %v3771
      %v4732 = vpack.c.b16 %v3777, %v3772
      %v4733 = vpack.c.b16 %v3783, %v3778
      %v4734 = vpack.c.b16 %v3784, %v3779
      %v4735 = vpack.c.b16 %v3785, %v3780
      %v4736 = vpack.c.b16 %v3786, %v3781
      %v4737 = vpack.c.b16 %v3787, %v3782
      %v4738 = vpack.c.b16 %v3793, %v3788
      %v4739 = vpack.c.b16 %v3794, %v3789
      %v4740 = vpack.c.b16 %v3795, %v3790
      %v4741 = vpack.c.b16 %v3796, %v3791
      %v4742 = vpack.c.b16 %v3797, %v3792
      %v4743 = vpack.c.b16 %v3803, %v3798
      %v4744 = vpack.c.b16 %v3804, %v3799
      %v4745 = vpack.c.b16 %v3805, %v3800
      %v4746 = vpack.c.b16 %v3806, %v3801
      %v4747 = vpack.c.b16 %v3807, %v3802
      %v4748 = vpack.c.b16 %v3813, %v3808
      %v4749 = vpack.c.b16 %v3814, %v3809
      %v4750 = vpack.c.b16 %v3815, %v3810
      %v4751 = vpack.c.b16 %v3816, %v3811
      %v4752 = vpack.c.b16 %v3817, %v3812
      %v4753 = vpack.c.b16 %v3823, %v3818
      %v4754 = vpack.c.b16 %v3824, %v3819
      %v4755 = vpack.c.b16 %v3825, %v3820
      %v4756 = vpack.c.b16 %v3826, %v3821
      %v4757 = vpack.c.b16 %v3827, %v3822
      %v4758 = vpack.c.b16 %v3833, %v3828
      %v4759 = vpack.c.b16 %v3834, %v3829
      %v4760 = vpack.c.b16 %v3835, %v3830
      %v4761 = vpack.c.b16 %v3836, %v3831
      %v4762 = vpack.c.b16 %v3837, %v3832
      %v4763 = vpack.c.b16 %v3843, %v3838
      %v4764 = vpack.c.b16 %v3844, %v3839
      %v4765 = vpack.c.b16 %v3845, %v3840
      %v4766 = vpack.c.b16 %v3846, %v3841
      %v4767 = vpack.c.b16 %v3847, %v3842
      %v4768 = vpack.c.b16 %v3853, %v3848
      %v4769 = vpack.c.b16 %v3854, %v3849
      %v4770 = vpack.c.b16 %v3855, %v3850
      %v4771 = vpack.c.b16 %v3856, %v3851
      %v4772 = vpack.c.b16 %v3857, %v3852
      %v4773 = vpack.c.b16 %v3863, %v3858
      %v4774 = vpack.c.b16 %v3864, %v3859
      %v4775 = vpack.c.b16 %v3865, %v3860
      %v4776 = vpack.c.b16 %v3866, %v3861
      %v4777 = vpack.c.b16 %v3867, %v3862
      %v4778 = vpack.c.b16 %v3873, %v3868
      %v4779 = vpack.c.b16 %v3874, %v3869
      %v4780 = vpack.c.b16 %v3875, %v3870
      %v4781 = vpack.c.b16 %v3876, %v3871
      %v4782 = vpack.c.b16 %v3877, %v3872
      %v4783 = vpack.c.b16 %v3883, %v3878
      %v4784 = vpack.c.b16 %v3884, %v3879
      %v4785 = vpack.c.b16 %v3885, %v3880
      %v4786 = vpack.c.b16 %v3886, %v3881
      %v4787 = vpack.c.b16 %v3887, %v3882
      %v4788 = vpack.c.b16 %v3893, %v3888
      %v4789 = vpack.c.b16 %v3894, %v3889
      %v4790 = vpack.c.b16 %v3895, %v3890
      %v4791 = vpack.c.b16 %v3896, %v3891
      %v4792 = vpack.c.b16 %v3897, %v3892
      %v4793 = vpack.c.b16 %v3903, %v3898
      %v4794 = vpack.c.b16 %v3904, %v3899
      %v4795 = vpack.c.b16 %v3905, %v3900
      %v4796 = vpack.c.b16 %v3906, %v3901
      %v4797 = vpack.c.b16 %v3907, %v3902
      %v4798 = vpack.c.b16 %v3913, %v3908
      %v4799 = vpack.c.b16 %v3914, %v3909
      %v4800 = vpack.c.b16 %v3915, %v3910
      %v4801 = vpack.c.b16 %v3916, %v3911
      %v4802 = vpack.c.b16 %v3917, %v3912
      %v4803 = vpack.c.b16 %v3923, %v3918
      %v4804 = vpack.c.b16 %v3924, %v3919
      %v4805 = vpack.c.b16 %v3925, %v3920
      %v4806 = vpack.c.b16 %v3926, %v3921
      %v4807 = vpack.c.b16 %v3927, %v3922
      %v4808 = vpack.c.b16 %v3933, %v3928
      %v4809 = vpack.c.b16 %v3934, %v3929
      %v4810 = vpack.c.b16 %v3935, %v3930
      %v4811 = vpack.c.b16 %v3936, %v3931
      %v4812 = vpack.c.b16 %v3937, %v3932
      %v4813 = vpack.c.b16 %v3943, %v3938
      %v4814 = vpack.c.b16 %v3944, %v3939
      %v4815 = vpack.c.b16 %v3945, %v3940
      %v4816 = vpack.c.b16 %v3946, %v3941
      %v4817 = vpack.c.b16 %v3947, %v3942
      %v4818 = vpack.c.b16 %v3953, %v3948
      %v4819 = vpack.c.b16 %v3954, %v3949
      %v4820 = vpack.c.b16 %v3955, %v3950
      %v4821 = vpack.c.b16 %v3956, %v3951
      %v4822 = vpack.c.b16 %v3957, %v3952
      %v4823 = vpack.c.b16 %v3963, %v3958
      %v4824 = vpack.c.b16 %v3964, %v3959
      %v4825 = vpack.c.b16 %v3965, %v3960
      %v4826 = vpack.c.b16 %v3966, %v3961
      %v4827 = vpack.c.b16 %v3967, %v3962
      %v4828 = vpack.c.b16 %v3973, %v3968
      %v4829 = vpack.c.b16 %v3974, %v3969
      %v4830 = vpack.c.b16 %v3975, %v3970
      %v4831 = vpack.c.b16 %v3976, %v3971
      %v4832 = vpack.c.b16 %v3977, %v3972
      %v4833 = vpack.c.b16 %v3983, %v3978
      %v4834 = vpack.c.b16 %v3984, %v3979
      %v4835 = vpack.c.b16 %v3985, %v3980
      %v4836 = vpack.c.b16 %v3986, %v3981
      %v4837 = vpack.c.b16 %v3987, %v3982
      %v4838 = vpack.c.b16 %v3993, %v3988
      %v4839 = vpack.c.b16 %v3994, %v3989
      %v4840 = vpack.c.b16 %v3995, %v3990
      %v4841 = vpack.c.b16 %v3996, %v3991
      %v4842 = vpack.c.b16 %v3997, %v3992
      %v4843 = vpack.c.b16 %v4003, %v3998
      %v4844 = vpack.c.b16 %v4004, %v3999
      %v4845 = vpack.c.b16 %v4005, %v4000
      %v4846 = vpack.c.b16 %v4006, %v4001
      %v4847 = vpack.c.b16 %v4007, %v4002
      %v4848 = vpack.c.b16 %v4013, %v4008
      %v4849 = vpack.c.b16 %v4014, %v4009
      %v4850 = vpack.c.b16 %v4015, %v4010
      %v4851 = vpack.c.b16 %v4016, %v4011
      %v4852 = vpack.c.b16 %v4017, %v4012
      %v4853 = vpack.c.b16 %v4023, %v4018
      %v4854 = vpack.c.b16 %v4024, %v4019
      %v4855 = vpack.c.b16 %v4025, %v4020
      %v4856 = vpack.c.b16 %v4026, %v4021
      %v4857 = vpack.c.b16 %v4027, %v4022
      %v4858 = vpack.c.b16 %v4033, %v4028
      %v4859 = vpack.c.b16 %v4034, %v4029
      %v4860 = vpack.c.b16 %v4035, %v4030
      %v4861 = vpack.c.b16 %v4036, %v4031
      %v4862 = vpack.c.b16 %v4037, %v4032
      %v4863 = vpack.c.b16 %v4043, %v4038
      %v4864 = vpack.c.b16 %v4044, %v4039
      %v4865 = vpack.c.b16 %v4045, %v4040
      %v4866 = vpack.c.b16 %v4046, %v4041
      %v4867 = vpack.c.b16 %v4047, %v4042
      %v4868 = vpack.c.b16 %v4053, %v4048
      %v4869 = vpack.c.b16 %v4054, %v4049
      %v4870 = vpack.c.b16 %v4055, %v4050
      %v4871 = vpack.c.b16 %v4056, %v4051
      %v4872 = vpack.c.b16 %v4057, %v4052
      %v4873 = vpack.c.b16 %v4063, %v4058
      %v4874 = vpack.c.b16 %v4064, %v4059
      %v4875 = vpack.c.b16 %v4065, %v4060
      %v4876 = vpack.c.b16 %v4066, %v4061
      %v4877 = vpack.c.b16 %v4067, %v4062
      %v4878 = vpack.c.b16 %v4073, %v4068
      %v4879 = vpack.c.b16 %v4074, %v4069
      %v4880 = vpack.c.b16 %v4075, %v4070
      %v4881 = vpack.c.b16 %v4076, %v4071
      %v4882 = vpack.c.b16 %v4077, %v4072
      %v4883 = vpack.c.b16 %v4083, %v4078
      %v4884 = vpack.c.b16 %v4084, %v4079
      %v4885 = vpack.c.b16 %v4085, %v4080
      %v4886 = vpack.c.b16 %v4086, %v4081
      %v4887 = vpack.c.b16 %v4087, %v4082
      %v4888 = vpack.c.b16 %v4093, %v4088
      %v4889 = vpack.c.b16 %v4094, %v4089
      %v4890 = vpack.c.b16 %v4095, %v4090
      %v4891 = vpack.c.b16 %v4096, %v4091
      %v4892 = vpack.c.b16 %v4097, %v4092
      %v4893 = vpack.c.b16 %v4103, %v4098
      %v4894 = vpack.c.b16 %v4104, %v4099
      %v4895 = vpack.c.b16 %v4105, %v4100
      %v4896 = vpack.c.b16 %v4106, %v4101
      %v4897 = vpack.c.b16 %v4107, %v4102
      %v4898 = vpack.c.b16 %v4113, %v4108
      %v4899 = vpack.c.b16 %v4114, %v4109
      %v4900 = vpack.c.b16 %v4115, %v4110
      %v4901 = vpack.c.b16 %v4116, %v4111
      %v4902 = vpack.c.b16 %v4117, %v4112
      %v4903 = vpack.c.b16 %v4123, %v4118
      %v4904 = vpack.c.b16 %v4124, %v4119
      %v4905 = vpack.c.b16 %v4125, %v4120
      %v4906 = vpack.c.b16 %v4126, %v4121
      %v4907 = vpack.c.b16 %v4127, %v4122
      %v4908 = vpack.c.b16 %v4133, %v4128
      %v4909 = vpack.c.b16 %v4134, %v4129
      %v4910 = vpack.c.b16 %v4135, %v4130
      %v4911 = vpack.c.b16 %v4136, %v4131
      %v4912 = vpack.c.b16 %v4137, %v4132
      %v4913 = vpack.c.b16 %v4143, %v4138
      %v4914 = vpack.c.b16 %v4144, %v4139
      %v4915 = vpack.c.b16 %v4145, %v4140
      %v4916 = vpack.c.b16 %v4146, %v4141
      %v4917 = vpack.c.b16 %v4147, %v4142
      %v4918 = vpack.c.b16 %v4153, %v4148
      %v4919 = vpack.c.b16 %v4154, %v4149
      %v4920 = vpack.c.b16 %v4155, %v4150
      %v4921 = vpack.c.b16 %v4156, %v4151
      %v4922 = vpack.c.b16 %v4157, %v4152
      %v4923 = vpack.c.b16 %v4163, %v4158
      %v4924 = vpack.c.b16 %v4164, %v4159
      %v4925 = vpack.c.b16 %v4165, %v4160
      %v4926 = vpack.c.b16 %v4166, %v4161
      %v4927 = vpack.c.b16 %v4167, %v4162
      %v4928 = vpack.c.b16 %v4173, %v4168
      %v4929 = vpack.c.b16 %v4174, %v4169
      %v4930 = vpack.c.b16 %v4175, %v4170
      %v4931 = vpack.c.b16 %v4176, %v4171
      %v4932 = vpack.c.b16 %v4177, %v4172
      %v4933 = vpack.c.b16 %v4183, %v4178
      %v4934 = vpack.c.b16 %v4184, %v4179
      %v4935 = vpack.c.b16 %v4185, %v4180
      %v4936 = vpack.c.b16 %v4186, %v4181
      %v4937 = vpack.c.b16 %v4187, %v4182
      %v4938 = vpack.c.b16 %v4193, %v4188
      %v4939 = vpack.c.b16 %v4194, %v4189
      %v4940 = vpack.c.b16 %v4195, %v4190
      %v4941 = vpack.c.b16 %v4196, %v4191
      %v4942 = vpack.c.b16 %v4197, %v4192
      %v4943 = vpack.c.b16 %v4203, %v4198
      %v4944 = vpack.c.b16 %v4204, %v4199
      %v4945 = vpack.c.b16 %v4205, %v4200
      %v4946 = vpack.c.b16 %v4206, %v4201
      %v4947 = vpack.c.b16 %v4207, %v4202
      %v4948 = vpack.c.b16 %v4213, %v4208
      %v4949 = vpack.c.b16 %v4214, %v4209
      %v4950 = vpack.c.b16 %v4215, %v4210
      %v4951 = vpack.c.b16 %v4216, %v4211
      %v4952 = vpack.c.b16 %v4217, %v4212
      %v4953 = vpack.c.b16 %v4223, %v4218
      %v4954 = vpack.c.b16 %v4224, %v4219
      %v4955 = vpack.c.b16 %v4225, %v4220
      %v4956 = vpack.c.b16 %v4226, %v4221
      %v4957 = vpack.c.b16 %v4227, %v4222
      %v4958 = vpack.c.b16 %v4233, %v4228
      %v4959 = vpack.c.b16 %v4234, %v4229
      %v4960 = vpack.c.b16 %v4235, %v4230
      %v4961 = vpack.c.b16 %v4236, %v4231
      %v4962 = vpack.c.b16 %v4237, %v4232
      %v4963 = vpack.c.b16 %v4243, %v4238
      %v4964 = vpack.c.b16 %v4244, %v4239
      %v4965 = vpack.c.b16 %v4245, %v4240
      %v4966 = vpack.c.b16 %v4246, %v4241
      %v4967 = vpack.c.b16 %v4247, %v4242
      %v4968 = vpack.c.b16 %v4253, %v4248
      %v4969 = vpack.c.b16 %v4254, %v4249
      %v4970 = vpack.c.b16 %v4255, %v4250
      %v4971 = vpack.c.b16 %v4256, %v4251
      %v4972 = vpack.c.b16 %v4257, %v4252
      %v4973 = vpack.c.b16 %v4263, %v4258
      %v4974 = vpack.c.b16 %v4264, %v4259
      %v4975 = vpack.c.b16 %v4265, %v4260
      %v4976 = vpack.c.b16 %v4266, %v4261
      %v4977 = vpack.c.b16 %v4267, %v4262
      %v4978 = vpack.c.b16 %v4273, %v4268
      %v4979 = vpack.c.b16 %v4274, %v4269
      %v4980 = vpack.c.b16 %v4275, %v4270
      %v4981 = vpack.c.b16 %v4276, %v4271
      %v4982 = vpack.c.b16 %v4277, %v4272
      %v4983 = vpack.c.b16 %v4283, %v4278
      %v4984 = vpack.c.b16 %v4284, %v4279
      %v4985 = vpack.c.b16 %v4285, %v4280
      %v4986 = vpack.c.b16 %v4286, %v4281
      %v4987 = vpack.c.b16 %v4287, %v4282
      %v4988 = vpack.c.b16 %v4293, %v4288
      %v4989 = vpack.c.b16 %v4294, %v4289
      %v4990 = vpack.c.b16 %v4295, %v4290
      %v4991 = vpack.c.b16 %v4296, %v4291
      %v4992 = vpack.c.b16 %v4297, %v4292
      %v4993 = vpack.c.b16 %v4303, %v4298
      %v4994 = vpack.c.b16 %v4304, %v4299
      %v4995 = vpack.c.b16 %v4305, %v4300
      %v4996 = vpack.c.b16 %v4306, %v4301
      %v4997 = vpack.c.b16 %v4307, %v4302
      %v4998 = vpack.c.b16 %v4313, %v4308
      %v4999 = vpack.c.b16 %v4314, %v4309
      %v5000 = vpack.c.b16 %v4315, %v4310
      %v5001 = vpack.c.b16 %v4316, %v4311
      %v5002 = vpack.c.b16 %v4317, %v4312
      %v5003 = vpack.c.b16 %v4323, %v4318
      %v5004 = vpack.c.b16 %v4324, %v4319
      %v5005 = vpack.c.b16 %v4325, %v4320
      %v5006 = vpack.c.b16 %v4326, %v4321
      %v5007 = vpack.c.b16 %v4327, %v4322
      %v5008 = vpack.c.b16 %v4333, %v4328
      %v5009 = vpack.c.b16 %v4334, %v4329
      %v5010 = vpack.c.b16 %v4335, %v4330
      %v5011 = vpack.c.b16 %v4336, %v4331
      %v5012 = vpack.c.b16 %v4337, %v4332
      %v5013 = vpack.c.b16 %v4343, %v4338
      %v5014 = vpack.c.b16 %v4344, %v4339
      %v5015 = vpack.c.b16 %v4345, %v4340
      %v5016 = vpack.c.b16 %v4346, %v4341
      %v5017 = vpack.c.b16 %v4347, %v4342
      %v5018 = vpack.c.b16 %v4353, %v4348
      %v5019 = vpack.c.b16 %v4354, %v4349
      %v5020 = vpack.c.b16 %v4355, %v4350
      %v5021 = vpack.c.b16 %v4356, %v4351
      %v5022 = vpack.c.b16 %v4357, %v4352
      %v5023 = vpack.c.b16 %v4363, %v4358
      %v5024 = vpack.c.b16 %v4364, %v4359
      %v5025 = vpack.c.b16 %v4365, %v4360
      %v5026 = vpack.c.b16 %v4366, %v4361
      %v5027 = vpack.c.b16 %v4367, %v4362
      %v5028 = vpack.c.b16 %v4373, %v4368
      %v5029 = vpack.c.b16 %v4374, %v4369
      %v5030 = vpack.c.b16 %v4375, %v4370
      %v5031 = vpack.c.b16 %v4376, %v4371
      %v5032 = vpack.c.b16 %v4377, %v4372
      %v5033 = vpack.c.b16 %v4383, %v4378
      %v5034 = vpack.c.b16 %v4384, %v4379
      %v5035 = vpack.c.b16 %v4385, %v4380
      %v5036 = vpack.c.b16 %v4386, %v4381
      %v5037 = vpack.c.b16 %v4387, %v4382
      %v5038 = vpack.c.b16 %v4393, %v4388
      %v5039 = vpack.c.b16 %v4394, %v4389
      %v5040 = vpack.c.b16 %v4395, %v4390
      %v5041 = vpack.c.b16 %v4396, %v4391
      %v5042 = vpack.c.b16 %v4397, %v4392
      %v5043 = vpack.c.b16 %v4403, %v4398
      %v5044 = vpack.c.b16 %v4404, %v4399
      %v5045 = vpack.c.b16 %v4405, %v4400
      %v5046 = vpack.c.b16 %v4406, %v4401
      %v5047 = vpack.c.b16 %v4407, %v4402
      %v5048 = vpack.c.b16 %v4413, %v4408
      %v5049 = vpack.c.b16 %v4414, %v4409
      %v5050 = vpack.c.b16 %v4415, %v4410
      %v5051 = vpack.c.b16 %v4416, %v4411
      %v5052 = vpack.c.b16 %v4417, %v4412
      %v5053 = vpack.c.b16 %v4423, %v4418
      %v5054 = vpack.c.b16 %v4424, %v4419
      %v5055 = vpack.c.b16 %v4425, %v4420
      %v5056 = vpack.c.b16 %v4426, %v4421
      %v5057 = vpack.c.b16 %v4427, %v4422
      %v5058 = vpack.c.b16 %v4433, %v4428
      %v5059 = vpack.c.b16 %v4434, %v4429
      %v5060 = vpack.c.b16 %v4435, %v4430
      %v5061 = vpack.c.b16 %v4436, %v4431
      %v5062 = vpack.c.b16 %v4437, %v4432
      %v5063 = vpack.c.b16 %v4443, %v4438
      %v5064 = vpack.c.b16 %v4444, %v4439
      %v5065 = vpack.c.b16 %v4445, %v4440
      %v5066 = vpack.c.b16 %v4446, %v4441
      %v5067 = vpack.c.b16 %v4447, %v4442
      %v5068 = vpack.c.b16 %v4453, %v4448
      %v5069 = vpack.c.b16 %v4454, %v4449
      %v5070 = vpack.c.b16 %v4455, %v4450
      %v5071 = vpack.c.b16 %v4456, %v4451
      %v5072 = vpack.c.b16 %v4457, %v4452
      %v5073 = vpack.c.b16 %v4463, %v4458
      %v5074 = vpack.c.b16 %v4464, %v4459
      %v5075 = vpack.c.b16 %v4465, %v4460
      %v5076 = vpack.c.b16 %v4466, %v4461
      %v5077 = vpack.c.b16 %v4467, %v4462
      %v5078 = vpack.c.b16 %v4473, %v4468
      %v5079 = vpack.c.b16 %v4474, %v4469
      %v5080 = vpack.c.b16 %v4475, %v4470
      %v5081 = vpack.c.b16 %v4476, %v4471
      %v5082 = vpack.c.b16 %v4477, %v4472
      %v5083 = vpack.c.b16 %v4483, %v4478
      %v5084 = vpack.c.b16 %v4484, %v4479
      %v5085 = vpack.c.b16 %v4485, %v4480
      %v5086 = vpack.c.b16 %v4486, %v4481
      %v5087 = vpack.c.b16 %v4487, %v4482
      %5688 = vmatprep.subr.bf16.mxu0 %v4524
      %5689 = vmatpush1.bf16.msra.mxu0 %v4523
      %5690 = vmatprep.subr.bf16.mxu0 %v4519
      %5691 = vmatpush1.bf16.msra.mxu0 %v4518
      %5692 = vmatprep.subr.bf16.mxu0 %v4514
      %5693 = vmatpush1.bf16.msra.mxu0 %v4513
      %5694 = vmatprep.subr.bf16.mxu0 %v4509
      %5695 = vmatpush1.bf16.msra.mxu0 %v4508
      %5696 = vmatprep.subr.bf16.mxu0 %v4504
      %5697 = vmatpush1.bf16.msra.mxu0 %v4503
      %5698 = vmatprep.subr.bf16.mxu0 %v4499
      %5699 = vmatpush1.bf16.msra.mxu0 %v4498
      %5700 = vmatprep.subr.bf16.mxu0 %v4494
      %5701 = vmatpush1.bf16.msra.mxu0 %v4493
      %5702 = vmatprep.subr.bf16.mxu0 %v4489
      %5703 = vmatpush1.bf16.msra.mxu0 %v4488
      %5704 = vmatprep.subr.bf16.mxu0 %v4564
      %5705 = vmatpush2.bf16.msra.mxu0 %v4563
      %5706 = vmatprep.subr.bf16.mxu0 %v4559
      %5707 = vmatpush2.bf16.msra.mxu0 %v4558
      %5708 = vmatprep.subr.bf16.mxu0 %v4554
      %5709 = vmatpush2.bf16.msra.mxu0 %v4553
      %5710 = vmatprep.subr.bf16.mxu0 %v4549
      %5711 = vmatpush2.bf16.msra.mxu0 %v4548
      %5712 = vmatprep.subr.bf16.mxu0 %v4544
      %5713 = vmatpush2.bf16.msra.mxu0 %v4543
      %5714 = vmatprep.subr.bf16.mxu0 %v4539
      %5715 = vmatpush2.bf16.msra.mxu0 %v4538
      %5716 = vmatprep.subr.bf16.mxu0 %v4534
      %5717 = vmatpush2.bf16.msra.mxu0 %v4533
      %5718 = vmatprep.subr.bf16.mxu0 %v4529
      %5719 = vmatpush2.bf16.msra.mxu0 %v4528
      %5720 = vmatprep.mubr.bf16.mxu0 %v1692
      %5721 = vmatmul.mubr.bf16.gmra.mxu0 %v1691
      %v5722 = vpop.f32.mrf.mxu0
      %v5723 = vadd.f32 %v2546, %v5722
      %v5724 = vpop.f32.mrf.mxu0
      %v5725 = vadd.f32 %v2550, %v5724
      %v5726 = vpop.f32.mrf.mxu0
      %v5727 = vadd.f32 %v2546, %v5726
      %v5728 = vpop.f32.mrf.mxu0
      %v5729 = vadd.f32 %v2550, %v5728
      %5730 = vmatprep.mubr.bf16.mxu0 %v1697
      %5731 = vmatmul.mubr.bf16.gmra.mxu0 %v1696
      %v5732 = vpop.f32.mrf.mxu0
      %v5733 = vadd.f32 %v2546, %v5732
      %v5734 = vpop.f32.mrf.mxu0
      %v5735 = vadd.f32 %v2550, %v5734
      %v5736 = vpop.f32.mrf.mxu0
      %v5737 = vpop.f32.mrf.mxu0
      %5738 = vdwg.mxu0
      %5739 = vmatprep.subr.bf16.mxu0 %v4604
      %5740 = vmatpush1.bf16.msra.mxu0 %v4603
      %5741 = vmatprep.subr.bf16.mxu0 %v4599
      %5742 = vmatpush1.bf16.msra.mxu0 %v4598
      %5743 = vmatprep.subr.bf16.mxu0 %v4594
      %5744 = vmatpush1.bf16.msra.mxu0 %v4593
      %5745 = vmatprep.subr.bf16.mxu0 %v4589
      %5746 = vmatpush1.bf16.msra.mxu0 %v4588
      %5747 = vmatprep.subr.bf16.mxu0 %v4584
      %5748 = vmatpush1.bf16.msra.mxu0 %v4583
      %5749 = vmatprep.subr.bf16.mxu0 %v4579
      %5750 = vmatpush1.bf16.msra.mxu0 %v4578
      %5751 = vmatprep.subr.bf16.mxu0 %v4574
      %5752 = vmatpush1.bf16.msra.mxu0 %v4573
      %5753 = vmatprep.subr.bf16.mxu0 %v4569
      %5754 = vmatpush1.bf16.msra.mxu0 %v4568
      %5755 = vmatprep.subr.bf16.mxu0 %v4644
      %5756 = vmatpush2.bf16.msra.mxu0 %v4643
      %5757 = vmatprep.subr.bf16.mxu0 %v4639
      %5758 = vmatpush2.bf16.msra.mxu0 %v4638
      %5759 = vmatprep.subr.bf16.mxu0 %v4634
      %5760 = vmatpush2.bf16.msra.mxu0 %v4633
      %5761 = vmatprep.subr.bf16.mxu0 %v4629
      %5762 = vmatpush2.bf16.msra.mxu0 %v4628
      %5763 = vmatprep.subr.bf16.mxu0 %v4624
      %5764 = vmatpush2.bf16.msra.mxu0 %v4623
      %5765 = vmatprep.subr.bf16.mxu0 %v4619
      %5766 = vmatpush2.bf16.msra.mxu0 %v4618
      %5767 = vmatprep.subr.bf16.mxu0 %v4614
      %5768 = vmatpush2.bf16.msra.mxu0 %v4613
      %5769 = vmatprep.subr.bf16.mxu0 %v4609
      %5770 = vmatpush2.bf16.msra.mxu0 %v4608
      %5771 = vmatprep.mubr.bf16.mxu0 %v1694
      %5772 = vmatmul.mubr.bf16.gmra.mxu0 %v1693
      %v5773 = vpop.f32.mrf.mxu0
      %v5774 = vadd.f32 %v5723, %v5773
      %v5775 = vpop.f32.mrf.mxu0
      %v5776 = vadd.f32 %v5725, %v5775
      %v5777 = vpop.f32.mrf.mxu0
      %v5778 = vadd.f32 %v5727, %v5777
      %v5779 = vpop.f32.mrf.mxu0
      %v5780 = vadd.f32 %v5729, %v5779
      %5781 = vmatprep.mubr.bf16.mxu0 %v1699
      %5782 = vmatmul.mubr.bf16.gmra.mxu0 %v1698
      %v5783 = vpop.f32.mrf.mxu0
      %v5784 = vadd.f32 %v5733, %v5783
      %v5785 = vpop.f32.mrf.mxu0
      %v5786 = vadd.f32 %v5735, %v5785
      %v5787 = vpop.f32.mrf.mxu0
      %v5788 = vpop.f32.mrf.mxu0
      %5789 = vdwg.mxu0
      %5790 = vmatprep.subr.bf16.mxu0 %v4684
      %5791 = vmatpush1.bf16.msra.mxu0 %v4683
      %5792 = vmatprep.subr.bf16.mxu0 %v4679
      %5793 = vmatpush1.bf16.msra.mxu0 %v4678
      %5794 = vmatprep.subr.bf16.mxu0 %v4674
      %5795 = vmatpush1.bf16.msra.mxu0 %v4673
      %5796 = vmatprep.subr.bf16.mxu0 %v4669
      %5797 = vmatpush1.bf16.msra.mxu0 %v4668
      %5798 = vmatprep.subr.bf16.mxu0 %v4664
      %5799 = vmatpush1.bf16.msra.mxu0 %v4663
      %5800 = vmatprep.subr.bf16.mxu0 %v4659
      %5801 = vmatpush1.bf16.msra.mxu0 %v4658
      %5802 = vmatprep.subr.bf16.mxu0 %v4654
      %5803 = vmatpush1.bf16.msra.mxu0 %v4653
      %5804 = vmatprep.subr.bf16.mxu0 %v4649
      %5805 = vmatpush1.bf16.msra.mxu0 %v4648
      %5806 = vmatprep.subr.bf16.mxu0 %v4724
      %5807 = vmatpush2.bf16.msra.mxu0 %v4723
      %5808 = vmatprep.subr.bf16.mxu0 %v4719
      %5809 = vmatpush2.bf16.msra.mxu0 %v4718
      %5810 = vmatprep.subr.bf16.mxu0 %v4714
      %5811 = vmatpush2.bf16.msra.mxu0 %v4713
      %5812 = vmatprep.subr.bf16.mxu0 %v4709
      %5813 = vmatpush2.bf16.msra.mxu0 %v4708
      %5814 = vmatprep.subr.bf16.mxu0 %v4704
      %5815 = vmatpush2.bf16.msra.mxu0 %v4703
      %5816 = vmatprep.subr.bf16.mxu0 %v4699
      %5817 = vmatpush2.bf16.msra.mxu0 %v4698
      %5818 = vmatprep.subr.bf16.mxu0 %v4694
      %5819 = vmatpush2.bf16.msra.mxu0 %v4693
      %5820 = vmatprep.subr.bf16.mxu0 %v4689
      %5821 = vmatpush2.bf16.msra.mxu0 %v4688
      %5822 = vmatprep.mubr.bf16.mxu0 %v1712
      %5823 = vmatmul.mubr.bf16.gmra.mxu0 %v1695
      %v5824 = vpop.f32.mrf.mxu0
      %v5825 = vadd.f32 %v5774, %v5824
      %v5826 = vpop.f32.mrf.mxu0
      %v5827 = vadd.f32 %v5776, %v5826
      %v5828 = vpop.f32.mrf.mxu0
      %v5829 = vadd.f32 %v5778, %v5828
      %v5830 = vpop.f32.mrf.mxu0
      %v5831 = vadd.f32 %v5780, %v5830
      %5832 = vmatprep.mubr.bf16.mxu0 %v1763
      %5833 = vmatmul.mubr.bf16.gmra.mxu0 %v1700
      %v5834 = vpop.f32.mrf.mxu0
      %v5835 = vadd.f32 %v5784, %v5834
      %v5836 = vpop.f32.mrf.mxu0
      %v5837 = vadd.f32 %v5786, %v5836
      %v5838 = vpop.f32.mrf.mxu0
      %v5839 = vpop.f32.mrf.mxu0
      %5840 = vdwg.mxu0
      %5841 = vmatprep.subr.bf16.mxu0 %v4764
      %5842 = vmatpush1.bf16.msra.mxu0 %v4763
      %5843 = vmatprep.subr.bf16.mxu0 %v4759
      %5844 = vmatpush1.bf16.msra.mxu0 %v4758
      %5845 = vmatprep.subr.bf16.mxu0 %v4754
      %5846 = vmatpush1.bf16.msra.mxu0 %v4753
      %5847 = vmatprep.subr.bf16.mxu0 %v4749
      %5848 = vmatpush1.bf16.msra.mxu0 %v4748
      %5849 = vmatprep.subr.bf16.mxu0 %v4744
      %5850 = vmatpush1.bf16.msra.mxu0 %v4743
      %5851 = vmatprep.subr.bf16.mxu0 %v4739
      %5852 = vmatpush1.bf16.msra.mxu0 %v4738
      %5853 = vmatprep.subr.bf16.mxu0 %v4734
      %5854 = vmatpush1.bf16.msra.mxu0 %v4733
      %5855 = vmatprep.subr.bf16.mxu0 %v4729
      %5856 = vmatpush1.bf16.msra.mxu0 %v4728
      %5857 = vmatprep.subr.bf16.mxu0 %v4804
      %5858 = vmatpush2.bf16.msra.mxu0 %v4803
      %5859 = vmatprep.subr.bf16.mxu0 %v4799
      %5860 = vmatpush2.bf16.msra.mxu0 %v4798
      %5861 = vmatprep.subr.bf16.mxu0 %v4794
      %5862 = vmatpush2.bf16.msra.mxu0 %v4793
      %5863 = vmatprep.subr.bf16.mxu0 %v4789
      %5864 = vmatpush2.bf16.msra.mxu0 %v4788
      %5865 = vmatprep.subr.bf16.mxu0 %v4784
      %5866 = vmatpush2.bf16.msra.mxu0 %v4783
      %5867 = vmatprep.subr.bf16.mxu0 %v4779
      %5868 = vmatpush2.bf16.msra.mxu0 %v4778
      %5869 = vmatprep.subr.bf16.mxu0 %v4774
      %5870 = vmatpush2.bf16.msra.mxu0 %v4773
      %5871 = vmatprep.subr.bf16.mxu0 %v4769
      %5872 = vmatpush2.bf16.msra.mxu0 %v4768
      %5873 = vmatprep.mubr.bf16.mxu0 %v1736
      %5874 = vmatmul.mubr.bf16.gmra.mxu0 %v1724
      %v5875 = vpop.f32.mrf.mxu0
      %v5876 = vadd.f32 %v5825, %v5875
      %v5877 = vpop.f32.mrf.mxu0
      %v5878 = vadd.f32 %v5827, %v5877
      %v5879 = vpop.f32.mrf.mxu0
      %v5880 = vadd.f32 %v5829, %v5879
      %v5881 = vpop.f32.mrf.mxu0
      %v5882 = vadd.f32 %v5831, %v5881
      %5883 = vmatprep.mubr.bf16.mxu0 %v1769
      %5884 = vmatmul.mubr.bf16.gmra.mxu0 %v1766
      %v5885 = vpop.f32.mrf.mxu0
      %v5886 = vadd.f32 %v5835, %v5885
      %v5887 = vpop.f32.mrf.mxu0
      %v5888 = vadd.f32 %v5837, %v5887
      %v5889 = vpop.f32.mrf.mxu0
      %v5890 = vpop.f32.mrf.mxu0
      %5891 = vdwg.mxu0
      %5892 = vmatprep.subr.bf16.mxu0 %v4844
      %5893 = vmatpush1.bf16.msra.mxu0 %v4843
      %5894 = vmatprep.subr.bf16.mxu0 %v4839
      %5895 = vmatpush1.bf16.msra.mxu0 %v4838
      %5896 = vmatprep.subr.bf16.mxu0 %v4834
      %5897 = vmatpush1.bf16.msra.mxu0 %v4833
      %5898 = vmatprep.subr.bf16.mxu0 %v4829
      %5899 = vmatpush1.bf16.msra.mxu0 %v4828
      %5900 = vmatprep.subr.bf16.mxu0 %v4824
      %5901 = vmatpush1.bf16.msra.mxu0 %v4823
      %5902 = vmatprep.subr.bf16.mxu0 %v4819
      %5903 = vmatpush1.bf16.msra.mxu0 %v4818
      %5904 = vmatprep.subr.bf16.mxu0 %v4814
      %5905 = vmatpush1.bf16.msra.mxu0 %v4813
      %5906 = vmatprep.subr.bf16.mxu0 %v4809
      %5907 = vmatpush1.bf16.msra.mxu0 %v4808
      %5908 = vmatprep.subr.bf16.mxu0 %v4884
      %5909 = vmatpush2.bf16.msra.mxu0 %v4883
      %5910 = vmatprep.subr.bf16.mxu0 %v4879
      %5911 = vmatpush2.bf16.msra.mxu0 %v4878
      %5912 = vmatprep.subr.bf16.mxu0 %v4874
      %5913 = vmatpush2.bf16.msra.mxu0 %v4873
      %5914 = vmatprep.subr.bf16.mxu0 %v4869
      %5915 = vmatpush2.bf16.msra.mxu0 %v4868
      %5916 = vmatprep.subr.bf16.mxu0 %v4864
      %5917 = vmatpush2.bf16.msra.mxu0 %v4863
      %5918 = vmatprep.subr.bf16.mxu0 %v4859
      %5919 = vmatpush2.bf16.msra.mxu0 %v4858
      %5920 = vmatprep.subr.bf16.mxu0 %v4854
      %5921 = vmatpush2.bf16.msra.mxu0 %v4853
      %5922 = vmatprep.subr.bf16.mxu0 %v4849
      %5923 = vmatpush2.bf16.msra.mxu0 %v4848
      %5924 = vmatprep.mubr.bf16.mxu0 %v1760
      %5925 = vmatmul.mubr.bf16.gmra.mxu0 %v1748
      %v5926 = vpop.f32.mrf.mxu0
      %v5927 = vadd.f32 %v5876, %v5926
      %v5928 = vpop.f32.mrf.mxu0
      %v5929 = vadd.f32 %v5878, %v5928
      %v5930 = vpop.f32.mrf.mxu0
      %v5931 = vadd.f32 %v5880, %v5930
      %v5932 = vpop.f32.mrf.mxu0
      %v5933 = vadd.f32 %v5882, %v5932
      %5934 = vmatprep.mubr.bf16.mxu0 %v1775
      %5935 = vmatmul.mubr.bf16.gmra.mxu0 %v1772
      %v5936 = vpop.f32.mrf.mxu0
      %v5937 = vadd.f32 %v5886, %v5936
      %v5938 = vpop.f32.mrf.mxu0
      %v5939 = vadd.f32 %v5888, %v5938
      %v5940 = vpop.f32.mrf.mxu0
      %v5941 = vpop.f32.mrf.mxu0
      %5942 = vdwg.mxu0
      %5943 = vmatprep.subr.bf16.mxu0 %v4924
      %5944 = vmatpush1.bf16.msra.mxu0 %v4923
      %5945 = vmatprep.subr.bf16.mxu0 %v4919
      %5946 = vmatpush1.bf16.msra.mxu0 %v4918
      %5947 = vmatprep.subr.bf16.mxu0 %v4914
      %5948 = vmatpush1.bf16.msra.mxu0 %v4913
      %5949 = vmatprep.subr.bf16.mxu0 %v4909
      %5950 = vmatpush1.bf16.msra.mxu0 %v4908
      %5951 = vmatprep.subr.bf16.mxu0 %v4904
      %5952 = vmatpush1.bf16.msra.mxu0 %v4903
      %5953 = vmatprep.subr.bf16.mxu0 %v4899
      %5954 = vmatpush1.bf16.msra.mxu0 %v4898
      %5955 = vmatprep.subr.bf16.mxu0 %v4894
      %5956 = vmatpush1.bf16.msra.mxu0 %v4893
      %5957 = vmatprep.subr.bf16.mxu0 %v4889
      %5958 = vmatpush1.bf16.msra.mxu0 %v4888
      %5959 = vmatprep.subr.bf16.mxu0 %v4964
      %5960 = vmatpush2.bf16.msra.mxu0 %v4963
      %5961 = vmatprep.subr.bf16.mxu0 %v4959
      %5962 = vmatpush2.bf16.msra.mxu0 %v4958
      %5963 = vmatprep.subr.bf16.mxu0 %v4954
      %5964 = vmatpush2.bf16.msra.mxu0 %v4953
      %5965 = vmatprep.subr.bf16.mxu0 %v4949
      %5966 = vmatpush2.bf16.msra.mxu0 %v4948
      %5967 = vmatprep.subr.bf16.mxu0 %v4944
      %5968 = vmatpush2.bf16.msra.mxu0 %v4943
      %5969 = vmatprep.subr.bf16.mxu0 %v4939
      %5970 = vmatpush2.bf16.msra.mxu0 %v4938
      %5971 = vmatprep.subr.bf16.mxu0 %v4934
      %5972 = vmatpush2.bf16.msra.mxu0 %v4933
      %5973 = vmatprep.subr.bf16.mxu0 %v4929
      %5974 = vmatpush2.bf16.msra.mxu0 %v4928
      %5975 = vmatprep.mubr.bf16.mxu0 %v1801
      %5976 = vmatmul.mubr.bf16.gmra.mxu0 %v1798
      %v5977 = vpop.f32.mrf.mxu0
      %v5978 = vadd.f32 %v5927, %v5977
      %v5979 = vpop.f32.mrf.mxu0
      %v5980 = vadd.f32 %v5929, %v5979
      %v5981 = vpop.f32.mrf.mxu0
      %v5982 = vadd.f32 %v5931, %v5981
      %v5983 = vpop.f32.mrf.mxu0
      %v5984 = vadd.f32 %v5933, %v5983
      %5985 = vmatprep.mubr.bf16.mxu0 %v1800
      %5986 = vmatmul.mubr.bf16.gmra.mxu0 %v1797
      %v5987 = vpop.f32.mrf.mxu0
      %v5988 = vadd.f32 %v5937, %v5987
      %v5989 = vpop.f32.mrf.mxu0
      %v5990 = vadd.f32 %v5939, %v5989
      %v5991 = vpop.f32.mrf.mxu0
      %v5992 = vpop.f32.mrf.mxu0
      %5993 = vdwg.mxu0
      %5994 = vmatprep.subr.bf16.mxu0 %v5004
      %5995 = vmatpush1.bf16.msra.mxu0 %v5003
      %5996 = vmatprep.subr.bf16.mxu0 %v4999
      %5997 = vmatpush1.bf16.msra.mxu0 %v4998
      %5998 = vmatprep.subr.bf16.mxu0 %v4994
      %5999 = vmatpush1.bf16.msra.mxu0 %v4993
      %6000 = vmatprep.subr.bf16.mxu0 %v4989
      %6001 = vmatpush1.bf16.msra.mxu0 %v4988
      %6002 = vmatprep.subr.bf16.mxu0 %v4984
      %6003 = vmatpush1.bf16.msra.mxu0 %v4983
      %6004 = vmatprep.subr.bf16.mxu0 %v4979
      %6005 = vmatpush1.bf16.msra.mxu0 %v4978
      %6006 = vmatprep.subr.bf16.mxu0 %v4974
      %6007 = vmatpush1.bf16.msra.mxu0 %v4973
      %6008 = vmatprep.subr.bf16.mxu0 %v4969
      %6009 = vmatpush1.bf16.msra.mxu0 %v4968
      %6010 = vmatprep.subr.bf16.mxu0 %v5044
      %6011 = vmatpush2.bf16.msra.mxu0 %v5043
      %6012 = vmatprep.subr.bf16.mxu0 %v5039
      %6013 = vmatpush2.bf16.msra.mxu0 %v5038
      %6014 = vmatprep.subr.bf16.mxu0 %v5034
      %6015 = vmatpush2.bf16.msra.mxu0 %v5033
      %6016 = vmatprep.subr.bf16.mxu0 %v5029
      %6017 = vmatpush2.bf16.msra.mxu0 %v5028
      %6018 = vmatprep.subr.bf16.mxu0 %v5024
      %6019 = vmatpush2.bf16.msra.mxu0 %v5023
      %6020 = vmatprep.subr.bf16.mxu0 %v5019
      %6021 = vmatpush2.bf16.msra.mxu0 %v5018
      %6022 = vmatprep.subr.bf16.mxu0 %v5014
      %6023 = vmatpush2.bf16.msra.mxu0 %v5013
      %6024 = vmatprep.subr.bf16.mxu0 %v5009
      %6025 = vmatpush2.bf16.msra.mxu0 %v5008
      %6026 = vmatprep.mubr.bf16.mxu0 %v1807
      %6027 = vmatmul.mubr.bf16.gmra.mxu0 %v1804
      %v6028 = vpop.f32.mrf.mxu0
      %v6029 = vadd.f32 %v5978, %v6028
      %v6030 = vpop.f32.mrf.mxu0
      %v6031 = vadd.f32 %v5980, %v6030
      %v6032 = vpop.f32.mrf.mxu0
      %v6033 = vadd.f32 %v5982, %v6032
      %v6034 = vpop.f32.mrf.mxu0
      %v6035 = vadd.f32 %v5984, %v6034
      %6036 = vmatprep.mubr.bf16.mxu0 %v1806
      %6037 = vmatmul.mubr.bf16.gmra.mxu0 %v1803
      %v6038 = vpop.f32.mrf.mxu0
      %v6039 = vadd.f32 %v5988, %v6038
      %v6040 = vpop.f32.mrf.mxu0
      %v6041 = vadd.f32 %v5990, %v6040
      %v6042 = vpop.f32.mrf.mxu0
      %v6043 = vpop.f32.mrf.mxu0
      %6044 = vdwg.mxu0
      %6045 = vmatprep.subr.bf16.mxu0 %v5084
      %6046 = vmatpush1.bf16.msra.mxu0 %v5083
      %6047 = vmatprep.subr.bf16.mxu0 %v5079
      %6048 = vmatpush1.bf16.msra.mxu0 %v5078
      %6049 = vmatprep.subr.bf16.mxu0 %v5074
      %6050 = vmatpush1.bf16.msra.mxu0 %v5073
      %6051 = vmatprep.subr.bf16.mxu0 %v5069
      %6052 = vmatpush1.bf16.msra.mxu0 %v5068
      %6053 = vmatprep.subr.bf16.mxu0 %v5064
      %6054 = vmatpush1.bf16.msra.mxu0 %v5063
      %6055 = vmatprep.subr.bf16.mxu0 %v5059
      %6056 = vmatpush1.bf16.msra.mxu0 %v5058
      %6057 = vmatprep.subr.bf16.mxu0 %v5054
      %6058 = vmatpush1.bf16.msra.mxu0 %v5053
      %6059 = vmatprep.subr.bf16.mxu0 %v5049
      %6060 = vmatpush1.bf16.msra.mxu0 %v5048
      %6061 = vmatprep.subr.bf16.mxu0 0
      %6062 = vmatpush2.bf16.msra.mxu0 0
      %6063 = vmatprep.subr.bf16.mxu0 0
      %6064 = vmatpush2.bf16.msra.mxu0 0
      %6065 = vmatprep.subr.bf16.mxu0 0
      %6066 = vmatpush2.bf16.msra.mxu0 0
      %6067 = vmatprep.subr.bf16.mxu0 0
      %6068 = vmatpush2.bf16.msra.mxu0 0
      %6069 = vmatprep.subr.bf16.mxu0 0
      %6070 = vmatpush2.bf16.msra.mxu0 0
      %6071 = vmatprep.subr.bf16.mxu0 0
      %6072 = vmatpush2.bf16.msra.mxu0 0
      %6073 = vmatprep.subr.bf16.mxu0 0
      %6074 = vmatpush2.bf16.msra.mxu0 0
      %6075 = vmatprep.subr.bf16.mxu0 0
      %6076 = vmatpush2.bf16.msra.mxu0 0
      %6077 = vmatprep.mubr.bf16.mxu0 0
      %6078 = vmatmul.mubr.bf16.gmra.mxu0 %v1810
      %v6079 = vpop.f32.mrf.mxu0
      %v6080 = vadd.f32 %v6029, %v6079
      %v6081 = vpop.f32.mrf.mxu0
      %v6082 = vadd.f32 %v6031, %v6081
      %v6083 = vpop.f32.mrf.mxu0
      %v6084 = vadd.f32 %v6033, %v6083
      %v6085 = vpop.f32.mrf.mxu0
      %v6086 = vadd.f32 %v6035, %v6085
      %6087 = vmatprep.mubr.bf16.mxu0 0
      %6088 = vmatmul.mubr.bf16.gmra.mxu0 %v1809
      %v6089 = vpop.f32.mrf.mxu0
      %v6090 = vadd.f32 %v6039, %v6089
      %v6091 = vpop.f32.mrf.mxu0
      %v6092 = vadd.f32 %v6041, %v6091
      %v6093 = vpop.f32.mrf.mxu0
      %v6094 = vpop.f32.mrf.mxu0
      %6095 = vdwg.mxu0
      %6096 = vmatprep.subr.bf16.mxu0 %v4526
      %6097 = vmatpush1.bf16.msra.mxu0 %v4525
      %6098 = vmatprep.subr.bf16.mxu0 %v4521
      %6099 = vmatpush1.bf16.msra.mxu0 %v4520
      %6100 = vmatprep.subr.bf16.mxu0 %v4516
      %6101 = vmatpush1.bf16.msra.mxu0 %v4515
      %6102 = vmatprep.subr.bf16.mxu0 %v4511
      %6103 = vmatpush1.bf16.msra.mxu0 %v4510
      %6104 = vmatprep.subr.bf16.mxu0 %v4506
      %6105 = vmatpush1.bf16.msra.mxu0 %v4505
      %6106 = vmatprep.subr.bf16.mxu0 %v4501
      %6107 = vmatpush1.bf16.msra.mxu0 %v4500
      %6108 = vmatprep.subr.bf16.mxu0 %v4496
      %6109 = vmatpush1.bf16.msra.mxu0 %v4495
      %6110 = vmatprep.subr.bf16.mxu0 %v4491
      %6111 = vmatpush1.bf16.msra.mxu0 %v4490
      %6112 = vmatprep.subr.bf16.mxu0 %v4566
      %6113 = vmatpush2.bf16.msra.mxu0 %v4565
      %6114 = vmatprep.subr.bf16.mxu0 %v4561
      %6115 = vmatpush2.bf16.msra.mxu0 %v4560
      %6116 = vmatprep.subr.bf16.mxu0 %v4556
      %6117 = vmatpush2.bf16.msra.mxu0 %v4555
      %6118 = vmatprep.subr.bf16.mxu0 %v4551
      %6119 = vmatpush2.bf16.msra.mxu0 %v4550
      %6120 = vmatprep.subr.bf16.mxu0 %v4546
      %6121 = vmatpush2.bf16.msra.mxu0 %v4545
      %6122 = vmatprep.subr.bf16.mxu0 %v4541
      %6123 = vmatpush2.bf16.msra.mxu0 %v4540
      %6124 = vmatprep.subr.bf16.mxu0 %v4536
      %6125 = vmatpush2.bf16.msra.mxu0 %v4535
      %6126 = vmatprep.subr.bf16.mxu0 %v4531
      %6127 = vmatpush2.bf16.msra.mxu0 %v4530
      %6128 = vmatprep.mubr.bf16.mxu0 %v1692
      %6129 = vmatmul.mubr.bf16.gmra.mxu0 %v1691
      %v6130 = vpop.f32.mrf.mxu0
      %v6131 = vadd.f32 %v2554, %v6130
      %v6132 = vpop.f32.mrf.mxu0
      %v6133 = vadd.f32 %v2558, %v6132
      %v6134 = vpop.f32.mrf.mxu0
      %v6135 = vadd.f32 %v2554, %v6134
      %v6136 = vpop.f32.mrf.mxu0
      %v6137 = vadd.f32 %v2558, %v6136
      %6138 = vmatprep.mubr.bf16.mxu0 %v1697
      %6139 = vmatmul.mubr.bf16.gmra.mxu0 %v1696
      %v6140 = vpop.f32.mrf.mxu0
      %v6141 = vadd.f32 %v2554, %v6140
      %v6142 = vpop.f32.mrf.mxu0
      %v6143 = vadd.f32 %v2558, %v6142
      %v6144 = vpop.f32.mrf.mxu0
      %v6145 = vpop.f32.mrf.mxu0
      %6146 = vdwg.mxu0
      %6147 = vmatprep.subr.bf16.mxu0 %v4606
      %6148 = vmatpush1.bf16.msra.mxu0 %v4605
      %6149 = vmatprep.subr.bf16.mxu0 %v4601
      %6150 = vmatpush1.bf16.msra.mxu0 %v4600
      %6151 = vmatprep.subr.bf16.mxu0 %v4596
      %6152 = vmatpush1.bf16.msra.mxu0 %v4595
      %6153 = vmatprep.subr.bf16.mxu0 %v4591
      %6154 = vmatpush1.bf16.msra.mxu0 %v4590
      %6155 = vmatprep.subr.bf16.mxu0 %v4586
      %6156 = vmatpush1.bf16.msra.mxu0 %v4585
      %6157 = vmatprep.subr.bf16.mxu0 %v4581
      %6158 = vmatpush1.bf16.msra.mxu0 %v4580
      %6159 = vmatprep.subr.bf16.mxu0 %v4576
      %6160 = vmatpush1.bf16.msra.mxu0 %v4575
      %6161 = vmatprep.subr.bf16.mxu0 %v4571
      %6162 = vmatpush1.bf16.msra.mxu0 %v4570
      %6163 = vmatprep.subr.bf16.mxu0 %v4646
      %6164 = vmatpush2.bf16.msra.mxu0 %v4645
      %6165 = vmatprep.subr.bf16.mxu0 %v4641
      %6166 = vmatpush2.bf16.msra.mxu0 %v4640
      %6167 = vmatprep.subr.bf16.mxu0 %v4636
      %6168 = vmatpush2.bf16.msra.mxu0 %v4635
      %6169 = vmatprep.subr.bf16.mxu0 %v4631
      %6170 = vmatpush2.bf16.msra.mxu0 %v4630
      %6171 = vmatprep.subr.bf16.mxu0 %v4626
      %6172 = vmatpush2.bf16.msra.mxu0 %v4625
      %6173 = vmatprep.subr.bf16.mxu0 %v4621
      %6174 = vmatpush2.bf16.msra.mxu0 %v4620
      %6175 = vmatprep.subr.bf16.mxu0 %v4616
      %6176 = vmatpush2.bf16.msra.mxu0 %v4615
      %6177 = vmatprep.subr.bf16.mxu0 %v4611
      %6178 = vmatpush2.bf16.msra.mxu0 %v4610
      %6179 = vmatprep.mubr.bf16.mxu0 %v1694
      %6180 = vmatmul.mubr.bf16.gmra.mxu0 %v1693
      %v6181 = vpop.f32.mrf.mxu0
      %v6182 = vadd.f32 %v6131, %v6181
      %v6183 = vpop.f32.mrf.mxu0
      %v6184 = vadd.f32 %v6133, %v6183
      %v6185 = vpop.f32.mrf.mxu0
      %v6186 = vadd.f32 %v6135, %v6185
      %v6187 = vpop.f32.mrf.mxu0
      %v6188 = vadd.f32 %v6137, %v6187
      %6189 = vmatprep.mubr.bf16.mxu0 %v1699
      %6190 = vmatmul.mubr.bf16.gmra.mxu0 %v1698
      %v6191 = vpop.f32.mrf.mxu0
      %v6192 = vadd.f32 %v6141, %v6191
      %v6193 = vpop.f32.mrf.mxu0
      %v6194 = vadd.f32 %v6143, %v6193
      %v6195 = vpop.f32.mrf.mxu0
      %v6196 = vpop.f32.mrf.mxu0
      %6197 = vdwg.mxu0
      %6198 = vmatprep.subr.bf16.mxu0 %v4686
      %6199 = vmatpush1.bf16.msra.mxu0 %v4685
      %6200 = vmatprep.subr.bf16.mxu0 %v4681
      %6201 = vmatpush1.bf16.msra.mxu0 %v4680
      %6202 = vmatprep.subr.bf16.mxu0 %v4676
      %6203 = vmatpush1.bf16.msra.mxu0 %v4675
      %6204 = vmatprep.subr.bf16.mxu0 %v4671
      %6205 = vmatpush1.bf16.msra.mxu0 %v4670
      %6206 = vmatprep.subr.bf16.mxu0 %v4666
      %6207 = vmatpush1.bf16.msra.mxu0 %v4665
      %6208 = vmatprep.subr.bf16.mxu0 %v4661
      %6209 = vmatpush1.bf16.msra.mxu0 %v4660
      %6210 = vmatprep.subr.bf16.mxu0 %v4656
      %6211 = vmatpush1.bf16.msra.mxu0 %v4655
      %6212 = vmatprep.subr.bf16.mxu0 %v4651
      %6213 = vmatpush1.bf16.msra.mxu0 %v4650
      %6214 = vmatprep.subr.bf16.mxu0 %v4726
      %6215 = vmatpush2.bf16.msra.mxu0 %v4725
      %6216 = vmatprep.subr.bf16.mxu0 %v4721
      %6217 = vmatpush2.bf16.msra.mxu0 %v4720
      %6218 = vmatprep.subr.bf16.mxu0 %v4716
      %6219 = vmatpush2.bf16.msra.mxu0 %v4715
      %6220 = vmatprep.subr.bf16.mxu0 %v4711
      %6221 = vmatpush2.bf16.msra.mxu0 %v4710
      %6222 = vmatprep.subr.bf16.mxu0 %v4706
      %6223 = vmatpush2.bf16.msra.mxu0 %v4705
      %6224 = vmatprep.subr.bf16.mxu0 %v4701
      %6225 = vmatpush2.bf16.msra.mxu0 %v4700
      %6226 = vmatprep.subr.bf16.mxu0 %v4696
      %6227 = vmatpush2.bf16.msra.mxu0 %v4695
      %6228 = vmatprep.subr.bf16.mxu0 %v4691
      %6229 = vmatpush2.bf16.msra.mxu0 %v4690
      %6230 = vmatprep.mubr.bf16.mxu0 %v1712
      %6231 = vmatmul.mubr.bf16.gmra.mxu0 %v1695
      %v6232 = vpop.f32.mrf.mxu0
      %v6233 = vadd.f32 %v6182, %v6232
      %v6234 = vpop.f32.mrf.mxu0
      %v6235 = vadd.f32 %v6184, %v6234
      %v6236 = vpop.f32.mrf.mxu0
      %v6237 = vadd.f32 %v6186, %v6236
      %v6238 = vpop.f32.mrf.mxu0
      %v6239 = vadd.f32 %v6188, %v6238
      %6240 = vmatprep.mubr.bf16.mxu0 %v1763
      %6241 = vmatmul.mubr.bf16.gmra.mxu0 %v1700
      %v6242 = vpop.f32.mrf.mxu0
      %v6243 = vadd.f32 %v6192, %v6242
      %v6244 = vpop.f32.mrf.mxu0
      %v6245 = vadd.f32 %v6194, %v6244
      %v6246 = vpop.f32.mrf.mxu0
      %v6247 = vpop.f32.mrf.mxu0
      %6248 = vdwg.mxu0
      %6249 = vmatprep.subr.bf16.mxu0 %v4766
      %6250 = vmatpush1.bf16.msra.mxu0 %v4765
      %6251 = vmatprep.subr.bf16.mxu0 %v4761
      %6252 = vmatpush1.bf16.msra.mxu0 %v4760
      %6253 = vmatprep.subr.bf16.mxu0 %v4756
      %6254 = vmatpush1.bf16.msra.mxu0 %v4755
      %6255 = vmatprep.subr.bf16.mxu0 %v4751
      %6256 = vmatpush1.bf16.msra.mxu0 %v4750
      %6257 = vmatprep.subr.bf16.mxu0 %v4746
      %6258 = vmatpush1.bf16.msra.mxu0 %v4745
      %6259 = vmatprep.subr.bf16.mxu0 %v4741
      %6260 = vmatpush1.bf16.msra.mxu0 %v4740
      %6261 = vmatprep.subr.bf16.mxu0 %v4736
      %6262 = vmatpush1.bf16.msra.mxu0 %v4735
      %6263 = vmatprep.subr.bf16.mxu0 %v4731
      %6264 = vmatpush1.bf16.msra.mxu0 %v4730
      %6265 = vmatprep.subr.bf16.mxu0 %v4806
      %6266 = vmatpush2.bf16.msra.mxu0 %v4805
      %6267 = vmatprep.subr.bf16.mxu0 %v4801
      %6268 = vmatpush2.bf16.msra.mxu0 %v4800
      %6269 = vmatprep.subr.bf16.mxu0 %v4796
      %6270 = vmatpush2.bf16.msra.mxu0 %v4795
      %6271 = vmatprep.subr.bf16.mxu0 %v4791
      %6272 = vmatpush2.bf16.msra.mxu0 %v4790
      %6273 = vmatprep.subr.bf16.mxu0 %v4786
      %6274 = vmatpush2.bf16.msra.mxu0 %v4785
      %6275 = vmatprep.subr.bf16.mxu0 %v4781
      %6276 = vmatpush2.bf16.msra.mxu0 %v4780
      %6277 = vmatprep.subr.bf16.mxu0 %v4776
      %6278 = vmatpush2.bf16.msra.mxu0 %v4775
      %6279 = vmatprep.subr.bf16.mxu0 %v4771
      %6280 = vmatpush2.bf16.msra.mxu0 %v4770
      %6281 = vmatprep.mubr.bf16.mxu0 %v1736
      %6282 = vmatmul.mubr.bf16.gmra.mxu0 %v1724
      %v6283 = vpop.f32.mrf.mxu0
      %v6284 = vadd.f32 %v6233, %v6283
      %v6285 = vpop.f32.mrf.mxu0
      %v6286 = vadd.f32 %v6235, %v6285
      %v6287 = vpop.f32.mrf.mxu0
      %v6288 = vadd.f32 %v6237, %v6287
      %v6289 = vpop.f32.mrf.mxu0
      %v6290 = vadd.f32 %v6239, %v6289
      %6291 = vmatprep.mubr.bf16.mxu0 %v1769
      %6292 = vmatmul.mubr.bf16.gmra.mxu0 %v1766
      %v6293 = vpop.f32.mrf.mxu0
      %v6294 = vadd.f32 %v6243, %v6293
      %v6295 = vpop.f32.mrf.mxu0
      %v6296 = vadd.f32 %v6245, %v6295
      %v6297 = vpop.f32.mrf.mxu0
      %v6298 = vpop.f32.mrf.mxu0
      %6299 = vdwg.mxu0
      %6300 = vmatprep.subr.bf16.mxu0 %v4846
      %6301 = vmatpush1.bf16.msra.mxu0 %v4845
      %6302 = vmatprep.subr.bf16.mxu0 %v4841
      %6303 = vmatpush1.bf16.msra.mxu0 %v4840
      %6304 = vmatprep.subr.bf16.mxu0 %v4836
      %6305 = vmatpush1.bf16.msra.mxu0 %v4835
      %6306 = vmatprep.subr.bf16.mxu0 %v4831
      %6307 = vmatpush1.bf16.msra.mxu0 %v4830
      %6308 = vmatprep.subr.bf16.mxu0 %v4826
      %6309 = vmatpush1.bf16.msra.mxu0 %v4825
      %6310 = vmatprep.subr.bf16.mxu0 %v4821
      %6311 = vmatpush1.bf16.msra.mxu0 %v4820
      %6312 = vmatprep.subr.bf16.mxu0 %v4816
      %6313 = vmatpush1.bf16.msra.mxu0 %v4815
      %6314 = vmatprep.subr.bf16.mxu0 %v4811
      %6315 = vmatpush1.bf16.msra.mxu0 %v4810
      %6316 = vmatprep.subr.bf16.mxu0 %v4886
      %6317 = vmatpush2.bf16.msra.mxu0 %v4885
      %6318 = vmatprep.subr.bf16.mxu0 %v4881
      %6319 = vmatpush2.bf16.msra.mxu0 %v4880
      %6320 = vmatprep.subr.bf16.mxu0 %v4876
      %6321 = vmatpush2.bf16.msra.mxu0 %v4875
      %6322 = vmatprep.subr.bf16.mxu0 %v4871
      %6323 = vmatpush2.bf16.msra.mxu0 %v4870
      %6324 = vmatprep.subr.bf16.mxu0 %v4866
      %6325 = vmatpush2.bf16.msra.mxu0 %v4865
      %6326 = vmatprep.subr.bf16.mxu0 %v4861
      %6327 = vmatpush2.bf16.msra.mxu0 %v4860
      %6328 = vmatprep.subr.bf16.mxu0 %v4856
      %6329 = vmatpush2.bf16.msra.mxu0 %v4855
      %6330 = vmatprep.subr.bf16.mxu0 %v4851
      %6331 = vmatpush2.bf16.msra.mxu0 %v4850
      %6332 = vmatprep.mubr.bf16.mxu0 %v1760
      %6333 = vmatmul.mubr.bf16.gmra.mxu0 %v1748
      %v6334 = vpop.f32.mrf.mxu0
      %v6335 = vadd.f32 %v6284, %v6334
      %v6336 = vpop.f32.mrf.mxu0
      %v6337 = vadd.f32 %v6286, %v6336
      %v6338 = vpop.f32.mrf.mxu0
      %v6339 = vadd.f32 %v6288, %v6338
      %v6340 = vpop.f32.mrf.mxu0
      %v6341 = vadd.f32 %v6290, %v6340
      %6342 = vmatprep.mubr.bf16.mxu0 %v1775
      %6343 = vmatmul.mubr.bf16.gmra.mxu0 %v1772
      %v6344 = vpop.f32.mrf.mxu0
      %v6345 = vadd.f32 %v6294, %v6344
      %v6346 = vpop.f32.mrf.mxu0
      %v6347 = vadd.f32 %v6296, %v6346
      %v6348 = vpop.f32.mrf.mxu0
      %v6349 = vpop.f32.mrf.mxu0
      %6350 = vdwg.mxu0
      %6351 = vmatprep.subr.bf16.mxu0 %v4926
      %6352 = vmatpush1.bf16.msra.mxu0 %v4925
      %6353 = vmatprep.subr.bf16.mxu0 %v4921
      %6354 = vmatpush1.bf16.msra.mxu0 %v4920
      %6355 = vmatprep.subr.bf16.mxu0 %v4916
      %6356 = vmatpush1.bf16.msra.mxu0 %v4915
      %6357 = vmatprep.subr.bf16.mxu0 %v4911
      %6358 = vmatpush1.bf16.msra.mxu0 %v4910
      %6359 = vmatprep.subr.bf16.mxu0 %v4906
      %6360 = vmatpush1.bf16.msra.mxu0 %v4905
      %6361 = vmatprep.subr.bf16.mxu0 %v4901
      %6362 = vmatpush1.bf16.msra.mxu0 %v4900
      %6363 = vmatprep.subr.bf16.mxu0 %v4896
      %6364 = vmatpush1.bf16.msra.mxu0 %v4895
      %6365 = vmatprep.subr.bf16.mxu0 %v4891
      %6366 = vmatpush1.bf16.msra.mxu0 %v4890
      %6367 = vmatprep.subr.bf16.mxu0 %v4966
      %6368 = vmatpush2.bf16.msra.mxu0 %v4965
      %6369 = vmatprep.subr.bf16.mxu0 %v4961
      %6370 = vmatpush2.bf16.msra.mxu0 %v4960
      %6371 = vmatprep.subr.bf16.mxu0 %v4956
      %6372 = vmatpush2.bf16.msra.mxu0 %v4955
      %6373 = vmatprep.subr.bf16.mxu0 %v4951
      %6374 = vmatpush2.bf16.msra.mxu0 %v4950
      %6375 = vmatprep.subr.bf16.mxu0 %v4946
      %6376 = vmatpush2.bf16.msra.mxu0 %v4945
      %6377 = vmatprep.subr.bf16.mxu0 %v4941
      %6378 = vmatpush2.bf16.msra.mxu0 %v4940
      %6379 = vmatprep.subr.bf16.mxu0 %v4936
      %6380 = vmatpush2.bf16.msra.mxu0 %v4935
      %6381 = vmatprep.subr.bf16.mxu0 %v4931
      %6382 = vmatpush2.bf16.msra.mxu0 %v4930
      %6383 = vmatprep.mubr.bf16.mxu0 %v1801
      %6384 = vmatmul.mubr.bf16.gmra.mxu0 %v1798
      %v6385 = vpop.f32.mrf.mxu0
      %v6386 = vadd.f32 %v6335, %v6385
      %v6387 = vpop.f32.mrf.mxu0
      %v6388 = vadd.f32 %v6337, %v6387
      %v6389 = vpop.f32.mrf.mxu0
      %v6390 = vadd.f32 %v6339, %v6389
      %v6391 = vpop.f32.mrf.mxu0
      %v6392 = vadd.f32 %v6341, %v6391
      %6393 = vmatprep.mubr.bf16.mxu0 %v1800
      %6394 = vmatmul.mubr.bf16.gmra.mxu0 %v1797
      %v6395 = vpop.f32.mrf.mxu0
      %v6396 = vadd.f32 %v6345, %v6395
      %v6397 = vpop.f32.mrf.mxu0
      %v6398 = vadd.f32 %v6347, %v6397
      %v6399 = vpop.f32.mrf.mxu0
      %v6400 = vpop.f32.mrf.mxu0
      %6401 = vdwg.mxu0
      %6402 = vmatprep.subr.bf16.mxu0 %v5006
      %6403 = vmatpush1.bf16.msra.mxu0 %v5005
      %6404 = vmatprep.subr.bf16.mxu0 %v5001
      %6405 = vmatpush1.bf16.msra.mxu0 %v5000
      %6406 = vmatprep.subr.bf16.mxu0 %v4996
      %6407 = vmatpush1.bf16.msra.mxu0 %v4995
      %6408 = vmatprep.subr.bf16.mxu0 %v4991
      %6409 = vmatpush1.bf16.msra.mxu0 %v4990
      %6410 = vmatprep.subr.bf16.mxu0 %v4986
      %6411 = vmatpush1.bf16.msra.mxu0 %v4985
      %6412 = vmatprep.subr.bf16.mxu0 %v4981
      %6413 = vmatpush1.bf16.msra.mxu0 %v4980
      %6414 = vmatprep.subr.bf16.mxu0 %v4976
      %6415 = vmatpush1.bf16.msra.mxu0 %v4975
      %6416 = vmatprep.subr.bf16.mxu0 %v4971
      %6417 = vmatpush1.bf16.msra.mxu0 %v4970
      %6418 = vmatprep.subr.bf16.mxu0 %v5046
      %6419 = vmatpush2.bf16.msra.mxu0 %v5045
      %6420 = vmatprep.subr.bf16.mxu0 %v5041
      %6421 = vmatpush2.bf16.msra.mxu0 %v5040
      %6422 = vmatprep.subr.bf16.mxu0 %v5036
      %6423 = vmatpush2.bf16.msra.mxu0 %v5035
      %6424 = vmatprep.subr.bf16.mxu0 %v5031
      %6425 = vmatpush2.bf16.msra.mxu0 %v5030
      %6426 = vmatprep.subr.bf16.mxu0 %v5026
      %6427 = vmatpush2.bf16.msra.mxu0 %v5025
      %6428 = vmatprep.subr.bf16.mxu0 %v5021
      %6429 = vmatpush2.bf16.msra.mxu0 %v5020
      %6430 = vmatprep.subr.bf16.mxu0 %v5016
      %6431 = vmatpush2.bf16.msra.mxu0 %v5015
      %6432 = vmatprep.subr.bf16.mxu0 %v5011
      %6433 = vmatpush2.bf16.msra.mxu0 %v5010
      %6434 = vmatprep.mubr.bf16.mxu0 %v1807
      %6435 = vmatmul.mubr.bf16.gmra.mxu0 %v1804
      %v6436 = vpop.f32.mrf.mxu0
      %v6437 = vadd.f32 %v6386, %v6436
      %v6438 = vpop.f32.mrf.mxu0
      %v6439 = vadd.f32 %v6388, %v6438
      %v6440 = vpop.f32.mrf.mxu0
      %v6441 = vadd.f32 %v6390, %v6440
      %v6442 = vpop.f32.mrf.mxu0
      %v6443 = vadd.f32 %v6392, %v6442
      %6444 = vmatprep.mubr.bf16.mxu0 %v1806
      %6445 = vmatmul.mubr.bf16.gmra.mxu0 %v1803
      %v6446 = vpop.f32.mrf.mxu0
      %v6447 = vadd.f32 %v6396, %v6446
      %v6448 = vpop.f32.mrf.mxu0
      %v6449 = vadd.f32 %v6398, %v6448
      %v6450 = vpop.f32.mrf.mxu0
      %v6451 = vpop.f32.mrf.mxu0
      %6452 = vdwg.mxu0
      %6453 = vmatprep.subr.bf16.mxu0 %v5086
      %6454 = vmatpush1.bf16.msra.mxu0 %v5085
      %6455 = vmatprep.subr.bf16.mxu0 %v5081
      %6456 = vmatpush1.bf16.msra.mxu0 %v5080
      %6457 = vmatprep.subr.bf16.mxu0 %v5076
      %6458 = vmatpush1.bf16.msra.mxu0 %v5075
      %6459 = vmatprep.subr.bf16.mxu0 %v5071
      %6460 = vmatpush1.bf16.msra.mxu0 %v5070
      %6461 = vmatprep.subr.bf16.mxu0 %v5066
      %6462 = vmatpush1.bf16.msra.mxu0 %v5065
      %6463 = vmatprep.subr.bf16.mxu0 %v5061
      %6464 = vmatpush1.bf16.msra.mxu0 %v5060
      %6465 = vmatprep.subr.bf16.mxu0 %v5056
      %6466 = vmatpush1.bf16.msra.mxu0 %v5055
      %6467 = vmatprep.subr.bf16.mxu0 %v5051
      %6468 = vmatpush1.bf16.msra.mxu0 %v5050
      %6469 = vmatprep.subr.bf16.mxu0 0
      %6470 = vmatpush2.bf16.msra.mxu0 0
      %6471 = vmatprep.subr.bf16.mxu0 0
      %6472 = vmatpush2.bf16.msra.mxu0 0
      %6473 = vmatprep.subr.bf16.mxu0 0
      %6474 = vmatpush2.bf16.msra.mxu0 0
      %6475 = vmatprep.subr.bf16.mxu0 0
      %6476 = vmatpush2.bf16.msra.mxu0 0
      %6477 = vmatprep.subr.bf16.mxu0 0
      %6478 = vmatpush2.bf16.msra.mxu0 0
      %6479 = vmatprep.subr.bf16.mxu0 0
      %6480 = vmatpush2.bf16.msra.mxu0 0
      %6481 = vmatprep.subr.bf16.mxu0 0
      %6482 = vmatpush2.bf16.msra.mxu0 0
      %6483 = vmatprep.subr.bf16.mxu0 0
      %6484 = vmatpush2.bf16.msra.mxu0 0
      %6485 = vmatprep.mubr.bf16.mxu0 0
      %6486 = vmatmul.mubr.bf16.gmra.mxu0 %v1810
      %v6487 = vpop.f32.mrf.mxu0
      %v6488 = vadd.f32 %v6437, %v6487
      %v6489 = vpop.f32.mrf.mxu0
      %v6490 = vadd.f32 %v6439, %v6489
      %v6491 = vpop.f32.mrf.mxu0
      %v6492 = vadd.f32 %v6441, %v6491
      %v6493 = vpop.f32.mrf.mxu0
      %v6494 = vadd.f32 %v6443, %v6493
      %6495 = vmatprep.mubr.bf16.mxu0 0
      %6496 = vmatmul.mubr.bf16.gmra.mxu0 %v1809
      %v6497 = vpop.f32.mrf.mxu0
      %v6498 = vadd.f32 %v6447, %v6497
      %v6499 = vpop.f32.mrf.mxu0
      %v6500 = vadd.f32 %v6449, %v6499
      %v6501 = vpop.f32.mrf.mxu0
      %v6502 = vpop.f32.mrf.mxu0
      %6503 = vdwg.mxu0
      %6504 = vmatprep.subr.bf16.mxu0 0
      %6505 = vmatpush1.bf16.msra.mxu0 %v4527
      %6506 = vmatprep.subr.bf16.mxu0 0
      %6507 = vmatpush1.bf16.msra.mxu0 %v4522
      %6508 = vmatprep.subr.bf16.mxu0 0
      %6509 = vmatpush1.bf16.msra.mxu0 %v4517
      %6510 = vmatprep.subr.bf16.mxu0 0
      %6511 = vmatpush1.bf16.msra.mxu0 %v4512
      %6512 = vmatprep.subr.bf16.mxu0 0
      %6513 = vmatpush1.bf16.msra.mxu0 %v4507
      %6514 = vmatprep.subr.bf16.mxu0 0
      %6515 = vmatpush1.bf16.msra.mxu0 %v4502
      %6516 = vmatprep.subr.bf16.mxu0 0
      %6517 = vmatpush1.bf16.msra.mxu0 %v4497
      %6518 = vmatprep.subr.bf16.mxu0 0
      %6519 = vmatpush1.bf16.msra.mxu0 %v4492
      %6520 = vmatprep.subr.bf16.mxu0 0
      %6521 = vmatpush2.bf16.msra.mxu0 %v4567
      %6522 = vmatprep.subr.bf16.mxu0 0
      %6523 = vmatpush2.bf16.msra.mxu0 %v4562
      %6524 = vmatprep.subr.bf16.mxu0 0
      %6525 = vmatpush2.bf16.msra.mxu0 %v4557
      %6526 = vmatprep.subr.bf16.mxu0 0
      %6527 = vmatpush2.bf16.msra.mxu0 %v4552
      %6528 = vmatprep.subr.bf16.mxu0 0
      %6529 = vmatpush2.bf16.msra.mxu0 %v4547
      %6530 = vmatprep.subr.bf16.mxu0 0
      %6531 = vmatpush2.bf16.msra.mxu0 %v4542
      %6532 = vmatprep.subr.bf16.mxu0 0
      %6533 = vmatpush2.bf16.msra.mxu0 %v4537
      %6534 = vmatprep.subr.bf16.mxu0 0
      %6535 = vmatpush2.bf16.msra.mxu0 %v4532
      %6536 = vmatprep.mubr.bf16.mxu0 %v1692
      %6537 = vmatmul.mubr.bf16.gmra.mxu0 %v1691
      %v6538 = vpop.f32.mrf.mxu0
      %v6539 = vadd.f32 %v2562, %v6538
      %v6540 = vpop.f32.mrf.mxu0
      %v6541 = vpop.f32.mrf.mxu0
      %v6542 = vadd.f32 %v2562, %v6541
      %v6543 = vpop.f32.mrf.mxu0
      %6544 = vmatprep.mubr.bf16.mxu0 %v1697
      %6545 = vmatmul.mubr.bf16.gmra.mxu0 %v1696
      %v6546 = vpop.f32.mrf.mxu0
      %v6547 = vadd.f32 %v2562, %v6546
      %v6548 = vpop.f32.mrf.mxu0
      %v6549 = vpop.f32.mrf.mxu0
      %v6550 = vpop.f32.mrf.mxu0
      %6551 = vdwg.mxu0
      %6552 = vmatprep.subr.bf16.mxu0 0
      %6553 = vmatpush1.bf16.msra.mxu0 %v4607
      %6554 = vmatprep.subr.bf16.mxu0 0
      %6555 = vmatpush1.bf16.msra.mxu0 %v4602
      %6556 = vmatprep.subr.bf16.mxu0 0
      %6557 = vmatpush1.bf16.msra.mxu0 %v4597
      %6558 = vmatprep.subr.bf16.mxu0 0
      %6559 = vmatpush1.bf16.msra.mxu0 %v4592
      %6560 = vmatprep.subr.bf16.mxu0 0
      %6561 = vmatpush1.bf16.msra.mxu0 %v4587
      %6562 = vmatprep.subr.bf16.mxu0 0
      %6563 = vmatpush1.bf16.msra.mxu0 %v4582
      %6564 = vmatprep.subr.bf16.mxu0 0
      %6565 = vmatpush1.bf16.msra.mxu0 %v4577
      %6566 = vmatprep.subr.bf16.mxu0 0
      %6567 = vmatpush1.bf16.msra.mxu0 %v4572
      %6568 = vmatprep.subr.bf16.mxu0 0
      %6569 = vmatpush2.bf16.msra.mxu0 %v4647
      %6570 = vmatprep.subr.bf16.mxu0 0
      %6571 = vmatpush2.bf16.msra.mxu0 %v4642
      %6572 = vmatprep.subr.bf16.mxu0 0
      %6573 = vmatpush2.bf16.msra.mxu0 %v4637
      %6574 = vmatprep.subr.bf16.mxu0 0
      %6575 = vmatpush2.bf16.msra.mxu0 %v4632
      %6576 = vmatprep.subr.bf16.mxu0 0
      %6577 = vmatpush2.bf16.msra.mxu0 %v4627
      %6578 = vmatprep.subr.bf16.mxu0 0
      %6579 = vmatpush2.bf16.msra.mxu0 %v4622
      %6580 = vmatprep.subr.bf16.mxu0 0
      %6581 = vmatpush2.bf16.msra.mxu0 %v4617
      %6582 = vmatprep.subr.bf16.mxu0 0
      %6583 = vmatpush2.bf16.msra.mxu0 %v4612
      %6584 = vmatprep.mubr.bf16.mxu0 %v1694
      %6585 = vmatmul.mubr.bf16.gmra.mxu0 %v1693
      %v6586 = vpop.f32.mrf.mxu0
      %v6587 = vadd.f32 %v6539, %v6586
      %v6588 = vpop.f32.mrf.mxu0
      %v6589 = vpop.f32.mrf.mxu0
      %v6590 = vadd.f32 %v6542, %v6589
      %v6591 = vpop.f32.mrf.mxu0
      %6592 = vmatprep.mubr.bf16.mxu0 %v1699
      %6593 = vmatmul.mubr.bf16.gmra.mxu0 %v1698
      %v6594 = vpop.f32.mrf.mxu0
      %v6595 = vadd.f32 %v6547, %v6594
      %v6596 = vpop.f32.mrf.mxu0
      %v6597 = vpop.f32.mrf.mxu0
      %v6598 = vpop.f32.mrf.mxu0
      %6599 = vdwg.mxu0
      %6600 = vmatprep.subr.bf16.mxu0 0
      %6601 = vmatpush1.bf16.msra.mxu0 %v4687
      %6602 = vmatprep.subr.bf16.mxu0 0
      %6603 = vmatpush1.bf16.msra.mxu0 %v4682
      %6604 = vmatprep.subr.bf16.mxu0 0
      %6605 = vmatpush1.bf16.msra.mxu0 %v4677
      %6606 = vmatprep.subr.bf16.mxu0 0
      %6607 = vmatpush1.bf16.msra.mxu0 %v4672
      %6608 = vmatprep.subr.bf16.mxu0 0
      %6609 = vmatpush1.bf16.msra.mxu0 %v4667
      %6610 = vmatprep.subr.bf16.mxu0 0
      %6611 = vmatpush1.bf16.msra.mxu0 %v4662
      %6612 = vmatprep.subr.bf16.mxu0 0
      %6613 = vmatpush1.bf16.msra.mxu0 %v4657
      %6614 = vmatprep.subr.bf16.mxu0 0
      %6615 = vmatpush1.bf16.msra.mxu0 %v4652
      %6616 = vmatprep.subr.bf16.mxu0 0
      %6617 = vmatpush2.bf16.msra.mxu0 %v4727
      %6618 = vmatprep.subr.bf16.mxu0 0
      %6619 = vmatpush2.bf16.msra.mxu0 %v4722
      %6620 = vmatprep.subr.bf16.mxu0 0
      %6621 = vmatpush2.bf16.msra.mxu0 %v4717
      %6622 = vmatprep.subr.bf16.mxu0 0
      %6623 = vmatpush2.bf16.msra.mxu0 %v4712
      %6624 = vmatprep.subr.bf16.mxu0 0
      %6625 = vmatpush2.bf16.msra.mxu0 %v4707
      %6626 = vmatprep.subr.bf16.mxu0 0
      %6627 = vmatpush2.bf16.msra.mxu0 %v4702
      %6628 = vmatprep.subr.bf16.mxu0 0
      %6629 = vmatpush2.bf16.msra.mxu0 %v4697
      %6630 = vmatprep.subr.bf16.mxu0 0
      %6631 = vmatpush2.bf16.msra.mxu0 %v4692
      %6632 = vmatprep.mubr.bf16.mxu0 %v1712
      %6633 = vmatmul.mubr.bf16.gmra.mxu0 %v1695
      %v6634 = vpop.f32.mrf.mxu0
      %v6635 = vadd.f32 %v6587, %v6634
      %v6636 = vpop.f32.mrf.mxu0
      %v6637 = vpop.f32.mrf.mxu0
      %v6638 = vadd.f32 %v6590, %v6637
      %v6639 = vpop.f32.mrf.mxu0
      %6640 = vmatprep.mubr.bf16.mxu0 %v1763
      %6641 = vmatmul.mubr.bf16.gmra.mxu0 %v1700
      %v6642 = vpop.f32.mrf.mxu0
      %v6643 = vadd.f32 %v6595, %v6642
      %v6644 = vpop.f32.mrf.mxu0
      %v6645 = vpop.f32.mrf.mxu0
      %v6646 = vpop.f32.mrf.mxu0
      %6647 = vdwg.mxu0
      %6648 = vmatprep.subr.bf16.mxu0 0
      %6649 = vmatpush1.bf16.msra.mxu0 %v4767
      %6650 = vmatprep.subr.bf16.mxu0 0
      %6651 = vmatpush1.bf16.msra.mxu0 %v4762
      %6652 = vmatprep.subr.bf16.mxu0 0
      %6653 = vmatpush1.bf16.msra.mxu0 %v4757
      %6654 = vmatprep.subr.bf16.mxu0 0
      %6655 = vmatpush1.bf16.msra.mxu0 %v4752
      %6656 = vmatprep.subr.bf16.mxu0 0
      %6657 = vmatpush1.bf16.msra.mxu0 %v4747
      %6658 = vmatprep.subr.bf16.mxu0 0
      %6659 = vmatpush1.bf16.msra.mxu0 %v4742
      %6660 = vmatprep.subr.bf16.mxu0 0
      %6661 = vmatpush1.bf16.msra.mxu0 %v4737
      %6662 = vmatprep.subr.bf16.mxu0 0
      %6663 = vmatpush1.bf16.msra.mxu0 %v4732
      %6664 = vmatprep.subr.bf16.mxu0 0
      %6665 = vmatpush2.bf16.msra.mxu0 %v4807
      %6666 = vmatprep.subr.bf16.mxu0 0
      %6667 = vmatpush2.bf16.msra.mxu0 %v4802
      %6668 = vmatprep.subr.bf16.mxu0 0
      %6669 = vmatpush2.bf16.msra.mxu0 %v4797
      %6670 = vmatprep.subr.bf16.mxu0 0
      %6671 = vmatpush2.bf16.msra.mxu0 %v4792
      %6672 = vmatprep.subr.bf16.mxu0 0
      %6673 = vmatpush2.bf16.msra.mxu0 %v4787
      %6674 = vmatprep.subr.bf16.mxu0 0
      %6675 = vmatpush2.bf16.msra.mxu0 %v4782
      %6676 = vmatprep.subr.bf16.mxu0 0
      %6677 = vmatpush2.bf16.msra.mxu0 %v4777
      %6678 = vmatprep.subr.bf16.mxu0 0
      %6679 = vmatpush2.bf16.msra.mxu0 %v4772
      %6680 = vmatprep.mubr.bf16.mxu0 %v1736
      %6681 = vmatmul.mubr.bf16.gmra.mxu0 %v1724
      %v6682 = vpop.f32.mrf.mxu0
      %v6683 = vadd.f32 %v6635, %v6682
      %v6684 = vpop.f32.mrf.mxu0
      %v6685 = vpop.f32.mrf.mxu0
      %v6686 = vadd.f32 %v6638, %v6685
      %v6687 = vpop.f32.mrf.mxu0
      %6688 = vmatprep.mubr.bf16.mxu0 %v1769
      %6689 = vmatmul.mubr.bf16.gmra.mxu0 %v1766
      %v6690 = vpop.f32.mrf.mxu0
      %v6691 = vadd.f32 %v6643, %v6690
      %v6692 = vpop.f32.mrf.mxu0
      %v6693 = vpop.f32.mrf.mxu0
      %v6694 = vpop.f32.mrf.mxu0
      %6695 = vdwg.mxu0
      %6696 = vmatprep.subr.bf16.mxu0 0
      %6697 = vmatpush1.bf16.msra.mxu0 %v4847
      %6698 = vmatprep.subr.bf16.mxu0 0
      %6699 = vmatpush1.bf16.msra.mxu0 %v4842
      %6700 = vmatprep.subr.bf16.mxu0 0
      %6701 = vmatpush1.bf16.msra.mxu0 %v4837
      %6702 = vmatprep.subr.bf16.mxu0 0
      %6703 = vmatpush1.bf16.msra.mxu0 %v4832
      %6704 = vmatprep.subr.bf16.mxu0 0
      %6705 = vmatpush1.bf16.msra.mxu0 %v4827
      %6706 = vmatprep.subr.bf16.mxu0 0
      %6707 = vmatpush1.bf16.msra.mxu0 %v4822
      %6708 = vmatprep.subr.bf16.mxu0 0
      %6709 = vmatpush1.bf16.msra.mxu0 %v4817
      %6710 = vmatprep.subr.bf16.mxu0 0
      %6711 = vmatpush1.bf16.msra.mxu0 %v4812
      %6712 = vmatprep.subr.bf16.mxu0 0
      %6713 = vmatpush2.bf16.msra.mxu0 %v4887
      %6714 = vmatprep.subr.bf16.mxu0 0
      %6715 = vmatpush2.bf16.msra.mxu0 %v4882
      %6716 = vmatprep.subr.bf16.mxu0 0
      %6717 = vmatpush2.bf16.msra.mxu0 %v4877
      %6718 = vmatprep.subr.bf16.mxu0 0
      %6719 = vmatpush2.bf16.msra.mxu0 %v4872
      %6720 = vmatprep.subr.bf16.mxu0 0
      %6721 = vmatpush2.bf16.msra.mxu0 %v4867
      %6722 = vmatprep.subr.bf16.mxu0 0
      %6723 = vmatpush2.bf16.msra.mxu0 %v4862
      %6724 = vmatprep.subr.bf16.mxu0 0
      %6725 = vmatpush2.bf16.msra.mxu0 %v4857
      %6726 = vmatprep.subr.bf16.mxu0 0
      %6727 = vmatpush2.bf16.msra.mxu0 %v4852
      %6728 = vmatprep.mubr.bf16.mxu0 %v1760
      %6729 = vmatmul.mubr.bf16.gmra.mxu0 %v1748
      %v6730 = vpop.f32.mrf.mxu0
      %v6731 = vadd.f32 %v6683, %v6730
      %v6732 = vpop.f32.mrf.mxu0
      %v6733 = vpop.f32.mrf.mxu0
      %v6734 = vadd.f32 %v6686, %v6733
      %v6735 = vpop.f32.mrf.mxu0
      %6736 = vmatprep.mubr.bf16.mxu0 %v1775
      %6737 = vmatmul.mubr.bf16.gmra.mxu0 %v1772
      %v6738 = vpop.f32.mrf.mxu0
      %v6739 = vadd.f32 %v6691, %v6738
      %v6740 = vpop.f32.mrf.mxu0
      %v6741 = vpop.f32.mrf.mxu0
      %v6742 = vpop.f32.mrf.mxu0
      %6743 = vdwg.mxu0
      %6744 = vmatprep.subr.bf16.mxu0 0
      %6745 = vmatpush1.bf16.msra.mxu0 %v4927
      %6746 = vmatprep.subr.bf16.mxu0 0
      %6747 = vmatpush1.bf16.msra.mxu0 %v4922
      %6748 = vmatprep.subr.bf16.mxu0 0
      %6749 = vmatpush1.bf16.msra.mxu0 %v4917
      %6750 = vmatprep.subr.bf16.mxu0 0
      %6751 = vmatpush1.bf16.msra.mxu0 %v4912
      %6752 = vmatprep.subr.bf16.mxu0 0
      %6753 = vmatpush1.bf16.msra.mxu0 %v4907
      %6754 = vmatprep.subr.bf16.mxu0 0
      %6755 = vmatpush1.bf16.msra.mxu0 %v4902
      %6756 = vmatprep.subr.bf16.mxu0 0
      %6757 = vmatpush1.bf16.msra.mxu0 %v4897
      %6758 = vmatprep.subr.bf16.mxu0 0
      %6759 = vmatpush1.bf16.msra.mxu0 %v4892
      %6760 = vmatprep.subr.bf16.mxu0 0
      %6761 = vmatpush2.bf16.msra.mxu0 %v4967
      %6762 = vmatprep.subr.bf16.mxu0 0
      %6763 = vmatpush2.bf16.msra.mxu0 %v4962
      %6764 = vmatprep.subr.bf16.mxu0 0
      %6765 = vmatpush2.bf16.msra.mxu0 %v4957
      %6766 = vmatprep.subr.bf16.mxu0 0
      %6767 = vmatpush2.bf16.msra.mxu0 %v4952
      %6768 = vmatprep.subr.bf16.mxu0 0
      %6769 = vmatpush2.bf16.msra.mxu0 %v4947
      %6770 = vmatprep.subr.bf16.mxu0 0
      %6771 = vmatpush2.bf16.msra.mxu0 %v4942
      %6772 = vmatprep.subr.bf16.mxu0 0
      %6773 = vmatpush2.bf16.msra.mxu0 %v4937
      %6774 = vmatprep.subr.bf16.mxu0 0
      %6775 = vmatpush2.bf16.msra.mxu0 %v4932
      %6776 = vmatprep.mubr.bf16.mxu0 %v1801
      %6777 = vmatmul.mubr.bf16.gmra.mxu0 %v1798
      %v6778 = vpop.f32.mrf.mxu0
      %v6779 = vadd.f32 %v6731, %v6778
      %v6780 = vpop.f32.mrf.mxu0
      %v6781 = vpop.f32.mrf.mxu0
      %v6782 = vadd.f32 %v6734, %v6781
      %v6783 = vpop.f32.mrf.mxu0
      %6784 = vmatprep.mubr.bf16.mxu0 %v1800
      %6785 = vmatmul.mubr.bf16.gmra.mxu0 %v1797
      %v6786 = vpop.f32.mrf.mxu0
      %v6787 = vadd.f32 %v6739, %v6786
      %v6788 = vpop.f32.mrf.mxu0
      %v6789 = vpop.f32.mrf.mxu0
      %v6790 = vpop.f32.mrf.mxu0
      %6791 = vdwg.mxu0
      %6792 = vmatprep.subr.bf16.mxu0 0
      %6793 = vmatpush1.bf16.msra.mxu0 %v5007
      %6794 = vmatprep.subr.bf16.mxu0 0
      %6795 = vmatpush1.bf16.msra.mxu0 %v5002
      %6796 = vmatprep.subr.bf16.mxu0 0
      %6797 = vmatpush1.bf16.msra.mxu0 %v4997
      %6798 = vmatprep.subr.bf16.mxu0 0
      %6799 = vmatpush1.bf16.msra.mxu0 %v4992
      %6800 = vmatprep.subr.bf16.mxu0 0
      %6801 = vmatpush1.bf16.msra.mxu0 %v4987
      %6802 = vmatprep.subr.bf16.mxu0 0
      %6803 = vmatpush1.bf16.msra.mxu0 %v4982
      %6804 = vmatprep.subr.bf16.mxu0 0
      %6805 = vmatpush1.bf16.msra.mxu0 %v4977
      %6806 = vmatprep.subr.bf16.mxu0 0
      %6807 = vmatpush1.bf16.msra.mxu0 %v4972
      %6808 = vmatprep.subr.bf16.mxu0 0
      %6809 = vmatpush2.bf16.msra.mxu0 %v5047
      %6810 = vmatprep.subr.bf16.mxu0 0
      %6811 = vmatpush2.bf16.msra.mxu0 %v5042
      %6812 = vmatprep.subr.bf16.mxu0 0
      %6813 = vmatpush2.bf16.msra.mxu0 %v5037
      %6814 = vmatprep.subr.bf16.mxu0 0
      %6815 = vmatpush2.bf16.msra.mxu0 %v5032
      %6816 = vmatprep.subr.bf16.mxu0 0
      %6817 = vmatpush2.bf16.msra.mxu0 %v5027
      %6818 = vmatprep.subr.bf16.mxu0 0
      %6819 = vmatpush2.bf16.msra.mxu0 %v5022
      %6820 = vmatprep.subr.bf16.mxu0 0
      %6821 = vmatpush2.bf16.msra.mxu0 %v5017
      %6822 = vmatprep.subr.bf16.mxu0 0
      %6823 = vmatpush2.bf16.msra.mxu0 %v5012
      %6824 = vmatprep.mubr.bf16.mxu0 %v1807
      %6825 = vmatmul.mubr.bf16.gmra.mxu0 %v1804
      %v6826 = vpop.f32.mrf.mxu0
      %v6827 = vadd.f32 %v6779, %v6826
      %v6828 = vpop.f32.mrf.mxu0
      %v6829 = vpop.f32.mrf.mxu0
      %v6830 = vadd.f32 %v6782, %v6829
      %v6831 = vpop.f32.mrf.mxu0
      %6832 = vmatprep.mubr.bf16.mxu0 %v1806
      %6833 = vmatmul.mubr.bf16.gmra.mxu0 %v1803
      %v6834 = vpop.f32.mrf.mxu0
      %v6835 = vadd.f32 %v6787, %v6834
      %v6836 = vpop.f32.mrf.mxu0
      %v6837 = vpop.f32.mrf.mxu0
      %v6838 = vpop.f32.mrf.mxu0
      %6839 = vdwg.mxu0
      %6840 = vmatprep.subr.bf16.mxu0 0
      %6841 = vmatpush1.bf16.msra.mxu0 %v5087
      %6842 = vmatprep.subr.bf16.mxu0 0
      %6843 = vmatpush1.bf16.msra.mxu0 %v5082
      %6844 = vmatprep.subr.bf16.mxu0 0
      %6845 = vmatpush1.bf16.msra.mxu0 %v5077
      %6846 = vmatprep.subr.bf16.mxu0 0
      %6847 = vmatpush1.bf16.msra.mxu0 %v5072
      %6848 = vmatprep.subr.bf16.mxu0 0
      %6849 = vmatpush1.bf16.msra.mxu0 %v5067
      %6850 = vmatprep.subr.bf16.mxu0 0
      %6851 = vmatpush1.bf16.msra.mxu0 %v5062
      %6852 = vmatprep.subr.bf16.mxu0 0
      %6853 = vmatpush1.bf16.msra.mxu0 %v5057
      %6854 = vmatprep.subr.bf16.mxu0 0
      %6855 = vmatpush1.bf16.msra.mxu0 %v5052
      %6856 = vmatprep.subr.bf16.mxu0 0
      %6857 = vmatpush2.bf16.msra.mxu0 0
      %6858 = vmatprep.subr.bf16.mxu0 0
      %6859 = vmatpush2.bf16.msra.mxu0 0
      %6860 = vmatprep.subr.bf16.mxu0 0
      %6861 = vmatpush2.bf16.msra.mxu0 0
      %6862 = vmatprep.subr.bf16.mxu0 0
      %6863 = vmatpush2.bf16.msra.mxu0 0
      %6864 = vmatprep.subr.bf16.mxu0 0
      %6865 = vmatpush2.bf16.msra.mxu0 0
      %6866 = vmatprep.subr.bf16.mxu0 0
      %6867 = vmatpush2.bf16.msra.mxu0 0
      %6868 = vmatprep.subr.bf16.mxu0 0
      %6869 = vmatpush2.bf16.msra.mxu0 0
      %6870 = vmatprep.subr.bf16.mxu0 0
      %6871 = vmatpush2.bf16.msra.mxu0 0
      %6872 = vmatprep.mubr.bf16.mxu0 0
      %6873 = vmatmul.mubr.bf16.gmra.mxu0 %v1810
      %v6874 = vpop.f32.mrf.mxu0
      %v6875 = vadd.f32 %v6827, %v6874
      %v6876 = vpop.f32.mrf.mxu0
      %v6877 = vpop.f32.mrf.mxu0
      %v6878 = vadd.f32 %v6830, %v6877
      %v6879 = vpop.f32.mrf.mxu0
      %6880 = vmatprep.mubr.bf16.mxu0 0
      %6881 = vmatmul.mubr.bf16.gmra.mxu0 %v1809
      %v6882 = vpop.f32.mrf.mxu0
      %v6883 = vadd.f32 %v6835, %v6882
      %v6884 = vpop.f32.mrf.mxu0
      %v6885 = vpop.f32.mrf.mxu0
      %v6886 = vpop.f32.mrf.mxu0
      %6887 = vdwg.mxu0
      %v6888 = vmax.f32 %v6080, 0.0
      %v6889 = vmax.f32 %v6082, 0.0
      %v6890 = vmax.f32 %v6488, 0.0
      %v6891 = vmax.f32 %v6490, 0.0
      %v6892 = vmax.f32 %v6875, 0.0
      %v6893 = vmax.f32 %v6084, 0.0
      %v6894 = vmax.f32 %v6086, 0.0
      %v6895 = vmax.f32 %v6492, 0.0
      %v6896 = vmax.f32 %v6494, 0.0
      %v6897 = vmax.f32 %v6878, 0.0
      %v6898 = vmax.f32 %v6090, 0.0
      %v6899 = vmax.f32 %v6092, 0.0
      %v6900 = vmax.f32 %v6498, 0.0
      %v6901 = vmax.f32 %v6500, 0.0
      %v6902 = vmax.f32 %v6883, 0.0
      %v6903 = vpack.c.bf16 %v6893, %v6888
      %v6904 = vpack.c.bf16 %v6894, %v6889
      %v6905 = vpack.c.bf16 %v6895, %v6890
      %v6906 = vpack.c.bf16 %v6896, %v6891
      %v6907 = vpack.c.bf16 %v6897, %v6892
      %v6908 = vpack.c.bf16 %v6898, %v6898
      %v6909 = vpack.c.bf16 %v6899, %v6899
      %v6910 = vpack.c.bf16 %v6900, %v6900
      %v6911 = vpack.c.bf16 %v6901, %v6901
      %v6912 = vpack.c.bf16 %v6902, %v6902
      %v6914 = vshrl.u32 %v6903, 16
      %v6916 = vshll.u32 %v6903, 16
      %v6918 = vrot.slane %v6916, 1
      %v6919 = vor.u32 %v6914, %v6918
      %v6921 = vshll.u32 %v6908, 16
      %v6923 = vrot.slane %v6921, 1
      %v6924 = vsel %vm318, %v6919, %v6923
      %v6926 = vshrl.u32 %v6904, 16
      %v6928 = vshll.u32 %v6904, 16
      %v6930 = vrot.slane %v6928, 1
      %v6931 = vor.u32 %v6926, %v6930
      %v6933 = vshll.u32 %v6909, 16
      %v6935 = vrot.slane %v6933, 1
      %v6936 = vsel %vm318, %v6931, %v6935
      %v6938 = vshrl.u32 %v6905, 16
      %v6940 = vshll.u32 %v6905, 16
      %v6942 = vrot.slane %v6940, 1
      %v6943 = vor.u32 %v6938, %v6942
      %v6945 = vshll.u32 %v6910, 16
      %v6947 = vrot.slane %v6945, 1
      %v6948 = vsel %vm318, %v6943, %v6947
      %v6950 = vshrl.u32 %v6906, 16
      %v6952 = vshll.u32 %v6906, 16
      %v6954 = vrot.slane %v6952, 1
      %v6955 = vor.u32 %v6950, %v6954
      %v6957 = vshll.u32 %v6911, 16
      %v6959 = vrot.slane %v6957, 1
      %v6960 = vsel %vm318, %v6955, %v6959
      %v6962 = vshrl.u32 %v6907, 16
      %v6964 = vshll.u32 %v6907, 16
      %v6966 = vrot.slane %v6964, 1
      %v6967 = vor.u32 %v6962, %v6966
      %v6969 = vshll.u32 %v6912, 16
      %v6971 = vrot.slane %v6969, 1
      %v6972 = vsel %vm318, %v6967, %v6971
      %6973 = vrot.lane.b32.xlu0 %v6924, 64
      %v6974 = vpop.permute.xlu0 %6973
      %6975 = vrot.lane.b32.xlu0 %v6936, 64
      %v6976 = vpop.permute.xlu0 %6975
      %6977 = vrot.lane.b32.xlu0 %v6948, 64
      %v6978 = vpop.permute.xlu0 %6977
      %6979 = vrot.lane.b32.xlu0 %v6960, 64
      %v6980 = vpop.permute.xlu0 %6979
      %6981 = vrot.lane.b32.xlu0 %v6972, 64
      %v6982 = vpop.permute.xlu0 %6981
      %vm6983 = vcmask 523264
      %v6984 = vsel %vm6983, %v6974, %v6976
      %v6985 = vsel %vm6983, %v6976, %v6978
      %v6986 = vsel %vm6983, %v6978, %v6980
      %v6987 = vsel %vm6983, %v6980, %v6982
      %v7002 = vrot.slane %v6903, 1
      %v7003 = vrot.slane %v6908, 1
      %v7004 = vsel %vm338, %v7002, %v7003
      %v7005 = vrot.slane %v6904, 1
      %v7006 = vrot.slane %v6909, 1
      %v7007 = vsel %vm338, %v7005, %v7006
      %v7008 = vrot.slane %v6905, 1
      %v7009 = vrot.slane %v6910, 1
      %v7010 = vsel %vm338, %v7008, %v7009
      %v7011 = vrot.slane %v6906, 1
      %v7012 = vrot.slane %v6911, 1
      %v7013 = vsel %vm338, %v7011, %v7012
      %v7014 = vrot.slane %v6907, 1
      %v7015 = vrot.slane %v6912, 1
      %v7016 = vsel %vm338, %v7014, %v7015
      %v7022 = vsel %vm369, %v6907, %v6974
      %v7024 = vld [vmem:[%s5] sm:$0xf]
      %v7025 = vld [vmem:[%s5 + $0x4] sm:$0xf]
      %v7026 = vld [vmem:[%s5 + $0x8] sm:$0xf]
      %v7027 = vld [vmem:[%s5 + $0xc] sm:$0xf]
      %v7028 = vld [vmem:[%s5 + $0x10] sm:$0xf]
      %v7029 = vld [vmem:[%s5 + $0x14] sm:$0xf]
      %v7030 = vld [vmem:[%s5 + $0x18] sm:$0xf]
      %v7031 = vld [vmem:[%s5 + $0x1c] sm:$0xf]
      %v7032 = vld [vmem:[%s5 + $0x20] sm:$0xf]
      %v7033 = vld [vmem:[%s5 + $0x24] sm:$0xf]
      %v7034 = vld [vmem:[%s5 + $0x28] sm:$0xf]
      %v7035 = vld [vmem:[%s5 + $0x2c] sm:$0xf]
      %v7036 = vld [vmem:[%s5 + $0x30] sm:$0xf]
      %v7037 = vld [vmem:[%s5 + $0x34] sm:$0xf]
      %v7038 = vld [vmem:[%s5 + $0x38] sm:$0xf]
      %v7039 = vld [vmem:[%s5 + $0x3c] sm:$0xf]
      %v7040 = vld [vmem:[%s5 + $0x40] sm:$0xf]
      %v7041 = vld [vmem:[%s5 + $0x44] sm:$0xf]
      %v7042 = vld [vmem:[%s5 + $0x48] sm:$0xf]
      %v7043 = vld [vmem:[%s5 + $0x4c] sm:$0xf]
      %v7044 = vld [vmem:[%s5 + $0x50] sm:$0xf]
      %v7045 = vld [vmem:[%s5 + $0x54] sm:$0xf]
      %v7046 = vld [vmem:[%s5 + $0x58] sm:$0xf]
      %v7047 = vld [vmem:[%s5 + $0x5c] sm:$0xf]
      %v7048 = vld [vmem:[%s5 + $0x60] sm:$0xf]
      %v7049 = vld [vmem:[%s5 + $0x64] sm:$0xf]
      %v7050 = vld [vmem:[%s5 + $0x68] sm:$0xf]
      %v7051 = vld [vmem:[%s5 + $0x6c] sm:$0xf]
      %v7052 = vld [vmem:[%s5 + $0x70] sm:$0xf]
      %v7053 = vld [vmem:[%s5 + $0x74] sm:$0xf]
      %v7054 = vld [vmem:[%s5 + $0x78] sm:$0xf]
      %v7055 = vld [vmem:[%s5 + $0x7c] sm:$0xf]
      %v7056 = vld [vmem:[%s5 + $0x80] sm:$0xf]
      %v7057 = vld [vmem:[%s5 + $0x84] sm:$0xf]
      %v7058 = vld [vmem:[%s5 + $0x88] sm:$0xf]
      %v7059 = vld [vmem:[%s5 + $0x8c] sm:$0xf]
      %v7060 = vld [vmem:[%s5 + $0x90] sm:$0xf]
      %v7061 = vld [vmem:[%s5 + $0x94] sm:$0xf]
      %v7062 = vld [vmem:[%s5 + $0x98] sm:$0xf]
      %v7063 = vld [vmem:[%s5 + $0x9c] sm:$0xf]
      %v7064 = vld [vmem:[%s5 + $0xa0] sm:$0xf]
      %v7065 = vld [vmem:[%s5 + $0xa4] sm:$0xf]
      %v7066 = vld [vmem:[%s5 + $0xa8] sm:$0xf]
      %v7067 = vld [vmem:[%s5 + $0xac] sm:$0xf]
      %v7068 = vld [vmem:[%s5 + $0xb0] sm:$0xf]
      %v7069 = vld [vmem:[%s5 + $0xb4] sm:$0xf]
      %v7070 = vld [vmem:[%s5 + $0xb8] sm:$0xf]
      %v7071 = vld [vmem:[%s5 + $0xbc] sm:$0xf]
      %v7072 = vld [vmem:[%s5 + $0xc0] sm:$0xf]
      %v7073 = vld [vmem:[%s5 + $0xc4] sm:$0xf]
      %v7074 = vld [vmem:[%s5 + $0xc8] sm:$0xf]
      %v7075 = vld [vmem:[%s5 + $0xcc] sm:$0xf]
      %v7076 = vld [vmem:[%s5 + $0xd0] sm:$0xf]
      %v7077 = vld [vmem:[%s5 + $0xd4] sm:$0xf]
      %v7078 = vld [vmem:[%s5 + $0xd8] sm:$0xf]
      %v7079 = vld [vmem:[%s5 + $0xdc] sm:$0xf]
      %v7080 = vld [vmem:[%s5 + $0xe0] sm:$0xf]
      %v7081 = vld [vmem:[%s5 + $0xe4] sm:$0xf]
      %v7082 = vld [vmem:[%s5 + $0xe8] sm:$0xf]
      %v7083 = vld [vmem:[%s5 + $0xec] sm:$0xf]
      %v7084 = vld [vmem:[%s5 + $0xf0] sm:$0xf]
      %v7085 = vld [vmem:[%s5 + $0xf4] sm:$0xf]
      %v7086 = vld [vmem:[%s5 + $0xf8] sm:$0xf]
      %v7087 = vld [vmem:[%s5 + $0xfc] sm:$0xf]
      %v7088 = vld [vmem:[%s5 + $0x100] sm:$0xf]
      %v7089 = vld [vmem:[%s5 + $0x104] sm:$0xf]
      %v7090 = vld [vmem:[%s5 + $0x108] sm:$0xf]
      %v7091 = vld [vmem:[%s5 + $0x10c] sm:$0xf]
      %v7092 = vld [vmem:[%s5 + $0x110] sm:$0xf]
      %v7093 = vld [vmem:[%s5 + $0x114] sm:$0xf]
      %v7094 = vld [vmem:[%s5 + $0x118] sm:$0xf]
      %v7095 = vld [vmem:[%s5 + $0x11c] sm:$0xf]
      %v7096 = vld [vmem:[%s5 + $0x120] sm:$0xf]
      %v7097 = vld [vmem:[%s5 + $0x124] sm:$0xf]
      %v7098 = vld [vmem:[%s5 + $0x128] sm:$0xf]
      %v7099 = vld [vmem:[%s5 + $0x12c] sm:$0xf]
      %v7100 = vld [vmem:[%s5 + $0x130] sm:$0xf]
      %v7101 = vld [vmem:[%s5 + $0x134] sm:$0xf]
      %v7102 = vld [vmem:[%s5 + $0x138] sm:$0xf]
      %v7103 = vld [vmem:[%s5 + $0x13c] sm:$0xf]
      %v7104 = vld [vmem:[%s5 + $0x140] sm:$0xf]
      %v7105 = vld [vmem:[%s5 + $0x144] sm:$0xf]
      %v7106 = vld [vmem:[%s5 + $0x148] sm:$0xf]
      %v7107 = vld [vmem:[%s5 + $0x14c] sm:$0xf]
      %v7108 = vld [vmem:[%s5 + $0x150] sm:$0xf]
      %v7109 = vld [vmem:[%s5 + $0x154] sm:$0xf]
      %v7110 = vld [vmem:[%s5 + $0x158] sm:$0xf]
      %v7111 = vld [vmem:[%s5 + $0x15c] sm:$0xf]
      %v7112 = vld [vmem:[%s5 + $0x160] sm:$0xf]
      %v7113 = vld [vmem:[%s5 + $0x164] sm:$0xf]
      %v7114 = vld [vmem:[%s5 + $0x168] sm:$0xf]
      %v7115 = vld [vmem:[%s5 + $0x16c] sm:$0xf]
      %v7116 = vld [vmem:[%s5 + $0x170] sm:$0xf]
      %v7117 = vld [vmem:[%s5 + $0x174] sm:$0xf]
      %v7118 = vld [vmem:[%s5 + $0x178] sm:$0xf]
      %v7119 = vld [vmem:[%s5 + $0x17c] sm:$0xf]
      %v7120 = vld [vmem:[%s5 + $0x180] sm:$0xf]
      %v7121 = vld [vmem:[%s5 + $0x184] sm:$0xf]
      %v7122 = vld [vmem:[%s5 + $0x188] sm:$0xf]
      %v7123 = vld [vmem:[%s5 + $0x18c] sm:$0xf]
      %v7124 = vld [vmem:[%s5 + $0x190] sm:$0xf]
      %v7125 = vld [vmem:[%s5 + $0x194] sm:$0xf]
      %v7126 = vld [vmem:[%s5 + $0x198] sm:$0xf]
      %v7127 = vld [vmem:[%s5 + $0x19c] sm:$0xf]
      %v7128 = vld [vmem:[%s5 + $0x1a0] sm:$0xf]
      %v7129 = vld [vmem:[%s5 + $0x1a4] sm:$0xf]
      %v7130 = vld [vmem:[%s5 + $0x1a8] sm:$0xf]
      %v7131 = vld [vmem:[%s5 + $0x1ac] sm:$0xf]
      %v7132 = vld [vmem:[%s5 + $0x1b0] sm:$0xf]
      %v7133 = vld [vmem:[%s5 + $0x1b4] sm:$0xf]
      %v7134 = vld [vmem:[%s5 + $0x1b8] sm:$0xf]
      %v7135 = vld [vmem:[%s5 + $0x1bc] sm:$0xf]
      %v7136 = vld [vmem:[%s5 + $0x1c0] sm:$0xf]
      %v7137 = vld [vmem:[%s5 + $0x1c4] sm:$0xf]
      %v7138 = vld [vmem:[%s5 + $0x1c8] sm:$0xf]
      %v7139 = vld [vmem:[%s5 + $0x1cc] sm:$0xf]
      %v7140 = vld [vmem:[%s5 + $0x1d0] sm:$0xf]
      %v7141 = vld [vmem:[%s5 + $0x1d4] sm:$0xf]
      %v7142 = vld [vmem:[%s5 + $0x1d8] sm:$0xf]
      %v7143 = vld [vmem:[%s5 + $0x1dc] sm:$0xf]
      %v7144 = vld [vmem:[%s5 + $0x1e0] sm:$0xf]
      %v7145 = vld [vmem:[%s5 + $0x1e4] sm:$0xf]
      %v7146 = vld [vmem:[%s5 + $0x1e8] sm:$0xf]
      %v7147 = vld [vmem:[%s5 + $0x1ec] sm:$0xf]
      %v7148 = vld [vmem:[%s5 + $0x1f0] sm:$0xf]
      %v7149 = vld [vmem:[%s5 + $0x1f4] sm:$0xf]
      %v7150 = vld [vmem:[%s5 + $0x1f8] sm:$0xf]
      %v7151 = vld [vmem:[%s5 + $0x1fc] sm:$0xf]
      %v7152 = vld [vmem:[%s5 + $0x200] sm:$0xf]
      %v7153 = vld [vmem:[%s5 + $0x204] sm:$0xf]
      %v7154 = vld [vmem:[%s5 + $0x208] sm:$0xf]
      %v7155 = vld [vmem:[%s5 + $0x20c] sm:$0xf]
      %v7156 = vld [vmem:[%s5 + $0x210] sm:$0xf]
      %v7157 = vld [vmem:[%s5 + $0x214] sm:$0xf]
      %v7158 = vld [vmem:[%s5 + $0x218] sm:$0xf]
      %v7159 = vld [vmem:[%s5 + $0x21c] sm:$0xf]
      %v7160 = vld [vmem:[%s5 + $0x220] sm:$0xf]
      %v7161 = vld [vmem:[%s5 + $0x224] sm:$0xf]
      %v7162 = vld [vmem:[%s5 + $0x228] sm:$0xf]
      %v7163 = vld [vmem:[%s5 + $0x22c] sm:$0xf]
      %v7164 = vld [vmem:[%s5 + $0x230] sm:$0xf]
      %v7165 = vld [vmem:[%s5 + $0x234] sm:$0xf]
      %v7166 = vld [vmem:[%s5 + $0x238] sm:$0xf]
      %v7167 = vld [vmem:[%s5 + $0x23c] sm:$0xf]
      %v7168 = vld [vmem:[%s5 + $0x240] sm:$0xf]
      %v7169 = vld [vmem:[%s5 + $0x244] sm:$0xf]
      %v7170 = vld [vmem:[%s5 + $0x248] sm:$0xf]
      %v7171 = vld [vmem:[%s5 + $0x24c] sm:$0xf]
      %v7172 = vld [vmem:[%s5 + $0x250] sm:$0xf]
      %v7173 = vld [vmem:[%s5 + $0x254] sm:$0xf]
      %v7174 = vld [vmem:[%s5 + $0x258] sm:$0xf]
      %v7175 = vld [vmem:[%s5 + $0x25c] sm:$0xf]
      %v7176 = vld [vmem:[%s5 + $0x260] sm:$0xf]
      %v7177 = vld [vmem:[%s5 + $0x264] sm:$0xf]
      %v7178 = vld [vmem:[%s5 + $0x268] sm:$0xf]
      %v7179 = vld [vmem:[%s5 + $0x26c] sm:$0xf]
      %v7180 = vld [vmem:[%s5 + $0x270] sm:$0xf]
      %v7181 = vld [vmem:[%s5 + $0x274] sm:$0xf]
      %v7182 = vld [vmem:[%s5 + $0x278] sm:$0xf]
      %v7183 = vld [vmem:[%s5 + $0x27c] sm:$0xf]
      %v7184 = vld [vmem:[%s5 + $0x280] sm:$0xf]
      %v7185 = vld [vmem:[%s5 + $0x284] sm:$0xf]
      %v7186 = vld [vmem:[%s5 + $0x288] sm:$0xf]
      %v7187 = vld [vmem:[%s5 + $0x28c] sm:$0xf]
      %v7188 = vld [vmem:[%s5 + $0x290] sm:$0xf]
      %v7189 = vld [vmem:[%s5 + $0x294] sm:$0xf]
      %v7190 = vld [vmem:[%s5 + $0x298] sm:$0xf]
      %v7191 = vld [vmem:[%s5 + $0x29c] sm:$0xf]
      %v7192 = vld [vmem:[%s5 + $0x2a0] sm:$0xf]
      %v7193 = vld [vmem:[%s5 + $0x2a4] sm:$0xf]
      %v7194 = vld [vmem:[%s5 + $0x2a8] sm:$0xf]
      %v7195 = vld [vmem:[%s5 + $0x2ac] sm:$0xf]
      %v7196 = vld [vmem:[%s5 + $0x2b0] sm:$0xf]
      %v7197 = vld [vmem:[%s5 + $0x2b4] sm:$0xf]
      %v7198 = vld [vmem:[%s5 + $0x2b8] sm:$0xf]
      %v7199 = vld [vmem:[%s5 + $0x2bc] sm:$0xf]
      %v7200 = vld [vmem:[%s5 + $0x2c0] sm:$0xf]
      %v7201 = vld [vmem:[%s5 + $0x2c4] sm:$0xf]
      %v7202 = vld [vmem:[%s5 + $0x2c8] sm:$0xf]
      %v7203 = vld [vmem:[%s5 + $0x2cc] sm:$0xf]
      %v7204 = vld [vmem:[%s5 + $0x2d0] sm:$0xf]
      %v7205 = vld [vmem:[%s5 + $0x2d4] sm:$0xf]
      %v7206 = vld [vmem:[%s5 + $0x2d8] sm:$0xf]
      %v7207 = vld [vmem:[%s5 + $0x2dc] sm:$0xf]
      %v7208 = vld [vmem:[%s5 + $0x2e0] sm:$0xf]
      %v7209 = vld [vmem:[%s5 + $0x2e4] sm:$0xf]
      %v7210 = vld [vmem:[%s5 + $0x2e8] sm:$0xf]
      %v7211 = vld [vmem:[%s5 + $0x2ec] sm:$0xf]
      %v7212 = vld [vmem:[%s5 + $0x2f0] sm:$0xf]
      %v7213 = vld [vmem:[%s5 + $0x2f4] sm:$0xf]
      %v7214 = vld [vmem:[%s5 + $0x2f8] sm:$0xf]
      %v7215 = vld [vmem:[%s5 + $0x2fc] sm:$0xf]
      %v7216 = vld [vmem:[%s5 + $0x300] sm:$0xf]
      %v7217 = vld [vmem:[%s5 + $0x304] sm:$0xf]
      %v7218 = vld [vmem:[%s5 + $0x308] sm:$0xf]
      %v7219 = vld [vmem:[%s5 + $0x30c] sm:$0xf]
      %v7220 = vld [vmem:[%s5 + $0x310] sm:$0xf]
      %v7221 = vld [vmem:[%s5 + $0x314] sm:$0xf]
      %v7222 = vld [vmem:[%s5 + $0x318] sm:$0xf]
      %v7223 = vld [vmem:[%s5 + $0x31c] sm:$0xf]
      %v7224 = vld [vmem:[%s5 + $0x320] sm:$0xf]
      %v7225 = vld [vmem:[%s5 + $0x324] sm:$0xf]
      %v7226 = vld [vmem:[%s5 + $0x328] sm:$0xf]
      %v7227 = vld [vmem:[%s5 + $0x32c] sm:$0xf]
      %v7228 = vld [vmem:[%s5 + $0x330] sm:$0xf]
      %v7229 = vld [vmem:[%s5 + $0x334] sm:$0xf]
      %v7230 = vld [vmem:[%s5 + $0x338] sm:$0xf]
      %v7231 = vld [vmem:[%s5 + $0x33c] sm:$0xf]
      %v7232 = vld [vmem:[%s5 + $0x340] sm:$0xf]
      %v7233 = vld [vmem:[%s5 + $0x344] sm:$0xf]
      %v7234 = vld [vmem:[%s5 + $0x348] sm:$0xf]
      %v7235 = vld [vmem:[%s5 + $0x34c] sm:$0xf]
      %v7236 = vld [vmem:[%s5 + $0x350] sm:$0xf]
      %v7237 = vld [vmem:[%s5 + $0x354] sm:$0xf]
      %v7238 = vld [vmem:[%s5 + $0x358] sm:$0xf]
      %v7239 = vld [vmem:[%s5 + $0x35c] sm:$0xf]
      %v7240 = vld [vmem:[%s6] sm:$0x1]
      %v7242 = vlaneseq
      %v7243 = vshrl.u32 %v7242, 7
      %v7244 = vsub.s32 0, %v7243
      %v7245 = vrot.slane %v7240, %v7244
      %v7463 = vunpack.c.l.b16 %v7024
      %v7464 = vunpack.c.l.b16 %v7025
      %v7465 = vunpack.c.l.b16 %v7026
      %v7466 = vunpack.c.l.b16 %v7027
      %v7467 = vunpack.c.l.b16 %v7028
      %v7468 = vunpack.c.l.b16 %v7029
      %v7469 = vunpack.c.l.b16 %v7030
      %v7470 = vunpack.c.l.b16 %v7031
      %v7471 = vunpack.c.l.b16 %v7032
      %v7472 = vunpack.c.l.b16 %v7033
      %v7473 = vunpack.c.l.b16 %v7034
      %v7474 = vunpack.c.l.b16 %v7035
      %v7475 = vunpack.c.l.b16 %v7036
      %v7476 = vunpack.c.l.b16 %v7037
      %v7477 = vunpack.c.l.b16 %v7038
      %v7478 = vunpack.c.l.b16 %v7039
      %v7479 = vunpack.c.l.b16 %v7040
      %v7480 = vunpack.c.l.b16 %v7041
      %v7481 = vunpack.c.l.b16 %v7042
      %v7482 = vunpack.c.l.b16 %v7043
      %v7483 = vunpack.c.l.b16 %v7044
      %v7484 = vunpack.c.l.b16 %v7045
      %v7485 = vunpack.c.l.b16 %v7046
      %v7486 = vunpack.c.l.b16 %v7047
      %v7487 = vunpack.c.l.b16 %v7048
      %v7488 = vunpack.c.l.b16 %v7049
      %v7489 = vunpack.c.l.b16 %v7050
      %v7490 = vunpack.c.l.b16 %v7051
      %v7491 = vunpack.c.l.b16 %v7052
      %v7492 = vunpack.c.l.b16 %v7053
      %v7493 = vunpack.c.l.b16 %v7054
      %v7494 = vunpack.c.l.b16 %v7055
      %v7495 = vunpack.c.l.b16 %v7056
      %v7496 = vunpack.c.l.b16 %v7057
      %v7497 = vunpack.c.l.b16 %v7058
      %v7498 = vunpack.c.l.b16 %v7059
      %v7499 = vunpack.c.l.b16 %v7060
      %v7500 = vunpack.c.l.b16 %v7061
      %v7501 = vunpack.c.l.b16 %v7062
      %v7502 = vunpack.c.l.b16 %v7063
      %v7503 = vunpack.c.l.b16 %v7064
      %v7504 = vunpack.c.l.b16 %v7065
      %v7505 = vunpack.c.l.b16 %v7066
      %v7506 = vunpack.c.l.b16 %v7067
      %v7507 = vunpack.c.l.b16 %v7068
      %v7508 = vunpack.c.l.b16 %v7069
      %v7509 = vunpack.c.l.b16 %v7070
      %v7510 = vunpack.c.l.b16 %v7071
      %v7511 = vunpack.c.l.b16 %v7072
      %v7512 = vunpack.c.l.b16 %v7073
      %v7513 = vunpack.c.l.b16 %v7074
      %v7514 = vunpack.c.l.b16 %v7075
      %v7515 = vunpack.c.l.b16 %v7076
      %v7516 = vunpack.c.l.b16 %v7077
      %v7517 = vunpack.c.l.b16 %v7078
      %v7518 = vunpack.c.l.b16 %v7079
      %v7519 = vunpack.c.l.b16 %v7080
      %v7520 = vunpack.c.l.b16 %v7081
      %v7521 = vunpack.c.l.b16 %v7082
      %v7522 = vunpack.c.l.b16 %v7083
      %v7523 = vunpack.c.l.b16 %v7084
      %v7524 = vunpack.c.l.b16 %v7085
      %v7525 = vunpack.c.l.b16 %v7086
      %v7526 = vunpack.c.l.b16 %v7087
      %v7527 = vunpack.c.l.b16 %v7088
      %v7528 = vunpack.c.l.b16 %v7089
      %v7529 = vunpack.c.l.b16 %v7090
      %v7530 = vunpack.c.l.b16 %v7091
      %v7531 = vunpack.c.l.b16 %v7092
      %v7532 = vunpack.c.l.b16 %v7093
      %v7533 = vunpack.c.l.b16 %v7094
      %v7534 = vunpack.c.l.b16 %v7095
      %v7535 = vunpack.c.l.b16 %v7096
      %v7536 = vunpack.c.l.b16 %v7097
      %v7537 = vunpack.c.l.b16 %v7098
      %v7538 = vunpack.c.l.b16 %v7099
      %v7539 = vunpack.c.l.b16 %v7100
      %v7540 = vunpack.c.l.b16 %v7101
      %v7541 = vunpack.c.l.b16 %v7102
      %v7542 = vunpack.c.l.b16 %v7103
      %v7543 = vunpack.c.l.b16 %v7104
      %v7544 = vunpack.c.l.b16 %v7105
      %v7545 = vunpack.c.l.b16 %v7106
      %v7546 = vunpack.c.l.b16 %v7107
      %v7547 = vunpack.c.l.b16 %v7108
      %v7548 = vunpack.c.l.b16 %v7109
      %v7549 = vunpack.c.l.b16 %v7110
      %v7550 = vunpack.c.l.b16 %v7111
      %v7551 = vunpack.c.l.b16 %v7112
      %v7552 = vunpack.c.l.b16 %v7113
      %v7553 = vunpack.c.l.b16 %v7114
      %v7554 = vunpack.c.l.b16 %v7115
      %v7555 = vunpack.c.l.b16 %v7116
      %v7556 = vunpack.c.l.b16 %v7117
      %v7557 = vunpack.c.l.b16 %v7118
      %v7558 = vunpack.c.l.b16 %v7119
      %v7559 = vunpack.c.l.b16 %v7120
      %v7560 = vunpack.c.l.b16 %v7121
      %v7561 = vunpack.c.l.b16 %v7122
      %v7562 = vunpack.c.l.b16 %v7123
      %v7563 = vunpack.c.l.b16 %v7124
      %v7564 = vunpack.c.l.b16 %v7125
      %v7565 = vunpack.c.l.b16 %v7126
      %v7566 = vunpack.c.l.b16 %v7127
      %v7567 = vunpack.c.l.b16 %v7128
      %v7568 = vunpack.c.l.b16 %v7129
      %v7569 = vunpack.c.l.b16 %v7130
      %v7570 = vunpack.c.l.b16 %v7131
      %v7571 = vunpack.c.l.b16 %v7132
      %v7572 = vunpack.c.l.b16 %v7133
      %v7573 = vunpack.c.l.b16 %v7134
      %v7574 = vunpack.c.l.b16 %v7135
      %v7575 = vunpack.c.l.b16 %v7136
      %v7576 = vunpack.c.l.b16 %v7137
      %v7577 = vunpack.c.l.b16 %v7138
      %v7578 = vunpack.c.l.b16 %v7139
      %v7579 = vunpack.c.l.b16 %v7140
      %v7580 = vunpack.c.l.b16 %v7141
      %v7581 = vunpack.c.l.b16 %v7142
      %v7582 = vunpack.c.l.b16 %v7143
      %v7583 = vunpack.c.l.b16 %v7144
      %v7584 = vunpack.c.l.b16 %v7145
      %v7585 = vunpack.c.l.b16 %v7146
      %v7586 = vunpack.c.l.b16 %v7147
      %v7587 = vunpack.c.l.b16 %v7148
      %v7588 = vunpack.c.l.b16 %v7149
      %v7589 = vunpack.c.l.b16 %v7150
      %v7590 = vunpack.c.l.b16 %v7151
      %v7591 = vunpack.c.l.b16 %v7152
      %v7592 = vunpack.c.l.b16 %v7153
      %v7593 = vunpack.c.l.b16 %v7154
      %v7594 = vunpack.c.l.b16 %v7155
      %v7595 = vunpack.c.l.b16 %v7156
      %v7596 = vunpack.c.l.b16 %v7157
      %v7597 = vunpack.c.l.b16 %v7158
      %v7598 = vunpack.c.l.b16 %v7159
      %v7599 = vunpack.c.l.b16 %v7160
      %v7600 = vunpack.c.l.b16 %v7161
      %v7601 = vunpack.c.l.b16 %v7162
      %v7602 = vunpack.c.l.b16 %v7163
      %v7603 = vunpack.c.l.b16 %v7164
      %v7604 = vunpack.c.l.b16 %v7165
      %v7605 = vunpack.c.l.b16 %v7166
      %v7606 = vunpack.c.l.b16 %v7167
      %v7607 = vunpack.c.l.b16 %v7168
      %v7608 = vunpack.c.l.b16 %v7169
      %v7609 = vunpack.c.l.b16 %v7170
      %v7610 = vunpack.c.l.b16 %v7171
      %v7611 = vunpack.c.l.b16 %v7172
      %v7612 = vunpack.c.l.b16 %v7173
      %v7613 = vunpack.c.l.b16 %v7174
      %v7614 = vunpack.c.l.b16 %v7175
      %v7615 = vunpack.c.l.b16 %v7176
      %v7616 = vunpack.c.l.b16 %v7177
      %v7617 = vunpack.c.l.b16 %v7178
      %v7618 = vunpack.c.l.b16 %v7179
      %v7619 = vunpack.c.l.b16 %v7180
      %v7620 = vunpack.c.l.b16 %v7181
      %v7621 = vunpack.c.l.b16 %v7182
      %v7622 = vunpack.c.l.b16 %v7183
      %v7623 = vunpack.c.l.b16 %v7184
      %v7624 = vunpack.c.l.b16 %v7185
      %v7625 = vunpack.c.l.b16 %v7186
      %v7626 = vunpack.c.l.b16 %v7187
      %v7627 = vunpack.c.l.b16 %v7188
      %v7628 = vunpack.c.l.b16 %v7189
      %v7629 = vunpack.c.l.b16 %v7190
      %v7630 = vunpack.c.l.b16 %v7191
      %v7631 = vunpack.c.l.b16 %v7192
      %v7632 = vunpack.c.l.b16 %v7193
      %v7633 = vunpack.c.l.b16 %v7194
      %v7634 = vunpack.c.l.b16 %v7195
      %v7635 = vunpack.c.l.b16 %v7196
      %v7636 = vunpack.c.l.b16 %v7197
      %v7637 = vunpack.c.l.b16 %v7198
      %v7638 = vunpack.c.l.b16 %v7199
      %v7639 = vunpack.c.l.b16 %v7200
      %v7640 = vunpack.c.l.b16 %v7201
      %v7641 = vunpack.c.l.b16 %v7202
      %v7642 = vunpack.c.l.b16 %v7203
      %v7643 = vunpack.c.l.b16 %v7204
      %v7644 = vunpack.c.l.b16 %v7205
      %v7645 = vunpack.c.l.b16 %v7206
      %v7646 = vunpack.c.l.b16 %v7207
      %v7647 = vunpack.c.l.b16 %v7208
      %v7648 = vunpack.c.l.b16 %v7209
      %v7649 = vunpack.c.l.b16 %v7210
      %v7650 = vunpack.c.l.b16 %v7211
      %v7651 = vunpack.c.l.b16 %v7212
      %v7652 = vunpack.c.l.b16 %v7213
      %v7653 = vunpack.c.l.b16 %v7214
      %v7654 = vunpack.c.l.b16 %v7215
      %v7655 = vunpack.c.l.b16 %v7216
      %v7656 = vunpack.c.l.b16 %v7217
      %v7657 = vunpack.c.l.b16 %v7218
      %v7658 = vunpack.c.l.b16 %v7219
      %v7659 = vunpack.c.l.b16 %v7220
      %v7660 = vunpack.c.l.b16 %v7221
      %v7661 = vunpack.c.l.b16 %v7222
      %v7662 = vunpack.c.l.b16 %v7223
      %v7663 = vunpack.c.l.b16 %v7224
      %v7664 = vunpack.c.l.b16 %v7225
      %v7665 = vunpack.c.l.b16 %v7226
      %v7666 = vunpack.c.l.b16 %v7227
      %v7667 = vunpack.c.l.b16 %v7228
      %v7668 = vunpack.c.l.b16 %v7229
      %v7669 = vunpack.c.l.b16 %v7230
      %v7670 = vunpack.c.l.b16 %v7231
      %v7671 = vunpack.c.l.b16 %v7232
      %v7672 = vunpack.c.l.b16 %v7233
      %v7673 = vunpack.c.l.b16 %v7234
      %v7674 = vunpack.c.l.b16 %v7235
      %v7675 = vunpack.c.l.b16 %v7236
      %v7676 = vunpack.c.l.b16 %v7237
      %v7677 = vunpack.c.l.b16 %v7238
      %v7678 = vunpack.c.l.b16 %v7239
      %v7679 = vpack.c.b16 %v7464, %v7463
      %v7680 = vpack.c.b16 %v7466, %v7465
      %v7681 = vpack.c.b16 %v7468, %v7467
      %v7682 = vpack.c.b16 %v7470, %v7469
      %v7683 = vpack.c.b16 %v7472, %v7471
      %v7684 = vpack.c.b16 %v7474, %v7473
      %v7685 = vpack.c.b16 %v7476, %v7475
      %v7686 = vpack.c.b16 %v7478, %v7477
      %v7687 = vpack.c.b16 %v7480, %v7479
      %v7688 = vpack.c.b16 %v7482, %v7481
      %v7689 = vpack.c.b16 %v7484, %v7483
      %v7690 = vpack.c.b16 %v7486, %v7485
      %v7691 = vpack.c.b16 %v7488, %v7487
      %v7692 = vpack.c.b16 %v7490, %v7489
      %v7693 = vpack.c.b16 %v7492, %v7491
      %v7694 = vpack.c.b16 %v7494, %v7493
      %v7695 = vpack.c.b16 %v7496, %v7495
      %v7696 = vpack.c.b16 %v7498, %v7497
      %v7697 = vpack.c.b16 %v7500, %v7499
      %v7698 = vpack.c.b16 %v7502, %v7501
      %v7699 = vpack.c.b16 %v7504, %v7503
      %v7700 = vpack.c.b16 %v7506, %v7505
      %v7701 = vpack.c.b16 %v7508, %v7507
      %v7702 = vpack.c.b16 %v7510, %v7509
      %v7703 = vpack.c.b16 %v7512, %v7511
      %v7704 = vpack.c.b16 %v7514, %v7513
      %v7705 = vpack.c.b16 %v7516, %v7515
      %v7706 = vpack.c.b16 %v7518, %v7517
      %v7707 = vpack.c.b16 %v7520, %v7519
      %v7708 = vpack.c.b16 %v7522, %v7521
      %v7709 = vpack.c.b16 %v7524, %v7523
      %v7710 = vpack.c.b16 %v7526, %v7525
      %v7711 = vpack.c.b16 %v7528, %v7527
      %v7712 = vpack.c.b16 %v7530, %v7529
      %v7713 = vpack.c.b16 %v7532, %v7531
      %v7714 = vpack.c.b16 %v7534, %v7533
      %v7715 = vpack.c.b16 %v7536, %v7535
      %v7716 = vpack.c.b16 %v7538, %v7537
      %v7717 = vpack.c.b16 %v7540, %v7539
      %v7718 = vpack.c.b16 %v7542, %v7541
      %v7719 = vpack.c.b16 %v7544, %v7543
      %v7720 = vpack.c.b16 %v7546, %v7545
      %v7721 = vpack.c.b16 %v7548, %v7547
      %v7722 = vpack.c.b16 %v7550, %v7549
      %v7723 = vpack.c.b16 %v7552, %v7551
      %v7724 = vpack.c.b16 %v7554, %v7553
      %v7725 = vpack.c.b16 %v7556, %v7555
      %v7726 = vpack.c.b16 %v7558, %v7557
      %v7727 = vpack.c.b16 %v7560, %v7559
      %v7728 = vpack.c.b16 %v7562, %v7561
      %v7729 = vpack.c.b16 %v7564, %v7563
      %v7730 = vpack.c.b16 %v7566, %v7565
      %v7731 = vpack.c.b16 %v7568, %v7567
      %v7732 = vpack.c.b16 %v7570, %v7569
      %v7733 = vpack.c.b16 %v7572, %v7571
      %v7734 = vpack.c.b16 %v7574, %v7573
      %v7735 = vpack.c.b16 %v7576, %v7575
      %v7736 = vpack.c.b16 %v7578, %v7577
      %v7737 = vpack.c.b16 %v7580, %v7579
      %v7738 = vpack.c.b16 %v7582, %v7581
      %v7739 = vpack.c.b16 %v7584, %v7583
      %v7740 = vpack.c.b16 %v7586, %v7585
      %v7741 = vpack.c.b16 %v7588, %v7587
      %v7742 = vpack.c.b16 %v7590, %v7589
      %v7743 = vpack.c.b16 %v7592, %v7591
      %v7744 = vpack.c.b16 %v7594, %v7593
      %v7745 = vpack.c.b16 %v7596, %v7595
      %v7746 = vpack.c.b16 %v7598, %v7597
      %v7747 = vpack.c.b16 %v7600, %v7599
      %v7748 = vpack.c.b16 %v7602, %v7601
      %v7749 = vpack.c.b16 %v7604, %v7603
      %v7750 = vpack.c.b16 %v7606, %v7605
      %v7751 = vpack.c.b16 %v7608, %v7607
      %v7752 = vpack.c.b16 %v7610, %v7609
      %v7753 = vpack.c.b16 %v7612, %v7611
      %v7754 = vpack.c.b16 %v7614, %v7613
      %v7755 = vpack.c.b16 %v7616, %v7615
      %v7756 = vpack.c.b16 %v7618, %v7617
      %v7757 = vpack.c.b16 %v7620, %v7619
      %v7758 = vpack.c.b16 %v7622, %v7621
      %v7759 = vpack.c.b16 %v7624, %v7623
      %v7760 = vpack.c.b16 %v7626, %v7625
      %v7761 = vpack.c.b16 %v7628, %v7627
      %v7762 = vpack.c.b16 %v7630, %v7629
      %v7763 = vpack.c.b16 %v7632, %v7631
      %v7764 = vpack.c.b16 %v7634, %v7633
      %v7765 = vpack.c.b16 %v7636, %v7635
      %v7766 = vpack.c.b16 %v7638, %v7637
      %v7767 = vpack.c.b16 %v7640, %v7639
      %v7768 = vpack.c.b16 %v7642, %v7641
      %v7769 = vpack.c.b16 %v7644, %v7643
      %v7770 = vpack.c.b16 %v7646, %v7645
      %v7771 = vpack.c.b16 %v7648, %v7647
      %v7772 = vpack.c.b16 %v7650, %v7649
      %v7773 = vpack.c.b16 %v7652, %v7651
      %v7774 = vpack.c.b16 %v7654, %v7653
      %v7775 = vpack.c.b16 %v7656, %v7655
      %v7776 = vpack.c.b16 %v7658, %v7657
      %v7777 = vpack.c.b16 %v7660, %v7659
      %v7778 = vpack.c.b16 %v7662, %v7661
      %v7779 = vpack.c.b16 %v7664, %v7663
      %v7780 = vpack.c.b16 %v7666, %v7665
      %v7781 = vpack.c.b16 %v7668, %v7667
      %v7782 = vpack.c.b16 %v7670, %v7669
      %v7783 = vpack.c.b16 %v7672, %v7671
      %v7784 = vpack.c.b16 %v7674, %v7673
      %v7785 = vpack.c.b16 %v7676, %v7675
      %v7786 = vpack.c.b16 %v7678, %v7677
      %v7896 = vsel %vm369, %v7016, 0
      %7898 = vmatprep.subr.bf16.mxu0 0
      %7899 = vmatpush1.bf16.msra.mxu0 %v7686
      %7900 = vmatprep.subr.bf16.mxu0 0
      %7901 = vmatpush1.bf16.msra.mxu0 %v7685
      %7902 = vmatprep.subr.bf16.mxu0 0
      %7903 = vmatpush1.bf16.msra.mxu0 %v7684
      %7904 = vmatprep.subr.bf16.mxu0 0
      %7905 = vmatpush1.bf16.msra.mxu0 %v7683
      %7906 = vmatprep.subr.bf16.mxu0 0
      %7907 = vmatpush1.bf16.msra.mxu0 %v7682
      %7908 = vmatprep.subr.bf16.mxu0 0
      %7909 = vmatpush1.bf16.msra.mxu0 %v7681
      %7910 = vmatprep.subr.bf16.mxu0 0
      %7911 = vmatpush1.bf16.msra.mxu0 %v7680
      %7912 = vmatprep.subr.bf16.mxu0 0
      %7913 = vmatpush1.bf16.msra.mxu0 %v7679
      %7914 = vmatprep.subr.bf16.mxu0 0
      %7915 = vmatpush2.bf16.msra.mxu0 %v7694
      %7916 = vmatprep.subr.bf16.mxu0 0
      %7917 = vmatpush2.bf16.msra.mxu0 %v7693
      %7918 = vmatprep.subr.bf16.mxu0 0
      %7919 = vmatpush2.bf16.msra.mxu0 %v7692
      %7920 = vmatprep.subr.bf16.mxu0 0
      %7921 = vmatpush2.bf16.msra.mxu0 %v7691
      %7922 = vmatprep.subr.bf16.mxu0 0
      %7923 = vmatpush2.bf16.msra.mxu0 %v7690
      %7924 = vmatprep.subr.bf16.mxu0 0
      %7925 = vmatpush2.bf16.msra.mxu0 %v7689
      %7926 = vmatprep.subr.bf16.mxu0 0
      %7927 = vmatpush2.bf16.msra.mxu0 %v7688
      %7928 = vmatprep.subr.bf16.mxu0 0
      %7929 = vmatpush2.bf16.msra.mxu0 %v7687
      %7930 = vmatprep.mubr.bf16.mxu0 %v6904
      %7931 = vmatmul.mubr.bf16.gmra.mxu0 %v6903
      %v7932 = vpop.f32.mrf.mxu0
      %v7933 = vadd.f32 %v7245, %v7932
      %v7934 = vpop.f32.mrf.mxu0
      %v7935 = vpop.f32.mrf.mxu0
      %v7936 = vadd.f32 %v7245, %v7935
      %v7937 = vpop.f32.mrf.mxu0
      %7938 = vdwg.mxu0
      %7939 = vmatprep.subr.bf16.mxu0 0
      %7940 = vmatpush1.bf16.msra.mxu0 %v7702
      %7941 = vmatprep.subr.bf16.mxu0 0
      %7942 = vmatpush1.bf16.msra.mxu0 %v7701
      %7943 = vmatprep.subr.bf16.mxu0 0
      %7944 = vmatpush1.bf16.msra.mxu0 %v7700
      %7945 = vmatprep.subr.bf16.mxu0 0
      %7946 = vmatpush1.bf16.msra.mxu0 %v7699
      %7947 = vmatprep.subr.bf16.mxu0 0
      %7948 = vmatpush1.bf16.msra.mxu0 %v7698
      %7949 = vmatprep.subr.bf16.mxu0 0
      %7950 = vmatpush1.bf16.msra.mxu0 %v7697
      %7951 = vmatprep.subr.bf16.mxu0 0
      %7952 = vmatpush1.bf16.msra.mxu0 %v7696
      %7953 = vmatprep.subr.bf16.mxu0 0
      %7954 = vmatpush1.bf16.msra.mxu0 %v7695
      %7955 = vmatprep.subr.bf16.mxu0 0
      %7956 = vmatpush2.bf16.msra.mxu0 %v7710
      %7957 = vmatprep.subr.bf16.mxu0 0
      %7958 = vmatpush2.bf16.msra.mxu0 %v7709
      %7959 = vmatprep.subr.bf16.mxu0 0
      %7960 = vmatpush2.bf16.msra.mxu0 %v7708
      %7961 = vmatprep.subr.bf16.mxu0 0
      %7962 = vmatpush2.bf16.msra.mxu0 %v7707
      %7963 = vmatprep.subr.bf16.mxu0 0
      %7964 = vmatpush2.bf16.msra.mxu0 %v7706
      %7965 = vmatprep.subr.bf16.mxu0 0
      %7966 = vmatpush2.bf16.msra.mxu0 %v7705
      %7967 = vmatprep.subr.bf16.mxu0 0
      %7968 = vmatpush2.bf16.msra.mxu0 %v7704
      %7969 = vmatprep.subr.bf16.mxu0 0
      %7970 = vmatpush2.bf16.msra.mxu0 %v7703
      %7971 = vmatprep.mubr.bf16.mxu0 %v6906
      %7972 = vmatmul.mubr.bf16.gmra.mxu0 %v6905
      %v7973 = vpop.f32.mrf.mxu0
      %v7974 = vadd.f32 %v7933, %v7973
      %v7975 = vpop.f32.mrf.mxu0
      %v7976 = vpop.f32.mrf.mxu0
      %v7977 = vadd.f32 %v7936, %v7976
      %v7978 = vpop.f32.mrf.mxu0
      %7979 = vdwg.mxu0
      %7980 = vmatprep.subr.bf16.mxu0 0
      %7981 = vmatpush1.bf16.msra.mxu0 %v7718
      %7982 = vmatprep.subr.bf16.mxu0 0
      %7983 = vmatpush1.bf16.msra.mxu0 %v7717
      %7984 = vmatprep.subr.bf16.mxu0 0
      %7985 = vmatpush1.bf16.msra.mxu0 %v7716
      %7986 = vmatprep.subr.bf16.mxu0 0
      %7987 = vmatpush1.bf16.msra.mxu0 %v7715
      %7988 = vmatprep.subr.bf16.mxu0 0
      %7989 = vmatpush1.bf16.msra.mxu0 %v7714
      %7990 = vmatprep.subr.bf16.mxu0 0
      %7991 = vmatpush1.bf16.msra.mxu0 %v7713
      %7992 = vmatprep.subr.bf16.mxu0 0
      %7993 = vmatpush1.bf16.msra.mxu0 %v7712
      %7994 = vmatprep.subr.bf16.mxu0 0
      %7995 = vmatpush1.bf16.msra.mxu0 %v7711
      %7996 = vmatprep.subr.bf16.mxu0 0
      %7997 = vmatpush2.bf16.msra.mxu0 %v7726
      %7998 = vmatprep.subr.bf16.mxu0 0
      %7999 = vmatpush2.bf16.msra.mxu0 %v7725
      %8000 = vmatprep.subr.bf16.mxu0 0
      %8001 = vmatpush2.bf16.msra.mxu0 %v7724
      %8002 = vmatprep.subr.bf16.mxu0 0
      %8003 = vmatpush2.bf16.msra.mxu0 %v7723
      %8004 = vmatprep.subr.bf16.mxu0 0
      %8005 = vmatpush2.bf16.msra.mxu0 %v7722
      %8006 = vmatprep.subr.bf16.mxu0 0
      %8007 = vmatpush2.bf16.msra.mxu0 %v7721
      %8008 = vmatprep.subr.bf16.mxu0 0
      %8009 = vmatpush2.bf16.msra.mxu0 %v7720
      %8010 = vmatprep.subr.bf16.mxu0 0
      %8011 = vmatpush2.bf16.msra.mxu0 %v7719
      %8012 = vmatprep.mubr.bf16.mxu0 %v6984
      %8013 = vmatmul.mubr.bf16.gmra.mxu0 %v7022
      %v8014 = vpop.f32.mrf.mxu0
      %v8015 = vadd.f32 %v7974, %v8014
      %v8016 = vpop.f32.mrf.mxu0
      %v8017 = vpop.f32.mrf.mxu0
      %v8018 = vadd.f32 %v7977, %v8017
      %v8019 = vpop.f32.mrf.mxu0
      %8020 = vdwg.mxu0
      %8021 = vmatprep.subr.bf16.mxu0 0
      %8022 = vmatpush1.bf16.msra.mxu0 %v7734
      %8023 = vmatprep.subr.bf16.mxu0 0
      %8024 = vmatpush1.bf16.msra.mxu0 %v7733
      %8025 = vmatprep.subr.bf16.mxu0 0
      %8026 = vmatpush1.bf16.msra.mxu0 %v7732
      %8027 = vmatprep.subr.bf16.mxu0 0
      %8028 = vmatpush1.bf16.msra.mxu0 %v7731
      %8029 = vmatprep.subr.bf16.mxu0 0
      %8030 = vmatpush1.bf16.msra.mxu0 %v7730
      %8031 = vmatprep.subr.bf16.mxu0 0
      %8032 = vmatpush1.bf16.msra.mxu0 %v7729
      %8033 = vmatprep.subr.bf16.mxu0 0
      %8034 = vmatpush1.bf16.msra.mxu0 %v7728
      %8035 = vmatprep.subr.bf16.mxu0 0
      %8036 = vmatpush1.bf16.msra.mxu0 %v7727
      %8037 = vmatprep.subr.bf16.mxu0 0
      %8038 = vmatpush2.bf16.msra.mxu0 %v7742
      %8039 = vmatprep.subr.bf16.mxu0 0
      %8040 = vmatpush2.bf16.msra.mxu0 %v7741
      %8041 = vmatprep.subr.bf16.mxu0 0
      %8042 = vmatpush2.bf16.msra.mxu0 %v7740
      %8043 = vmatprep.subr.bf16.mxu0 0
      %8044 = vmatpush2.bf16.msra.mxu0 %v7739
      %8045 = vmatprep.subr.bf16.mxu0 0
      %8046 = vmatpush2.bf16.msra.mxu0 %v7738
      %8047 = vmatprep.subr.bf16.mxu0 0
      %8048 = vmatpush2.bf16.msra.mxu0 %v7737
      %8049 = vmatprep.subr.bf16.mxu0 0
      %8050 = vmatpush2.bf16.msra.mxu0 %v7736
      %8051 = vmatprep.subr.bf16.mxu0 0
      %8052 = vmatpush2.bf16.msra.mxu0 %v7735
      %8053 = vmatprep.mubr.bf16.mxu0 %v6986
      %8054 = vmatmul.mubr.bf16.gmra.mxu0 %v6985
      %v8055 = vpop.f32.mrf.mxu0
      %v8056 = vadd.f32 %v8015, %v8055
      %v8057 = vpop.f32.mrf.mxu0
      %v8058 = vpop.f32.mrf.mxu0
      %v8059 = vadd.f32 %v8018, %v8058
      %v8060 = vpop.f32.mrf.mxu0
      %8061 = vdwg.mxu0
      %8062 = vmatprep.subr.bf16.mxu0 0
      %8063 = vmatpush1.bf16.msra.mxu0 %v7750
      %8064 = vmatprep.subr.bf16.mxu0 0
      %8065 = vmatpush1.bf16.msra.mxu0 %v7749
      %8066 = vmatprep.subr.bf16.mxu0 0
      %8067 = vmatpush1.bf16.msra.mxu0 %v7748
      %8068 = vmatprep.subr.bf16.mxu0 0
      %8069 = vmatpush1.bf16.msra.mxu0 %v7747
      %8070 = vmatprep.subr.bf16.mxu0 0
      %8071 = vmatpush1.bf16.msra.mxu0 %v7746
      %8072 = vmatprep.subr.bf16.mxu0 0
      %8073 = vmatpush1.bf16.msra.mxu0 %v7745
      %8074 = vmatprep.subr.bf16.mxu0 0
      %8075 = vmatpush1.bf16.msra.mxu0 %v7744
      %8076 = vmatprep.subr.bf16.mxu0 0
      %8077 = vmatpush1.bf16.msra.mxu0 %v7743
      %8078 = vmatprep.subr.bf16.mxu0 0
      %8079 = vmatpush2.bf16.msra.mxu0 %v7758
      %8080 = vmatprep.subr.bf16.mxu0 0
      %8081 = vmatpush2.bf16.msra.mxu0 %v7757
      %8082 = vmatprep.subr.bf16.mxu0 0
      %8083 = vmatpush2.bf16.msra.mxu0 %v7756
      %8084 = vmatprep.subr.bf16.mxu0 0
      %8085 = vmatpush2.bf16.msra.mxu0 %v7755
      %8086 = vmatprep.subr.bf16.mxu0 0
      %8087 = vmatpush2.bf16.msra.mxu0 %v7754
      %8088 = vmatprep.subr.bf16.mxu0 0
      %8089 = vmatpush2.bf16.msra.mxu0 %v7753
      %8090 = vmatprep.subr.bf16.mxu0 0
      %8091 = vmatpush2.bf16.msra.mxu0 %v7752
      %8092 = vmatprep.subr.bf16.mxu0 0
      %8093 = vmatpush2.bf16.msra.mxu0 %v7751
      %8094 = vmatprep.mubr.bf16.mxu0 %v7004
      %8095 = vmatmul.mubr.bf16.gmra.mxu0 %v6987
      %v8096 = vpop.f32.mrf.mxu0
      %v8097 = vadd.f32 %v8056, %v8096
      %v8098 = vpop.f32.mrf.mxu0
      %v8099 = vpop.f32.mrf.mxu0
      %v8100 = vadd.f32 %v8059, %v8099
      %v8101 = vpop.f32.mrf.mxu0
      %8102 = vdwg.mxu0
      %8103 = vmatprep.subr.bf16.mxu0 0
      %8104 = vmatpush1.bf16.msra.mxu0 %v7766
      %8105 = vmatprep.subr.bf16.mxu0 0
      %8106 = vmatpush1.bf16.msra.mxu0 %v7765
      %8107 = vmatprep.subr.bf16.mxu0 0
      %8108 = vmatpush1.bf16.msra.mxu0 %v7764
      %8109 = vmatprep.subr.bf16.mxu0 0
      %8110 = vmatpush1.bf16.msra.mxu0 %v7763
      %8111 = vmatprep.subr.bf16.mxu0 0
      %8112 = vmatpush1.bf16.msra.mxu0 %v7762
      %8113 = vmatprep.subr.bf16.mxu0 0
      %8114 = vmatpush1.bf16.msra.mxu0 %v7761
      %8115 = vmatprep.subr.bf16.mxu0 0
      %8116 = vmatpush1.bf16.msra.mxu0 %v7760
      %8117 = vmatprep.subr.bf16.mxu0 0
      %8118 = vmatpush1.bf16.msra.mxu0 %v7759
      %8119 = vmatprep.subr.bf16.mxu0 0
      %8120 = vmatpush2.bf16.msra.mxu0 %v7774
      %8121 = vmatprep.subr.bf16.mxu0 0
      %8122 = vmatpush2.bf16.msra.mxu0 %v7773
      %8123 = vmatprep.subr.bf16.mxu0 0
      %8124 = vmatpush2.bf16.msra.mxu0 %v7772
      %8125 = vmatprep.subr.bf16.mxu0 0
      %8126 = vmatpush2.bf16.msra.mxu0 %v7771
      %8127 = vmatprep.subr.bf16.mxu0 0
      %8128 = vmatpush2.bf16.msra.mxu0 %v7770
      %8129 = vmatprep.subr.bf16.mxu0 0
      %8130 = vmatpush2.bf16.msra.mxu0 %v7769
      %8131 = vmatprep.subr.bf16.mxu0 0
      %8132 = vmatpush2.bf16.msra.mxu0 %v7768
      %8133 = vmatprep.subr.bf16.mxu0 0
      %8134 = vmatpush2.bf16.msra.mxu0 %v7767
      %8135 = vmatprep.mubr.bf16.mxu0 %v7010
      %8136 = vmatmul.mubr.bf16.gmra.mxu0 %v7007
      %v8137 = vpop.f32.mrf.mxu0
      %v8138 = vadd.f32 %v8097, %v8137
      %v8139 = vpop.f32.mrf.mxu0
      %v8140 = vpop.f32.mrf.mxu0
      %v8141 = vadd.f32 %v8100, %v8140
      %v8142 = vpop.f32.mrf.mxu0
      %8143 = vdwg.mxu0
      %8144 = vmatprep.subr.bf16.mxu0 0
      %8145 = vmatpush1.bf16.msra.mxu0 %v7782
      %8146 = vmatprep.subr.bf16.mxu0 0
      %8147 = vmatpush1.bf16.msra.mxu0 %v7781
      %8148 = vmatprep.subr.bf16.mxu0 0
      %8149 = vmatpush1.bf16.msra.mxu0 %v7780
      %8150 = vmatprep.subr.bf16.mxu0 0
      %8151 = vmatpush1.bf16.msra.mxu0 %v7779
      %8152 = vmatprep.subr.bf16.mxu0 0
      %8153 = vmatpush1.bf16.msra.mxu0 %v7778
      %8154 = vmatprep.subr.bf16.mxu0 0
      %8155 = vmatpush1.bf16.msra.mxu0 %v7777
      %8156 = vmatprep.subr.bf16.mxu0 0
      %8157 = vmatpush1.bf16.msra.mxu0 %v7776
      %8158 = vmatprep.subr.bf16.mxu0 0
      %8159 = vmatpush1.bf16.msra.mxu0 %v7775
      %8160 = vmatprep.subr.bf16.mxu0 0
      %8161 = vmatpush2.bf16.msra.mxu0 0
      %8162 = vmatprep.subr.bf16.mxu0 0
      %8163 = vmatpush2.bf16.msra.mxu0 0
      %8164 = vmatprep.subr.bf16.mxu0 0
      %8165 = vmatpush2.bf16.msra.mxu0 0
      %8166 = vmatprep.subr.bf16.mxu0 0
      %8167 = vmatpush2.bf16.msra.mxu0 0
      %8168 = vmatprep.subr.bf16.mxu0 0
      %8169 = vmatpush2.bf16.msra.mxu0 %v7786
      %8170 = vmatprep.subr.bf16.mxu0 0
      %8171 = vmatpush2.bf16.msra.mxu0 %v7785
      %8172 = vmatprep.subr.bf16.mxu0 0
      %8173 = vmatpush2.bf16.msra.mxu0 %v7784
      %8174 = vmatprep.subr.bf16.mxu0 0
      %8175 = vmatpush2.bf16.msra.mxu0 %v7783
      %8176 = vmatprep.mubr.bf16.mxu0 %v7896
      %8177 = vmatmul.mubr.bf16.gmra.mxu0 %v7013
      %v8178 = vpop.f32.mrf.mxu0
      %v8179 = vadd.f32 %v8138, %v8178
      %v8180 = vpop.f32.mrf.mxu0
      %v8181 = vpop.f32.mrf.mxu0
      %v8182 = vadd.f32 %v8141, %v8181
      %v8183 = vpop.f32.mrf.mxu0
      %8184 = vdwg.mxu0
      %v8185 = vmax.f32 %v8179, 0.0
      %v8186 = vmax.f32 %v8182, 0.0
      %8187 = vst.msk [vmem:[%s278] sm:$0xff] %vm369, %v8185
      %8188 = vst.msk [vmem:[%s278 + $0x8] sm:$0xff] %vm369, %v8186
      %p8189 = scmp.lt.s32.totalorder %s18, 1
      %s8190 = scalar_select %p8189, %s18, 1
      %s8191 = smul.addr %s8190, 2
      %s8192 = smul.addr %s8191, 8
      %s8193 = scalar_lea.vmem %s7, %s8192
      // Predicated region
      $region49: #{one_iteration_reverse_net.1} parent=47 // pred_check
        %p8194 = pneg %p188
      $region50: #{one_iteration_reverse_net.1} parent=47 // pred_check_branch
        %8196 = sbr.rel (%p8194) target = $region52
      $region51: #{one_iteration_reverse_net.1} parent=47 // pred_region
        _
      $region52: #{one_iteration_reverse_net.1} parent=47 // pred_fallthru
        _
    $region48: #{one_iteration_reverse_net.1} parent=5 // pred_fallthru
      _
    %p8197 = scmp.le.s32.totalorder 2, %s13
    // Predicated region
    $region53: #{one_iteration_reverse_net.1} parent=5 // pred_check
      %p8198 = pneg %p8197
    $region54: #{one_iteration_reverse_net.1} parent=5 // pred_check_branch
      %8200 = sbr.rel (%p8198) target = $region56
    $region55: #{one_iteration_reverse_net.1} parent=5 // pred_region
      %s8201 = ssub.s32 %s13, 2
      // Predicated region
      $region57: #{one_iteration_reverse_net.1} parent=55 // pred_check
        %p8202 = pneg %p194
      $region58: #{one_iteration_reverse_net.1} parent=55 // pred_check_branch
        %8204 = sbr.rel (%p8202) target = $region60
      $region59: #{one_iteration_reverse_net.1} parent=55 // pred_region
        %p8205 = scmp.lt.s32.totalorder %s19, 1
        %s8206 = scalar_select %p8205, %s19, 1
        %s8207 = smul.addr %s8206, 2
        %s8208 = smul.addr %s8207, 8
        %s8209 = scalar_lea.vmem %s7, %s8208
      $region60: #{one_iteration_reverse_net.1} parent=55 // pred_fallthru
        _
    $region56: #{one_iteration_reverse_net.1} parent=5 // pred_fallthru
      _
  $region6: #{one_iteration_reverse_net.1} parent=0 // loop_footer
    %s17 = sadd.s32 1, %s13
  $region7: #{one_iteration_reverse_net.1} parent=0 // loop_footer_branch
    %12 = sbr.rel target = $region3
  $region8: #{one_iteration_reverse_net.1} parent=0 // loop_exit
    _

</llo_original>
